<compile_context>
chip_gen: v6e
topology: v6e:2x2x1
jax: 0.10.0
libtpu: 0.0.40
codegen_flags: <defaults>
</compile_context>

<pallas_src>
import functools

import numpy as np
import jax
import jax.numpy as jnp
from jax.experimental import pallas as pl
from jax.experimental.pallas import tpu as pltpu


# ----------------------------------------------------------------------------
# small math helpers (f32 elementwise math on all generations)
# ----------------------------------------------------------------------------
def _gelu(x):
    # exact GELU (erf form), matching torch.nn.GELU() default
    return 0.5 * x * (1.0 + jax.lax.erf(x * (1.0 / np.sqrt(2.0))))


def _layer_norm(x, gamma, beta, eps=1e-5):
    mean = jnp.mean(x, axis=-1, keepdims=True)
    xc = x - mean
    var = jnp.mean(xc * xc, axis=-1, keepdims=True)
    inv = jax.lax.rsqrt(var + eps)
    return xc * inv * gamma + beta


# ----------------------------------------------------------------------------
# the single fused kernel (TB batch elements per grid step)
# ----------------------------------------------------------------------------
def fused_transformer_kernel(
    x_ref, cw1_ref, cb1_ref, cw2_ref, cb2_ref, pe_ref,
    wqkv_ref, bqkv_ref, wo_ref, bo_ref, ln1_ref,
    wf1_ref, bf1_ref, wf2_ref, bf2_ref, ln2_ref,
    wc_ref, bc_ref, o_ref,
    h1pad_scr, head_scr,
    *, num_heads, num_layers,
):
    f32 = jnp.float32
    bf16 = jnp.bfloat16

    TB = x_ref.shape[0]
    T = x_ref.shape[1] - 2                      # input is pre-padded for conv1
    K = cw1_ref.shape[0]
    E = cw1_ref.shape[2]
    S = head_scr.shape[1]                       # seq length after stride-2 conv2
    H = num_heads
    dh = E // H

    # ---- conv1 (k=3, pad=1, stride=1) + GELU : stacked (TB*T, Cin) tap matmuls ----
    xb = x_ref[...]                             # (TB, T+2, Cin) bf16 (pre-cast host-side)
    acc1 = jnp.zeros((TB * T, E), f32)
    for k in range(K):                          # static tap unroll
        tap = xb[:, k:k + T, :].reshape(TB * T, -1)
        acc1 = acc1 + jnp.dot(tap, cw1_ref[k], preferred_element_type=f32)
    h1 = _gelu(acc1 + cb1_ref[...])             # (TB*T, E) f32

    # ---- conv2 (k=3, pad=1, stride=2) + GELU : zero-padded scratch + strided sublane reads ----
    h1pad_scr[:, 0:1, :] = jnp.zeros((TB, 1, E), f32)
    h1pad_scr[:, T + 1:T + 2, :] = jnp.zeros((TB, 1, E), f32)
    h1pad_scr[:, 1:T + 1, :] = h1.reshape(TB, T, E)
    acc2 = jnp.zeros((TB * S, E), f32)
    for k in range(K):
        tap = h1pad_scr[:, pl.ds(k, S, stride=2), :]          # (TB, S, E) strided read
        acc2 = acc2 + jnp.dot(tap.reshape(TB * S, E).astype(bf16), cw2_ref[k],
                              preferred_element_type=f32)
    x = _gelu(acc2 + cb2_ref[...]) + pe_ref[...]               # (TB*S, E) f32

    # ---- transformer encoder stack (post-LN), statically unrolled ----
    for l in range(num_layers):
        xb2 = x.astype(bf16)
        # fused Q/K/V projection: one (TB*S,E)x(E,3E) matmul; Q-scale folded into weights
        qkv = jnp.dot(xb2, wqkv_ref[l], preferred_element_type=f32) + bqkv_ref[l]
        qkv3 = qkv.reshape(TB, S, 3 * E)

        for h in range(H):                       # static head loop; batched over TB via einsum
            qh = qkv3[:, :, h * dh:(h + 1) * dh].astype(bf16)
            kh = qkv3[:, :, E + h * dh:E + (h + 1) * dh].astype(bf16)
            vh = qkv3[:, :, 2 * E + h * dh:2 * E + (h + 1) * dh].astype(bf16)
            s = jnp.einsum('bqd,bkd->bqk', qh, kh, preferred_element_type=f32)   # (TB,S,S)
            s = s - jnp.max(s, axis=-1, keepdims=True)
            p = jnp.exp(s)
            p = p * pl.reciprocal(jnp.sum(p, axis=-1, keepdims=True), approx=True)
            oh = jnp.einsum('bqk,bkd->bqd', p.astype(bf16), vh,
                            preferred_element_type=f32)                          # (TB,S,dh)
            head_scr[:, :, h * dh:(h + 1) * dh] = oh

        # single output projection over all heads
        attn = jnp.dot(head_scr[...].reshape(TB * S, E).astype(bf16), wo_ref[l],
                       preferred_element_type=f32) + bo_ref[l]

        ln1 = ln1_ref[l]
        hx = _layer_norm(x + attn, ln1[0:1, :], ln1[1:2, :])

        ff = _gelu(jnp.dot(hx.astype(bf16), wf1_ref[l], preferred_element_type=f32)
                   + bf1_ref[l])
        ff = jnp.dot(ff.astype(bf16), wf2_ref[l], preferred_element_type=f32) + bf2_ref[l]

        ln2 = ln2_ref[l]
        x = _layer_norm(hx + ff, ln2[0:1, :], ln2[1:2, :])

    # ---- mean-pool over sequence + lane-dense (128-padded) classifier ----
    pooled = jnp.mean(x.reshape(TB, S, E), axis=1)                                # (TB, E)
    logits = jnp.dot(pooled.astype(bf16), wc_ref[...], preferred_element_type=f32) \
        + bc_ref[...]                                                             # (TB, CPAD)
    o_ref[...] = logits.astype(o_ref.dtype)


# ----------------------------------------------------------------------------
# glue: positional encoding, parameter init, full forward
# ----------------------------------------------------------------------------
def get_position_encoding(seq_len, d, n=10000.0):
    pos = np.arange(seq_len, dtype=np.float32)[:, None]
    i = np.arange(d // 2, dtype=np.float32)[None, :]
    denom = np.power(n, 2.0 * i / d)
    pe = np.zeros((seq_len, d), dtype=np.float32)
    pe[:, 0::2] = np.sin(pos / denom)
    pe[:, 1::2] = np.cos(pos / denom)
    return jnp.asarray(pe)


def init_params(key, emb, ff, layers, classes, in_ch):
    def u(k, shape, fan_in):
        bound = 1.0 / np.sqrt(fan_in)
        return jax.random.uniform(k, shape, jnp.float32, -bound, bound)

    keys = jax.random.split(key, 6 + layers * 8)
    p = {
        "conv1_w": u(keys[0], (3, in_ch, emb), in_ch * 3),
        "conv1_b": u(keys[1], (1, emb), in_ch * 3),
        "conv2_w": u(keys[2], (3, emb, emb), emb * 3),
        "conv2_b": u(keys[3], (1, emb), emb * 3),
        "wc": u(keys[4], (emb, classes), emb),
        "bc": u(keys[5], (1, classes), emb),
    }
    ln_init = jnp.stack([jnp.ones((emb,), jnp.float32), jnp.zeros((emb,), jnp.float32)])
    wqkv, bqkv, wo, bo, ln1 = [], [], [], [], []
    w1, b1, w2, b2, ln2 = [], [], [], [], []
    for li in range(layers):
        lk = keys[6 + li * 8: 6 + (li + 1) * 8]
        wqkv.append(u(lk[0], (emb, 3 * emb), emb))
        bqkv.append(u(lk[1], (1, 3 * emb), emb))
        wo.append(u(lk[2], (emb, emb), emb))
        bo.append(u(lk[3], (1, emb), emb))
        ln1.append(ln_init)
        w1.append(u(lk[4], (emb, ff), emb))
        b1.append(u(lk[5], (1, ff), emb))
        w2.append(u(lk[6], (ff, emb), ff))
        b2.append(u(lk[7], (1, emb), ff))
        ln2.append(ln_init)
    p.update({
        "wqkv": jnp.stack(wqkv), "bqkv": jnp.stack(bqkv),
        "wo": jnp.stack(wo), "bo": jnp.stack(bo), "ln1": jnp.stack(ln1),
        "w1": jnp.stack(w1), "b1": jnp.stack(b1),
        "w2": jnp.stack(w2), "b2": jnp.stack(b2), "ln2": jnp.stack(ln2),
    })
    return p


def transformer_forward(audio_input, params, num_heads, tb_max=32):
    # audio_input: (B, 80, T), NCW as in PyTorch
    B, Cin, T = audio_input.shape
    K = params["conv1_w"].shape[0]
    E = params["conv1_w"].shape[2]
    F = params["w1"].shape[2]
    L = params["wqkv"].shape[0]
    C = params["wc"].shape[1]
    assert E % num_heads == 0
    dh = E // num_heads
    S = (T + 2 - K) // 2 + 1                       # seq length after stride-2 conv2
    CPAD = ((C + 127) // 128) * 128                # lane-dense classifier output

    # batch tiling: TB elements per grid step (stacked-M matmuls inside the kernel)
    if B <= tb_max:
        TB, G = B, 1
    else:
        TB = tb_max                                # multiple of 8 so row blocks tile cleanly
        G = (B + TB - 1) // TB
    Bp = G * TB

    # host-side glue: NCW -> NWC, pad time once for conv1, pad batch, pre-cast to bf16
    bf16 = jnp.bfloat16
    x = jnp.transpose(audio_input, (0, 2, 1))                  # (B, T, Cin)
    xp = jnp.pad(x, ((0, Bp - B), (1, 1), (0, 0))).astype(bf16)

    pe = get_position_encoding(S, E)
    pe_tiled = jnp.tile(pe, (TB, 1))                           # (TB*S, E) f32

    # fold 1/sqrt(dh) into the Q columns, pre-cast all matmul weights to bf16
    scale = 1.0 / np.sqrt(dh)
    wqkv = params["wqkv"].at[:, :, :E].multiply(scale).astype(bf16)
    bqkv = params["bqkv"].at[:, :, :E].multiply(scale)
    cw1 = params["conv1_w"].astype(bf16)
    cw2 = params["conv2_w"].astype(bf16)
    wo = params["wo"].astype(bf16)
    w1 = params["w1"].astype(bf16)
    w2 = params["w2"].astype(bf16)
    wc_pad = jnp.pad(params["wc"], ((0, 0), (0, CPAD - C))).astype(bf16)
    bc_pad = jnp.pad(params["bc"], ((0, 0), (0, CPAD - C)))

    kernel = functools.partial(fused_transformer_kernel,
                               num_heads=num_heads, num_layers=L)

    out = pl.pallas_call(
        kernel,
        out_shape=jax.ShapeDtypeStruct((Bp, CPAD), jnp.float32),
        grid=(G,),
        in_specs=[
            pl.BlockSpec((TB, T + 2, Cin), lambda i: (i, 0, 0)),   # x (per-tile block, bf16)
            pl.BlockSpec((K, Cin, E), lambda i: (0, 0, 0)),        # conv1 w (bf16)
            pl.BlockSpec((1, E), lambda i: (0, 0)),                # conv1 b
            pl.BlockSpec((K, E, E), lambda i: (0, 0, 0)),          # conv2 w (bf16)
            pl.BlockSpec((1, E), lambda i: (0, 0)),                # conv2 b
            pl.BlockSpec((TB * S, E), lambda i: (0, 0)),           # positional encoding (tiled)
            pl.BlockSpec((L, E, 3 * E), lambda i: (0, 0, 0)),      # Wqkv (bf16, Q pre-scaled)
            pl.BlockSpec((L, 1, 3 * E), lambda i: (0, 0, 0)),      # Bqkv (Q pre-scaled)
            pl.BlockSpec((L, E, E), lambda i: (0, 0, 0)),          # Wo (bf16)
            pl.BlockSpec((L, 1, E), lambda i: (0, 0, 0)),          # Bo
            pl.BlockSpec((L, 2, E), lambda i: (0, 0, 0)),          # LN1 gamma/beta
            pl.BlockSpec((L, E, F), lambda i: (0, 0, 0)),          # FF w1 (bf16)
            pl.BlockSpec((L, 1, F), lambda i: (0, 0, 0)),          # FF b1
            pl.BlockSpec((L, F, E), lambda i: (0, 0, 0)),          # FF w2 (bf16)
            pl.BlockSpec((L, 1, E), lambda i: (0, 0, 0)),          # FF b2
            pl.BlockSpec((L, 2, E), lambda i: (0, 0, 0)),          # LN2 gamma/beta
            pl.BlockSpec((E, CPAD), lambda i: (0, 0)),             # classifier W (bf16, padded)
            pl.BlockSpec((1, CPAD), lambda i: (0, 0)),             # classifier b (padded)
        ],
        out_specs=pl.BlockSpec((TB, CPAD), lambda i: (i, 0)),
        scratch_shapes=[
            pltpu.VMEM((TB, T + 2, E), jnp.float32),               # zero-padded conv1 output
            pltpu.VMEM((TB, S, E), jnp.float32),                   # per-head attention outputs
        ],
        compiler_params=pltpu.CompilerParams(dimension_semantics=("parallel",)),
    )(xp, cw1, params["conv1_b"], cw2, params["conv2_b"], pe_tiled,
      wqkv, bqkv, wo, params["bo"], params["ln1"],
      w1, params["b1"], w2, params["b2"], params["ln2"],
      wc_pad, bc_pad)

    return out[:B, :C]                             # (B, num_classes)


# ----------------------------------------------------------------------------
# pure-JAX f32 reference (same assumed semantics) for a sanity check
# ----------------------------------------------------------------------------
def reference_forward(audio_input, params, num_heads):
    x = jnp.transpose(audio_input, (0, 2, 1))      # (B, T, Cin)
    B, T, Cin = x.shape
    K = params["conv1_w"].shape[0]
    E = params["conv1_w"].shape[2]
    H = num_heads
    dh = E // H

    xp = jnp.pad(x, ((0, 0), (1, 1), (0, 0)))
    h1 = sum(jnp.einsum("btc,ce->bte", xp[:, k:k + T, :], params["conv1_w"][k])
             for k in range(K)) + params["conv1_b"]
    h1 = _gelu(h1)

    S = (T + 2 - K) // 2 + 1
    h1p = jnp.pad(h1, ((0, 0), (1, 1), (0, 0)))
    h2 = sum(jnp.einsum("bse,ef->bsf", h1p[:, k:k + 2 * S:2, :], params["conv2_w"][k])
             for k in range(K)) + params["conv2_b"]
    h2 = _gelu(h2)

    x = h2 + get_position_encoding(S, E)[None]
    L = params["wqkv"].shape[0]
    for l in range(L):
        qkv = x @ params["wqkv"][l] + params["bqkv"][l]
        q, kk, v = qkv[..., :E], qkv[..., E:2 * E], qkv[..., 2 * E:]
        heads = []
        for h in range(H):
            qh = q[..., h * dh:(h + 1) * dh] / np.sqrt(dh)
            kh = kk[..., h * dh:(h + 1) * dh]
            vh = v[..., h * dh:(h + 1) * dh]
            s = jnp.einsum("bqd,bkd->bqk", qh, kh)
            p = jax.nn.softmax(s, axis=-1)
            heads.append(jnp.einsum("bqk,bkd->bqd", p, vh))
        attn = jnp.concatenate(heads, axis=-1) @ params["wo"][l] + params["bo"][l]
        hx = _layer_norm(x + attn, params["ln1"][l][0], params["ln1"][l][1])
        ff = _gelu(hx @ params["w1"][l] + params["b1"][l])
        ff = ff @ params["w2"][l] + params["b2"][l]
        x = _layer_norm(hx + ff, params["ln2"][l][0], params["ln2"][l][1])
    pooled = x.mean(axis=1)
    return pooled @ params["wc"] + params["bc"]


if __name__ == "__main__":
    B, T, IN_CH = 2, 16, 80
    EMB, HEADS, FF, LAYERS, CLASSES = 32, 4, 64, 6, 10

    key = jax.random.PRNGKey(0)
    pkey, xkey = jax.random.split(key)
    params = init_params(pkey, EMB, FF, LAYERS, CLASSES, IN_CH)
    audio = jax.random.normal(xkey, (B, IN_CH, T), jnp.float32)

    logits = transformer_forward(audio, params, HEADS)
    logits = jax.block_until_ready(logits)
    assert logits.shape == (B, CLASSES) and logits.dtype == jnp.float32
    assert bool(jnp.all(jnp.isfinite(logits)))

    # loose tolerance vs. pure-JAX f32 reference (kernel matmuls run in bf16)
    ref = reference_forward(audio, params, HEADS)
    err = float(jnp.max(jnp.abs(logits - ref)))
    assert err < 0.2, f"mismatch vs f32 reference: {err}"

    print("KERNEL_OK")
</pallas_src>

<mosaic_0001>
module attributes {stable_mosaic.version = 11 : i64} {
  func.func @fused_transformer_kernel(%arg0: i32, %arg1: memref<2x18x80xbf16, #tpu.memory_space<vmem>>, %arg2: memref<3x80x32xbf16, #tpu.memory_space<vmem>>, %arg3: memref<1x32xf32, #tpu.memory_space<vmem>>, %arg4: memref<3x32x32xbf16, #tpu.memory_space<vmem>>, %arg5: memref<1x32xf32, #tpu.memory_space<vmem>>, %arg6: memref<16x32xf32, #tpu.memory_space<vmem>>, %arg7: memref<6x32x96xbf16, #tpu.memory_space<vmem>>, %arg8: memref<6x1x96xf32, #tpu.memory_space<vmem>>, %arg9: memref<6x32x32xbf16, #tpu.memory_space<vmem>>, %arg10: memref<6x1x32xf32, #tpu.memory_space<vmem>>, %arg11: memref<6x2x32xf32, #tpu.memory_space<vmem>>, %arg12: memref<6x32x64xbf16, #tpu.memory_space<vmem>>, %arg13: memref<6x1x64xf32, #tpu.memory_space<vmem>>, %arg14: memref<6x64x32xbf16, #tpu.memory_space<vmem>>, %arg15: memref<6x1x32xf32, #tpu.memory_space<vmem>>, %arg16: memref<6x2x32xf32, #tpu.memory_space<vmem>>, %arg17: memref<32x128xbf16, #tpu.memory_space<vmem>>, %arg18: memref<1x128xf32, #tpu.memory_space<vmem>>, %arg19: memref<2x128xf32, #tpu.memory_space<vmem>>, %arg20: memref<2x18x32xf32, #tpu.memory_space<vmem>>, %arg21: memref<2x8x32xf32, #tpu.memory_space<vmem>>) attributes {dimension_semantics = [#tpu.dimension_semantics<parallel>], iteration_bounds = array<i64: 1>, scalar_prefetch = 0 : i64, scratch_operands = 2 : i64, tpu.core_type = #tpu.core_type<tc>, window_params = [{transform_indices = @transform_0, window_bounds = array<i64: 2, 18, 80>}, {pipeline_mode = #tpu.pipeline_mode<synchronous>, transform_indices = @transform_1, window_bounds = array<i64: 3, 80, 32>}, {pipeline_mode = #tpu.pipeline_mode<synchronous>, transform_indices = @transform_2, window_bounds = array<i64: 1, 32>}, {pipeline_mode = #tpu.pipeline_mode<synchronous>, transform_indices = @transform_3, window_bounds = array<i64: 3, 32, 32>}, {pipeline_mode = #tpu.pipeline_mode<synchronous>, transform_indices = @transform_4, window_bounds = array<i64: 1, 32>}, {pipeline_mode = #tpu.pipeline_mode<synchronous>, transform_indices = @transform_5, window_bounds = array<i64: 16, 32>}, {pipeline_mode = #tpu.pipeline_mode<synchronous>, transform_indices = @transform_6, window_bounds = array<i64: 6, 32, 96>}, {pipeline_mode = #tpu.pipeline_mode<synchronous>, transform_indices = @transform_7, window_bounds = array<i64: 6, 1, 96>}, {pipeline_mode = #tpu.pipeline_mode<synchronous>, transform_indices = @transform_8, window_bounds = array<i64: 6, 32, 32>}, {pipeline_mode = #tpu.pipeline_mode<synchronous>, transform_indices = @transform_9, window_bounds = array<i64: 6, 1, 32>}, {pipeline_mode = #tpu.pipeline_mode<synchronous>, transform_indices = @transform_10, window_bounds = array<i64: 6, 2, 32>}, {pipeline_mode = #tpu.pipeline_mode<synchronous>, transform_indices = @transform_11, window_bounds = array<i64: 6, 32, 64>}, {pipeline_mode = #tpu.pipeline_mode<synchronous>, transform_indices = @transform_12, window_bounds = array<i64: 6, 1, 64>}, {pipeline_mode = #tpu.pipeline_mode<synchronous>, transform_indices = @transform_13, window_bounds = array<i64: 6, 64, 32>}, {pipeline_mode = #tpu.pipeline_mode<synchronous>, transform_indices = @transform_14, window_bounds = array<i64: 6, 1, 32>}, {pipeline_mode = #tpu.pipeline_mode<synchronous>, transform_indices = @transform_15, window_bounds = array<i64: 6, 2, 32>}, {pipeline_mode = #tpu.pipeline_mode<synchronous>, transform_indices = @transform_16, window_bounds = array<i64: 32, 128>}, {pipeline_mode = #tpu.pipeline_mode<synchronous>, transform_indices = @transform_17, window_bounds = array<i64: 1, 128>}, {transform_indices = @transform_18, window_bounds = array<i64: 2, 128>}]} {
    %c0 = arith.constant 0 : index
    %c0_0 = arith.constant 0 : index
    %c0_1 = arith.constant 0 : index
    %0 = vector.load %arg1[%c0, %c0_0, %c0_1] : memref<2x18x80xbf16, #tpu.memory_space<vmem>>, vector<2x18x80xbf16>
    %cst = arith.constant 0.000000e+00 : f32
    %1 = vector.broadcast %cst : f32 to vector<32x32xf32>
    %2 = vector.extract_strided_slice %0 {offsets = [0, 0, 0], sizes = [2, 16, 80], strides = [1, 1, 1]} : vector<2x18x80xbf16> to vector<2x16x80xbf16>
    %3 = vector.shape_cast %2 : vector<2x16x80xbf16> to vector<32x80xbf16>
    %c0_2 = arith.constant 0 : index
    %c0_3 = arith.constant 0 : index
    %c0_4 = arith.constant 0 : index
    %4 = vector.load %arg2[%c0_2, %c0_3, %c0_4] : memref<3x80x32xbf16, #tpu.memory_space<vmem>>, vector<1x80x32xbf16>
    %5 = vector.shape_cast %4 : vector<1x80x32xbf16> to vector<80x32xbf16>
    %cst_5 = arith.constant dense<0.000000e+00> : vector<32x32xf32>
    %6 = tpu.matmul %3, %5, %cst_5 {dimension_numbers = #tpu.dot_dimension_numbers<[1], [0], [0], [1], [0, 0, 1, 1], [], []>} : vector<32x80xbf16>, vector<80x32xbf16>, vector<32x32xf32> -> vector<32x32xf32>
    %7 = arith.addf %1, %6 : vector<32x32xf32>
    %8 = vector.extract_strided_slice %0 {offsets = [0, 1, 0], sizes = [2, 16, 80], strides = [1, 1, 1]} : vector<2x18x80xbf16> to vector<2x16x80xbf16>
    %9 = vector.shape_cast %8 : vector<2x16x80xbf16> to vector<32x80xbf16>
    %c1 = arith.constant 1 : index
    %c0_6 = arith.constant 0 : index
    %c0_7 = arith.constant 0 : index
    %10 = vector.load %arg2[%c1, %c0_6, %c0_7] : memref<3x80x32xbf16, #tpu.memory_space<vmem>>, vector<1x80x32xbf16>
    %11 = vector.shape_cast %10 : vector<1x80x32xbf16> to vector<80x32xbf16>
    %cst_8 = arith.constant dense<0.000000e+00> : vector<32x32xf32>
    %12 = tpu.matmul %9, %11, %cst_8 {dimension_numbers = #tpu.dot_dimension_numbers<[1], [0], [0], [1], [0, 0, 1, 1], [], []>} : vector<32x80xbf16>, vector<80x32xbf16>, vector<32x32xf32> -> vector<32x32xf32>
    %13 = arith.addf %7, %12 : vector<32x32xf32>
    %14 = vector.extract_strided_slice %0 {offsets = [0, 2, 0], sizes = [2, 16, 80], strides = [1, 1, 1]} : vector<2x18x80xbf16> to vector<2x16x80xbf16>
    %15 = vector.shape_cast %14 : vector<2x16x80xbf16> to vector<32x80xbf16>
    %c2 = arith.constant 2 : index
    %c0_9 = arith.constant 0 : index
    %c0_10 = arith.constant 0 : index
    %16 = vector.load %arg2[%c2, %c0_9, %c0_10] : memref<3x80x32xbf16, #tpu.memory_space<vmem>>, vector<1x80x32xbf16>
    %17 = vector.shape_cast %16 : vector<1x80x32xbf16> to vector<80x32xbf16>
    %cst_11 = arith.constant dense<0.000000e+00> : vector<32x32xf32>
    %18 = tpu.matmul %15, %17, %cst_11 {dimension_numbers = #tpu.dot_dimension_numbers<[1], [0], [0], [1], [0, 0, 1, 1], [], []>} : vector<32x80xbf16>, vector<80x32xbf16>, vector<32x32xf32> -> vector<32x32xf32>
    %19 = arith.addf %13, %18 : vector<32x32xf32>
    %c0_12 = arith.constant 0 : index
    %c0_13 = arith.constant 0 : index
    %20 = vector.load %arg3[%c0_12, %c0_13] : memref<1x32xf32, #tpu.memory_space<vmem>>, vector<1x32xf32>
    %21 = vector.broadcast %20 : vector<1x32xf32> to vector<32x32xf32>
    %22 = arith.addf %19, %21 : vector<32x32xf32>
    %cst_14 = arith.constant 5.000000e-01 : f32
    %23 = vector.broadcast %cst_14 : f32 to vector<32x32xf32>
    %24 = arith.mulf %23, %22 : vector<32x32xf32>
    %cst_15 = arith.constant 0.707106769 : f32
    %25 = vector.broadcast %cst_15 : f32 to vector<32x32xf32>
    %26 = arith.mulf %22, %25 : vector<32x32xf32>
    %27 = math.erf %26 : vector<32x32xf32>
    %cst_16 = arith.constant 1.000000e+00 : f32
    %28 = vector.broadcast %cst_16 : f32 to vector<32x32xf32>
    %29 = arith.addf %28, %27 : vector<32x32xf32>
    %30 = arith.mulf %24, %29 : vector<32x32xf32>
    %cst_17 = arith.constant 0.000000e+00 : f32
    %31 = vector.broadcast %cst_17 : f32 to vector<2x1x32xf32>
    %c0_18 = arith.constant 0 : index
    %c0_19 = arith.constant 0 : index
    %c0_20 = arith.constant 0 : index
    %32 = vector.load %arg20[%c0_18, %c0_19, %c0_20] : memref<2x18x32xf32, #tpu.memory_space<vmem>>, vector<2x1x32xf32>
    tpu.vector_store %arg20[%c0_18, %c0_19, %c0_20], %31 {strides = array<i32>} : memref<2x18x32xf32, #tpu.memory_space<vmem>>, vector<2x1x32xf32>,
    %cst_21 = arith.constant 0.000000e+00 : f32
    %33 = vector.broadcast %cst_21 : f32 to vector<2x1x32xf32>
    %c0_22 = arith.constant 0 : index
    %c17 = arith.constant 17 : index
    %c0_23 = arith.constant 0 : index
    %34 = vector.load %arg20[%c0_22, %c17, %c0_23] : memref<2x18x32xf32, #tpu.memory_space<vmem>>, vector<2x1x32xf32>
    tpu.vector_store %arg20[%c0_22, %c17, %c0_23], %33 {strides = array<i32>} : memref<2x18x32xf32, #tpu.memory_space<vmem>>, vector<2x1x32xf32>,
    %35 = vector.shape_cast %30 : vector<32x32xf32> to vector<2x16x32xf32>
    %c0_24 = arith.constant 0 : index
    %c1_25 = arith.constant 1 : index
    %c0_26 = arith.constant 0 : index
    %36 = vector.load %arg20[%c0_24, %c1_25, %c0_26] : memref<2x18x32xf32, #tpu.memory_space<vmem>>, vector<2x16x32xf32>
    tpu.vector_store %arg20[%c0_24, %c1_25, %c0_26], %35 {strides = array<i32>} : memref<2x18x32xf32, #tpu.memory_space<vmem>>, vector<2x16x32xf32>,
    %cst_27 = arith.constant 0.000000e+00 : f32
    %37 = vector.broadcast %cst_27 : f32 to vector<16x32xf32>
    %c0_28 = arith.constant 0 : index
    %c0_29 = arith.constant 0 : index
    %c0_30 = arith.constant 0 : index
    %38 = tpu.strided_load %arg20[%c0_28, %c0_29, %c0_30] {strides = array<i32: 1, 2, 1>} : memref<2x18x32xf32, #tpu.memory_space<vmem>>, vector<2x8x32xf32>
    %39 = vector.shape_cast %38 : vector<2x8x32xf32> to vector<16x32xf32>
    %40 = arith.truncf %39 : vector<16x32xf32> to vector<16x32xbf16>
    %c0_31 = arith.constant 0 : index
    %c0_32 = arith.constant 0 : index
    %c0_33 = arith.constant 0 : index
    %41 = vector.load %arg4[%c0_31, %c0_32, %c0_33] : memref<3x32x32xbf16, #tpu.memory_space<vmem>>, vector<1x32x32xbf16>
    %42 = vector.shape_cast %41 : vector<1x32x32xbf16> to vector<32x32xbf16>
    %cst_34 = arith.constant dense<0.000000e+00> : vector<16x32xf32>
    %43 = tpu.matmul %40, %42, %cst_34 {dimension_numbers = #tpu.dot_dimension_numbers<[1], [0], [0], [1], [0, 0, 1, 1], [], []>} : vector<16x32xbf16>, vector<32x32xbf16>, vector<16x32xf32> -> vector<16x32xf32>
    %44 = arith.addf %37, %43 : vector<16x32xf32>
    %c0_35 = arith.constant 0 : index
    %c1_36 = arith.constant 1 : index
    %c0_37 = arith.constant 0 : index
    %45 = tpu.strided_load %arg20[%c0_35, %c1_36, %c0_37] {strides = array<i32: 1, 2, 1>} : memref<2x18x32xf32, #tpu.memory_space<vmem>>, vector<2x8x32xf32>
    %46 = vector.shape_cast %45 : vector<2x8x32xf32> to vector<16x32xf32>
    %47 = arith.truncf %46 : vector<16x32xf32> to vector<16x32xbf16>
    %c1_38 = arith.constant 1 : index
    %c0_39 = arith.constant 0 : index
    %c0_40 = arith.constant 0 : index
    %48 = vector.load %arg4[%c1_38, %c0_39, %c0_40] : memref<3x32x32xbf16, #tpu.memory_space<vmem>>, vector<1x32x32xbf16>
    %49 = vector.shape_cast %48 : vector<1x32x32xbf16> to vector<32x32xbf16>
    %cst_41 = arith.constant dense<0.000000e+00> : vector<16x32xf32>
    %50 = tpu.matmul %47, %49, %cst_41 {dimension_numbers = #tpu.dot_dimension_numbers<[1], [0], [0], [1], [0, 0, 1, 1], [], []>} : vector<16x32xbf16>, vector<32x32xbf16>, vector<16x32xf32> -> vector<16x32xf32>
    %51 = arith.addf %44, %50 : vector<16x32xf32>
    %c0_42 = arith.constant 0 : index
    %c2_43 = arith.constant 2 : index
    %c0_44 = arith.constant 0 : index
    %52 = tpu.strided_load %arg20[%c0_42, %c2_43, %c0_44] {strides = array<i32: 1, 2, 1>} : memref<2x18x32xf32, #tpu.memory_space<vmem>>, vector<2x8x32xf32>
    %53 = vector.shape_cast %52 : vector<2x8x32xf32> to vector<16x32xf32>
    %54 = arith.truncf %53 : vector<16x32xf32> to vector<16x32xbf16>
    %c2_45 = arith.constant 2 : index
    %c0_46 = arith.constant 0 : index
    %c0_47 = arith.constant 0 : index
    %55 = vector.load %arg4[%c2_45, %c0_46, %c0_47] : memref<3x32x32xbf16, #tpu.memory_space<vmem>>, vector<1x32x32xbf16>
    %56 = vector.shape_cast %55 : vector<1x32x32xbf16> to vector<32x32xbf16>
    %cst_48 = arith.constant dense<0.000000e+00> : vector<16x32xf32>
    %57 = tpu.matmul %54, %56, %cst_48 {dimension_numbers = #tpu.dot_dimension_numbers<[1], [0], [0], [1], [0, 0, 1, 1], [], []>} : vector<16x32xbf16>, vector<32x32xbf16>, vector<16x32xf32> -> vector<16x32xf32>
    %58 = arith.addf %51, %57 : vector<16x32xf32>
    %c0_49 = arith.constant 0 : index
    %c0_50 = arith.constant 0 : index
    %59 = vector.load %arg5[%c0_49, %c0_50] : memref<1x32xf32, #tpu.memory_space<vmem>>, vector<1x32xf32>
    %60 = vector.broadcast %59 : vector<1x32xf32> to vector<16x32xf32>
    %61 = arith.addf %58, %60 : vector<16x32xf32>
    %cst_51 = arith.constant 5.000000e-01 : f32
    %62 = vector.broadcast %cst_51 : f32 to vector<16x32xf32>
    %63 = arith.mulf %62, %61 : vector<16x32xf32>
    %cst_52 = arith.constant 0.707106769 : f32
    %64 = vector.broadcast %cst_52 : f32 to vector<16x32xf32>
    %65 = arith.mulf %61, %64 : vector<16x32xf32>
    %66 = math.erf %65 : vector<16x32xf32>
    %cst_53 = arith.constant 1.000000e+00 : f32
    %67 = vector.broadcast %cst_53 : f32 to vector<16x32xf32>
    %68 = arith.addf %67, %66 : vector<16x32xf32>
    %69 = arith.mulf %63, %68 : vector<16x32xf32>
    %c0_54 = arith.constant 0 : index
    %c0_55 = arith.constant 0 : index
    %70 = vector.load %arg6[%c0_54, %c0_55] : memref<16x32xf32, #tpu.memory_space<vmem>>, vector<16x32xf32>
    %71 = arith.addf %69, %70 : vector<16x32xf32>
    %72 = arith.truncf %71 : vector<16x32xf32> to vector<16x32xbf16>
    %c0_56 = arith.constant 0 : index
    %c0_57 = arith.constant 0 : index
    %c0_58 = arith.constant 0 : index
    %73 = vector.load %arg7[%c0_56, %c0_57, %c0_58] : memref<6x32x96xbf16, #tpu.memory_space<vmem>>, vector<1x32x96xbf16>
    %74 = vector.shape_cast %73 : vector<1x32x96xbf16> to vector<32x96xbf16>
    %cst_59 = arith.constant dense<0.000000e+00> : vector<16x96xf32>
    %75 = tpu.matmul %72, %74, %cst_59 {dimension_numbers = #tpu.dot_dimension_numbers<[1], [0], [0], [1], [0, 0, 1, 1], [], []>} : vector<16x32xbf16>, vector<32x96xbf16>, vector<16x96xf32> -> vector<16x96xf32>
    %c0_60 = arith.constant 0 : index
    %c0_61 = arith.constant 0 : index
    %c0_62 = arith.constant 0 : index
    %76 = vector.load %arg8[%c0_60, %c0_61, %c0_62] : memref<6x1x96xf32, #tpu.memory_space<vmem>>, vector<1x1x96xf32>
    %77 = vector.shape_cast %76 : vector<1x1x96xf32> to vector<1x96xf32>
    %78 = vector.broadcast %77 : vector<1x96xf32> to vector<16x96xf32>
    %79 = arith.addf %75, %78 : vector<16x96xf32>
    %80 = vector.shape_cast %79 : vector<16x96xf32> to vector<2x8x96xf32>
    %81 = vector.extract_strided_slice %80 {offsets = [0, 0, 0], sizes = [2, 8, 8], strides = [1, 1, 1]} : vector<2x8x96xf32> to vector<2x8x8xf32>
    %82 = arith.truncf %81 : vector<2x8x8xf32> to vector<2x8x8xbf16>
    %83 = vector.extract_strided_slice %80 {offsets = [0, 0, 32], sizes = [2, 8, 8], strides = [1, 1, 1]} : vector<2x8x96xf32> to vector<2x8x8xf32>
    %84 = arith.truncf %83 : vector<2x8x8xf32> to vector<2x8x8xbf16>
    %85 = vector.extract_strided_slice %80 {offsets = [0, 0, 64], sizes = [2, 8, 8], strides = [1, 1, 1]} : vector<2x8x96xf32> to vector<2x8x8xf32>
    %86 = arith.truncf %85 : vector<2x8x8xf32> to vector<2x8x8xbf16>
    "tpu.trace_start"() <{level = 10 : i32, message = "bqd,bkd->bqk"}> : () -> ()
    %cst_63 = arith.constant dense<0.000000e+00> : vector<2x8x8xf32>
    %87 = tpu.matmul %82, %84, %cst_63 {dimension_numbers = #tpu.dot_dimension_numbers<[2], [2], [1], [1], [0, 0, 0, 1, 1, 1], [0], [0]>} : vector<2x8x8xbf16>, vector<2x8x8xbf16>, vector<2x8x8xf32> -> vector<2x8x8xf32>
    "tpu.trace_stop"() : () -> ()
    %cst_64 = arith.constant dense<0xFF800000> : vector<2x8xf32>
    %88 = vector.multi_reduction <maximumf>, %87, %cst_64 [2] : vector<2x8x8xf32> to vector<2x8xf32>
    %89 = vector.shape_cast %88 : vector<2x8xf32> to vector<2x8x1xf32>
    %90 = vector.broadcast %89 : vector<2x8x1xf32> to vector<2x8x8xf32>
    %91 = arith.subf %87, %90 : vector<2x8x8xf32>
    %92 = math.exp %91 : vector<2x8x8xf32>
    %cst_65 = arith.constant dense<0.000000e+00> : vector<2x8xf32>
    %93 = vector.multi_reduction <add>, %92, %cst_65 [2] : vector<2x8x8xf32> to vector<2x8xf32>
    %94 = vector.shape_cast %93 : vector<2x8xf32> to vector<2x8x1xf32>
    %95 = tpu.reciprocal %94 {approx = true} : vector<2x8x1xf32> -> vector<2x8x1xf32>
    %96 = vector.broadcast %95 : vector<2x8x1xf32> to vector<2x8x8xf32>
    %97 = arith.mulf %92, %96 : vector<2x8x8xf32>
    %98 = arith.truncf %97 : vector<2x8x8xf32> to vector<2x8x8xbf16>
    "tpu.trace_start"() <{level = 10 : i32, message = "bqk,bkd->bqd"}> : () -> ()
    %cst_66 = arith.constant dense<0.000000e+00> : vector<2x8x8xf32>
    %99 = tpu.matmul %98, %86, %cst_66 {dimension_numbers = #tpu.dot_dimension_numbers<[2], [1], [1], [2], [0, 0, 0, 1, 1, 2], [0], [0]>} : vector<2x8x8xbf16>, vector<2x8x8xbf16>, vector<2x8x8xf32> -> vector<2x8x8xf32>
    "tpu.trace_stop"() : () -> ()
    %c0_67 = arith.constant 0 : index
    %c0_68 = arith.constant 0 : index
    %c0_69 = arith.constant 0 : index
    %100 = vector.load %arg21[%c0_67, %c0_68, %c0_69] : memref<2x8x32xf32, #tpu.memory_space<vmem>>, vector<2x8x8xf32>
    tpu.vector_store %arg21[%c0_67, %c0_68, %c0_69], %99 {strides = array<i32>} : memref<2x8x32xf32, #tpu.memory_space<vmem>>, vector<2x8x8xf32>,
    %101 = vector.extract_strided_slice %80 {offsets = [0, 0, 8], sizes = [2, 8, 8], strides = [1, 1, 1]} : vector<2x8x96xf32> to vector<2x8x8xf32>
    %102 = arith.truncf %101 : vector<2x8x8xf32> to vector<2x8x8xbf16>
    %103 = vector.extract_strided_slice %80 {offsets = [0, 0, 40], sizes = [2, 8, 8], strides = [1, 1, 1]} : vector<2x8x96xf32> to vector<2x8x8xf32>
    %104 = arith.truncf %103 : vector<2x8x8xf32> to vector<2x8x8xbf16>
    %105 = vector.extract_strided_slice %80 {offsets = [0, 0, 72], sizes = [2, 8, 8], strides = [1, 1, 1]} : vector<2x8x96xf32> to vector<2x8x8xf32>
    %106 = arith.truncf %105 : vector<2x8x8xf32> to vector<2x8x8xbf16>
    "tpu.trace_start"() <{level = 10 : i32, message = "bqd,bkd->bqk"}> : () -> ()
    %cst_70 = arith.constant dense<0.000000e+00> : vector<2x8x8xf32>
    %107 = tpu.matmul %102, %104, %cst_70 {dimension_numbers = #tpu.dot_dimension_numbers<[2], [2], [1], [1], [0, 0, 0, 1, 1, 1], [0], [0]>} : vector<2x8x8xbf16>, vector<2x8x8xbf16>, vector<2x8x8xf32> -> vector<2x8x8xf32>
    "tpu.trace_stop"() : () -> ()
    %cst_71 = arith.constant dense<0xFF800000> : vector<2x8xf32>
    %108 = vector.multi_reduction <maximumf>, %107, %cst_71 [2] : vector<2x8x8xf32> to vector<2x8xf32>
    %109 = vector.shape_cast %108 : vector<2x8xf32> to vector<2x8x1xf32>
    %110 = vector.broadcast %109 : vector<2x8x1xf32> to vector<2x8x8xf32>
    %111 = arith.subf %107, %110 : vector<2x8x8xf32>
    %112 = math.exp %111 : vector<2x8x8xf32>
    %cst_72 = arith.constant dense<0.000000e+00> : vector<2x8xf32>
    %113 = vector.multi_reduction <add>, %112, %cst_72 [2] : vector<2x8x8xf32> to vector<2x8xf32>
    %114 = vector.shape_cast %113 : vector<2x8xf32> to vector<2x8x1xf32>
    %115 = tpu.reciprocal %114 {approx = true} : vector<2x8x1xf32> -> vector<2x8x1xf32>
    %116 = vector.broadcast %115 : vector<2x8x1xf32> to vector<2x8x8xf32>
    %117 = arith.mulf %112, %116 : vector<2x8x8xf32>
    %118 = arith.truncf %117 : vector<2x8x8xf32> to vector<2x8x8xbf16>
    "tpu.trace_start"() <{level = 10 : i32, message = "bqk,bkd->bqd"}> : () -> ()
    %cst_73 = arith.constant dense<0.000000e+00> : vector<2x8x8xf32>
    %119 = tpu.matmul %118, %106, %cst_73 {dimension_numbers = #tpu.dot_dimension_numbers<[2], [1], [1], [2], [0, 0, 0, 1, 1, 2], [0], [0]>} : vector<2x8x8xbf16>, vector<2x8x8xbf16>, vector<2x8x8xf32> -> vector<2x8x8xf32>
    "tpu.trace_stop"() : () -> ()
    %c0_74 = arith.constant 0 : index
    %c0_75 = arith.constant 0 : index
    %c8 = arith.constant 8 : index
    %120 = vector.load %arg21[%c0_74, %c0_75, %c8] : memref<2x8x32xf32, #tpu.memory_space<vmem>>, vector<2x8x8xf32>
    tpu.vector_store %arg21[%c0_74, %c0_75, %c8], %119 {strides = array<i32>} : memref<2x8x32xf32, #tpu.memory_space<vmem>>, vector<2x8x8xf32>,
    %121 = vector.extract_strided_slice %80 {offsets = [0, 0, 16], sizes = [2, 8, 8], strides = [1, 1, 1]} : vector<2x8x96xf32> to vector<2x8x8xf32>
    %122 = arith.truncf %121 : vector<2x8x8xf32> to vector<2x8x8xbf16>
    %123 = vector.extract_strided_slice %80 {offsets = [0, 0, 48], sizes = [2, 8, 8], strides = [1, 1, 1]} : vector<2x8x96xf32> to vector<2x8x8xf32>
    %124 = arith.truncf %123 : vector<2x8x8xf32> to vector<2x8x8xbf16>
    %125 = vector.extract_strided_slice %80 {offsets = [0, 0, 80], sizes = [2, 8, 8], strides = [1, 1, 1]} : vector<2x8x96xf32> to vector<2x8x8xf32>
    %126 = arith.truncf %125 : vector<2x8x8xf32> to vector<2x8x8xbf16>
    "tpu.trace_start"() <{level = 10 : i32, message = "bqd,bkd->bqk"}> : () -> ()
    %cst_76 = arith.constant dense<0.000000e+00> : vector<2x8x8xf32>
    %127 = tpu.matmul %122, %124, %cst_76 {dimension_numbers = #tpu.dot_dimension_numbers<[2], [2], [1], [1], [0, 0, 0, 1, 1, 1], [0], [0]>} : vector<2x8x8xbf16>, vector<2x8x8xbf16>, vector<2x8x8xf32> -> vector<2x8x8xf32>
    "tpu.trace_stop"() : () -> ()
    %cst_77 = arith.constant dense<0xFF800000> : vector<2x8xf32>
    %128 = vector.multi_reduction <maximumf>, %127, %cst_77 [2] : vector<2x8x8xf32> to vector<2x8xf32>
    %129 = vector.shape_cast %128 : vector<2x8xf32> to vector<2x8x1xf32>
    %130 = vector.broadcast %129 : vector<2x8x1xf32> to vector<2x8x8xf32>
    %131 = arith.subf %127, %130 : vector<2x8x8xf32>
    %132 = math.exp %131 : vector<2x8x8xf32>
    %cst_78 = arith.constant dense<0.000000e+00> : vector<2x8xf32>
    %133 = vector.multi_reduction <add>, %132, %cst_78 [2] : vector<2x8x8xf32> to vector<2x8xf32>
    %134 = vector.shape_cast %133 : vector<2x8xf32> to vector<2x8x1xf32>
    %135 = tpu.reciprocal %134 {approx = true} : vector<2x8x1xf32> -> vector<2x8x1xf32>
    %136 = vector.broadcast %135 : vector<2x8x1xf32> to vector<2x8x8xf32>
    %137 = arith.mulf %132, %136 : vector<2x8x8xf32>
    %138 = arith.truncf %137 : vector<2x8x8xf32> to vector<2x8x8xbf16>
    "tpu.trace_start"() <{level = 10 : i32, message = "bqk,bkd->bqd"}> : () -> ()
    %cst_79 = arith.constant dense<0.000000e+00> : vector<2x8x8xf32>
    %139 = tpu.matmul %138, %126, %cst_79 {dimension_numbers = #tpu.dot_dimension_numbers<[2], [1], [1], [2], [0, 0, 0, 1, 1, 2], [0], [0]>} : vector<2x8x8xbf16>, vector<2x8x8xbf16>, vector<2x8x8xf32> -> vector<2x8x8xf32>
    "tpu.trace_stop"() : () -> ()
    %c0_80 = arith.constant 0 : index
    %c0_81 = arith.constant 0 : index
    %c16 = arith.constant 16 : index
    %140 = vector.load %arg21[%c0_80, %c0_81, %c16] : memref<2x8x32xf32, #tpu.memory_space<vmem>>, vector<2x8x8xf32>
    tpu.vector_store %arg21[%c0_80, %c0_81, %c16], %139 {strides = array<i32>} : memref<2x8x32xf32, #tpu.memory_space<vmem>>, vector<2x8x8xf32>,
    %141 = vector.extract_strided_slice %80 {offsets = [0, 0, 24], sizes = [2, 8, 8], strides = [1, 1, 1]} : vector<2x8x96xf32> to vector<2x8x8xf32>
    %142 = arith.truncf %141 : vector<2x8x8xf32> to vector<2x8x8xbf16>
    %143 = vector.extract_strided_slice %80 {offsets = [0, 0, 56], sizes = [2, 8, 8], strides = [1, 1, 1]} : vector<2x8x96xf32> to vector<2x8x8xf32>
    %144 = arith.truncf %143 : vector<2x8x8xf32> to vector<2x8x8xbf16>
    %145 = vector.extract_strided_slice %80 {offsets = [0, 0, 88], sizes = [2, 8, 8], strides = [1, 1, 1]} : vector<2x8x96xf32> to vector<2x8x8xf32>
    %146 = arith.truncf %145 : vector<2x8x8xf32> to vector<2x8x8xbf16>
    "tpu.trace_start"() <{level = 10 : i32, message = "bqd,bkd->bqk"}> : () -> ()
    %cst_82 = arith.constant dense<0.000000e+00> : vector<2x8x8xf32>
    %147 = tpu.matmul %142, %144, %cst_82 {dimension_numbers = #tpu.dot_dimension_numbers<[2], [2], [1], [1], [0, 0, 0, 1, 1, 1], [0], [0]>} : vector<2x8x8xbf16>, vector<2x8x8xbf16>, vector<2x8x8xf32> -> vector<2x8x8xf32>
    "tpu.trace_stop"() : () -> ()
    %cst_83 = arith.constant dense<0xFF800000> : vector<2x8xf32>
    %148 = vector.multi_reduction <maximumf>, %147, %cst_83 [2] : vector<2x8x8xf32> to vector<2x8xf32>
    %149 = vector.shape_cast %148 : vector<2x8xf32> to vector<2x8x1xf32>
    %150 = vector.broadcast %149 : vector<2x8x1xf32> to vector<2x8x8xf32>
    %151 = arith.subf %147, %150 : vector<2x8x8xf32>
    %152 = math.exp %151 : vector<2x8x8xf32>
    %cst_84 = arith.constant dense<0.000000e+00> : vector<2x8xf32>
    %153 = vector.multi_reduction <add>, %152, %cst_84 [2] : vector<2x8x8xf32> to vector<2x8xf32>
    %154 = vector.shape_cast %153 : vector<2x8xf32> to vector<2x8x1xf32>
    %155 = tpu.reciprocal %154 {approx = true} : vector<2x8x1xf32> -> vector<2x8x1xf32>
    %156 = vector.broadcast %155 : vector<2x8x1xf32> to vector<2x8x8xf32>
    %157 = arith.mulf %152, %156 : vector<2x8x8xf32>
    %158 = arith.truncf %157 : vector<2x8x8xf32> to vector<2x8x8xbf16>
    "tpu.trace_start"() <{level = 10 : i32, message = "bqk,bkd->bqd"}> : () -> ()
    %cst_85 = arith.constant dense<0.000000e+00> : vector<2x8x8xf32>
    %159 = tpu.matmul %158, %146, %cst_85 {dimension_numbers = #tpu.dot_dimension_numbers<[2], [1], [1], [2], [0, 0, 0, 1, 1, 2], [0], [0]>} : vector<2x8x8xbf16>, vector<2x8x8xbf16>, vector<2x8x8xf32> -> vector<2x8x8xf32>
    "tpu.trace_stop"() : () -> ()
    %c0_86 = arith.constant 0 : index
    %c0_87 = arith.constant 0 : index
    %c24 = arith.constant 24 : index
    %160 = vector.load %arg21[%c0_86, %c0_87, %c24] : memref<2x8x32xf32, #tpu.memory_space<vmem>>, vector<2x8x8xf32>
    tpu.vector_store %arg21[%c0_86, %c0_87, %c24], %159 {strides = array<i32>} : memref<2x8x32xf32, #tpu.memory_space<vmem>>, vector<2x8x8xf32>,
    %c0_88 = arith.constant 0 : index
    %c0_89 = arith.constant 0 : index
    %c0_90 = arith.constant 0 : index
    %161 = vector.load %arg21[%c0_88, %c0_89, %c0_90] : memref<2x8x32xf32, #tpu.memory_space<vmem>>, vector<2x8x32xf32>
    %162 = vector.shape_cast %161 : vector<2x8x32xf32> to vector<16x32xf32>
    %163 = arith.truncf %162 : vector<16x32xf32> to vector<16x32xbf16>
    %c0_91 = arith.constant 0 : index
    %c0_92 = arith.constant 0 : index
    %c0_93 = arith.constant 0 : index
    %164 = vector.load %arg9[%c0_91, %c0_92, %c0_93] : memref<6x32x32xbf16, #tpu.memory_space<vmem>>, vector<1x32x32xbf16>
    %165 = vector.shape_cast %164 : vector<1x32x32xbf16> to vector<32x32xbf16>
    %cst_94 = arith.constant dense<0.000000e+00> : vector<16x32xf32>
    %166 = tpu.matmul %163, %165, %cst_94 {dimension_numbers = #tpu.dot_dimension_numbers<[1], [0], [0], [1], [0, 0, 1, 1], [], []>} : vector<16x32xbf16>, vector<32x32xbf16>, vector<16x32xf32> -> vector<16x32xf32>
    %c0_95 = arith.constant 0 : index
    %c0_96 = arith.constant 0 : index
    %c0_97 = arith.constant 0 : index
    %167 = vector.load %arg10[%c0_95, %c0_96, %c0_97] : memref<6x1x32xf32, #tpu.memory_space<vmem>>, vector<1x1x32xf32>
    %168 = vector.shape_cast %167 : vector<1x1x32xf32> to vector<1x32xf32>
    %169 = vector.broadcast %168 : vector<1x32xf32> to vector<16x32xf32>
    %170 = arith.addf %166, %169 : vector<16x32xf32>
    %c0_98 = arith.constant 0 : index
    %c0_99 = arith.constant 0 : index
    %c0_100 = arith.constant 0 : index
    %171 = vector.load %arg11[%c0_98, %c0_99, %c0_100] : memref<6x2x32xf32, #tpu.memory_space<vmem>>, vector<1x2x32xf32>
    %172 = vector.shape_cast %171 : vector<1x2x32xf32> to vector<2x32xf32>
    %173 = arith.addf %71, %170 : vector<16x32xf32>
    %174 = vector.extract_strided_slice %172 {offsets = [0, 0], sizes = [1, 32], strides = [1, 1]} : vector<2x32xf32> to vector<1x32xf32>
    %175 = vector.extract_strided_slice %172 {offsets = [1, 0], sizes = [1, 32], strides = [1, 1]} : vector<2x32xf32> to vector<1x32xf32>
    %cst_101 = arith.constant dense<0.000000e+00> : vector<16xf32>
    %176 = vector.multi_reduction <add>, %173, %cst_101 [1] : vector<16x32xf32> to vector<16xf32>
    %177 = vector.shape_cast %176 : vector<16xf32> to vector<16x1xf32>
    %cst_102 = arith.constant 3.200000e+01 : f32
    %178 = vector.broadcast %cst_102 : f32 to vector<16x1xf32>
    %179 = arith.divf %177, %178 : vector<16x1xf32>
    %180 = vector.broadcast %179 : vector<16x1xf32> to vector<16x32xf32>
    %181 = arith.subf %173, %180 : vector<16x32xf32>
    %182 = arith.mulf %181, %181 : vector<16x32xf32>
    %cst_103 = arith.constant dense<0.000000e+00> : vector<16xf32>
    %183 = vector.multi_reduction <add>, %182, %cst_103 [1] : vector<16x32xf32> to vector<16xf32>
    %184 = vector.shape_cast %183 : vector<16xf32> to vector<16x1xf32>
    %cst_104 = arith.constant 3.200000e+01 : f32
    %185 = vector.broadcast %cst_104 : f32 to vector<16x1xf32>
    %186 = arith.divf %184, %185 : vector<16x1xf32>
    %cst_105 = arith.constant 9.99999974E-6 : f32
    %187 = vector.broadcast %cst_105 : f32 to vector<16x1xf32>
    %188 = arith.addf %186, %187 : vector<16x1xf32>
    %189 = math.rsqrt %188 : vector<16x1xf32>
    %190 = vector.broadcast %189 : vector<16x1xf32> to vector<16x32xf32>
    %191 = arith.mulf %181, %190 : vector<16x32xf32>
    %192 = vector.broadcast %174 : vector<1x32xf32> to vector<16x32xf32>
    %193 = arith.mulf %191, %192 : vector<16x32xf32>
    %194 = vector.broadcast %175 : vector<1x32xf32> to vector<16x32xf32>
    %195 = arith.addf %193, %194 : vector<16x32xf32>
    %196 = arith.truncf %195 : vector<16x32xf32> to vector<16x32xbf16>
    %c0_106 = arith.constant 0 : index
    %c0_107 = arith.constant 0 : index
    %c0_108 = arith.constant 0 : index
    %197 = vector.load %arg12[%c0_106, %c0_107, %c0_108] : memref<6x32x64xbf16, #tpu.memory_space<vmem>>, vector<1x32x64xbf16>
    %198 = vector.shape_cast %197 : vector<1x32x64xbf16> to vector<32x64xbf16>
    %cst_109 = arith.constant dense<0.000000e+00> : vector<16x64xf32>
    %199 = tpu.matmul %196, %198, %cst_109 {dimension_numbers = #tpu.dot_dimension_numbers<[1], [0], [0], [1], [0, 0, 1, 1], [], []>} : vector<16x32xbf16>, vector<32x64xbf16>, vector<16x64xf32> -> vector<16x64xf32>
    %c0_110 = arith.constant 0 : index
    %c0_111 = arith.constant 0 : index
    %c0_112 = arith.constant 0 : index
    %200 = vector.load %arg13[%c0_110, %c0_111, %c0_112] : memref<6x1x64xf32, #tpu.memory_space<vmem>>, vector<1x1x64xf32>
    %201 = vector.shape_cast %200 : vector<1x1x64xf32> to vector<1x64xf32>
    %202 = vector.broadcast %201 : vector<1x64xf32> to vector<16x64xf32>
    %203 = arith.addf %199, %202 : vector<16x64xf32>
    %cst_113 = arith.constant 5.000000e-01 : f32
    %204 = vector.broadcast %cst_113 : f32 to vector<16x64xf32>
    %205 = arith.mulf %204, %203 : vector<16x64xf32>
    %cst_114 = arith.constant 0.707106769 : f32
    %206 = vector.broadcast %cst_114 : f32 to vector<16x64xf32>
    %207 = arith.mulf %203, %206 : vector<16x64xf32>
    %208 = math.erf %207 : vector<16x64xf32>
    %cst_115 = arith.constant 1.000000e+00 : f32
    %209 = vector.broadcast %cst_115 : f32 to vector<16x64xf32>
    %210 = arith.addf %209, %208 : vector<16x64xf32>
    %211 = arith.mulf %205, %210 : vector<16x64xf32>
    %212 = arith.truncf %211 : vector<16x64xf32> to vector<16x64xbf16>
    %c0_116 = arith.constant 0 : index
    %c0_117 = arith.constant 0 : index
    %c0_118 = arith.constant 0 : index
    %213 = vector.load %arg14[%c0_116, %c0_117, %c0_118] : memref<6x64x32xbf16, #tpu.memory_space<vmem>>, vector<1x64x32xbf16>
    %214 = vector.shape_cast %213 : vector<1x64x32xbf16> to vector<64x32xbf16>
    %cst_119 = arith.constant dense<0.000000e+00> : vector<16x32xf32>
    %215 = tpu.matmul %212, %214, %cst_119 {dimension_numbers = #tpu.dot_dimension_numbers<[1], [0], [0], [1], [0, 0, 1, 1], [], []>} : vector<16x64xbf16>, vector<64x32xbf16>, vector<16x32xf32> -> vector<16x32xf32>
    %c0_120 = arith.constant 0 : index
    %c0_121 = arith.constant 0 : index
    %c0_122 = arith.constant 0 : index
    %216 = vector.load %arg15[%c0_120, %c0_121, %c0_122] : memref<6x1x32xf32, #tpu.memory_space<vmem>>, vector<1x1x32xf32>
    %217 = vector.shape_cast %216 : vector<1x1x32xf32> to vector<1x32xf32>
    %218 = vector.broadcast %217 : vector<1x32xf32> to vector<16x32xf32>
    %219 = arith.addf %215, %218 : vector<16x32xf32>
    %c0_123 = arith.constant 0 : index
    %c0_124 = arith.constant 0 : index
    %c0_125 = arith.constant 0 : index
    %220 = vector.load %arg16[%c0_123, %c0_124, %c0_125] : memref<6x2x32xf32, #tpu.memory_space<vmem>>, vector<1x2x32xf32>
    %221 = vector.shape_cast %220 : vector<1x2x32xf32> to vector<2x32xf32>
    %222 = arith.addf %195, %219 : vector<16x32xf32>
    %223 = vector.extract_strided_slice %221 {offsets = [0, 0], sizes = [1, 32], strides = [1, 1]} : vector<2x32xf32> to vector<1x32xf32>
    %224 = vector.extract_strided_slice %221 {offsets = [1, 0], sizes = [1, 32], strides = [1, 1]} : vector<2x32xf32> to vector<1x32xf32>
    %cst_126 = arith.constant dense<0.000000e+00> : vector<16xf32>
    %225 = vector.multi_reduction <add>, %222, %cst_126 [1] : vector<16x32xf32> to vector<16xf32>
    %226 = vector.shape_cast %225 : vector<16xf32> to vector<16x1xf32>
    %cst_127 = arith.constant 3.200000e+01 : f32
    %227 = vector.broadcast %cst_127 : f32 to vector<16x1xf32>
    %228 = arith.divf %226, %227 : vector<16x1xf32>
    %229 = vector.broadcast %228 : vector<16x1xf32> to vector<16x32xf32>
    %230 = arith.subf %222, %229 : vector<16x32xf32>
    %231 = arith.mulf %230, %230 : vector<16x32xf32>
    %cst_128 = arith.constant dense<0.000000e+00> : vector<16xf32>
    %232 = vector.multi_reduction <add>, %231, %cst_128 [1] : vector<16x32xf32> to vector<16xf32>
    %233 = vector.shape_cast %232 : vector<16xf32> to vector<16x1xf32>
    %cst_129 = arith.constant 3.200000e+01 : f32
    %234 = vector.broadcast %cst_129 : f32 to vector<16x1xf32>
    %235 = arith.divf %233, %234 : vector<16x1xf32>
    %cst_130 = arith.constant 9.99999974E-6 : f32
    %236 = vector.broadcast %cst_130 : f32 to vector<16x1xf32>
    %237 = arith.addf %235, %236 : vector<16x1xf32>
    %238 = math.rsqrt %237 : vector<16x1xf32>
    %239 = vector.broadcast %238 : vector<16x1xf32> to vector<16x32xf32>
    %240 = arith.mulf %230, %239 : vector<16x32xf32>
    %241 = vector.broadcast %223 : vector<1x32xf32> to vector<16x32xf32>
    %242 = arith.mulf %240, %241 : vector<16x32xf32>
    %243 = vector.broadcast %224 : vector<1x32xf32> to vector<16x32xf32>
    %244 = arith.addf %242, %243 : vector<16x32xf32>
    %245 = arith.truncf %244 : vector<16x32xf32> to vector<16x32xbf16>
    %c1_131 = arith.constant 1 : index
    %c0_132 = arith.constant 0 : index
    %c0_133 = arith.constant 0 : index
    %246 = vector.load %arg7[%c1_131, %c0_132, %c0_133] : memref<6x32x96xbf16, #tpu.memory_space<vmem>>, vector<1x32x96xbf16>
    %247 = vector.shape_cast %246 : vector<1x32x96xbf16> to vector<32x96xbf16>
    %cst_134 = arith.constant dense<0.000000e+00> : vector<16x96xf32>
    %248 = tpu.matmul %245, %247, %cst_134 {dimension_numbers = #tpu.dot_dimension_numbers<[1], [0], [0], [1], [0, 0, 1, 1], [], []>} : vector<16x32xbf16>, vector<32x96xbf16>, vector<16x96xf32> -> vector<16x96xf32>
    %c1_135 = arith.constant 1 : index
    %c0_136 = arith.constant 0 : index
    %c0_137 = arith.constant 0 : index
    %249 = vector.load %arg8[%c1_135, %c0_136, %c0_137] : memref<6x1x96xf32, #tpu.memory_space<vmem>>, vector<1x1x96xf32>
    %250 = vector.shape_cast %249 : vector<1x1x96xf32> to vector<1x96xf32>
    %251 = vector.broadcast %250 : vector<1x96xf32> to vector<16x96xf32>
    %252 = arith.addf %248, %251 : vector<16x96xf32>
    %253 = vector.shape_cast %252 : vector<16x96xf32> to vector<2x8x96xf32>
    %254 = vector.extract_strided_slice %253 {offsets = [0, 0, 0], sizes = [2, 8, 8], strides = [1, 1, 1]} : vector<2x8x96xf32> to vector<2x8x8xf32>
    %255 = arith.truncf %254 : vector<2x8x8xf32> to vector<2x8x8xbf16>
    %256 = vector.extract_strided_slice %253 {offsets = [0, 0, 32], sizes = [2, 8, 8], strides = [1, 1, 1]} : vector<2x8x96xf32> to vector<2x8x8xf32>
    %257 = arith.truncf %256 : vector<2x8x8xf32> to vector<2x8x8xbf16>
    %258 = vector.extract_strided_slice %253 {offsets = [0, 0, 64], sizes = [2, 8, 8], strides = [1, 1, 1]} : vector<2x8x96xf32> to vector<2x8x8xf32>
    %259 = arith.truncf %258 : vector<2x8x8xf32> to vector<2x8x8xbf16>
    "tpu.trace_start"() <{level = 10 : i32, message = "bqd,bkd->bqk"}> : () -> ()
    %cst_138 = arith.constant dense<0.000000e+00> : vector<2x8x8xf32>
    %260 = tpu.matmul %255, %257, %cst_138 {dimension_numbers = #tpu.dot_dimension_numbers<[2], [2], [1], [1], [0, 0, 0, 1, 1, 1], [0], [0]>} : vector<2x8x8xbf16>, vector<2x8x8xbf16>, vector<2x8x8xf32> -> vector<2x8x8xf32>
    "tpu.trace_stop"() : () -> ()
    %cst_139 = arith.constant dense<0xFF800000> : vector<2x8xf32>
    %261 = vector.multi_reduction <maximumf>, %260, %cst_139 [2] : vector<2x8x8xf32> to vector<2x8xf32>
    %262 = vector.shape_cast %261 : vector<2x8xf32> to vector<2x8x1xf32>
    %263 = vector.broadcast %262 : vector<2x8x1xf32> to vector<2x8x8xf32>
    %264 = arith.subf %260, %263 : vector<2x8x8xf32>
    %265 = math.exp %264 : vector<2x8x8xf32>
    %cst_140 = arith.constant dense<0.000000e+00> : vector<2x8xf32>
    %266 = vector.multi_reduction <add>, %265, %cst_140 [2] : vector<2x8x8xf32> to vector<2x8xf32>
    %267 = vector.shape_cast %266 : vector<2x8xf32> to vector<2x8x1xf32>
    %268 = tpu.reciprocal %267 {approx = true} : vector<2x8x1xf32> -> vector<2x8x1xf32>
    %269 = vector.broadcast %268 : vector<2x8x1xf32> to vector<2x8x8xf32>
    %270 = arith.mulf %265, %269 : vector<2x8x8xf32>
    %271 = arith.truncf %270 : vector<2x8x8xf32> to vector<2x8x8xbf16>
    "tpu.trace_start"() <{level = 10 : i32, message = "bqk,bkd->bqd"}> : () -> ()
    %cst_141 = arith.constant dense<0.000000e+00> : vector<2x8x8xf32>
    %272 = tpu.matmul %271, %259, %cst_141 {dimension_numbers = #tpu.dot_dimension_numbers<[2], [1], [1], [2], [0, 0, 0, 1, 1, 2], [0], [0]>} : vector<2x8x8xbf16>, vector<2x8x8xbf16>, vector<2x8x8xf32> -> vector<2x8x8xf32>
    "tpu.trace_stop"() : () -> ()
    %c0_142 = arith.constant 0 : index
    %c0_143 = arith.constant 0 : index
    %c0_144 = arith.constant 0 : index
    %273 = vector.load %arg21[%c0_142, %c0_143, %c0_144] : memref<2x8x32xf32, #tpu.memory_space<vmem>>, vector<2x8x8xf32>
    tpu.vector_store %arg21[%c0_142, %c0_143, %c0_144], %272 {strides = array<i32>} : memref<2x8x32xf32, #tpu.memory_space<vmem>>, vector<2x8x8xf32>,
    %274 = vector.extract_strided_slice %253 {offsets = [0, 0, 8], sizes = [2, 8, 8], strides = [1, 1, 1]} : vector<2x8x96xf32> to vector<2x8x8xf32>
    %275 = arith.truncf %274 : vector<2x8x8xf32> to vector<2x8x8xbf16>
    %276 = vector.extract_strided_slice %253 {offsets = [0, 0, 40], sizes = [2, 8, 8], strides = [1, 1, 1]} : vector<2x8x96xf32> to vector<2x8x8xf32>
    %277 = arith.truncf %276 : vector<2x8x8xf32> to vector<2x8x8xbf16>
    %278 = vector.extract_strided_slice %253 {offsets = [0, 0, 72], sizes = [2, 8, 8], strides = [1, 1, 1]} : vector<2x8x96xf32> to vector<2x8x8xf32>
    %279 = arith.truncf %278 : vector<2x8x8xf32> to vector<2x8x8xbf16>
    "tpu.trace_start"() <{level = 10 : i32, message = "bqd,bkd->bqk"}> : () -> ()
    %cst_145 = arith.constant dense<0.000000e+00> : vector<2x8x8xf32>
    %280 = tpu.matmul %275, %277, %cst_145 {dimension_numbers = #tpu.dot_dimension_numbers<[2], [2], [1], [1], [0, 0, 0, 1, 1, 1], [0], [0]>} : vector<2x8x8xbf16>, vector<2x8x8xbf16>, vector<2x8x8xf32> -> vector<2x8x8xf32>
    "tpu.trace_stop"() : () -> ()
    %cst_146 = arith.constant dense<0xFF800000> : vector<2x8xf32>
    %281 = vector.multi_reduction <maximumf>, %280, %cst_146 [2] : vector<2x8x8xf32> to vector<2x8xf32>
    %282 = vector.shape_cast %281 : vector<2x8xf32> to vector<2x8x1xf32>
    %283 = vector.broadcast %282 : vector<2x8x1xf32> to vector<2x8x8xf32>
    %284 = arith.subf %280, %283 : vector<2x8x8xf32>
    %285 = math.exp %284 : vector<2x8x8xf32>
    %cst_147 = arith.constant dense<0.000000e+00> : vector<2x8xf32>
    %286 = vector.multi_reduction <add>, %285, %cst_147 [2] : vector<2x8x8xf32> to vector<2x8xf32>
    %287 = vector.shape_cast %286 : vector<2x8xf32> to vector<2x8x1xf32>
    %288 = tpu.reciprocal %287 {approx = true} : vector<2x8x1xf32> -> vector<2x8x1xf32>
    %289 = vector.broadcast %288 : vector<2x8x1xf32> to vector<2x8x8xf32>
    %290 = arith.mulf %285, %289 : vector<2x8x8xf32>
    %291 = arith.truncf %290 : vector<2x8x8xf32> to vector<2x8x8xbf16>
    "tpu.trace_start"() <{level = 10 : i32, message = "bqk,bkd->bqd"}> : () -> ()
    %cst_148 = arith.constant dense<0.000000e+00> : vector<2x8x8xf32>
    %292 = tpu.matmul %291, %279, %cst_148 {dimension_numbers = #tpu.dot_dimension_numbers<[2], [1], [1], [2], [0, 0, 0, 1, 1, 2], [0], [0]>} : vector<2x8x8xbf16>, vector<2x8x8xbf16>, vector<2x8x8xf32> -> vector<2x8x8xf32>
    "tpu.trace_stop"() : () -> ()
    %c0_149 = arith.constant 0 : index
    %c0_150 = arith.constant 0 : index
    %c8_151 = arith.constant 8 : index
    %293 = vector.load %arg21[%c0_149, %c0_150, %c8_151] : memref<2x8x32xf32, #tpu.memory_space<vmem>>, vector<2x8x8xf32>
    tpu.vector_store %arg21[%c0_149, %c0_150, %c8_151], %292 {strides = array<i32>} : memref<2x8x32xf32, #tpu.memory_space<vmem>>, vector<2x8x8xf32>,
    %294 = vector.extract_strided_slice %253 {offsets = [0, 0, 16], sizes = [2, 8, 8], strides = [1, 1, 1]} : vector<2x8x96xf32> to vector<2x8x8xf32>
    %295 = arith.truncf %294 : vector<2x8x8xf32> to vector<2x8x8xbf16>
    %296 = vector.extract_strided_slice %253 {offsets = [0, 0, 48], sizes = [2, 8, 8], strides = [1, 1, 1]} : vector<2x8x96xf32> to vector<2x8x8xf32>
    %297 = arith.truncf %296 : vector<2x8x8xf32> to vector<2x8x8xbf16>
    %298 = vector.extract_strided_slice %253 {offsets = [0, 0, 80], sizes = [2, 8, 8], strides = [1, 1, 1]} : vector<2x8x96xf32> to vector<2x8x8xf32>
    %299 = arith.truncf %298 : vector<2x8x8xf32> to vector<2x8x8xbf16>
    "tpu.trace_start"() <{level = 10 : i32, message = "bqd,bkd->bqk"}> : () -> ()
    %cst_152 = arith.constant dense<0.000000e+00> : vector<2x8x8xf32>
    %300 = tpu.matmul %295, %297, %cst_152 {dimension_numbers = #tpu.dot_dimension_numbers<[2], [2], [1], [1], [0, 0, 0, 1, 1, 1], [0], [0]>} : vector<2x8x8xbf16>, vector<2x8x8xbf16>, vector<2x8x8xf32> -> vector<2x8x8xf32>
    "tpu.trace_stop"() : () -> ()
    %cst_153 = arith.constant dense<0xFF800000> : vector<2x8xf32>
    %301 = vector.multi_reduction <maximumf>, %300, %cst_153 [2] : vector<2x8x8xf32> to vector<2x8xf32>
    %302 = vector.shape_cast %301 : vector<2x8xf32> to vector<2x8x1xf32>
    %303 = vector.broadcast %302 : vector<2x8x1xf32> to vector<2x8x8xf32>
    %304 = arith.subf %300, %303 : vector<2x8x8xf32>
    %305 = math.exp %304 : vector<2x8x8xf32>
    %cst_154 = arith.constant dense<0.000000e+00> : vector<2x8xf32>
    %306 = vector.multi_reduction <add>, %305, %cst_154 [2] : vector<2x8x8xf32> to vector<2x8xf32>
    %307 = vector.shape_cast %306 : vector<2x8xf32> to vector<2x8x1xf32>
    %308 = tpu.reciprocal %307 {approx = true} : vector<2x8x1xf32> -> vector<2x8x1xf32>
    %309 = vector.broadcast %308 : vector<2x8x1xf32> to vector<2x8x8xf32>
    %310 = arith.mulf %305, %309 : vector<2x8x8xf32>
    %311 = arith.truncf %310 : vector<2x8x8xf32> to vector<2x8x8xbf16>
    "tpu.trace_start"() <{level = 10 : i32, message = "bqk,bkd->bqd"}> : () -> ()
    %cst_155 = arith.constant dense<0.000000e+00> : vector<2x8x8xf32>
    %312 = tpu.matmul %311, %299, %cst_155 {dimension_numbers = #tpu.dot_dimension_numbers<[2], [1], [1], [2], [0, 0, 0, 1, 1, 2], [0], [0]>} : vector<2x8x8xbf16>, vector<2x8x8xbf16>, vector<2x8x8xf32> -> vector<2x8x8xf32>
    "tpu.trace_stop"() : () -> ()
    %c0_156 = arith.constant 0 : index
    %c0_157 = arith.constant 0 : index
    %c16_158 = arith.constant 16 : index
    %313 = vector.load %arg21[%c0_156, %c0_157, %c16_158] : memref<2x8x32xf32, #tpu.memory_space<vmem>>, vector<2x8x8xf32>
    tpu.vector_store %arg21[%c0_156, %c0_157, %c16_158], %312 {strides = array<i32>} : memref<2x8x32xf32, #tpu.memory_space<vmem>>, vector<2x8x8xf32>,
    %314 = vector.extract_strided_slice %253 {offsets = [0, 0, 24], sizes = [2, 8, 8], strides = [1, 1, 1]} : vector<2x8x96xf32> to vector<2x8x8xf32>
    %315 = arith.truncf %314 : vector<2x8x8xf32> to vector<2x8x8xbf16>
    %316 = vector.extract_strided_slice %253 {offsets = [0, 0, 56], sizes = [2, 8, 8], strides = [1, 1, 1]} : vector<2x8x96xf32> to vector<2x8x8xf32>
    %317 = arith.truncf %316 : vector<2x8x8xf32> to vector<2x8x8xbf16>
    %318 = vector.extract_strided_slice %253 {offsets = [0, 0, 88], sizes = [2, 8, 8], strides = [1, 1, 1]} : vector<2x8x96xf32> to vector<2x8x8xf32>
    %319 = arith.truncf %318 : vector<2x8x8xf32> to vector<2x8x8xbf16>
    "tpu.trace_start"() <{level = 10 : i32, message = "bqd,bkd->bqk"}> : () -> ()
    %cst_159 = arith.constant dense<0.000000e+00> : vector<2x8x8xf32>
    %320 = tpu.matmul %315, %317, %cst_159 {dimension_numbers = #tpu.dot_dimension_numbers<[2], [2], [1], [1], [0, 0, 0, 1, 1, 1], [0], [0]>} : vector<2x8x8xbf16>, vector<2x8x8xbf16>, vector<2x8x8xf32> -> vector<2x8x8xf32>
    "tpu.trace_stop"() : () -> ()
    %cst_160 = arith.constant dense<0xFF800000> : vector<2x8xf32>
    %321 = vector.multi_reduction <maximumf>, %320, %cst_160 [2] : vector<2x8x8xf32> to vector<2x8xf32>
    %322 = vector.shape_cast %321 : vector<2x8xf32> to vector<2x8x1xf32>
    %323 = vector.broadcast %322 : vector<2x8x1xf32> to vector<2x8x8xf32>
    %324 = arith.subf %320, %323 : vector<2x8x8xf32>
    %325 = math.exp %324 : vector<2x8x8xf32>
    %cst_161 = arith.constant dense<0.000000e+00> : vector<2x8xf32>
    %326 = vector.multi_reduction <add>, %325, %cst_161 [2] : vector<2x8x8xf32> to vector<2x8xf32>
    %327 = vector.shape_cast %326 : vector<2x8xf32> to vector<2x8x1xf32>
    %328 = tpu.reciprocal %327 {approx = true} : vector<2x8x1xf32> -> vector<2x8x1xf32>
    %329 = vector.broadcast %328 : vector<2x8x1xf32> to vector<2x8x8xf32>
    %330 = arith.mulf %325, %329 : vector<2x8x8xf32>
    %331 = arith.truncf %330 : vector<2x8x8xf32> to vector<2x8x8xbf16>
    "tpu.trace_start"() <{level = 10 : i32, message = "bqk,bkd->bqd"}> : () -> ()
    %cst_162 = arith.constant dense<0.000000e+00> : vector<2x8x8xf32>
    %332 = tpu.matmul %331, %319, %cst_162 {dimension_numbers = #tpu.dot_dimension_numbers<[2], [1], [1], [2], [0, 0, 0, 1, 1, 2], [0], [0]>} : vector<2x8x8xbf16>, vector<2x8x8xbf16>, vector<2x8x8xf32> -> vector<2x8x8xf32>
    "tpu.trace_stop"() : () -> ()
    %c0_163 = arith.constant 0 : index
    %c0_164 = arith.constant 0 : index
    %c24_165 = arith.constant 24 : index
    %333 = vector.load %arg21[%c0_163, %c0_164, %c24_165] : memref<2x8x32xf32, #tpu.memory_space<vmem>>, vector<2x8x8xf32>
    tpu.vector_store %arg21[%c0_163, %c0_164, %c24_165], %332 {strides = array<i32>} : memref<2x8x32xf32, #tpu.memory_space<vmem>>, vector<2x8x8xf32>,
    %c0_166 = arith.constant 0 : index
    %c0_167 = arith.constant 0 : index
    %c0_168 = arith.constant 0 : index
    %334 = vector.load %arg21[%c0_166, %c0_167, %c0_168] : memref<2x8x32xf32, #tpu.memory_space<vmem>>, vector<2x8x32xf32>
    %335 = vector.shape_cast %334 : vector<2x8x32xf32> to vector<16x32xf32>
    %336 = arith.truncf %335 : vector<16x32xf32> to vector<16x32xbf16>
    %c1_169 = arith.constant 1 : index
    %c0_170 = arith.constant 0 : index
    %c0_171 = arith.constant 0 : index
    %337 = vector.load %arg9[%c1_169, %c0_170, %c0_171] : memref<6x32x32xbf16, #tpu.memory_space<vmem>>, vector<1x32x32xbf16>
    %338 = vector.shape_cast %337 : vector<1x32x32xbf16> to vector<32x32xbf16>
    %cst_172 = arith.constant dense<0.000000e+00> : vector<16x32xf32>
    %339 = tpu.matmul %336, %338, %cst_172 {dimension_numbers = #tpu.dot_dimension_numbers<[1], [0], [0], [1], [0, 0, 1, 1], [], []>} : vector<16x32xbf16>, vector<32x32xbf16>, vector<16x32xf32> -> vector<16x32xf32>
    %c1_173 = arith.constant 1 : index
    %c0_174 = arith.constant 0 : index
    %c0_175 = arith.constant 0 : index
    %340 = vector.load %arg10[%c1_173, %c0_174, %c0_175] : memref<6x1x32xf32, #tpu.memory_space<vmem>>, vector<1x1x32xf32>
    %341 = vector.shape_cast %340 : vector<1x1x32xf32> to vector<1x32xf32>
    %342 = vector.broadcast %341 : vector<1x32xf32> to vector<16x32xf32>
    %343 = arith.addf %339, %342 : vector<16x32xf32>
    %c1_176 = arith.constant 1 : index
    %c0_177 = arith.constant 0 : index
    %c0_178 = arith.constant 0 : index
    %344 = vector.load %arg11[%c1_176, %c0_177, %c0_178] : memref<6x2x32xf32, #tpu.memory_space<vmem>>, vector<1x2x32xf32>
    %345 = vector.shape_cast %344 : vector<1x2x32xf32> to vector<2x32xf32>
    %346 = arith.addf %244, %343 : vector<16x32xf32>
    %347 = vector.extract_strided_slice %345 {offsets = [0, 0], sizes = [1, 32], strides = [1, 1]} : vector<2x32xf32> to vector<1x32xf32>
    %348 = vector.extract_strided_slice %345 {offsets = [1, 0], sizes = [1, 32], strides = [1, 1]} : vector<2x32xf32> to vector<1x32xf32>
    %cst_179 = arith.constant dense<0.000000e+00> : vector<16xf32>
    %349 = vector.multi_reduction <add>, %346, %cst_179 [1] : vector<16x32xf32> to vector<16xf32>
    %350 = vector.shape_cast %349 : vector<16xf32> to vector<16x1xf32>
    %cst_180 = arith.constant 3.200000e+01 : f32
    %351 = vector.broadcast %cst_180 : f32 to vector<16x1xf32>
    %352 = arith.divf %350, %351 : vector<16x1xf32>
    %353 = vector.broadcast %352 : vector<16x1xf32> to vector<16x32xf32>
    %354 = arith.subf %346, %353 : vector<16x32xf32>
    %355 = arith.mulf %354, %354 : vector<16x32xf32>
    %cst_181 = arith.constant dense<0.000000e+00> : vector<16xf32>
    %356 = vector.multi_reduction <add>, %355, %cst_181 [1] : vector<16x32xf32> to vector<16xf32>
    %357 = vector.shape_cast %356 : vector<16xf32> to vector<16x1xf32>
    %cst_182 = arith.constant 3.200000e+01 : f32
    %358 = vector.broadcast %cst_182 : f32 to vector<16x1xf32>
    %359 = arith.divf %357, %358 : vector<16x1xf32>
    %cst_183 = arith.constant 9.99999974E-6 : f32
    %360 = vector.broadcast %cst_183 : f32 to vector<16x1xf32>
    %361 = arith.addf %359, %360 : vector<16x1xf32>
    %362 = math.rsqrt %361 : vector<16x1xf32>
    %363 = vector.broadcast %362 : vector<16x1xf32> to vector<16x32xf32>
    %364 = arith.mulf %354, %363 : vector<16x32xf32>
    %365 = vector.broadcast %347 : vector<1x32xf32> to vector<16x32xf32>
    %366 = arith.mulf %364, %365 : vector<16x32xf32>
    %367 = vector.broadcast %348 : vector<1x32xf32> to vector<16x32xf32>
    %368 = arith.addf %366, %367 : vector<16x32xf32>
    %369 = arith.truncf %368 : vector<16x32xf32> to vector<16x32xbf16>
    %c1_184 = arith.constant 1 : index
    %c0_185 = arith.constant 0 : index
    %c0_186 = arith.constant 0 : index
    %370 = vector.load %arg12[%c1_184, %c0_185, %c0_186] : memref<6x32x64xbf16, #tpu.memory_space<vmem>>, vector<1x32x64xbf16>
    %371 = vector.shape_cast %370 : vector<1x32x64xbf16> to vector<32x64xbf16>
    %cst_187 = arith.constant dense<0.000000e+00> : vector<16x64xf32>
    %372 = tpu.matmul %369, %371, %cst_187 {dimension_numbers = #tpu.dot_dimension_numbers<[1], [0], [0], [1], [0, 0, 1, 1], [], []>} : vector<16x32xbf16>, vector<32x64xbf16>, vector<16x64xf32> -> vector<16x64xf32>
    %c1_188 = arith.constant 1 : index
    %c0_189 = arith.constant 0 : index
    %c0_190 = arith.constant 0 : index
    %373 = vector.load %arg13[%c1_188, %c0_189, %c0_190] : memref<6x1x64xf32, #tpu.memory_space<vmem>>, vector<1x1x64xf32>
    %374 = vector.shape_cast %373 : vector<1x1x64xf32> to vector<1x64xf32>
    %375 = vector.broadcast %374 : vector<1x64xf32> to vector<16x64xf32>
    %376 = arith.addf %372, %375 : vector<16x64xf32>
    %cst_191 = arith.constant 5.000000e-01 : f32
    %377 = vector.broadcast %cst_191 : f32 to vector<16x64xf32>
    %378 = arith.mulf %377, %376 : vector<16x64xf32>
    %cst_192 = arith.constant 0.707106769 : f32
    %379 = vector.broadcast %cst_192 : f32 to vector<16x64xf32>
    %380 = arith.mulf %376, %379 : vector<16x64xf32>
    %381 = math.erf %380 : vector<16x64xf32>
    %cst_193 = arith.constant 1.000000e+00 : f32
    %382 = vector.broadcast %cst_193 : f32 to vector<16x64xf32>
    %383 = arith.addf %382, %381 : vector<16x64xf32>
    %384 = arith.mulf %378, %383 : vector<16x64xf32>
    %385 = arith.truncf %384 : vector<16x64xf32> to vector<16x64xbf16>
    %c1_194 = arith.constant 1 : index
    %c0_195 = arith.constant 0 : index
    %c0_196 = arith.constant 0 : index
    %386 = vector.load %arg14[%c1_194, %c0_195, %c0_196] : memref<6x64x32xbf16, #tpu.memory_space<vmem>>, vector<1x64x32xbf16>
    %387 = vector.shape_cast %386 : vector<1x64x32xbf16> to vector<64x32xbf16>
    %cst_197 = arith.constant dense<0.000000e+00> : vector<16x32xf32>
    %388 = tpu.matmul %385, %387, %cst_197 {dimension_numbers = #tpu.dot_dimension_numbers<[1], [0], [0], [1], [0, 0, 1, 1], [], []>} : vector<16x64xbf16>, vector<64x32xbf16>, vector<16x32xf32> -> vector<16x32xf32>
    %c1_198 = arith.constant 1 : index
    %c0_199 = arith.constant 0 : index
    %c0_200 = arith.constant 0 : index
    %389 = vector.load %arg15[%c1_198, %c0_199, %c0_200] : memref<6x1x32xf32, #tpu.memory_space<vmem>>, vector<1x1x32xf32>
    %390 = vector.shape_cast %389 : vector<1x1x32xf32> to vector<1x32xf32>
    %391 = vector.broadcast %390 : vector<1x32xf32> to vector<16x32xf32>
    %392 = arith.addf %388, %391 : vector<16x32xf32>
    %c1_201 = arith.constant 1 : index
    %c0_202 = arith.constant 0 : index
    %c0_203 = arith.constant 0 : index
    %393 = vector.load %arg16[%c1_201, %c0_202, %c0_203] : memref<6x2x32xf32, #tpu.memory_space<vmem>>, vector<1x2x32xf32>
    %394 = vector.shape_cast %393 : vector<1x2x32xf32> to vector<2x32xf32>
    %395 = arith.addf %368, %392 : vector<16x32xf32>
    %396 = vector.extract_strided_slice %394 {offsets = [0, 0], sizes = [1, 32], strides = [1, 1]} : vector<2x32xf32> to vector<1x32xf32>
    %397 = vector.extract_strided_slice %394 {offsets = [1, 0], sizes = [1, 32], strides = [1, 1]} : vector<2x32xf32> to vector<1x32xf32>
    %cst_204 = arith.constant dense<0.000000e+00> : vector<16xf32>
    %398 = vector.multi_reduction <add>, %395, %cst_204 [1] : vector<16x32xf32> to vector<16xf32>
    %399 = vector.shape_cast %398 : vector<16xf32> to vector<16x1xf32>
    %cst_205 = arith.constant 3.200000e+01 : f32
    %400 = vector.broadcast %cst_205 : f32 to vector<16x1xf32>
    %401 = arith.divf %399, %400 : vector<16x1xf32>
    %402 = vector.broadcast %401 : vector<16x1xf32> to vector<16x32xf32>
    %403 = arith.subf %395, %402 : vector<16x32xf32>
    %404 = arith.mulf %403, %403 : vector<16x32xf32>
    %cst_206 = arith.constant dense<0.000000e+00> : vector<16xf32>
    %405 = vector.multi_reduction <add>, %404, %cst_206 [1] : vector<16x32xf32> to vector<16xf32>
    %406 = vector.shape_cast %405 : vector<16xf32> to vector<16x1xf32>
    %cst_207 = arith.constant 3.200000e+01 : f32
    %407 = vector.broadcast %cst_207 : f32 to vector<16x1xf32>
    %408 = arith.divf %406, %407 : vector<16x1xf32>
    %cst_208 = arith.constant 9.99999974E-6 : f32
    %409 = vector.broadcast %cst_208 : f32 to vector<16x1xf32>
    %410 = arith.addf %408, %409 : vector<16x1xf32>
    %411 = math.rsqrt %410 : vector<16x1xf32>
    %412 = vector.broadcast %411 : vector<16x1xf32> to vector<16x32xf32>
    %413 = arith.mulf %403, %412 : vector<16x32xf32>
    %414 = vector.broadcast %396 : vector<1x32xf32> to vector<16x32xf32>
    %415 = arith.mulf %413, %414 : vector<16x32xf32>
    %416 = vector.broadcast %397 : vector<1x32xf32> to vector<16x32xf32>
    %417 = arith.addf %415, %416 : vector<16x32xf32>
    %418 = arith.truncf %417 : vector<16x32xf32> to vector<16x32xbf16>
    %c2_209 = arith.constant 2 : index
    %c0_210 = arith.constant 0 : index
    %c0_211 = arith.constant 0 : index
    %419 = vector.load %arg7[%c2_209, %c0_210, %c0_211] : memref<6x32x96xbf16, #tpu.memory_space<vmem>>, vector<1x32x96xbf16>
    %420 = vector.shape_cast %419 : vector<1x32x96xbf16> to vector<32x96xbf16>
    %cst_212 = arith.constant dense<0.000000e+00> : vector<16x96xf32>
    %421 = tpu.matmul %418, %420, %cst_212 {dimension_numbers = #tpu.dot_dimension_numbers<[1], [0], [0], [1], [0, 0, 1, 1], [], []>} : vector<16x32xbf16>, vector<32x96xbf16>, vector<16x96xf32> -> vector<16x96xf32>
    %c2_213 = arith.constant 2 : index
    %c0_214 = arith.constant 0 : index
    %c0_215 = arith.constant 0 : index
    %422 = vector.load %arg8[%c2_213, %c0_214, %c0_215] : memref<6x1x96xf32, #tpu.memory_space<vmem>>, vector<1x1x96xf32>
    %423 = vector.shape_cast %422 : vector<1x1x96xf32> to vector<1x96xf32>
    %424 = vector.broadcast %423 : vector<1x96xf32> to vector<16x96xf32>
    %425 = arith.addf %421, %424 : vector<16x96xf32>
    %426 = vector.shape_cast %425 : vector<16x96xf32> to vector<2x8x96xf32>
    %427 = vector.extract_strided_slice %426 {offsets = [0, 0, 0], sizes = [2, 8, 8], strides = [1, 1, 1]} : vector<2x8x96xf32> to vector<2x8x8xf32>
    %428 = arith.truncf %427 : vector<2x8x8xf32> to vector<2x8x8xbf16>
    %429 = vector.extract_strided_slice %426 {offsets = [0, 0, 32], sizes = [2, 8, 8], strides = [1, 1, 1]} : vector<2x8x96xf32> to vector<2x8x8xf32>
    %430 = arith.truncf %429 : vector<2x8x8xf32> to vector<2x8x8xbf16>
    %431 = vector.extract_strided_slice %426 {offsets = [0, 0, 64], sizes = [2, 8, 8], strides = [1, 1, 1]} : vector<2x8x96xf32> to vector<2x8x8xf32>
    %432 = arith.truncf %431 : vector<2x8x8xf32> to vector<2x8x8xbf16>
    "tpu.trace_start"() <{level = 10 : i32, message = "bqd,bkd->bqk"}> : () -> ()
    %cst_216 = arith.constant dense<0.000000e+00> : vector<2x8x8xf32>
    %433 = tpu.matmul %428, %430, %cst_216 {dimension_numbers = #tpu.dot_dimension_numbers<[2], [2], [1], [1], [0, 0, 0, 1, 1, 1], [0], [0]>} : vector<2x8x8xbf16>, vector<2x8x8xbf16>, vector<2x8x8xf32> -> vector<2x8x8xf32>
    "tpu.trace_stop"() : () -> ()
    %cst_217 = arith.constant dense<0xFF800000> : vector<2x8xf32>
    %434 = vector.multi_reduction <maximumf>, %433, %cst_217 [2] : vector<2x8x8xf32> to vector<2x8xf32>
    %435 = vector.shape_cast %434 : vector<2x8xf32> to vector<2x8x1xf32>
    %436 = vector.broadcast %435 : vector<2x8x1xf32> to vector<2x8x8xf32>
    %437 = arith.subf %433, %436 : vector<2x8x8xf32>
    %438 = math.exp %437 : vector<2x8x8xf32>
    %cst_218 = arith.constant dense<0.000000e+00> : vector<2x8xf32>
    %439 = vector.multi_reduction <add>, %438, %cst_218 [2] : vector<2x8x8xf32> to vector<2x8xf32>
    %440 = vector.shape_cast %439 : vector<2x8xf32> to vector<2x8x1xf32>
    %441 = tpu.reciprocal %440 {approx = true} : vector<2x8x1xf32> -> vector<2x8x1xf32>
    %442 = vector.broadcast %441 : vector<2x8x1xf32> to vector<2x8x8xf32>
    %443 = arith.mulf %438, %442 : vector<2x8x8xf32>
    %444 = arith.truncf %443 : vector<2x8x8xf32> to vector<2x8x8xbf16>
    "tpu.trace_start"() <{level = 10 : i32, message = "bqk,bkd->bqd"}> : () -> ()
    %cst_219 = arith.constant dense<0.000000e+00> : vector<2x8x8xf32>
    %445 = tpu.matmul %444, %432, %cst_219 {dimension_numbers = #tpu.dot_dimension_numbers<[2], [1], [1], [2], [0, 0, 0, 1, 1, 2], [0], [0]>} : vector<2x8x8xbf16>, vector<2x8x8xbf16>, vector<2x8x8xf32> -> vector<2x8x8xf32>
    "tpu.trace_stop"() : () -> ()
    %c0_220 = arith.constant 0 : index
    %c0_221 = arith.constant 0 : index
    %c0_222 = arith.constant 0 : index
    %446 = vector.load %arg21[%c0_220, %c0_221, %c0_222] : memref<2x8x32xf32, #tpu.memory_space<vmem>>, vector<2x8x8xf32>
    tpu.vector_store %arg21[%c0_220, %c0_221, %c0_222], %445 {strides = array<i32>} : memref<2x8x32xf32, #tpu.memory_space<vmem>>, vector<2x8x8xf32>,
    %447 = vector.extract_strided_slice %426 {offsets = [0, 0, 8], sizes = [2, 8, 8], strides = [1, 1, 1]} : vector<2x8x96xf32> to vector<2x8x8xf32>
    %448 = arith.truncf %447 : vector<2x8x8xf32> to vector<2x8x8xbf16>
    %449 = vector.extract_strided_slice %426 {offsets = [0, 0, 40], sizes = [2, 8, 8], strides = [1, 1, 1]} : vector<2x8x96xf32> to vector<2x8x8xf32>
    %450 = arith.truncf %449 : vector<2x8x8xf32> to vector<2x8x8xbf16>
    %451 = vector.extract_strided_slice %426 {offsets = [0, 0, 72], sizes = [2, 8, 8], strides = [1, 1, 1]} : vector<2x8x96xf32> to vector<2x8x8xf32>
    %452 = arith.truncf %451 : vector<2x8x8xf32> to vector<2x8x8xbf16>
    "tpu.trace_start"() <{level = 10 : i32, message = "bqd,bkd->bqk"}> : () -> ()
    %cst_223 = arith.constant dense<0.000000e+00> : vector<2x8x8xf32>
    %453 = tpu.matmul %448, %450, %cst_223 {dimension_numbers = #tpu.dot_dimension_numbers<[2], [2], [1], [1], [0, 0, 0, 1, 1, 1], [0], [0]>} : vector<2x8x8xbf16>, vector<2x8x8xbf16>, vector<2x8x8xf32> -> vector<2x8x8xf32>
    "tpu.trace_stop"() : () -> ()
    %cst_224 = arith.constant dense<0xFF800000> : vector<2x8xf32>
    %454 = vector.multi_reduction <maximumf>, %453, %cst_224 [2] : vector<2x8x8xf32> to vector<2x8xf32>
    %455 = vector.shape_cast %454 : vector<2x8xf32> to vector<2x8x1xf32>
    %456 = vector.broadcast %455 : vector<2x8x1xf32> to vector<2x8x8xf32>
    %457 = arith.subf %453, %456 : vector<2x8x8xf32>
    %458 = math.exp %457 : vector<2x8x8xf32>
    %cst_225 = arith.constant dense<0.000000e+00> : vector<2x8xf32>
    %459 = vector.multi_reduction <add>, %458, %cst_225 [2] : vector<2x8x8xf32> to vector<2x8xf32>
    %460 = vector.shape_cast %459 : vector<2x8xf32> to vector<2x8x1xf32>
    %461 = tpu.reciprocal %460 {approx = true} : vector<2x8x1xf32> -> vector<2x8x1xf32>
    %462 = vector.broadcast %461 : vector<2x8x1xf32> to vector<2x8x8xf32>
    %463 = arith.mulf %458, %462 : vector<2x8x8xf32>
    %464 = arith.truncf %463 : vector<2x8x8xf32> to vector<2x8x8xbf16>
    "tpu.trace_start"() <{level = 10 : i32, message = "bqk,bkd->bqd"}> : () -> ()
    %cst_226 = arith.constant dense<0.000000e+00> : vector<2x8x8xf32>
    %465 = tpu.matmul %464, %452, %cst_226 {dimension_numbers = #tpu.dot_dimension_numbers<[2], [1], [1], [2], [0, 0, 0, 1, 1, 2], [0], [0]>} : vector<2x8x8xbf16>, vector<2x8x8xbf16>, vector<2x8x8xf32> -> vector<2x8x8xf32>
    "tpu.trace_stop"() : () -> ()
    %c0_227 = arith.constant 0 : index
    %c0_228 = arith.constant 0 : index
    %c8_229 = arith.constant 8 : index
    %466 = vector.load %arg21[%c0_227, %c0_228, %c8_229] : memref<2x8x32xf32, #tpu.memory_space<vmem>>, vector<2x8x8xf32>
    tpu.vector_store %arg21[%c0_227, %c0_228, %c8_229], %465 {strides = array<i32>} : memref<2x8x32xf32, #tpu.memory_space<vmem>>, vector<2x8x8xf32>,
    %467 = vector.extract_strided_slice %426 {offsets = [0, 0, 16], sizes = [2, 8, 8], strides = [1, 1, 1]} : vector<2x8x96xf32> to vector<2x8x8xf32>
    %468 = arith.truncf %467 : vector<2x8x8xf32> to vector<2x8x8xbf16>
    %469 = vector.extract_strided_slice %426 {offsets = [0, 0, 48], sizes = [2, 8, 8], strides = [1, 1, 1]} : vector<2x8x96xf32> to vector<2x8x8xf32>
    %470 = arith.truncf %469 : vector<2x8x8xf32> to vector<2x8x8xbf16>
    %471 = vector.extract_strided_slice %426 {offsets = [0, 0, 80], sizes = [2, 8, 8], strides = [1, 1, 1]} : vector<2x8x96xf32> to vector<2x8x8xf32>
    %472 = arith.truncf %471 : vector<2x8x8xf32> to vector<2x8x8xbf16>
    "tpu.trace_start"() <{level = 10 : i32, message = "bqd,bkd->bqk"}> : () -> ()
    %cst_230 = arith.constant dense<0.000000e+00> : vector<2x8x8xf32>
    %473 = tpu.matmul %468, %470, %cst_230 {dimension_numbers = #tpu.dot_dimension_numbers<[2], [2], [1], [1], [0, 0, 0, 1, 1, 1], [0], [0]>} : vector<2x8x8xbf16>, vector<2x8x8xbf16>, vector<2x8x8xf32> -> vector<2x8x8xf32>
    "tpu.trace_stop"() : () -> ()
    %cst_231 = arith.constant dense<0xFF800000> : vector<2x8xf32>
    %474 = vector.multi_reduction <maximumf>, %473, %cst_231 [2] : vector<2x8x8xf32> to vector<2x8xf32>
    %475 = vector.shape_cast %474 : vector<2x8xf32> to vector<2x8x1xf32>
    %476 = vector.broadcast %475 : vector<2x8x1xf32> to vector<2x8x8xf32>
    %477 = arith.subf %473, %476 : vector<2x8x8xf32>
    %478 = math.exp %477 : vector<2x8x8xf32>
    %cst_232 = arith.constant dense<0.000000e+00> : vector<2x8xf32>
    %479 = vector.multi_reduction <add>, %478, %cst_232 [2] : vector<2x8x8xf32> to vector<2x8xf32>
    %480 = vector.shape_cast %479 : vector<2x8xf32> to vector<2x8x1xf32>
    %481 = tpu.reciprocal %480 {approx = true} : vector<2x8x1xf32> -> vector<2x8x1xf32>
    %482 = vector.broadcast %481 : vector<2x8x1xf32> to vector<2x8x8xf32>
    %483 = arith.mulf %478, %482 : vector<2x8x8xf32>
    %484 = arith.truncf %483 : vector<2x8x8xf32> to vector<2x8x8xbf16>
    "tpu.trace_start"() <{level = 10 : i32, message = "bqk,bkd->bqd"}> : () -> ()
    %cst_233 = arith.constant dense<0.000000e+00> : vector<2x8x8xf32>
    %485 = tpu.matmul %484, %472, %cst_233 {dimension_numbers = #tpu.dot_dimension_numbers<[2], [1], [1], [2], [0, 0, 0, 1, 1, 2], [0], [0]>} : vector<2x8x8xbf16>, vector<2x8x8xbf16>, vector<2x8x8xf32> -> vector<2x8x8xf32>
    "tpu.trace_stop"() : () -> ()
    %c0_234 = arith.constant 0 : index
    %c0_235 = arith.constant 0 : index
    %c16_236 = arith.constant 16 : index
    %486 = vector.load %arg21[%c0_234, %c0_235, %c16_236] : memref<2x8x32xf32, #tpu.memory_space<vmem>>, vector<2x8x8xf32>
    tpu.vector_store %arg21[%c0_234, %c0_235, %c16_236], %485 {strides = array<i32>} : memref<2x8x32xf32, #tpu.memory_space<vmem>>, vector<2x8x8xf32>,
    %487 = vector.extract_strided_slice %426 {offsets = [0, 0, 24], sizes = [2, 8, 8], strides = [1, 1, 1]} : vector<2x8x96xf32> to vector<2x8x8xf32>
    %488 = arith.truncf %487 : vector<2x8x8xf32> to vector<2x8x8xbf16>
    %489 = vector.extract_strided_slice %426 {offsets = [0, 0, 56], sizes = [2, 8, 8], strides = [1, 1, 1]} : vector<2x8x96xf32> to vector<2x8x8xf32>
    %490 = arith.truncf %489 : vector<2x8x8xf32> to vector<2x8x8xbf16>
    %491 = vector.extract_strided_slice %426 {offsets = [0, 0, 88], sizes = [2, 8, 8], strides = [1, 1, 1]} : vector<2x8x96xf32> to vector<2x8x8xf32>
    %492 = arith.truncf %491 : vector<2x8x8xf32> to vector<2x8x8xbf16>
    "tpu.trace_start"() <{level = 10 : i32, message = "bqd,bkd->bqk"}> : () -> ()
    %cst_237 = arith.constant dense<0.000000e+00> : vector<2x8x8xf32>
    %493 = tpu.matmul %488, %490, %cst_237 {dimension_numbers = #tpu.dot_dimension_numbers<[2], [2], [1], [1], [0, 0, 0, 1, 1, 1], [0], [0]>} : vector<2x8x8xbf16>, vector<2x8x8xbf16>, vector<2x8x8xf32> -> vector<2x8x8xf32>
    "tpu.trace_stop"() : () -> ()
    %cst_238 = arith.constant dense<0xFF800000> : vector<2x8xf32>
    %494 = vector.multi_reduction <maximumf>, %493, %cst_238 [2] : vector<2x8x8xf32> to vector<2x8xf32>
    %495 = vector.shape_cast %494 : vector<2x8xf32> to vector<2x8x1xf32>
    %496 = vector.broadcast %495 : vector<2x8x1xf32> to vector<2x8x8xf32>
    %497 = arith.subf %493, %496 : vector<2x8x8xf32>
    %498 = math.exp %497 : vector<2x8x8xf32>
    %cst_239 = arith.constant dense<0.000000e+00> : vector<2x8xf32>
    %499 = vector.multi_reduction <add>, %498, %cst_239 [2] : vector<2x8x8xf32> to vector<2x8xf32>
    %500 = vector.shape_cast %499 : vector<2x8xf32> to vector<2x8x1xf32>
    %501 = tpu.reciprocal %500 {approx = true} : vector<2x8x1xf32> -> vector<2x8x1xf32>
    %502 = vector.broadcast %501 : vector<2x8x1xf32> to vector<2x8x8xf32>
    %503 = arith.mulf %498, %502 : vector<2x8x8xf32>
    %504 = arith.truncf %503 : vector<2x8x8xf32> to vector<2x8x8xbf16>
    "tpu.trace_start"() <{level = 10 : i32, message = "bqk,bkd->bqd"}> : () -> ()
    %cst_240 = arith.constant dense<0.000000e+00> : vector<2x8x8xf32>
    %505 = tpu.matmul %504, %492, %cst_240 {dimension_numbers = #tpu.dot_dimension_numbers<[2], [1], [1], [2], [0, 0, 0, 1, 1, 2], [0], [0]>} : vector<2x8x8xbf16>, vector<2x8x8xbf16>, vector<2x8x8xf32> -> vector<2x8x8xf32>
    "tpu.trace_stop"() : () -> ()
    %c0_241 = arith.constant 0 : index
    %c0_242 = arith.constant 0 : index
    %c24_243 = arith.constant 24 : index
    %506 = vector.load %arg21[%c0_241, %c0_242, %c24_243] : memref<2x8x32xf32, #tpu.memory_space<vmem>>, vector<2x8x8xf32>
    tpu.vector_store %arg21[%c0_241, %c0_242, %c24_243], %505 {strides = array<i32>} : memref<2x8x32xf32, #tpu.memory_space<vmem>>, vector<2x8x8xf32>,
    %c0_244 = arith.constant 0 : index
    %c0_245 = arith.constant 0 : index
    %c0_246 = arith.constant 0 : index
    %507 = vector.load %arg21[%c0_244, %c0_245, %c0_246] : memref<2x8x32xf32, #tpu.memory_space<vmem>>, vector<2x8x32xf32>
    %508 = vector.shape_cast %507 : vector<2x8x32xf32> to vector<16x32xf32>
    %509 = arith.truncf %508 : vector<16x32xf32> to vector<16x32xbf16>
    %c2_247 = arith.constant 2 : index
    %c0_248 = arith.constant 0 : index
    %c0_249 = arith.constant 0 : index
    %510 = vector.load %arg9[%c2_247, %c0_248, %c0_249] : memref<6x32x32xbf16, #tpu.memory_space<vmem>>, vector<1x32x32xbf16>
    %511 = vector.shape_cast %510 : vector<1x32x32xbf16> to vector<32x32xbf16>
    %cst_250 = arith.constant dense<0.000000e+00> : vector<16x32xf32>
    %512 = tpu.matmul %509, %511, %cst_250 {dimension_numbers = #tpu.dot_dimension_numbers<[1], [0], [0], [1], [0, 0, 1, 1], [], []>} : vector<16x32xbf16>, vector<32x32xbf16>, vector<16x32xf32> -> vector<16x32xf32>
    %c2_251 = arith.constant 2 : index
    %c0_252 = arith.constant 0 : index
    %c0_253 = arith.constant 0 : index
    %513 = vector.load %arg10[%c2_251, %c0_252, %c0_253] : memref<6x1x32xf32, #tpu.memory_space<vmem>>, vector<1x1x32xf32>
    %514 = vector.shape_cast %513 : vector<1x1x32xf32> to vector<1x32xf32>
    %515 = vector.broadcast %514 : vector<1x32xf32> to vector<16x32xf32>
    %516 = arith.addf %512, %515 : vector<16x32xf32>
    %c2_254 = arith.constant 2 : index
    %c0_255 = arith.constant 0 : index
    %c0_256 = arith.constant 0 : index
    %517 = vector.load %arg11[%c2_254, %c0_255, %c0_256] : memref<6x2x32xf32, #tpu.memory_space<vmem>>, vector<1x2x32xf32>
    %518 = vector.shape_cast %517 : vector<1x2x32xf32> to vector<2x32xf32>
    %519 = arith.addf %417, %516 : vector<16x32xf32>
    %520 = vector.extract_strided_slice %518 {offsets = [0, 0], sizes = [1, 32], strides = [1, 1]} : vector<2x32xf32> to vector<1x32xf32>
    %521 = vector.extract_strided_slice %518 {offsets = [1, 0], sizes = [1, 32], strides = [1, 1]} : vector<2x32xf32> to vector<1x32xf32>
    %cst_257 = arith.constant dense<0.000000e+00> : vector<16xf32>
    %522 = vector.multi_reduction <add>, %519, %cst_257 [1] : vector<16x32xf32> to vector<16xf32>
    %523 = vector.shape_cast %522 : vector<16xf32> to vector<16x1xf32>
    %cst_258 = arith.constant 3.200000e+01 : f32
    %524 = vector.broadcast %cst_258 : f32 to vector<16x1xf32>
    %525 = arith.divf %523, %524 : vector<16x1xf32>
    %526 = vector.broadcast %525 : vector<16x1xf32> to vector<16x32xf32>
    %527 = arith.subf %519, %526 : vector<16x32xf32>
    %528 = arith.mulf %527, %527 : vector<16x32xf32>
    %cst_259 = arith.constant dense<0.000000e+00> : vector<16xf32>
    %529 = vector.multi_reduction <add>, %528, %cst_259 [1] : vector<16x32xf32> to vector<16xf32>
    %530 = vector.shape_cast %529 : vector<16xf32> to vector<16x1xf32>
    %cst_260 = arith.constant 3.200000e+01 : f32
    %531 = vector.broadcast %cst_260 : f32 to vector<16x1xf32>
    %532 = arith.divf %530, %531 : vector<16x1xf32>
    %cst_261 = arith.constant 9.99999974E-6 : f32
    %533 = vector.broadcast %cst_261 : f32 to vector<16x1xf32>
    %534 = arith.addf %532, %533 : vector<16x1xf32>
    %535 = math.rsqrt %534 : vector<16x1xf32>
    %536 = vector.broadcast %535 : vector<16x1xf32> to vector<16x32xf32>
    %537 = arith.mulf %527, %536 : vector<16x32xf32>
    %538 = vector.broadcast %520 : vector<1x32xf32> to vector<16x32xf32>
    %539 = arith.mulf %537, %538 : vector<16x32xf32>
    %540 = vector.broadcast %521 : vector<1x32xf32> to vector<16x32xf32>
    %541 = arith.addf %539, %540 : vector<16x32xf32>
    %542 = arith.truncf %541 : vector<16x32xf32> to vector<16x32xbf16>
    %c2_262 = arith.constant 2 : index
    %c0_263 = arith.constant 0 : index
    %c0_264 = arith.constant 0 : index
    %543 = vector.load %arg12[%c2_262, %c0_263, %c0_264] : memref<6x32x64xbf16, #tpu.memory_space<vmem>>, vector<1x32x64xbf16>
    %544 = vector.shape_cast %543 : vector<1x32x64xbf16> to vector<32x64xbf16>
    %cst_265 = arith.constant dense<0.000000e+00> : vector<16x64xf32>
    %545 = tpu.matmul %542, %544, %cst_265 {dimension_numbers = #tpu.dot_dimension_numbers<[1], [0], [0], [1], [0, 0, 1, 1], [], []>} : vector<16x32xbf16>, vector<32x64xbf16>, vector<16x64xf32> -> vector<16x64xf32>
    %c2_266 = arith.constant 2 : index
    %c0_267 = arith.constant 0 : index
    %c0_268 = arith.constant 0 : index
    %546 = vector.load %arg13[%c2_266, %c0_267, %c0_268] : memref<6x1x64xf32, #tpu.memory_space<vmem>>, vector<1x1x64xf32>
    %547 = vector.shape_cast %546 : vector<1x1x64xf32> to vector<1x64xf32>
    %548 = vector.broadcast %547 : vector<1x64xf32> to vector<16x64xf32>
    %549 = arith.addf %545, %548 : vector<16x64xf32>
    %cst_269 = arith.constant 5.000000e-01 : f32
    %550 = vector.broadcast %cst_269 : f32 to vector<16x64xf32>
    %551 = arith.mulf %550, %549 : vector<16x64xf32>
    %cst_270 = arith.constant 0.707106769 : f32
    %552 = vector.broadcast %cst_270 : f32 to vector<16x64xf32>
    %553 = arith.mulf %549, %552 : vector<16x64xf32>
    %554 = math.erf %553 : vector<16x64xf32>
    %cst_271 = arith.constant 1.000000e+00 : f32
    %555 = vector.broadcast %cst_271 : f32 to vector<16x64xf32>
    %556 = arith.addf %555, %554 : vector<16x64xf32>
    %557 = arith.mulf %551, %556 : vector<16x64xf32>
    %558 = arith.truncf %557 : vector<16x64xf32> to vector<16x64xbf16>
    %c2_272 = arith.constant 2 : index
    %c0_273 = arith.constant 0 : index
    %c0_274 = arith.constant 0 : index
    %559 = vector.load %arg14[%c2_272, %c0_273, %c0_274] : memref<6x64x32xbf16, #tpu.memory_space<vmem>>, vector<1x64x32xbf16>
    %560 = vector.shape_cast %559 : vector<1x64x32xbf16> to vector<64x32xbf16>
    %cst_275 = arith.constant dense<0.000000e+00> : vector<16x32xf32>
    %561 = tpu.matmul %558, %560, %cst_275 {dimension_numbers = #tpu.dot_dimension_numbers<[1], [0], [0], [1], [0, 0, 1, 1], [], []>} : vector<16x64xbf16>, vector<64x32xbf16>, vector<16x32xf32> -> vector<16x32xf32>
    %c2_276 = arith.constant 2 : index
    %c0_277 = arith.constant 0 : index
    %c0_278 = arith.constant 0 : index
    %562 = vector.load %arg15[%c2_276, %c0_277, %c0_278] : memref<6x1x32xf32, #tpu.memory_space<vmem>>, vector<1x1x32xf32>
    %563 = vector.shape_cast %562 : vector<1x1x32xf32> to vector<1x32xf32>
    %564 = vector.broadcast %563 : vector<1x32xf32> to vector<16x32xf32>
    %565 = arith.addf %561, %564 : vector<16x32xf32>
    %c2_279 = arith.constant 2 : index
    %c0_280 = arith.constant 0 : index
    %c0_281 = arith.constant 0 : index
    %566 = vector.load %arg16[%c2_279, %c0_280, %c0_281] : memref<6x2x32xf32, #tpu.memory_space<vmem>>, vector<1x2x32xf32>
    %567 = vector.shape_cast %566 : vector<1x2x32xf32> to vector<2x32xf32>
    %568 = arith.addf %541, %565 : vector<16x32xf32>
    %569 = vector.extract_strided_slice %567 {offsets = [0, 0], sizes = [1, 32], strides = [1, 1]} : vector<2x32xf32> to vector<1x32xf32>
    %570 = vector.extract_strided_slice %567 {offsets = [1, 0], sizes = [1, 32], strides = [1, 1]} : vector<2x32xf32> to vector<1x32xf32>
    %cst_282 = arith.constant dense<0.000000e+00> : vector<16xf32>
    %571 = vector.multi_reduction <add>, %568, %cst_282 [1] : vector<16x32xf32> to vector<16xf32>
    %572 = vector.shape_cast %571 : vector<16xf32> to vector<16x1xf32>
    %cst_283 = arith.constant 3.200000e+01 : f32
    %573 = vector.broadcast %cst_283 : f32 to vector<16x1xf32>
    %574 = arith.divf %572, %573 : vector<16x1xf32>
    %575 = vector.broadcast %574 : vector<16x1xf32> to vector<16x32xf32>
    %576 = arith.subf %568, %575 : vector<16x32xf32>
    %577 = arith.mulf %576, %576 : vector<16x32xf32>
    %cst_284 = arith.constant dense<0.000000e+00> : vector<16xf32>
    %578 = vector.multi_reduction <add>, %577, %cst_284 [1] : vector<16x32xf32> to vector<16xf32>
    %579 = vector.shape_cast %578 : vector<16xf32> to vector<16x1xf32>
    %cst_285 = arith.constant 3.200000e+01 : f32
    %580 = vector.broadcast %cst_285 : f32 to vector<16x1xf32>
    %581 = arith.divf %579, %580 : vector<16x1xf32>
    %cst_286 = arith.constant 9.99999974E-6 : f32
    %582 = vector.broadcast %cst_286 : f32 to vector<16x1xf32>
    %583 = arith.addf %581, %582 : vector<16x1xf32>
    %584 = math.rsqrt %583 : vector<16x1xf32>
    %585 = vector.broadcast %584 : vector<16x1xf32> to vector<16x32xf32>
    %586 = arith.mulf %576, %585 : vector<16x32xf32>
    %587 = vector.broadcast %569 : vector<1x32xf32> to vector<16x32xf32>
    %588 = arith.mulf %586, %587 : vector<16x32xf32>
    %589 = vector.broadcast %570 : vector<1x32xf32> to vector<16x32xf32>
    %590 = arith.addf %588, %589 : vector<16x32xf32>
    %591 = arith.truncf %590 : vector<16x32xf32> to vector<16x32xbf16>
    %c3 = arith.constant 3 : index
    %c0_287 = arith.constant 0 : index
    %c0_288 = arith.constant 0 : index
    %592 = vector.load %arg7[%c3, %c0_287, %c0_288] : memref<6x32x96xbf16, #tpu.memory_space<vmem>>, vector<1x32x96xbf16>
    %593 = vector.shape_cast %592 : vector<1x32x96xbf16> to vector<32x96xbf16>
    %cst_289 = arith.constant dense<0.000000e+00> : vector<16x96xf32>
    %594 = tpu.matmul %591, %593, %cst_289 {dimension_numbers = #tpu.dot_dimension_numbers<[1], [0], [0], [1], [0, 0, 1, 1], [], []>} : vector<16x32xbf16>, vector<32x96xbf16>, vector<16x96xf32> -> vector<16x96xf32>
    %c3_290 = arith.constant 3 : index
    %c0_291 = arith.constant 0 : index
    %c0_292 = arith.constant 0 : index
    %595 = vector.load %arg8[%c3_290, %c0_291, %c0_292] : memref<6x1x96xf32, #tpu.memory_space<vmem>>, vector<1x1x96xf32>
    %596 = vector.shape_cast %595 : vector<1x1x96xf32> to vector<1x96xf32>
    %597 = vector.broadcast %596 : vector<1x96xf32> to vector<16x96xf32>
    %598 = arith.addf %594, %597 : vector<16x96xf32>
    %599 = vector.shape_cast %598 : vector<16x96xf32> to vector<2x8x96xf32>
    %600 = vector.extract_strided_slice %599 {offsets = [0, 0, 0], sizes = [2, 8, 8], strides = [1, 1, 1]} : vector<2x8x96xf32> to vector<2x8x8xf32>
    %601 = arith.truncf %600 : vector<2x8x8xf32> to vector<2x8x8xbf16>
    %602 = vector.extract_strided_slice %599 {offsets = [0, 0, 32], sizes = [2, 8, 8], strides = [1, 1, 1]} : vector<2x8x96xf32> to vector<2x8x8xf32>
    %603 = arith.truncf %602 : vector<2x8x8xf32> to vector<2x8x8xbf16>
    %604 = vector.extract_strided_slice %599 {offsets = [0, 0, 64], sizes = [2, 8, 8], strides = [1, 1, 1]} : vector<2x8x96xf32> to vector<2x8x8xf32>
    %605 = arith.truncf %604 : vector<2x8x8xf32> to vector<2x8x8xbf16>
    "tpu.trace_start"() <{level = 10 : i32, message = "bqd,bkd->bqk"}> : () -> ()
    %cst_293 = arith.constant dense<0.000000e+00> : vector<2x8x8xf32>
    %606 = tpu.matmul %601, %603, %cst_293 {dimension_numbers = #tpu.dot_dimension_numbers<[2], [2], [1], [1], [0, 0, 0, 1, 1, 1], [0], [0]>} : vector<2x8x8xbf16>, vector<2x8x8xbf16>, vector<2x8x8xf32> -> vector<2x8x8xf32>
    "tpu.trace_stop"() : () -> ()
    %cst_294 = arith.constant dense<0xFF800000> : vector<2x8xf32>
    %607 = vector.multi_reduction <maximumf>, %606, %cst_294 [2] : vector<2x8x8xf32> to vector<2x8xf32>
    %608 = vector.shape_cast %607 : vector<2x8xf32> to vector<2x8x1xf32>
    %609 = vector.broadcast %608 : vector<2x8x1xf32> to vector<2x8x8xf32>
    %610 = arith.subf %606, %609 : vector<2x8x8xf32>
    %611 = math.exp %610 : vector<2x8x8xf32>
    %cst_295 = arith.constant dense<0.000000e+00> : vector<2x8xf32>
    %612 = vector.multi_reduction <add>, %611, %cst_295 [2] : vector<2x8x8xf32> to vector<2x8xf32>
    %613 = vector.shape_cast %612 : vector<2x8xf32> to vector<2x8x1xf32>
    %614 = tpu.reciprocal %613 {approx = true} : vector<2x8x1xf32> -> vector<2x8x1xf32>
    %615 = vector.broadcast %614 : vector<2x8x1xf32> to vector<2x8x8xf32>
    %616 = arith.mulf %611, %615 : vector<2x8x8xf32>
    %617 = arith.truncf %616 : vector<2x8x8xf32> to vector<2x8x8xbf16>
    "tpu.trace_start"() <{level = 10 : i32, message = "bqk,bkd->bqd"}> : () -> ()
    %cst_296 = arith.constant dense<0.000000e+00> : vector<2x8x8xf32>
    %618 = tpu.matmul %617, %605, %cst_296 {dimension_numbers = #tpu.dot_dimension_numbers<[2], [1], [1], [2], [0, 0, 0, 1, 1, 2], [0], [0]>} : vector<2x8x8xbf16>, vector<2x8x8xbf16>, vector<2x8x8xf32> -> vector<2x8x8xf32>
    "tpu.trace_stop"() : () -> ()
    %c0_297 = arith.constant 0 : index
    %c0_298 = arith.constant 0 : index
    %c0_299 = arith.constant 0 : index
    %619 = vector.load %arg21[%c0_297, %c0_298, %c0_299] : memref<2x8x32xf32, #tpu.memory_space<vmem>>, vector<2x8x8xf32>
    tpu.vector_store %arg21[%c0_297, %c0_298, %c0_299], %618 {strides = array<i32>} : memref<2x8x32xf32, #tpu.memory_space<vmem>>, vector<2x8x8xf32>,
    %620 = vector.extract_strided_slice %599 {offsets = [0, 0, 8], sizes = [2, 8, 8], strides = [1, 1, 1]} : vector<2x8x96xf32> to vector<2x8x8xf32>
    %621 = arith.truncf %620 : vector<2x8x8xf32> to vector<2x8x8xbf16>
    %622 = vector.extract_strided_slice %599 {offsets = [0, 0, 40], sizes = [2, 8, 8], strides = [1, 1, 1]} : vector<2x8x96xf32> to vector<2x8x8xf32>
    %623 = arith.truncf %622 : vector<2x8x8xf32> to vector<2x8x8xbf16>
    %624 = vector.extract_strided_slice %599 {offsets = [0, 0, 72], sizes = [2, 8, 8], strides = [1, 1, 1]} : vector<2x8x96xf32> to vector<2x8x8xf32>
    %625 = arith.truncf %624 : vector<2x8x8xf32> to vector<2x8x8xbf16>
    "tpu.trace_start"() <{level = 10 : i32, message = "bqd,bkd->bqk"}> : () -> ()
    %cst_300 = arith.constant dense<0.000000e+00> : vector<2x8x8xf32>
    %626 = tpu.matmul %621, %623, %cst_300 {dimension_numbers = #tpu.dot_dimension_numbers<[2], [2], [1], [1], [0, 0, 0, 1, 1, 1], [0], [0]>} : vector<2x8x8xbf16>, vector<2x8x8xbf16>, vector<2x8x8xf32> -> vector<2x8x8xf32>
    "tpu.trace_stop"() : () -> ()
    %cst_301 = arith.constant dense<0xFF800000> : vector<2x8xf32>
    %627 = vector.multi_reduction <maximumf>, %626, %cst_301 [2] : vector<2x8x8xf32> to vector<2x8xf32>
    %628 = vector.shape_cast %627 : vector<2x8xf32> to vector<2x8x1xf32>
    %629 = vector.broadcast %628 : vector<2x8x1xf32> to vector<2x8x8xf32>
    %630 = arith.subf %626, %629 : vector<2x8x8xf32>
    %631 = math.exp %630 : vector<2x8x8xf32>
    %cst_302 = arith.constant dense<0.000000e+00> : vector<2x8xf32>
    %632 = vector.multi_reduction <add>, %631, %cst_302 [2] : vector<2x8x8xf32> to vector<2x8xf32>
    %633 = vector.shape_cast %632 : vector<2x8xf32> to vector<2x8x1xf32>
    %634 = tpu.reciprocal %633 {approx = true} : vector<2x8x1xf32> -> vector<2x8x1xf32>
    %635 = vector.broadcast %634 : vector<2x8x1xf32> to vector<2x8x8xf32>
    %636 = arith.mulf %631, %635 : vector<2x8x8xf32>
    %637 = arith.truncf %636 : vector<2x8x8xf32> to vector<2x8x8xbf16>
    "tpu.trace_start"() <{level = 10 : i32, message = "bqk,bkd->bqd"}> : () -> ()
    %cst_303 = arith.constant dense<0.000000e+00> : vector<2x8x8xf32>
    %638 = tpu.matmul %637, %625, %cst_303 {dimension_numbers = #tpu.dot_dimension_numbers<[2], [1], [1], [2], [0, 0, 0, 1, 1, 2], [0], [0]>} : vector<2x8x8xbf16>, vector<2x8x8xbf16>, vector<2x8x8xf32> -> vector<2x8x8xf32>
    "tpu.trace_stop"() : () -> ()
    %c0_304 = arith.constant 0 : index
    %c0_305 = arith.constant 0 : index
    %c8_306 = arith.constant 8 : index
    %639 = vector.load %arg21[%c0_304, %c0_305, %c8_306] : memref<2x8x32xf32, #tpu.memory_space<vmem>>, vector<2x8x8xf32>
    tpu.vector_store %arg21[%c0_304, %c0_305, %c8_306], %638 {strides = array<i32>} : memref<2x8x32xf32, #tpu.memory_space<vmem>>, vector<2x8x8xf32>,
    %640 = vector.extract_strided_slice %599 {offsets = [0, 0, 16], sizes = [2, 8, 8], strides = [1, 1, 1]} : vector<2x8x96xf32> to vector<2x8x8xf32>
    %641 = arith.truncf %640 : vector<2x8x8xf32> to vector<2x8x8xbf16>
    %642 = vector.extract_strided_slice %599 {offsets = [0, 0, 48], sizes = [2, 8, 8], strides = [1, 1, 1]} : vector<2x8x96xf32> to vector<2x8x8xf32>
    %643 = arith.truncf %642 : vector<2x8x8xf32> to vector<2x8x8xbf16>
    %644 = vector.extract_strided_slice %599 {offsets = [0, 0, 80], sizes = [2, 8, 8], strides = [1, 1, 1]} : vector<2x8x96xf32> to vector<2x8x8xf32>
    %645 = arith.truncf %644 : vector<2x8x8xf32> to vector<2x8x8xbf16>
    "tpu.trace_start"() <{level = 10 : i32, message = "bqd,bkd->bqk"}> : () -> ()
    %cst_307 = arith.constant dense<0.000000e+00> : vector<2x8x8xf32>
    %646 = tpu.matmul %641, %643, %cst_307 {dimension_numbers = #tpu.dot_dimension_numbers<[2], [2], [1], [1], [0, 0, 0, 1, 1, 1], [0], [0]>} : vector<2x8x8xbf16>, vector<2x8x8xbf16>, vector<2x8x8xf32> -> vector<2x8x8xf32>
    "tpu.trace_stop"() : () -> ()
    %cst_308 = arith.constant dense<0xFF800000> : vector<2x8xf32>
    %647 = vector.multi_reduction <maximumf>, %646, %cst_308 [2] : vector<2x8x8xf32> to vector<2x8xf32>
    %648 = vector.shape_cast %647 : vector<2x8xf32> to vector<2x8x1xf32>
    %649 = vector.broadcast %648 : vector<2x8x1xf32> to vector<2x8x8xf32>
    %650 = arith.subf %646, %649 : vector<2x8x8xf32>
    %651 = math.exp %650 : vector<2x8x8xf32>
    %cst_309 = arith.constant dense<0.000000e+00> : vector<2x8xf32>
    %652 = vector.multi_reduction <add>, %651, %cst_309 [2] : vector<2x8x8xf32> to vector<2x8xf32>
    %653 = vector.shape_cast %652 : vector<2x8xf32> to vector<2x8x1xf32>
    %654 = tpu.reciprocal %653 {approx = true} : vector<2x8x1xf32> -> vector<2x8x1xf32>
    %655 = vector.broadcast %654 : vector<2x8x1xf32> to vector<2x8x8xf32>
    %656 = arith.mulf %651, %655 : vector<2x8x8xf32>
    %657 = arith.truncf %656 : vector<2x8x8xf32> to vector<2x8x8xbf16>
    "tpu.trace_start"() <{level = 10 : i32, message = "bqk,bkd->bqd"}> : () -> ()
    %cst_310 = arith.constant dense<0.000000e+00> : vector<2x8x8xf32>
    %658 = tpu.matmul %657, %645, %cst_310 {dimension_numbers = #tpu.dot_dimension_numbers<[2], [1], [1], [2], [0, 0, 0, 1, 1, 2], [0], [0]>} : vector<2x8x8xbf16>, vector<2x8x8xbf16>, vector<2x8x8xf32> -> vector<2x8x8xf32>
    "tpu.trace_stop"() : () -> ()
    %c0_311 = arith.constant 0 : index
    %c0_312 = arith.constant 0 : index
    %c16_313 = arith.constant 16 : index
    %659 = vector.load %arg21[%c0_311, %c0_312, %c16_313] : memref<2x8x32xf32, #tpu.memory_space<vmem>>, vector<2x8x8xf32>
    tpu.vector_store %arg21[%c0_311, %c0_312, %c16_313], %658 {strides = array<i32>} : memref<2x8x32xf32, #tpu.memory_space<vmem>>, vector<2x8x8xf32>,
    %660 = vector.extract_strided_slice %599 {offsets = [0, 0, 24], sizes = [2, 8, 8], strides = [1, 1, 1]} : vector<2x8x96xf32> to vector<2x8x8xf32>
    %661 = arith.truncf %660 : vector<2x8x8xf32> to vector<2x8x8xbf16>
    %662 = vector.extract_strided_slice %599 {offsets = [0, 0, 56], sizes = [2, 8, 8], strides = [1, 1, 1]} : vector<2x8x96xf32> to vector<2x8x8xf32>
    %663 = arith.truncf %662 : vector<2x8x8xf32> to vector<2x8x8xbf16>
    %664 = vector.extract_strided_slice %599 {offsets = [0, 0, 88], sizes = [2, 8, 8], strides = [1, 1, 1]} : vector<2x8x96xf32> to vector<2x8x8xf32>
    %665 = arith.truncf %664 : vector<2x8x8xf32> to vector<2x8x8xbf16>
    "tpu.trace_start"() <{level = 10 : i32, message = "bqd,bkd->bqk"}> : () -> ()
    %cst_314 = arith.constant dense<0.000000e+00> : vector<2x8x8xf32>
    %666 = tpu.matmul %661, %663, %cst_314 {dimension_numbers = #tpu.dot_dimension_numbers<[2], [2], [1], [1], [0, 0, 0, 1, 1, 1], [0], [0]>} : vector<2x8x8xbf16>, vector<2x8x8xbf16>, vector<2x8x8xf32> -> vector<2x8x8xf32>
    "tpu.trace_stop"() : () -> ()
    %cst_315 = arith.constant dense<0xFF800000> : vector<2x8xf32>
    %667 = vector.multi_reduction <maximumf>, %666, %cst_315 [2] : vector<2x8x8xf32> to vector<2x8xf32>
    %668 = vector.shape_cast %667 : vector<2x8xf32> to vector<2x8x1xf32>
    %669 = vector.broadcast %668 : vector<2x8x1xf32> to vector<2x8x8xf32>
    %670 = arith.subf %666, %669 : vector<2x8x8xf32>
    %671 = math.exp %670 : vector<2x8x8xf32>
    %cst_316 = arith.constant dense<0.000000e+00> : vector<2x8xf32>
    %672 = vector.multi_reduction <add>, %671, %cst_316 [2] : vector<2x8x8xf32> to vector<2x8xf32>
    %673 = vector.shape_cast %672 : vector<2x8xf32> to vector<2x8x1xf32>
    %674 = tpu.reciprocal %673 {approx = true} : vector<2x8x1xf32> -> vector<2x8x1xf32>
    %675 = vector.broadcast %674 : vector<2x8x1xf32> to vector<2x8x8xf32>
    %676 = arith.mulf %671, %675 : vector<2x8x8xf32>
    %677 = arith.truncf %676 : vector<2x8x8xf32> to vector<2x8x8xbf16>
    "tpu.trace_start"() <{level = 10 : i32, message = "bqk,bkd->bqd"}> : () -> ()
    %cst_317 = arith.constant dense<0.000000e+00> : vector<2x8x8xf32>
    %678 = tpu.matmul %677, %665, %cst_317 {dimension_numbers = #tpu.dot_dimension_numbers<[2], [1], [1], [2], [0, 0, 0, 1, 1, 2], [0], [0]>} : vector<2x8x8xbf16>, vector<2x8x8xbf16>, vector<2x8x8xf32> -> vector<2x8x8xf32>
    "tpu.trace_stop"() : () -> ()
    %c0_318 = arith.constant 0 : index
    %c0_319 = arith.constant 0 : index
    %c24_320 = arith.constant 24 : index
    %679 = vector.load %arg21[%c0_318, %c0_319, %c24_320] : memref<2x8x32xf32, #tpu.memory_space<vmem>>, vector<2x8x8xf32>
    tpu.vector_store %arg21[%c0_318, %c0_319, %c24_320], %678 {strides = array<i32>} : memref<2x8x32xf32, #tpu.memory_space<vmem>>, vector<2x8x8xf32>,
    %c0_321 = arith.constant 0 : index
    %c0_322 = arith.constant 0 : index
    %c0_323 = arith.constant 0 : index
    %680 = vector.load %arg21[%c0_321, %c0_322, %c0_323] : memref<2x8x32xf32, #tpu.memory_space<vmem>>, vector<2x8x32xf32>
    %681 = vector.shape_cast %680 : vector<2x8x32xf32> to vector<16x32xf32>
    %682 = arith.truncf %681 : vector<16x32xf32> to vector<16x32xbf16>
    %c3_324 = arith.constant 3 : index
    %c0_325 = arith.constant 0 : index
    %c0_326 = arith.constant 0 : index
    %683 = vector.load %arg9[%c3_324, %c0_325, %c0_326] : memref<6x32x32xbf16, #tpu.memory_space<vmem>>, vector<1x32x32xbf16>
    %684 = vector.shape_cast %683 : vector<1x32x32xbf16> to vector<32x32xbf16>
    %cst_327 = arith.constant dense<0.000000e+00> : vector<16x32xf32>
    %685 = tpu.matmul %682, %684, %cst_327 {dimension_numbers = #tpu.dot_dimension_numbers<[1], [0], [0], [1], [0, 0, 1, 1], [], []>} : vector<16x32xbf16>, vector<32x32xbf16>, vector<16x32xf32> -> vector<16x32xf32>
    %c3_328 = arith.constant 3 : index
    %c0_329 = arith.constant 0 : index
    %c0_330 = arith.constant 0 : index
    %686 = vector.load %arg10[%c3_328, %c0_329, %c0_330] : memref<6x1x32xf32, #tpu.memory_space<vmem>>, vector<1x1x32xf32>
    %687 = vector.shape_cast %686 : vector<1x1x32xf32> to vector<1x32xf32>
    %688 = vector.broadcast %687 : vector<1x32xf32> to vector<16x32xf32>
    %689 = arith.addf %685, %688 : vector<16x32xf32>
    %c3_331 = arith.constant 3 : index
    %c0_332 = arith.constant 0 : index
    %c0_333 = arith.constant 0 : index
    %690 = vector.load %arg11[%c3_331, %c0_332, %c0_333] : memref<6x2x32xf32, #tpu.memory_space<vmem>>, vector<1x2x32xf32>
    %691 = vector.shape_cast %690 : vector<1x2x32xf32> to vector<2x32xf32>
    %692 = arith.addf %590, %689 : vector<16x32xf32>
    %693 = vector.extract_strided_slice %691 {offsets = [0, 0], sizes = [1, 32], strides = [1, 1]} : vector<2x32xf32> to vector<1x32xf32>
    %694 = vector.extract_strided_slice %691 {offsets = [1, 0], sizes = [1, 32], strides = [1, 1]} : vector<2x32xf32> to vector<1x32xf32>
    %cst_334 = arith.constant dense<0.000000e+00> : vector<16xf32>
    %695 = vector.multi_reduction <add>, %692, %cst_334 [1] : vector<16x32xf32> to vector<16xf32>
    %696 = vector.shape_cast %695 : vector<16xf32> to vector<16x1xf32>
    %cst_335 = arith.constant 3.200000e+01 : f32
    %697 = vector.broadcast %cst_335 : f32 to vector<16x1xf32>
    %698 = arith.divf %696, %697 : vector<16x1xf32>
    %699 = vector.broadcast %698 : vector<16x1xf32> to vector<16x32xf32>
    %700 = arith.subf %692, %699 : vector<16x32xf32>
    %701 = arith.mulf %700, %700 : vector<16x32xf32>
    %cst_336 = arith.constant dense<0.000000e+00> : vector<16xf32>
    %702 = vector.multi_reduction <add>, %701, %cst_336 [1] : vector<16x32xf32> to vector<16xf32>
    %703 = vector.shape_cast %702 : vector<16xf32> to vector<16x1xf32>
    %cst_337 = arith.constant 3.200000e+01 : f32
    %704 = vector.broadcast %cst_337 : f32 to vector<16x1xf32>
    %705 = arith.divf %703, %704 : vector<16x1xf32>
    %cst_338 = arith.constant 9.99999974E-6 : f32
    %706 = vector.broadcast %cst_338 : f32 to vector<16x1xf32>
    %707 = arith.addf %705, %706 : vector<16x1xf32>
    %708 = math.rsqrt %707 : vector<16x1xf32>
    %709 = vector.broadcast %708 : vector<16x1xf32> to vector<16x32xf32>
    %710 = arith.mulf %700, %709 : vector<16x32xf32>
    %711 = vector.broadcast %693 : vector<1x32xf32> to vector<16x32xf32>
    %712 = arith.mulf %710, %711 : vector<16x32xf32>
    %713 = vector.broadcast %694 : vector<1x32xf32> to vector<16x32xf32>
    %714 = arith.addf %712, %713 : vector<16x32xf32>
    %715 = arith.truncf %714 : vector<16x32xf32> to vector<16x32xbf16>
    %c3_339 = arith.constant 3 : index
    %c0_340 = arith.constant 0 : index
    %c0_341 = arith.constant 0 : index
    %716 = vector.load %arg12[%c3_339, %c0_340, %c0_341] : memref<6x32x64xbf16, #tpu.memory_space<vmem>>, vector<1x32x64xbf16>
    %717 = vector.shape_cast %716 : vector<1x32x64xbf16> to vector<32x64xbf16>
    %cst_342 = arith.constant dense<0.000000e+00> : vector<16x64xf32>
    %718 = tpu.matmul %715, %717, %cst_342 {dimension_numbers = #tpu.dot_dimension_numbers<[1], [0], [0], [1], [0, 0, 1, 1], [], []>} : vector<16x32xbf16>, vector<32x64xbf16>, vector<16x64xf32> -> vector<16x64xf32>
    %c3_343 = arith.constant 3 : index
    %c0_344 = arith.constant 0 : index
    %c0_345 = arith.constant 0 : index
    %719 = vector.load %arg13[%c3_343, %c0_344, %c0_345] : memref<6x1x64xf32, #tpu.memory_space<vmem>>, vector<1x1x64xf32>
    %720 = vector.shape_cast %719 : vector<1x1x64xf32> to vector<1x64xf32>
    %721 = vector.broadcast %720 : vector<1x64xf32> to vector<16x64xf32>
    %722 = arith.addf %718, %721 : vector<16x64xf32>
    %cst_346 = arith.constant 5.000000e-01 : f32
    %723 = vector.broadcast %cst_346 : f32 to vector<16x64xf32>
    %724 = arith.mulf %723, %722 : vector<16x64xf32>
    %cst_347 = arith.constant 0.707106769 : f32
    %725 = vector.broadcast %cst_347 : f32 to vector<16x64xf32>
    %726 = arith.mulf %722, %725 : vector<16x64xf32>
    %727 = math.erf %726 : vector<16x64xf32>
    %cst_348 = arith.constant 1.000000e+00 : f32
    %728 = vector.broadcast %cst_348 : f32 to vector<16x64xf32>
    %729 = arith.addf %728, %727 : vector<16x64xf32>
    %730 = arith.mulf %724, %729 : vector<16x64xf32>
    %731 = arith.truncf %730 : vector<16x64xf32> to vector<16x64xbf16>
    %c3_349 = arith.constant 3 : index
    %c0_350 = arith.constant 0 : index
    %c0_351 = arith.constant 0 : index
    %732 = vector.load %arg14[%c3_349, %c0_350, %c0_351] : memref<6x64x32xbf16, #tpu.memory_space<vmem>>, vector<1x64x32xbf16>
    %733 = vector.shape_cast %732 : vector<1x64x32xbf16> to vector<64x32xbf16>
    %cst_352 = arith.constant dense<0.000000e+00> : vector<16x32xf32>
    %734 = tpu.matmul %731, %733, %cst_352 {dimension_numbers = #tpu.dot_dimension_numbers<[1], [0], [0], [1], [0, 0, 1, 1], [], []>} : vector<16x64xbf16>, vector<64x32xbf16>, vector<16x32xf32> -> vector<16x32xf32>
    %c3_353 = arith.constant 3 : index
    %c0_354 = arith.constant 0 : index
    %c0_355 = arith.constant 0 : index
    %735 = vector.load %arg15[%c3_353, %c0_354, %c0_355] : memref<6x1x32xf32, #tpu.memory_space<vmem>>, vector<1x1x32xf32>
    %736 = vector.shape_cast %735 : vector<1x1x32xf32> to vector<1x32xf32>
    %737 = vector.broadcast %736 : vector<1x32xf32> to vector<16x32xf32>
    %738 = arith.addf %734, %737 : vector<16x32xf32>
    %c3_356 = arith.constant 3 : index
    %c0_357 = arith.constant 0 : index
    %c0_358 = arith.constant 0 : index
    %739 = vector.load %arg16[%c3_356, %c0_357, %c0_358] : memref<6x2x32xf32, #tpu.memory_space<vmem>>, vector<1x2x32xf32>
    %740 = vector.shape_cast %739 : vector<1x2x32xf32> to vector<2x32xf32>
    %741 = arith.addf %714, %738 : vector<16x32xf32>
    %742 = vector.extract_strided_slice %740 {offsets = [0, 0], sizes = [1, 32], strides = [1, 1]} : vector<2x32xf32> to vector<1x32xf32>
    %743 = vector.extract_strided_slice %740 {offsets = [1, 0], sizes = [1, 32], strides = [1, 1]} : vector<2x32xf32> to vector<1x32xf32>
    %cst_359 = arith.constant dense<0.000000e+00> : vector<16xf32>
    %744 = vector.multi_reduction <add>, %741, %cst_359 [1] : vector<16x32xf32> to vector<16xf32>
    %745 = vector.shape_cast %744 : vector<16xf32> to vector<16x1xf32>
    %cst_360 = arith.constant 3.200000e+01 : f32
    %746 = vector.broadcast %cst_360 : f32 to vector<16x1xf32>
    %747 = arith.divf %745, %746 : vector<16x1xf32>
    %748 = vector.broadcast %747 : vector<16x1xf32> to vector<16x32xf32>
    %749 = arith.subf %741, %748 : vector<16x32xf32>
    %750 = arith.mulf %749, %749 : vector<16x32xf32>
    %cst_361 = arith.constant dense<0.000000e+00> : vector<16xf32>
    %751 = vector.multi_reduction <add>, %750, %cst_361 [1] : vector<16x32xf32> to vector<16xf32>
    %752 = vector.shape_cast %751 : vector<16xf32> to vector<16x1xf32>
    %cst_362 = arith.constant 3.200000e+01 : f32
    %753 = vector.broadcast %cst_362 : f32 to vector<16x1xf32>
    %754 = arith.divf %752, %753 : vector<16x1xf32>
    %cst_363 = arith.constant 9.99999974E-6 : f32
    %755 = vector.broadcast %cst_363 : f32 to vector<16x1xf32>
    %756 = arith.addf %754, %755 : vector<16x1xf32>
    %757 = math.rsqrt %756 : vector<16x1xf32>
    %758 = vector.broadcast %757 : vector<16x1xf32> to vector<16x32xf32>
    %759 = arith.mulf %749, %758 : vector<16x32xf32>
    %760 = vector.broadcast %742 : vector<1x32xf32> to vector<16x32xf32>
    %761 = arith.mulf %759, %760 : vector<16x32xf32>
    %762 = vector.broadcast %743 : vector<1x32xf32> to vector<16x32xf32>
    %763 = arith.addf %761, %762 : vector<16x32xf32>
    %764 = arith.truncf %763 : vector<16x32xf32> to vector<16x32xbf16>
    %c4 = arith.constant 4 : index
    %c0_364 = arith.constant 0 : index
    %c0_365 = arith.constant 0 : index
    %765 = vector.load %arg7[%c4, %c0_364, %c0_365] : memref<6x32x96xbf16, #tpu.memory_space<vmem>>, vector<1x32x96xbf16>
    %766 = vector.shape_cast %765 : vector<1x32x96xbf16> to vector<32x96xbf16>
    %cst_366 = arith.constant dense<0.000000e+00> : vector<16x96xf32>
    %767 = tpu.matmul %764, %766, %cst_366 {dimension_numbers = #tpu.dot_dimension_numbers<[1], [0], [0], [1], [0, 0, 1, 1], [], []>} : vector<16x32xbf16>, vector<32x96xbf16>, vector<16x96xf32> -> vector<16x96xf32>
    %c4_367 = arith.constant 4 : index
    %c0_368 = arith.constant 0 : index
    %c0_369 = arith.constant 0 : index
    %768 = vector.load %arg8[%c4_367, %c0_368, %c0_369] : memref<6x1x96xf32, #tpu.memory_space<vmem>>, vector<1x1x96xf32>
    %769 = vector.shape_cast %768 : vector<1x1x96xf32> to vector<1x96xf32>
    %770 = vector.broadcast %769 : vector<1x96xf32> to vector<16x96xf32>
    %771 = arith.addf %767, %770 : vector<16x96xf32>
    %772 = vector.shape_cast %771 : vector<16x96xf32> to vector<2x8x96xf32>
    %773 = vector.extract_strided_slice %772 {offsets = [0, 0, 0], sizes = [2, 8, 8], strides = [1, 1, 1]} : vector<2x8x96xf32> to vector<2x8x8xf32>
    %774 = arith.truncf %773 : vector<2x8x8xf32> to vector<2x8x8xbf16>
    %775 = vector.extract_strided_slice %772 {offsets = [0, 0, 32], sizes = [2, 8, 8], strides = [1, 1, 1]} : vector<2x8x96xf32> to vector<2x8x8xf32>
    %776 = arith.truncf %775 : vector<2x8x8xf32> to vector<2x8x8xbf16>
    %777 = vector.extract_strided_slice %772 {offsets = [0, 0, 64], sizes = [2, 8, 8], strides = [1, 1, 1]} : vector<2x8x96xf32> to vector<2x8x8xf32>
    %778 = arith.truncf %777 : vector<2x8x8xf32> to vector<2x8x8xbf16>
    "tpu.trace_start"() <{level = 10 : i32, message = "bqd,bkd->bqk"}> : () -> ()
    %cst_370 = arith.constant dense<0.000000e+00> : vector<2x8x8xf32>
    %779 = tpu.matmul %774, %776, %cst_370 {dimension_numbers = #tpu.dot_dimension_numbers<[2], [2], [1], [1], [0, 0, 0, 1, 1, 1], [0], [0]>} : vector<2x8x8xbf16>, vector<2x8x8xbf16>, vector<2x8x8xf32> -> vector<2x8x8xf32>
    "tpu.trace_stop"() : () -> ()
    %cst_371 = arith.constant dense<0xFF800000> : vector<2x8xf32>
    %780 = vector.multi_reduction <maximumf>, %779, %cst_371 [2] : vector<2x8x8xf32> to vector<2x8xf32>
    %781 = vector.shape_cast %780 : vector<2x8xf32> to vector<2x8x1xf32>
    %782 = vector.broadcast %781 : vector<2x8x1xf32> to vector<2x8x8xf32>
    %783 = arith.subf %779, %782 : vector<2x8x8xf32>
    %784 = math.exp %783 : vector<2x8x8xf32>
    %cst_372 = arith.constant dense<0.000000e+00> : vector<2x8xf32>
    %785 = vector.multi_reduction <add>, %784, %cst_372 [2] : vector<2x8x8xf32> to vector<2x8xf32>
    %786 = vector.shape_cast %785 : vector<2x8xf32> to vector<2x8x1xf32>
    %787 = tpu.reciprocal %786 {approx = true} : vector<2x8x1xf32> -> vector<2x8x1xf32>
    %788 = vector.broadcast %787 : vector<2x8x1xf32> to vector<2x8x8xf32>
    %789 = arith.mulf %784, %788 : vector<2x8x8xf32>
    %790 = arith.truncf %789 : vector<2x8x8xf32> to vector<2x8x8xbf16>
    "tpu.trace_start"() <{level = 10 : i32, message = "bqk,bkd->bqd"}> : () -> ()
    %cst_373 = arith.constant dense<0.000000e+00> : vector<2x8x8xf32>
    %791 = tpu.matmul %790, %778, %cst_373 {dimension_numbers = #tpu.dot_dimension_numbers<[2], [1], [1], [2], [0, 0, 0, 1, 1, 2], [0], [0]>} : vector<2x8x8xbf16>, vector<2x8x8xbf16>, vector<2x8x8xf32> -> vector<2x8x8xf32>
    "tpu.trace_stop"() : () -> ()
    %c0_374 = arith.constant 0 : index
    %c0_375 = arith.constant 0 : index
    %c0_376 = arith.constant 0 : index
    %792 = vector.load %arg21[%c0_374, %c0_375, %c0_376] : memref<2x8x32xf32, #tpu.memory_space<vmem>>, vector<2x8x8xf32>
    tpu.vector_store %arg21[%c0_374, %c0_375, %c0_376], %791 {strides = array<i32>} : memref<2x8x32xf32, #tpu.memory_space<vmem>>, vector<2x8x8xf32>,
    %793 = vector.extract_strided_slice %772 {offsets = [0, 0, 8], sizes = [2, 8, 8], strides = [1, 1, 1]} : vector<2x8x96xf32> to vector<2x8x8xf32>
    %794 = arith.truncf %793 : vector<2x8x8xf32> to vector<2x8x8xbf16>
    %795 = vector.extract_strided_slice %772 {offsets = [0, 0, 40], sizes = [2, 8, 8], strides = [1, 1, 1]} : vector<2x8x96xf32> to vector<2x8x8xf32>
    %796 = arith.truncf %795 : vector<2x8x8xf32> to vector<2x8x8xbf16>
    %797 = vector.extract_strided_slice %772 {offsets = [0, 0, 72], sizes = [2, 8, 8], strides = [1, 1, 1]} : vector<2x8x96xf32> to vector<2x8x8xf32>
    %798 = arith.truncf %797 : vector<2x8x8xf32> to vector<2x8x8xbf16>
    "tpu.trace_start"() <{level = 10 : i32, message = "bqd,bkd->bqk"}> : () -> ()
    %cst_377 = arith.constant dense<0.000000e+00> : vector<2x8x8xf32>
    %799 = tpu.matmul %794, %796, %cst_377 {dimension_numbers = #tpu.dot_dimension_numbers<[2], [2], [1], [1], [0, 0, 0, 1, 1, 1], [0], [0]>} : vector<2x8x8xbf16>, vector<2x8x8xbf16>, vector<2x8x8xf32> -> vector<2x8x8xf32>
    "tpu.trace_stop"() : () -> ()
    %cst_378 = arith.constant dense<0xFF800000> : vector<2x8xf32>
    %800 = vector.multi_reduction <maximumf>, %799, %cst_378 [2] : vector<2x8x8xf32> to vector<2x8xf32>
    %801 = vector.shape_cast %800 : vector<2x8xf32> to vector<2x8x1xf32>
    %802 = vector.broadcast %801 : vector<2x8x1xf32> to vector<2x8x8xf32>
    %803 = arith.subf %799, %802 : vector<2x8x8xf32>
    %804 = math.exp %803 : vector<2x8x8xf32>
    %cst_379 = arith.constant dense<0.000000e+00> : vector<2x8xf32>
    %805 = vector.multi_reduction <add>, %804, %cst_379 [2] : vector<2x8x8xf32> to vector<2x8xf32>
    %806 = vector.shape_cast %805 : vector<2x8xf32> to vector<2x8x1xf32>
    %807 = tpu.reciprocal %806 {approx = true} : vector<2x8x1xf32> -> vector<2x8x1xf32>
    %808 = vector.broadcast %807 : vector<2x8x1xf32> to vector<2x8x8xf32>
    %809 = arith.mulf %804, %808 : vector<2x8x8xf32>
    %810 = arith.truncf %809 : vector<2x8x8xf32> to vector<2x8x8xbf16>
    "tpu.trace_start"() <{level = 10 : i32, message = "bqk,bkd->bqd"}> : () -> ()
    %cst_380 = arith.constant dense<0.000000e+00> : vector<2x8x8xf32>
    %811 = tpu.matmul %810, %798, %cst_380 {dimension_numbers = #tpu.dot_dimension_numbers<[2], [1], [1], [2], [0, 0, 0, 1, 1, 2], [0], [0]>} : vector<2x8x8xbf16>, vector<2x8x8xbf16>, vector<2x8x8xf32> -> vector<2x8x8xf32>
    "tpu.trace_stop"() : () -> ()
    %c0_381 = arith.constant 0 : index
    %c0_382 = arith.constant 0 : index
    %c8_383 = arith.constant 8 : index
    %812 = vector.load %arg21[%c0_381, %c0_382, %c8_383] : memref<2x8x32xf32, #tpu.memory_space<vmem>>, vector<2x8x8xf32>
    tpu.vector_store %arg21[%c0_381, %c0_382, %c8_383], %811 {strides = array<i32>} : memref<2x8x32xf32, #tpu.memory_space<vmem>>, vector<2x8x8xf32>,
    %813 = vector.extract_strided_slice %772 {offsets = [0, 0, 16], sizes = [2, 8, 8], strides = [1, 1, 1]} : vector<2x8x96xf32> to vector<2x8x8xf32>
    %814 = arith.truncf %813 : vector<2x8x8xf32> to vector<2x8x8xbf16>
    %815 = vector.extract_strided_slice %772 {offsets = [0, 0, 48], sizes = [2, 8, 8], strides = [1, 1, 1]} : vector<2x8x96xf32> to vector<2x8x8xf32>
    %816 = arith.truncf %815 : vector<2x8x8xf32> to vector<2x8x8xbf16>
    %817 = vector.extract_strided_slice %772 {offsets = [0, 0, 80], sizes = [2, 8, 8], strides = [1, 1, 1]} : vector<2x8x96xf32> to vector<2x8x8xf32>
    %818 = arith.truncf %817 : vector<2x8x8xf32> to vector<2x8x8xbf16>
    "tpu.trace_start"() <{level = 10 : i32, message = "bqd,bkd->bqk"}> : () -> ()
    %cst_384 = arith.constant dense<0.000000e+00> : vector<2x8x8xf32>
    %819 = tpu.matmul %814, %816, %cst_384 {dimension_numbers = #tpu.dot_dimension_numbers<[2], [2], [1], [1], [0, 0, 0, 1, 1, 1], [0], [0]>} : vector<2x8x8xbf16>, vector<2x8x8xbf16>, vector<2x8x8xf32> -> vector<2x8x8xf32>
    "tpu.trace_stop"() : () -> ()
    %cst_385 = arith.constant dense<0xFF800000> : vector<2x8xf32>
    %820 = vector.multi_reduction <maximumf>, %819, %cst_385 [2] : vector<2x8x8xf32> to vector<2x8xf32>
    %821 = vector.shape_cast %820 : vector<2x8xf32> to vector<2x8x1xf32>
    %822 = vector.broadcast %821 : vector<2x8x1xf32> to vector<2x8x8xf32>
    %823 = arith.subf %819, %822 : vector<2x8x8xf32>
    %824 = math.exp %823 : vector<2x8x8xf32>
    %cst_386 = arith.constant dense<0.000000e+00> : vector<2x8xf32>
    %825 = vector.multi_reduction <add>, %824, %cst_386 [2] : vector<2x8x8xf32> to vector<2x8xf32>
    %826 = vector.shape_cast %825 : vector<2x8xf32> to vector<2x8x1xf32>
    %827 = tpu.reciprocal %826 {approx = true} : vector<2x8x1xf32> -> vector<2x8x1xf32>
    %828 = vector.broadcast %827 : vector<2x8x1xf32> to vector<2x8x8xf32>
    %829 = arith.mulf %824, %828 : vector<2x8x8xf32>
    %830 = arith.truncf %829 : vector<2x8x8xf32> to vector<2x8x8xbf16>
    "tpu.trace_start"() <{level = 10 : i32, message = "bqk,bkd->bqd"}> : () -> ()
    %cst_387 = arith.constant dense<0.000000e+00> : vector<2x8x8xf32>
    %831 = tpu.matmul %830, %818, %cst_387 {dimension_numbers = #tpu.dot_dimension_numbers<[2], [1], [1], [2], [0, 0, 0, 1, 1, 2], [0], [0]>} : vector<2x8x8xbf16>, vector<2x8x8xbf16>, vector<2x8x8xf32> -> vector<2x8x8xf32>
    "tpu.trace_stop"() : () -> ()
    %c0_388 = arith.constant 0 : index
    %c0_389 = arith.constant 0 : index
    %c16_390 = arith.constant 16 : index
    %832 = vector.load %arg21[%c0_388, %c0_389, %c16_390] : memref<2x8x32xf32, #tpu.memory_space<vmem>>, vector<2x8x8xf32>
    tpu.vector_store %arg21[%c0_388, %c0_389, %c16_390], %831 {strides = array<i32>} : memref<2x8x32xf32, #tpu.memory_space<vmem>>, vector<2x8x8xf32>,
    %833 = vector.extract_strided_slice %772 {offsets = [0, 0, 24], sizes = [2, 8, 8], strides = [1, 1, 1]} : vector<2x8x96xf32> to vector<2x8x8xf32>
    %834 = arith.truncf %833 : vector<2x8x8xf32> to vector<2x8x8xbf16>
    %835 = vector.extract_strided_slice %772 {offsets = [0, 0, 56], sizes = [2, 8, 8], strides = [1, 1, 1]} : vector<2x8x96xf32> to vector<2x8x8xf32>
    %836 = arith.truncf %835 : vector<2x8x8xf32> to vector<2x8x8xbf16>
    %837 = vector.extract_strided_slice %772 {offsets = [0, 0, 88], sizes = [2, 8, 8], strides = [1, 1, 1]} : vector<2x8x96xf32> to vector<2x8x8xf32>
    %838 = arith.truncf %837 : vector<2x8x8xf32> to vector<2x8x8xbf16>
    "tpu.trace_start"() <{level = 10 : i32, message = "bqd,bkd->bqk"}> : () -> ()
    %cst_391 = arith.constant dense<0.000000e+00> : vector<2x8x8xf32>
    %839 = tpu.matmul %834, %836, %cst_391 {dimension_numbers = #tpu.dot_dimension_numbers<[2], [2], [1], [1], [0, 0, 0, 1, 1, 1], [0], [0]>} : vector<2x8x8xbf16>, vector<2x8x8xbf16>, vector<2x8x8xf32> -> vector<2x8x8xf32>
    "tpu.trace_stop"() : () -> ()
    %cst_392 = arith.constant dense<0xFF800000> : vector<2x8xf32>
    %840 = vector.multi_reduction <maximumf>, %839, %cst_392 [2] : vector<2x8x8xf32> to vector<2x8xf32>
    %841 = vector.shape_cast %840 : vector<2x8xf32> to vector<2x8x1xf32>
    %842 = vector.broadcast %841 : vector<2x8x1xf32> to vector<2x8x8xf32>
    %843 = arith.subf %839, %842 : vector<2x8x8xf32>
    %844 = math.exp %843 : vector<2x8x8xf32>
    %cst_393 = arith.constant dense<0.000000e+00> : vector<2x8xf32>
    %845 = vector.multi_reduction <add>, %844, %cst_393 [2] : vector<2x8x8xf32> to vector<2x8xf32>
    %846 = vector.shape_cast %845 : vector<2x8xf32> to vector<2x8x1xf32>
    %847 = tpu.reciprocal %846 {approx = true} : vector<2x8x1xf32> -> vector<2x8x1xf32>
    %848 = vector.broadcast %847 : vector<2x8x1xf32> to vector<2x8x8xf32>
    %849 = arith.mulf %844, %848 : vector<2x8x8xf32>
    %850 = arith.truncf %849 : vector<2x8x8xf32> to vector<2x8x8xbf16>
    "tpu.trace_start"() <{level = 10 : i32, message = "bqk,bkd->bqd"}> : () -> ()
    %cst_394 = arith.constant dense<0.000000e+00> : vector<2x8x8xf32>
    %851 = tpu.matmul %850, %838, %cst_394 {dimension_numbers = #tpu.dot_dimension_numbers<[2], [1], [1], [2], [0, 0, 0, 1, 1, 2], [0], [0]>} : vector<2x8x8xbf16>, vector<2x8x8xbf16>, vector<2x8x8xf32> -> vector<2x8x8xf32>
    "tpu.trace_stop"() : () -> ()
    %c0_395 = arith.constant 0 : index
    %c0_396 = arith.constant 0 : index
    %c24_397 = arith.constant 24 : index
    %852 = vector.load %arg21[%c0_395, %c0_396, %c24_397] : memref<2x8x32xf32, #tpu.memory_space<vmem>>, vector<2x8x8xf32>
    tpu.vector_store %arg21[%c0_395, %c0_396, %c24_397], %851 {strides = array<i32>} : memref<2x8x32xf32, #tpu.memory_space<vmem>>, vector<2x8x8xf32>,
    %c0_398 = arith.constant 0 : index
    %c0_399 = arith.constant 0 : index
    %c0_400 = arith.constant 0 : index
    %853 = vector.load %arg21[%c0_398, %c0_399, %c0_400] : memref<2x8x32xf32, #tpu.memory_space<vmem>>, vector<2x8x32xf32>
    %854 = vector.shape_cast %853 : vector<2x8x32xf32> to vector<16x32xf32>
    %855 = arith.truncf %854 : vector<16x32xf32> to vector<16x32xbf16>
    %c4_401 = arith.constant 4 : index
    %c0_402 = arith.constant 0 : index
    %c0_403 = arith.constant 0 : index
    %856 = vector.load %arg9[%c4_401, %c0_402, %c0_403] : memref<6x32x32xbf16, #tpu.memory_space<vmem>>, vector<1x32x32xbf16>
    %857 = vector.shape_cast %856 : vector<1x32x32xbf16> to vector<32x32xbf16>
    %cst_404 = arith.constant dense<0.000000e+00> : vector<16x32xf32>
    %858 = tpu.matmul %855, %857, %cst_404 {dimension_numbers = #tpu.dot_dimension_numbers<[1], [0], [0], [1], [0, 0, 1, 1], [], []>} : vector<16x32xbf16>, vector<32x32xbf16>, vector<16x32xf32> -> vector<16x32xf32>
    %c4_405 = arith.constant 4 : index
    %c0_406 = arith.constant 0 : index
    %c0_407 = arith.constant 0 : index
    %859 = vector.load %arg10[%c4_405, %c0_406, %c0_407] : memref<6x1x32xf32, #tpu.memory_space<vmem>>, vector<1x1x32xf32>
    %860 = vector.shape_cast %859 : vector<1x1x32xf32> to vector<1x32xf32>
    %861 = vector.broadcast %860 : vector<1x32xf32> to vector<16x32xf32>
    %862 = arith.addf %858, %861 : vector<16x32xf32>
    %c4_408 = arith.constant 4 : index
    %c0_409 = arith.constant 0 : index
    %c0_410 = arith.constant 0 : index
    %863 = vector.load %arg11[%c4_408, %c0_409, %c0_410] : memref<6x2x32xf32, #tpu.memory_space<vmem>>, vector<1x2x32xf32>
    %864 = vector.shape_cast %863 : vector<1x2x32xf32> to vector<2x32xf32>
    %865 = arith.addf %763, %862 : vector<16x32xf32>
    %866 = vector.extract_strided_slice %864 {offsets = [0, 0], sizes = [1, 32], strides = [1, 1]} : vector<2x32xf32> to vector<1x32xf32>
    %867 = vector.extract_strided_slice %864 {offsets = [1, 0], sizes = [1, 32], strides = [1, 1]} : vector<2x32xf32> to vector<1x32xf32>
    %cst_411 = arith.constant dense<0.000000e+00> : vector<16xf32>
    %868 = vector.multi_reduction <add>, %865, %cst_411 [1] : vector<16x32xf32> to vector<16xf32>
    %869 = vector.shape_cast %868 : vector<16xf32> to vector<16x1xf32>
    %cst_412 = arith.constant 3.200000e+01 : f32
    %870 = vector.broadcast %cst_412 : f32 to vector<16x1xf32>
    %871 = arith.divf %869, %870 : vector<16x1xf32>
    %872 = vector.broadcast %871 : vector<16x1xf32> to vector<16x32xf32>
    %873 = arith.subf %865, %872 : vector<16x32xf32>
    %874 = arith.mulf %873, %873 : vector<16x32xf32>
    %cst_413 = arith.constant dense<0.000000e+00> : vector<16xf32>
    %875 = vector.multi_reduction <add>, %874, %cst_413 [1] : vector<16x32xf32> to vector<16xf32>
    %876 = vector.shape_cast %875 : vector<16xf32> to vector<16x1xf32>
    %cst_414 = arith.constant 3.200000e+01 : f32
    %877 = vector.broadcast %cst_414 : f32 to vector<16x1xf32>
    %878 = arith.divf %876, %877 : vector<16x1xf32>
    %cst_415 = arith.constant 9.99999974E-6 : f32
    %879 = vector.broadcast %cst_415 : f32 to vector<16x1xf32>
    %880 = arith.addf %878, %879 : vector<16x1xf32>
    %881 = math.rsqrt %880 : vector<16x1xf32>
    %882 = vector.broadcast %881 : vector<16x1xf32> to vector<16x32xf32>
    %883 = arith.mulf %873, %882 : vector<16x32xf32>
    %884 = vector.broadcast %866 : vector<1x32xf32> to vector<16x32xf32>
    %885 = arith.mulf %883, %884 : vector<16x32xf32>
    %886 = vector.broadcast %867 : vector<1x32xf32> to vector<16x32xf32>
    %887 = arith.addf %885, %886 : vector<16x32xf32>
    %888 = arith.truncf %887 : vector<16x32xf32> to vector<16x32xbf16>
    %c4_416 = arith.constant 4 : index
    %c0_417 = arith.constant 0 : index
    %c0_418 = arith.constant 0 : index
    %889 = vector.load %arg12[%c4_416, %c0_417, %c0_418] : memref<6x32x64xbf16, #tpu.memory_space<vmem>>, vector<1x32x64xbf16>
    %890 = vector.shape_cast %889 : vector<1x32x64xbf16> to vector<32x64xbf16>
    %cst_419 = arith.constant dense<0.000000e+00> : vector<16x64xf32>
    %891 = tpu.matmul %888, %890, %cst_419 {dimension_numbers = #tpu.dot_dimension_numbers<[1], [0], [0], [1], [0, 0, 1, 1], [], []>} : vector<16x32xbf16>, vector<32x64xbf16>, vector<16x64xf32> -> vector<16x64xf32>
    %c4_420 = arith.constant 4 : index
    %c0_421 = arith.constant 0 : index
    %c0_422 = arith.constant 0 : index
    %892 = vector.load %arg13[%c4_420, %c0_421, %c0_422] : memref<6x1x64xf32, #tpu.memory_space<vmem>>, vector<1x1x64xf32>
    %893 = vector.shape_cast %892 : vector<1x1x64xf32> to vector<1x64xf32>
    %894 = vector.broadcast %893 : vector<1x64xf32> to vector<16x64xf32>
    %895 = arith.addf %891, %894 : vector<16x64xf32>
    %cst_423 = arith.constant 5.000000e-01 : f32
    %896 = vector.broadcast %cst_423 : f32 to vector<16x64xf32>
    %897 = arith.mulf %896, %895 : vector<16x64xf32>
    %cst_424 = arith.constant 0.707106769 : f32
    %898 = vector.broadcast %cst_424 : f32 to vector<16x64xf32>
    %899 = arith.mulf %895, %898 : vector<16x64xf32>
    %900 = math.erf %899 : vector<16x64xf32>
    %cst_425 = arith.constant 1.000000e+00 : f32
    %901 = vector.broadcast %cst_425 : f32 to vector<16x64xf32>
    %902 = arith.addf %901, %900 : vector<16x64xf32>
    %903 = arith.mulf %897, %902 : vector<16x64xf32>
    %904 = arith.truncf %903 : vector<16x64xf32> to vector<16x64xbf16>
    %c4_426 = arith.constant 4 : index
    %c0_427 = arith.constant 0 : index
    %c0_428 = arith.constant 0 : index
    %905 = vector.load %arg14[%c4_426, %c0_427, %c0_428] : memref<6x64x32xbf16, #tpu.memory_space<vmem>>, vector<1x64x32xbf16>
    %906 = vector.shape_cast %905 : vector<1x64x32xbf16> to vector<64x32xbf16>
    %cst_429 = arith.constant dense<0.000000e+00> : vector<16x32xf32>
    %907 = tpu.matmul %904, %906, %cst_429 {dimension_numbers = #tpu.dot_dimension_numbers<[1], [0], [0], [1], [0, 0, 1, 1], [], []>} : vector<16x64xbf16>, vector<64x32xbf16>, vector<16x32xf32> -> vector<16x32xf32>
    %c4_430 = arith.constant 4 : index
    %c0_431 = arith.constant 0 : index
    %c0_432 = arith.constant 0 : index
    %908 = vector.load %arg15[%c4_430, %c0_431, %c0_432] : memref<6x1x32xf32, #tpu.memory_space<vmem>>, vector<1x1x32xf32>
    %909 = vector.shape_cast %908 : vector<1x1x32xf32> to vector<1x32xf32>
    %910 = vector.broadcast %909 : vector<1x32xf32> to vector<16x32xf32>
    %911 = arith.addf %907, %910 : vector<16x32xf32>
    %c4_433 = arith.constant 4 : index
    %c0_434 = arith.constant 0 : index
    %c0_435 = arith.constant 0 : index
    %912 = vector.load %arg16[%c4_433, %c0_434, %c0_435] : memref<6x2x32xf32, #tpu.memory_space<vmem>>, vector<1x2x32xf32>
    %913 = vector.shape_cast %912 : vector<1x2x32xf32> to vector<2x32xf32>
    %914 = arith.addf %887, %911 : vector<16x32xf32>
    %915 = vector.extract_strided_slice %913 {offsets = [0, 0], sizes = [1, 32], strides = [1, 1]} : vector<2x32xf32> to vector<1x32xf32>
    %916 = vector.extract_strided_slice %913 {offsets = [1, 0], sizes = [1, 32], strides = [1, 1]} : vector<2x32xf32> to vector<1x32xf32>
    %cst_436 = arith.constant dense<0.000000e+00> : vector<16xf32>
    %917 = vector.multi_reduction <add>, %914, %cst_436 [1] : vector<16x32xf32> to vector<16xf32>
    %918 = vector.shape_cast %917 : vector<16xf32> to vector<16x1xf32>
    %cst_437 = arith.constant 3.200000e+01 : f32
    %919 = vector.broadcast %cst_437 : f32 to vector<16x1xf32>
    %920 = arith.divf %918, %919 : vector<16x1xf32>
    %921 = vector.broadcast %920 : vector<16x1xf32> to vector<16x32xf32>
    %922 = arith.subf %914, %921 : vector<16x32xf32>
    %923 = arith.mulf %922, %922 : vector<16x32xf32>
    %cst_438 = arith.constant dense<0.000000e+00> : vector<16xf32>
    %924 = vector.multi_reduction <add>, %923, %cst_438 [1] : vector<16x32xf32> to vector<16xf32>
    %925 = vector.shape_cast %924 : vector<16xf32> to vector<16x1xf32>
    %cst_439 = arith.constant 3.200000e+01 : f32
    %926 = vector.broadcast %cst_439 : f32 to vector<16x1xf32>
    %927 = arith.divf %925, %926 : vector<16x1xf32>
    %cst_440 = arith.constant 9.99999974E-6 : f32
    %928 = vector.broadcast %cst_440 : f32 to vector<16x1xf32>
    %929 = arith.addf %927, %928 : vector<16x1xf32>
    %930 = math.rsqrt %929 : vector<16x1xf32>
    %931 = vector.broadcast %930 : vector<16x1xf32> to vector<16x32xf32>
    %932 = arith.mulf %922, %931 : vector<16x32xf32>
    %933 = vector.broadcast %915 : vector<1x32xf32> to vector<16x32xf32>
    %934 = arith.mulf %932, %933 : vector<16x32xf32>
    %935 = vector.broadcast %916 : vector<1x32xf32> to vector<16x32xf32>
    %936 = arith.addf %934, %935 : vector<16x32xf32>
    %937 = arith.truncf %936 : vector<16x32xf32> to vector<16x32xbf16>
    %c5 = arith.constant 5 : index
    %c0_441 = arith.constant 0 : index
    %c0_442 = arith.constant 0 : index
    %938 = vector.load %arg7[%c5, %c0_441, %c0_442] : memref<6x32x96xbf16, #tpu.memory_space<vmem>>, vector<1x32x96xbf16>
    %939 = vector.shape_cast %938 : vector<1x32x96xbf16> to vector<32x96xbf16>
    %cst_443 = arith.constant dense<0.000000e+00> : vector<16x96xf32>
    %940 = tpu.matmul %937, %939, %cst_443 {dimension_numbers = #tpu.dot_dimension_numbers<[1], [0], [0], [1], [0, 0, 1, 1], [], []>} : vector<16x32xbf16>, vector<32x96xbf16>, vector<16x96xf32> -> vector<16x96xf32>
    %c5_444 = arith.constant 5 : index
    %c0_445 = arith.constant 0 : index
    %c0_446 = arith.constant 0 : index
    %941 = vector.load %arg8[%c5_444, %c0_445, %c0_446] : memref<6x1x96xf32, #tpu.memory_space<vmem>>, vector<1x1x96xf32>
    %942 = vector.shape_cast %941 : vector<1x1x96xf32> to vector<1x96xf32>
    %943 = vector.broadcast %942 : vector<1x96xf32> to vector<16x96xf32>
    %944 = arith.addf %940, %943 : vector<16x96xf32>
    %945 = vector.shape_cast %944 : vector<16x96xf32> to vector<2x8x96xf32>
    %946 = vector.extract_strided_slice %945 {offsets = [0, 0, 0], sizes = [2, 8, 8], strides = [1, 1, 1]} : vector<2x8x96xf32> to vector<2x8x8xf32>
    %947 = arith.truncf %946 : vector<2x8x8xf32> to vector<2x8x8xbf16>
    %948 = vector.extract_strided_slice %945 {offsets = [0, 0, 32], sizes = [2, 8, 8], strides = [1, 1, 1]} : vector<2x8x96xf32> to vector<2x8x8xf32>
    %949 = arith.truncf %948 : vector<2x8x8xf32> to vector<2x8x8xbf16>
    %950 = vector.extract_strided_slice %945 {offsets = [0, 0, 64], sizes = [2, 8, 8], strides = [1, 1, 1]} : vector<2x8x96xf32> to vector<2x8x8xf32>
    %951 = arith.truncf %950 : vector<2x8x8xf32> to vector<2x8x8xbf16>
    "tpu.trace_start"() <{level = 10 : i32, message = "bqd,bkd->bqk"}> : () -> ()
    %cst_447 = arith.constant dense<0.000000e+00> : vector<2x8x8xf32>
    %952 = tpu.matmul %947, %949, %cst_447 {dimension_numbers = #tpu.dot_dimension_numbers<[2], [2], [1], [1], [0, 0, 0, 1, 1, 1], [0], [0]>} : vector<2x8x8xbf16>, vector<2x8x8xbf16>, vector<2x8x8xf32> -> vector<2x8x8xf32>
    "tpu.trace_stop"() : () -> ()
    %cst_448 = arith.constant dense<0xFF800000> : vector<2x8xf32>
    %953 = vector.multi_reduction <maximumf>, %952, %cst_448 [2] : vector<2x8x8xf32> to vector<2x8xf32>
    %954 = vector.shape_cast %953 : vector<2x8xf32> to vector<2x8x1xf32>
    %955 = vector.broadcast %954 : vector<2x8x1xf32> to vector<2x8x8xf32>
    %956 = arith.subf %952, %955 : vector<2x8x8xf32>
    %957 = math.exp %956 : vector<2x8x8xf32>
    %cst_449 = arith.constant dense<0.000000e+00> : vector<2x8xf32>
    %958 = vector.multi_reduction <add>, %957, %cst_449 [2] : vector<2x8x8xf32> to vector<2x8xf32>
    %959 = vector.shape_cast %958 : vector<2x8xf32> to vector<2x8x1xf32>
    %960 = tpu.reciprocal %959 {approx = true} : vector<2x8x1xf32> -> vector<2x8x1xf32>
    %961 = vector.broadcast %960 : vector<2x8x1xf32> to vector<2x8x8xf32>
    %962 = arith.mulf %957, %961 : vector<2x8x8xf32>
    %963 = arith.truncf %962 : vector<2x8x8xf32> to vector<2x8x8xbf16>
    "tpu.trace_start"() <{level = 10 : i32, message = "bqk,bkd->bqd"}> : () -> ()
    %cst_450 = arith.constant dense<0.000000e+00> : vector<2x8x8xf32>
    %964 = tpu.matmul %963, %951, %cst_450 {dimension_numbers = #tpu.dot_dimension_numbers<[2], [1], [1], [2], [0, 0, 0, 1, 1, 2], [0], [0]>} : vector<2x8x8xbf16>, vector<2x8x8xbf16>, vector<2x8x8xf32> -> vector<2x8x8xf32>
    "tpu.trace_stop"() : () -> ()
    %c0_451 = arith.constant 0 : index
    %c0_452 = arith.constant 0 : index
    %c0_453 = arith.constant 0 : index
    %965 = vector.load %arg21[%c0_451, %c0_452, %c0_453] : memref<2x8x32xf32, #tpu.memory_space<vmem>>, vector<2x8x8xf32>
    tpu.vector_store %arg21[%c0_451, %c0_452, %c0_453], %964 {strides = array<i32>} : memref<2x8x32xf32, #tpu.memory_space<vmem>>, vector<2x8x8xf32>,
    %966 = vector.extract_strided_slice %945 {offsets = [0, 0, 8], sizes = [2, 8, 8], strides = [1, 1, 1]} : vector<2x8x96xf32> to vector<2x8x8xf32>
    %967 = arith.truncf %966 : vector<2x8x8xf32> to vector<2x8x8xbf16>
    %968 = vector.extract_strided_slice %945 {offsets = [0, 0, 40], sizes = [2, 8, 8], strides = [1, 1, 1]} : vector<2x8x96xf32> to vector<2x8x8xf32>
    %969 = arith.truncf %968 : vector<2x8x8xf32> to vector<2x8x8xbf16>
    %970 = vector.extract_strided_slice %945 {offsets = [0, 0, 72], sizes = [2, 8, 8], strides = [1, 1, 1]} : vector<2x8x96xf32> to vector<2x8x8xf32>
    %971 = arith.truncf %970 : vector<2x8x8xf32> to vector<2x8x8xbf16>
    "tpu.trace_start"() <{level = 10 : i32, message = "bqd,bkd->bqk"}> : () -> ()
    %cst_454 = arith.constant dense<0.000000e+00> : vector<2x8x8xf32>
    %972 = tpu.matmul %967, %969, %cst_454 {dimension_numbers = #tpu.dot_dimension_numbers<[2], [2], [1], [1], [0, 0, 0, 1, 1, 1], [0], [0]>} : vector<2x8x8xbf16>, vector<2x8x8xbf16>, vector<2x8x8xf32> -> vector<2x8x8xf32>
    "tpu.trace_stop"() : () -> ()
    %cst_455 = arith.constant dense<0xFF800000> : vector<2x8xf32>
    %973 = vector.multi_reduction <maximumf>, %972, %cst_455 [2] : vector<2x8x8xf32> to vector<2x8xf32>
    %974 = vector.shape_cast %973 : vector<2x8xf32> to vector<2x8x1xf32>
    %975 = vector.broadcast %974 : vector<2x8x1xf32> to vector<2x8x8xf32>
    %976 = arith.subf %972, %975 : vector<2x8x8xf32>
    %977 = math.exp %976 : vector<2x8x8xf32>
    %cst_456 = arith.constant dense<0.000000e+00> : vector<2x8xf32>
    %978 = vector.multi_reduction <add>, %977, %cst_456 [2] : vector<2x8x8xf32> to vector<2x8xf32>
    %979 = vector.shape_cast %978 : vector<2x8xf32> to vector<2x8x1xf32>
    %980 = tpu.reciprocal %979 {approx = true} : vector<2x8x1xf32> -> vector<2x8x1xf32>
    %981 = vector.broadcast %980 : vector<2x8x1xf32> to vector<2x8x8xf32>
    %982 = arith.mulf %977, %981 : vector<2x8x8xf32>
    %983 = arith.truncf %982 : vector<2x8x8xf32> to vector<2x8x8xbf16>
    "tpu.trace_start"() <{level = 10 : i32, message = "bqk,bkd->bqd"}> : () -> ()
    %cst_457 = arith.constant dense<0.000000e+00> : vector<2x8x8xf32>
    %984 = tpu.matmul %983, %971, %cst_457 {dimension_numbers = #tpu.dot_dimension_numbers<[2], [1], [1], [2], [0, 0, 0, 1, 1, 2], [0], [0]>} : vector<2x8x8xbf16>, vector<2x8x8xbf16>, vector<2x8x8xf32> -> vector<2x8x8xf32>
    "tpu.trace_stop"() : () -> ()
    %c0_458 = arith.constant 0 : index
    %c0_459 = arith.constant 0 : index
    %c8_460 = arith.constant 8 : index
    %985 = vector.load %arg21[%c0_458, %c0_459, %c8_460] : memref<2x8x32xf32, #tpu.memory_space<vmem>>, vector<2x8x8xf32>
    tpu.vector_store %arg21[%c0_458, %c0_459, %c8_460], %984 {strides = array<i32>} : memref<2x8x32xf32, #tpu.memory_space<vmem>>, vector<2x8x8xf32>,
    %986 = vector.extract_strided_slice %945 {offsets = [0, 0, 16], sizes = [2, 8, 8], strides = [1, 1, 1]} : vector<2x8x96xf32> to vector<2x8x8xf32>
    %987 = arith.truncf %986 : vector<2x8x8xf32> to vector<2x8x8xbf16>
    %988 = vector.extract_strided_slice %945 {offsets = [0, 0, 48], sizes = [2, 8, 8], strides = [1, 1, 1]} : vector<2x8x96xf32> to vector<2x8x8xf32>
    %989 = arith.truncf %988 : vector<2x8x8xf32> to vector<2x8x8xbf16>
    %990 = vector.extract_strided_slice %945 {offsets = [0, 0, 80], sizes = [2, 8, 8], strides = [1, 1, 1]} : vector<2x8x96xf32> to vector<2x8x8xf32>
    %991 = arith.truncf %990 : vector<2x8x8xf32> to vector<2x8x8xbf16>
    "tpu.trace_start"() <{level = 10 : i32, message = "bqd,bkd->bqk"}> : () -> ()
    %cst_461 = arith.constant dense<0.000000e+00> : vector<2x8x8xf32>
    %992 = tpu.matmul %987, %989, %cst_461 {dimension_numbers = #tpu.dot_dimension_numbers<[2], [2], [1], [1], [0, 0, 0, 1, 1, 1], [0], [0]>} : vector<2x8x8xbf16>, vector<2x8x8xbf16>, vector<2x8x8xf32> -> vector<2x8x8xf32>
    "tpu.trace_stop"() : () -> ()
    %cst_462 = arith.constant dense<0xFF800000> : vector<2x8xf32>
    %993 = vector.multi_reduction <maximumf>, %992, %cst_462 [2] : vector<2x8x8xf32> to vector<2x8xf32>
    %994 = vector.shape_cast %993 : vector<2x8xf32> to vector<2x8x1xf32>
    %995 = vector.broadcast %994 : vector<2x8x1xf32> to vector<2x8x8xf32>
    %996 = arith.subf %992, %995 : vector<2x8x8xf32>
    %997 = math.exp %996 : vector<2x8x8xf32>
    %cst_463 = arith.constant dense<0.000000e+00> : vector<2x8xf32>
    %998 = vector.multi_reduction <add>, %997, %cst_463 [2] : vector<2x8x8xf32> to vector<2x8xf32>
    %999 = vector.shape_cast %998 : vector<2x8xf32> to vector<2x8x1xf32>
    %1000 = tpu.reciprocal %999 {approx = true} : vector<2x8x1xf32> -> vector<2x8x1xf32>
    %1001 = vector.broadcast %1000 : vector<2x8x1xf32> to vector<2x8x8xf32>
    %1002 = arith.mulf %997, %1001 : vector<2x8x8xf32>
    %1003 = arith.truncf %1002 : vector<2x8x8xf32> to vector<2x8x8xbf16>
    "tpu.trace_start"() <{level = 10 : i32, message = "bqk,bkd->bqd"}> : () -> ()
    %cst_464 = arith.constant dense<0.000000e+00> : vector<2x8x8xf32>
    %1004 = tpu.matmul %1003, %991, %cst_464 {dimension_numbers = #tpu.dot_dimension_numbers<[2], [1], [1], [2], [0, 0, 0, 1, 1, 2], [0], [0]>} : vector<2x8x8xbf16>, vector<2x8x8xbf16>, vector<2x8x8xf32> -> vector<2x8x8xf32>
    "tpu.trace_stop"() : () -> ()
    %c0_465 = arith.constant 0 : index
    %c0_466 = arith.constant 0 : index
    %c16_467 = arith.constant 16 : index
    %1005 = vector.load %arg21[%c0_465, %c0_466, %c16_467] : memref<2x8x32xf32, #tpu.memory_space<vmem>>, vector<2x8x8xf32>
    tpu.vector_store %arg21[%c0_465, %c0_466, %c16_467], %1004 {strides = array<i32>} : memref<2x8x32xf32, #tpu.memory_space<vmem>>, vector<2x8x8xf32>,
    %1006 = vector.extract_strided_slice %945 {offsets = [0, 0, 24], sizes = [2, 8, 8], strides = [1, 1, 1]} : vector<2x8x96xf32> to vector<2x8x8xf32>
    %1007 = arith.truncf %1006 : vector<2x8x8xf32> to vector<2x8x8xbf16>
    %1008 = vector.extract_strided_slice %945 {offsets = [0, 0, 56], sizes = [2, 8, 8], strides = [1, 1, 1]} : vector<2x8x96xf32> to vector<2x8x8xf32>
    %1009 = arith.truncf %1008 : vector<2x8x8xf32> to vector<2x8x8xbf16>
    %1010 = vector.extract_strided_slice %945 {offsets = [0, 0, 88], sizes = [2, 8, 8], strides = [1, 1, 1]} : vector<2x8x96xf32> to vector<2x8x8xf32>
    %1011 = arith.truncf %1010 : vector<2x8x8xf32> to vector<2x8x8xbf16>
    "tpu.trace_start"() <{level = 10 : i32, message = "bqd,bkd->bqk"}> : () -> ()
    %cst_468 = arith.constant dense<0.000000e+00> : vector<2x8x8xf32>
    %1012 = tpu.matmul %1007, %1009, %cst_468 {dimension_numbers = #tpu.dot_dimension_numbers<[2], [2], [1], [1], [0, 0, 0, 1, 1, 1], [0], [0]>} : vector<2x8x8xbf16>, vector<2x8x8xbf16>, vector<2x8x8xf32> -> vector<2x8x8xf32>
    "tpu.trace_stop"() : () -> ()
    %cst_469 = arith.constant dense<0xFF800000> : vector<2x8xf32>
    %1013 = vector.multi_reduction <maximumf>, %1012, %cst_469 [2] : vector<2x8x8xf32> to vector<2x8xf32>
    %1014 = vector.shape_cast %1013 : vector<2x8xf32> to vector<2x8x1xf32>
    %1015 = vector.broadcast %1014 : vector<2x8x1xf32> to vector<2x8x8xf32>
    %1016 = arith.subf %1012, %1015 : vector<2x8x8xf32>
    %1017 = math.exp %1016 : vector<2x8x8xf32>
    %cst_470 = arith.constant dense<0.000000e+00> : vector<2x8xf32>
    %1018 = vector.multi_reduction <add>, %1017, %cst_470 [2] : vector<2x8x8xf32> to vector<2x8xf32>
    %1019 = vector.shape_cast %1018 : vector<2x8xf32> to vector<2x8x1xf32>
    %1020 = tpu.reciprocal %1019 {approx = true} : vector<2x8x1xf32> -> vector<2x8x1xf32>
    %1021 = vector.broadcast %1020 : vector<2x8x1xf32> to vector<2x8x8xf32>
    %1022 = arith.mulf %1017, %1021 : vector<2x8x8xf32>
    %1023 = arith.truncf %1022 : vector<2x8x8xf32> to vector<2x8x8xbf16>
    "tpu.trace_start"() <{level = 10 : i32, message = "bqk,bkd->bqd"}> : () -> ()
    %cst_471 = arith.constant dense<0.000000e+00> : vector<2x8x8xf32>
    %1024 = tpu.matmul %1023, %1011, %cst_471 {dimension_numbers = #tpu.dot_dimension_numbers<[2], [1], [1], [2], [0, 0, 0, 1, 1, 2], [0], [0]>} : vector<2x8x8xbf16>, vector<2x8x8xbf16>, vector<2x8x8xf32> -> vector<2x8x8xf32>
    "tpu.trace_stop"() : () -> ()
    %c0_472 = arith.constant 0 : index
    %c0_473 = arith.constant 0 : index
    %c24_474 = arith.constant 24 : index
    %1025 = vector.load %arg21[%c0_472, %c0_473, %c24_474] : memref<2x8x32xf32, #tpu.memory_space<vmem>>, vector<2x8x8xf32>
    tpu.vector_store %arg21[%c0_472, %c0_473, %c24_474], %1024 {strides = array<i32>} : memref<2x8x32xf32, #tpu.memory_space<vmem>>, vector<2x8x8xf32>,
    %c0_475 = arith.constant 0 : index
    %c0_476 = arith.constant 0 : index
    %c0_477 = arith.constant 0 : index
    %1026 = vector.load %arg21[%c0_475, %c0_476, %c0_477] : memref<2x8x32xf32, #tpu.memory_space<vmem>>, vector<2x8x32xf32>
    %1027 = vector.shape_cast %1026 : vector<2x8x32xf32> to vector<16x32xf32>
    %1028 = arith.truncf %1027 : vector<16x32xf32> to vector<16x32xbf16>
    %c5_478 = arith.constant 5 : index
    %c0_479 = arith.constant 0 : index
    %c0_480 = arith.constant 0 : index
    %1029 = vector.load %arg9[%c5_478, %c0_479, %c0_480] : memref<6x32x32xbf16, #tpu.memory_space<vmem>>, vector<1x32x32xbf16>
    %1030 = vector.shape_cast %1029 : vector<1x32x32xbf16> to vector<32x32xbf16>
    %cst_481 = arith.constant dense<0.000000e+00> : vector<16x32xf32>
    %1031 = tpu.matmul %1028, %1030, %cst_481 {dimension_numbers = #tpu.dot_dimension_numbers<[1], [0], [0], [1], [0, 0, 1, 1], [], []>} : vector<16x32xbf16>, vector<32x32xbf16>, vector<16x32xf32> -> vector<16x32xf32>
    %c5_482 = arith.constant 5 : index
    %c0_483 = arith.constant 0 : index
    %c0_484 = arith.constant 0 : index
    %1032 = vector.load %arg10[%c5_482, %c0_483, %c0_484] : memref<6x1x32xf32, #tpu.memory_space<vmem>>, vector<1x1x32xf32>
    %1033 = vector.shape_cast %1032 : vector<1x1x32xf32> to vector<1x32xf32>
    %1034 = vector.broadcast %1033 : vector<1x32xf32> to vector<16x32xf32>
    %1035 = arith.addf %1031, %1034 : vector<16x32xf32>
    %c5_485 = arith.constant 5 : index
    %c0_486 = arith.constant 0 : index
    %c0_487 = arith.constant 0 : index
    %1036 = vector.load %arg11[%c5_485, %c0_486, %c0_487] : memref<6x2x32xf32, #tpu.memory_space<vmem>>, vector<1x2x32xf32>
    %1037 = vector.shape_cast %1036 : vector<1x2x32xf32> to vector<2x32xf32>
    %1038 = arith.addf %936, %1035 : vector<16x32xf32>
    %1039 = vector.extract_strided_slice %1037 {offsets = [0, 0], sizes = [1, 32], strides = [1, 1]} : vector<2x32xf32> to vector<1x32xf32>
    %1040 = vector.extract_strided_slice %1037 {offsets = [1, 0], sizes = [1, 32], strides = [1, 1]} : vector<2x32xf32> to vector<1x32xf32>
    %cst_488 = arith.constant dense<0.000000e+00> : vector<16xf32>
    %1041 = vector.multi_reduction <add>, %1038, %cst_488 [1] : vector<16x32xf32> to vector<16xf32>
    %1042 = vector.shape_cast %1041 : vector<16xf32> to vector<16x1xf32>
    %cst_489 = arith.constant 3.200000e+01 : f32
    %1043 = vector.broadcast %cst_489 : f32 to vector<16x1xf32>
    %1044 = arith.divf %1042, %1043 : vector<16x1xf32>
    %1045 = vector.broadcast %1044 : vector<16x1xf32> to vector<16x32xf32>
    %1046 = arith.subf %1038, %1045 : vector<16x32xf32>
    %1047 = arith.mulf %1046, %1046 : vector<16x32xf32>
    %cst_490 = arith.constant dense<0.000000e+00> : vector<16xf32>
    %1048 = vector.multi_reduction <add>, %1047, %cst_490 [1] : vector<16x32xf32> to vector<16xf32>
    %1049 = vector.shape_cast %1048 : vector<16xf32> to vector<16x1xf32>
    %cst_491 = arith.constant 3.200000e+01 : f32
    %1050 = vector.broadcast %cst_491 : f32 to vector<16x1xf32>
    %1051 = arith.divf %1049, %1050 : vector<16x1xf32>
    %cst_492 = arith.constant 9.99999974E-6 : f32
    %1052 = vector.broadcast %cst_492 : f32 to vector<16x1xf32>
    %1053 = arith.addf %1051, %1052 : vector<16x1xf32>
    %1054 = math.rsqrt %1053 : vector<16x1xf32>
    %1055 = vector.broadcast %1054 : vector<16x1xf32> to vector<16x32xf32>
    %1056 = arith.mulf %1046, %1055 : vector<16x32xf32>
    %1057 = vector.broadcast %1039 : vector<1x32xf32> to vector<16x32xf32>
    %1058 = arith.mulf %1056, %1057 : vector<16x32xf32>
    %1059 = vector.broadcast %1040 : vector<1x32xf32> to vector<16x32xf32>
    %1060 = arith.addf %1058, %1059 : vector<16x32xf32>
    %1061 = arith.truncf %1060 : vector<16x32xf32> to vector<16x32xbf16>
    %c5_493 = arith.constant 5 : index
    %c0_494 = arith.constant 0 : index
    %c0_495 = arith.constant 0 : index
    %1062 = vector.load %arg12[%c5_493, %c0_494, %c0_495] : memref<6x32x64xbf16, #tpu.memory_space<vmem>>, vector<1x32x64xbf16>
    %1063 = vector.shape_cast %1062 : vector<1x32x64xbf16> to vector<32x64xbf16>
    %cst_496 = arith.constant dense<0.000000e+00> : vector<16x64xf32>
    %1064 = tpu.matmul %1061, %1063, %cst_496 {dimension_numbers = #tpu.dot_dimension_numbers<[1], [0], [0], [1], [0, 0, 1, 1], [], []>} : vector<16x32xbf16>, vector<32x64xbf16>, vector<16x64xf32> -> vector<16x64xf32>
    %c5_497 = arith.constant 5 : index
    %c0_498 = arith.constant 0 : index
    %c0_499 = arith.constant 0 : index
    %1065 = vector.load %arg13[%c5_497, %c0_498, %c0_499] : memref<6x1x64xf32, #tpu.memory_space<vmem>>, vector<1x1x64xf32>
    %1066 = vector.shape_cast %1065 : vector<1x1x64xf32> to vector<1x64xf32>
    %1067 = vector.broadcast %1066 : vector<1x64xf32> to vector<16x64xf32>
    %1068 = arith.addf %1064, %1067 : vector<16x64xf32>
    %cst_500 = arith.constant 5.000000e-01 : f32
    %1069 = vector.broadcast %cst_500 : f32 to vector<16x64xf32>
    %1070 = arith.mulf %1069, %1068 : vector<16x64xf32>
    %cst_501 = arith.constant 0.707106769 : f32
    %1071 = vector.broadcast %cst_501 : f32 to vector<16x64xf32>
    %1072 = arith.mulf %1068, %1071 : vector<16x64xf32>
    %1073 = math.erf %1072 : vector<16x64xf32>
    %cst_502 = arith.constant 1.000000e+00 : f32
    %1074 = vector.broadcast %cst_502 : f32 to vector<16x64xf32>
    %1075 = arith.addf %1074, %1073 : vector<16x64xf32>
    %1076 = arith.mulf %1070, %1075 : vector<16x64xf32>
    %1077 = arith.truncf %1076 : vector<16x64xf32> to vector<16x64xbf16>
    %c5_503 = arith.constant 5 : index
    %c0_504 = arith.constant 0 : index
    %c0_505 = arith.constant 0 : index
    %1078 = vector.load %arg14[%c5_503, %c0_504, %c0_505] : memref<6x64x32xbf16, #tpu.memory_space<vmem>>, vector<1x64x32xbf16>
    %1079 = vector.shape_cast %1078 : vector<1x64x32xbf16> to vector<64x32xbf16>
    %cst_506 = arith.constant dense<0.000000e+00> : vector<16x32xf32>
    %1080 = tpu.matmul %1077, %1079, %cst_506 {dimension_numbers = #tpu.dot_dimension_numbers<[1], [0], [0], [1], [0, 0, 1, 1], [], []>} : vector<16x64xbf16>, vector<64x32xbf16>, vector<16x32xf32> -> vector<16x32xf32>
    %c5_507 = arith.constant 5 : index
    %c0_508 = arith.constant 0 : index
    %c0_509 = arith.constant 0 : index
    %1081 = vector.load %arg15[%c5_507, %c0_508, %c0_509] : memref<6x1x32xf32, #tpu.memory_space<vmem>>, vector<1x1x32xf32>
    %1082 = vector.shape_cast %1081 : vector<1x1x32xf32> to vector<1x32xf32>
    %1083 = vector.broadcast %1082 : vector<1x32xf32> to vector<16x32xf32>
    %1084 = arith.addf %1080, %1083 : vector<16x32xf32>
    %c5_510 = arith.constant 5 : index
    %c0_511 = arith.constant 0 : index
    %c0_512 = arith.constant 0 : index
    %1085 = vector.load %arg16[%c5_510, %c0_511, %c0_512] : memref<6x2x32xf32, #tpu.memory_space<vmem>>, vector<1x2x32xf32>
    %1086 = vector.shape_cast %1085 : vector<1x2x32xf32> to vector<2x32xf32>
    %1087 = arith.addf %1060, %1084 : vector<16x32xf32>
    %1088 = vector.extract_strided_slice %1086 {offsets = [0, 0], sizes = [1, 32], strides = [1, 1]} : vector<2x32xf32> to vector<1x32xf32>
    %1089 = vector.extract_strided_slice %1086 {offsets = [1, 0], sizes = [1, 32], strides = [1, 1]} : vector<2x32xf32> to vector<1x32xf32>
    %cst_513 = arith.constant dense<0.000000e+00> : vector<16xf32>
    %1090 = vector.multi_reduction <add>, %1087, %cst_513 [1] : vector<16x32xf32> to vector<16xf32>
    %1091 = vector.shape_cast %1090 : vector<16xf32> to vector<16x1xf32>
    %cst_514 = arith.constant 3.200000e+01 : f32
    %1092 = vector.broadcast %cst_514 : f32 to vector<16x1xf32>
    %1093 = arith.divf %1091, %1092 : vector<16x1xf32>
    %1094 = vector.broadcast %1093 : vector<16x1xf32> to vector<16x32xf32>
    %1095 = arith.subf %1087, %1094 : vector<16x32xf32>
    %1096 = arith.mulf %1095, %1095 : vector<16x32xf32>
    %cst_515 = arith.constant dense<0.000000e+00> : vector<16xf32>
    %1097 = vector.multi_reduction <add>, %1096, %cst_515 [1] : vector<16x32xf32> to vector<16xf32>
    %1098 = vector.shape_cast %1097 : vector<16xf32> to vector<16x1xf32>
    %cst_516 = arith.constant 3.200000e+01 : f32
    %1099 = vector.broadcast %cst_516 : f32 to vector<16x1xf32>
    %1100 = arith.divf %1098, %1099 : vector<16x1xf32>
    %cst_517 = arith.constant 9.99999974E-6 : f32
    %1101 = vector.broadcast %cst_517 : f32 to vector<16x1xf32>
    %1102 = arith.addf %1100, %1101 : vector<16x1xf32>
    %1103 = math.rsqrt %1102 : vector<16x1xf32>
    %1104 = vector.broadcast %1103 : vector<16x1xf32> to vector<16x32xf32>
    %1105 = arith.mulf %1095, %1104 : vector<16x32xf32>
    %1106 = vector.broadcast %1088 : vector<1x32xf32> to vector<16x32xf32>
    %1107 = arith.mulf %1105, %1106 : vector<16x32xf32>
    %1108 = vector.broadcast %1089 : vector<1x32xf32> to vector<16x32xf32>
    %1109 = arith.addf %1107, %1108 : vector<16x32xf32>
    %1110 = vector.shape_cast %1109 : vector<16x32xf32> to vector<2x8x32xf32>
    %cst_518 = arith.constant dense<0.000000e+00> : vector<2x32xf32>
    %1111 = vector.multi_reduction <add>, %1110, %cst_518 [1] : vector<2x8x32xf32> to vector<2x32xf32>
    %cst_519 = arith.constant 8.000000e+00 : f32
    %1112 = vector.broadcast %cst_519 : f32 to vector<2x32xf32>
    %1113 = arith.divf %1111, %1112 : vector<2x32xf32>
    %1114 = arith.truncf %1113 : vector<2x32xf32> to vector<2x32xbf16>
    %c0_520 = arith.constant 0 : index
    %c0_521 = arith.constant 0 : index
    %1115 = vector.load %arg17[%c0_520, %c0_521] : memref<32x128xbf16, #tpu.memory_space<vmem>>, vector<32x128xbf16>
    %cst_522 = arith.constant dense<0.000000e+00> : vector<2x128xf32>
    %1116 = tpu.matmul %1114, %1115, %cst_522 {dimension_numbers = #tpu.dot_dimension_numbers<[1], [0], [0], [1], [0, 0, 1, 1], [], []>} : vector<2x32xbf16>, vector<32x128xbf16>, vector<2x128xf32> -> vector<2x128xf32>
    %c0_523 = arith.constant 0 : index
    %c0_524 = arith.constant 0 : index
    %1117 = vector.load %arg18[%c0_523, %c0_524] : memref<1x128xf32, #tpu.memory_space<vmem>>, vector<1x128xf32>
    %1118 = vector.broadcast %1117 : vector<1x128xf32> to vector<2x128xf32>
    %1119 = arith.addf %1116, %1118 : vector<2x128xf32>
    %c0_525 = arith.constant 0 : index
    %c0_526 = arith.constant 0 : index
    %1120 = vector.load %arg19[%c0_525, %c0_526] : memref<2x128xf32, #tpu.memory_space<vmem>>, vector<2x128xf32>
    tpu.vector_store %arg19[%c0_525, %c0_526], %1119 {strides = array<i32>} : memref<2x128xf32, #tpu.memory_space<vmem>>, vector<2x128xf32>,
    return
  }
  func.func @transform_0(%arg0: i32) -> (i32, i32, i32) {
    %c0_i32 = arith.constant 0 : i32
    %c0_i32_0 = arith.constant 0 : i32
    %c0_i32_1 = arith.constant 0 : i32
    return %arg0, %c0_i32, %c0_i32_0 : i32, i32, i32
  }
  func.func @transform_1(%arg0: i32) -> (i32, i32, i32) {
    %c0_i32 = arith.constant 0 : i32
    %c0_i32_0 = arith.constant 0 : i32
    %c0_i32_1 = arith.constant 0 : i32
    %c0_i32_2 = arith.constant 0 : i32
    return %c0_i32, %c0_i32_0, %c0_i32_1 : i32, i32, i32
  }
  func.func @transform_2(%arg0: i32) -> (i32, i32) {
    %c0_i32 = arith.constant 0 : i32
    %c0_i32_0 = arith.constant 0 : i32
    %c0_i32_1 = arith.constant 0 : i32
    return %c0_i32, %c0_i32_0 : i32, i32
  }
  func.func @transform_3(%arg0: i32) -> (i32, i32, i32) {
    %c0_i32 = arith.constant 0 : i32
    %c0_i32_0 = arith.constant 0 : i32
    %c0_i32_1 = arith.constant 0 : i32
    %c0_i32_2 = arith.constant 0 : i32
    return %c0_i32, %c0_i32_0, %c0_i32_1 : i32, i32, i32
  }
  func.func @transform_4(%arg0: i32) -> (i32, i32) {
    %c0_i32 = arith.constant 0 : i32
    %c0_i32_0 = arith.constant 0 : i32
    %c0_i32_1 = arith.constant 0 : i32
    return %c0_i32, %c0_i32_0 : i32, i32
  }
  func.func @transform_5(%arg0: i32) -> (i32, i32) {
    %c0_i32 = arith.constant 0 : i32
    %c0_i32_0 = arith.constant 0 : i32
    %c0_i32_1 = arith.constant 0 : i32
    return %c0_i32, %c0_i32_0 : i32, i32
  }
  func.func @transform_6(%arg0: i32) -> (i32, i32, i32) {
    %c0_i32 = arith.constant 0 : i32
    %c0_i32_0 = arith.constant 0 : i32
    %c0_i32_1 = arith.constant 0 : i32
    %c0_i32_2 = arith.constant 0 : i32
    return %c0_i32, %c0_i32_0, %c0_i32_1 : i32, i32, i32
  }
  func.func @transform_7(%arg0: i32) -> (i32, i32, i32) {
    %c0_i32 = arith.constant 0 : i32
    %c0_i32_0 = arith.constant 0 : i32
    %c0_i32_1 = arith.constant 0 : i32
    %c0_i32_2 = arith.constant 0 : i32
    return %c0_i32, %c0_i32_0, %c0_i32_1 : i32, i32, i32
  }
  func.func @transform_8(%arg0: i32) -> (i32, i32, i32) {
    %c0_i32 = arith.constant 0 : i32
    %c0_i32_0 = arith.constant 0 : i32
    %c0_i32_1 = arith.constant 0 : i32
    %c0_i32_2 = arith.constant 0 : i32
    return %c0_i32, %c0_i32_0, %c0_i32_1 : i32, i32, i32
  }
  func.func @transform_9(%arg0: i32) -> (i32, i32, i32) {
    %c0_i32 = arith.constant 0 : i32
    %c0_i32_0 = arith.constant 0 : i32
    %c0_i32_1 = arith.constant 0 : i32
    %c0_i32_2 = arith.constant 0 : i32
    return %c0_i32, %c0_i32_0, %c0_i32_1 : i32, i32, i32
  }
  func.func @transform_10(%arg0: i32) -> (i32, i32, i32) {
    %c0_i32 = arith.constant 0 : i32
    %c0_i32_0 = arith.constant 0 : i32
    %c0_i32_1 = arith.constant 0 : i32
    %c0_i32_2 = arith.constant 0 : i32
    return %c0_i32, %c0_i32_0, %c0_i32_1 : i32, i32, i32
  }
  func.func @transform_11(%arg0: i32) -> (i32, i32, i32) {
    %c0_i32 = arith.constant 0 : i32
    %c0_i32_0 = arith.constant 0 : i32
    %c0_i32_1 = arith.constant 0 : i32
    %c0_i32_2 = arith.constant 0 : i32
    return %c0_i32, %c0_i32_0, %c0_i32_1 : i32, i32, i32
  }
  func.func @transform_12(%arg0: i32) -> (i32, i32, i32) {
    %c0_i32 = arith.constant 0 : i32
    %c0_i32_0 = arith.constant 0 : i32
    %c0_i32_1 = arith.constant 0 : i32
    %c0_i32_2 = arith.constant 0 : i32
    return %c0_i32, %c0_i32_0, %c0_i32_1 : i32, i32, i32
  }
  func.func @transform_13(%arg0: i32) -> (i32, i32, i32) {
    %c0_i32 = arith.constant 0 : i32
    %c0_i32_0 = arith.constant 0 : i32
    %c0_i32_1 = arith.constant 0 : i32
    %c0_i32_2 = arith.constant 0 : i32
    return %c0_i32, %c0_i32_0, %c0_i32_1 : i32, i32, i32
  }
  func.func @transform_14(%arg0: i32) -> (i32, i32, i32) {
    %c0_i32 = arith.constant 0 : i32
    %c0_i32_0 = arith.constant 0 : i32
    %c0_i32_1 = arith.constant 0 : i32
    %c0_i32_2 = arith.constant 0 : i32
    return %c0_i32, %c0_i32_0, %c0_i32_1 : i32, i32, i32
  }
  func.func @transform_15(%arg0: i32) -> (i32, i32, i32) {
    %c0_i32 = arith.constant 0 : i32
    %c0_i32_0 = arith.constant 0 : i32
    %c0_i32_1 = arith.constant 0 : i32
    %c0_i32_2 = arith.constant 0 : i32
    return %c0_i32, %c0_i32_0, %c0_i32_1 : i32, i32, i32
  }
  func.func @transform_16(%arg0: i32) -> (i32, i32) {
    %c0_i32 = arith.constant 0 : i32
    %c0_i32_0 = arith.constant 0 : i32
    %c0_i32_1 = arith.constant 0 : i32
    return %c0_i32, %c0_i32_0 : i32, i32
  }
  func.func @transform_17(%arg0: i32) -> (i32, i32) {
    %c0_i32 = arith.constant 0 : i32
    %c0_i32_0 = arith.constant 0 : i32
    %c0_i32_1 = arith.constant 0 : i32
    return %c0_i32, %c0_i32_0 : i32, i32
  }
  func.func @transform_18(%arg0: i32) -> (i32, i32) {
    %c0_i32 = arith.constant 0 : i32
    %c0_i32_0 = arith.constant 0 : i32
    return %arg0, %c0_i32 : i32, i32
  }
}

</mosaic_0001>

<llo_original>
// kernel: tpu_custom_call.1
$region0: #{tpu_custom_call.1}
  #allocation0 [shape = 'u32[]', space=smem, size = 0x4, offset = 0x4, fixed_abs, tag = 'smem constant byte address 0x4 - core index']
  #allocation1 [shape = 'u32[144,128]{1,0:T(1,128)}', space=vmem, size = 0x12000, scoped, tag = 'internal scratch']
  #allocation2 [shape = 'f32[2,18,32]{2,1,0:T(8,128)}', space=vmem, size = 0x6000, scoped, tag = 'scratch operand']
  #allocation3 [shape = 'f32[2,8,32]{2,1,0:T(8,128)}', space=vmem, size = 0x2000, scoped, tag = 'scratch operand']
  %s0 = inlined_call_operand.vmem [shape: bf16[2,18,80], index: 0, kind: input, shape index: {}]
  %s1 = inlined_call_operand.vmem [shape: bf16[3,80,32], index: 1, kind: input, shape index: {}]
  %s2 = inlined_call_operand.vmem [shape: f32[1,32], index: 2, kind: input, shape index: {}]
  %s3 = inlined_call_operand.vmem [shape: bf16[3,32,32], index: 3, kind: input, shape index: {}]
  %s4 = inlined_call_operand.vmem [shape: f32[1,32], index: 4, kind: input, shape index: {}]
  %s5 = inlined_call_operand.vmem [shape: f32[16,32], index: 5, kind: input, shape index: {}]
  %s6 = inlined_call_operand.vmem [shape: bf16[6,32,96], index: 6, kind: input, shape index: {}]
  %s7 = inlined_call_operand.vmem [shape: f32[6,1,96], index: 7, kind: input, shape index: {}]
  %s8 = inlined_call_operand.vmem [shape: bf16[6,32,32], index: 8, kind: input, shape index: {}]
  %s9 = inlined_call_operand.vmem [shape: f32[6,1,32], index: 9, kind: input, shape index: {}]
  %s10 = inlined_call_operand.vmem [shape: f32[6,2,32], index: 10, kind: input, shape index: {}]
  %s11 = inlined_call_operand.vmem [shape: bf16[6,32,64], index: 11, kind: input, shape index: {}]
  %s12 = inlined_call_operand.vmem [shape: f32[6,1,64], index: 12, kind: input, shape index: {}]
  %s13 = inlined_call_operand.vmem [shape: bf16[6,64,32], index: 13, kind: input, shape index: {}]
  %s14 = inlined_call_operand.vmem [shape: f32[6,1,32], index: 14, kind: input, shape index: {}]
  %s15 = inlined_call_operand.vmem [shape: f32[6,2,32], index: 15, kind: input, shape index: {}]
  %s16 = inlined_call_operand.vmem [shape: bf16[32,128], index: 16, kind: input, shape index: {}]
  %s17 = inlined_call_operand.vmem [shape: f32[1,128], index: 17, kind: input, shape index: {}]
  %s18 = inlined_call_operand.hbm [shape: f32[2,128], index: 18, kind: output, shape index: {}]
  %s19 = sld [smem:[#allocation0]]
  $region82: #{tpu_custom_call.1} parent=0
    _
  %s21 = ssub.s32 1, %s19
  %s22 = scalar_select 0, %s21, %s19
  $region1: #{tpu_custom_call.1} parent=0
    #allocation4 [shape = 'u8[1024]{0}', space=vmem, size = 0x400, scoped, tag = 'output window, operand 0, single buffered']
    #allocation5 [shape = 's32[1]{0}', space=sflag, size = 0x4, scoped, tag = 'scoped memory for tpu_custom_call.1']
    %23 = vsyncpa [#allocation5], 0
    // Predicated region
    $region2: #{tpu_custom_call.1} parent=1 // pred_check
      _
    $region3: #{tpu_custom_call.1} parent=1 // pred_check_branch
      %25 = sbr.rel (0) target = $region5
    $region4: #{tpu_custom_call.1} parent=1 // pred_region
      _
    $region5: #{tpu_custom_call.1} parent=1 // pred_fallthru
      _
    // Predicated region
    $region6: #{tpu_custom_call.1} parent=1 // pred_check
      _
    $region7: #{tpu_custom_call.1} parent=1 // pred_check_branch
      %27 = sbr.rel (0) target = $region9
    $region8: #{tpu_custom_call.1} parent=1 // pred_region
      _
    $region9: #{tpu_custom_call.1} parent=1 // pred_fallthru
      _
    // Predicated region
    $region10: #{tpu_custom_call.1} parent=1 // pred_check
      _
    $region11: #{tpu_custom_call.1} parent=1 // pred_check_branch
      %29 = sbr.rel (0) target = $region13
    $region12: #{tpu_custom_call.1} parent=1 // pred_region
      _
    $region13: #{tpu_custom_call.1} parent=1 // pred_fallthru
      _
    // Predicated region
    $region14: #{tpu_custom_call.1} parent=1 // pred_check
      _
    $region15: #{tpu_custom_call.1} parent=1 // pred_check_branch
      %31 = sbr.rel (0) target = $region17
    $region16: #{tpu_custom_call.1} parent=1 // pred_region
      _
    $region17: #{tpu_custom_call.1} parent=1 // pred_fallthru
      _
    // Predicated region
    $region18: #{tpu_custom_call.1} parent=1 // pred_check
      _
    $region19: #{tpu_custom_call.1} parent=1 // pred_check_branch
      %33 = sbr.rel (0) target = $region21
    $region20: #{tpu_custom_call.1} parent=1 // pred_region
      _
    $region21: #{tpu_custom_call.1} parent=1 // pred_fallthru
      _
    // Predicated region
    $region22: #{tpu_custom_call.1} parent=1 // pred_check
      _
    $region23: #{tpu_custom_call.1} parent=1 // pred_check_branch
      %35 = sbr.rel (0) target = $region25
    $region24: #{tpu_custom_call.1} parent=1 // pred_region
      _
    $region25: #{tpu_custom_call.1} parent=1 // pred_fallthru
      _
    // Predicated region
    $region26: #{tpu_custom_call.1} parent=1 // pred_check
      _
    $region27: #{tpu_custom_call.1} parent=1 // pred_check_branch
      %37 = sbr.rel (0) target = $region29
    $region28: #{tpu_custom_call.1} parent=1 // pred_region
      _
    $region29: #{tpu_custom_call.1} parent=1 // pred_fallthru
      _
    // Predicated region
    $region30: #{tpu_custom_call.1} parent=1 // pred_check
      _
    $region31: #{tpu_custom_call.1} parent=1 // pred_check_branch
      %39 = sbr.rel (0) target = $region33
    $region32: #{tpu_custom_call.1} parent=1 // pred_region
      _
    $region33: #{tpu_custom_call.1} parent=1 // pred_fallthru
      _
    // Predicated region
    $region34: #{tpu_custom_call.1} parent=1 // pred_check
      _
    $region35: #{tpu_custom_call.1} parent=1 // pred_check_branch
      %41 = sbr.rel (0) target = $region37
    $region36: #{tpu_custom_call.1} parent=1 // pred_region
      _
    $region37: #{tpu_custom_call.1} parent=1 // pred_fallthru
      _
    // Predicated region
    $region38: #{tpu_custom_call.1} parent=1 // pred_check
      _
    $region39: #{tpu_custom_call.1} parent=1 // pred_check_branch
      %43 = sbr.rel (0) target = $region41
    $region40: #{tpu_custom_call.1} parent=1 // pred_region
      _
    $region41: #{tpu_custom_call.1} parent=1 // pred_fallthru
      _
    // Predicated region
    $region42: #{tpu_custom_call.1} parent=1 // pred_check
      _
    $region43: #{tpu_custom_call.1} parent=1 // pred_check_branch
      %45 = sbr.rel (0) target = $region45
    $region44: #{tpu_custom_call.1} parent=1 // pred_region
      _
    $region45: #{tpu_custom_call.1} parent=1 // pred_fallthru
      _
    // Predicated region
    $region46: #{tpu_custom_call.1} parent=1 // pred_check
      _
    $region47: #{tpu_custom_call.1} parent=1 // pred_check_branch
      %47 = sbr.rel (0) target = $region49
    $region48: #{tpu_custom_call.1} parent=1 // pred_region
      _
    $region49: #{tpu_custom_call.1} parent=1 // pred_fallthru
      _
    // Predicated region
    $region50: #{tpu_custom_call.1} parent=1 // pred_check
      _
    $region51: #{tpu_custom_call.1} parent=1 // pred_check_branch
      %49 = sbr.rel (0) target = $region53
    $region52: #{tpu_custom_call.1} parent=1 // pred_region
      _
    $region53: #{tpu_custom_call.1} parent=1 // pred_fallthru
      _
    // Predicated region
    $region54: #{tpu_custom_call.1} parent=1 // pred_check
      _
    $region55: #{tpu_custom_call.1} parent=1 // pred_check_branch
      %51 = sbr.rel (0) target = $region57
    $region56: #{tpu_custom_call.1} parent=1 // pred_region
      _
    $region57: #{tpu_custom_call.1} parent=1 // pred_fallthru
      _
    // Predicated region
    $region58: #{tpu_custom_call.1} parent=1 // pred_check
      _
    $region59: #{tpu_custom_call.1} parent=1 // pred_check_branch
      %53 = sbr.rel (0) target = $region61
    $region60: #{tpu_custom_call.1} parent=1 // pred_region
      _
    $region61: #{tpu_custom_call.1} parent=1 // pred_fallthru
      _
    // Predicated region
    $region62: #{tpu_custom_call.1} parent=1 // pred_check
      _
    $region63: #{tpu_custom_call.1} parent=1 // pred_check_branch
      %55 = sbr.rel (0) target = $region65
    $region64: #{tpu_custom_call.1} parent=1 // pred_region
      _
    $region65: #{tpu_custom_call.1} parent=1 // pred_fallthru
      _
    // Predicated region
    $region66: #{tpu_custom_call.1} parent=1 // pred_check
      _
    $region67: #{tpu_custom_call.1} parent=1 // pred_check_branch
      %57 = sbr.rel (0) target = $region69
    $region68: #{tpu_custom_call.1} parent=1 // pred_region
      _
    $region69: #{tpu_custom_call.1} parent=1 // pred_fallthru
      _
    // Predicated region
    $region70: #{tpu_custom_call.1} parent=1 // pred_check
      _
    $region71: #{tpu_custom_call.1} parent=1 // pred_check_branch
      %59 = sbr.rel (0) target = $region73
    $region72: #{tpu_custom_call.1} parent=1 // pred_region
      _
    $region73: #{tpu_custom_call.1} parent=1 // pred_fallthru
      _
    %v61 = vld [vmem:[%s0] sm:$0xf]
    %v62 = vld [vmem:[%s0 + $0x4] sm:$0xf]
    %v63 = vld [vmem:[%s0 + $0x8] sm:$0x1]
    %v64 = vld [vmem:[%s0 + $0xc] sm:$0xf]
    %v65 = vld [vmem:[%s0 + $0x10] sm:$0xf]
    %v66 = vld [vmem:[%s0 + $0x14] sm:$0x1]
    %v67 = vld [vmem:[%s1] sm:$0xf]
    %v68 = vld [vmem:[%s1 + $0x4] sm:$0xf]
    %v69 = vld [vmem:[%s1 + $0x8] sm:$0xf]
    %v70 = vld [vmem:[%s1 + $0xc] sm:$0xf]
    %v71 = vld [vmem:[%s1 + $0x10] sm:$0xf]
    %v72 = vld [vmem:[%s1 + $0x14] sm:$0xf]
    %v73 = vld [vmem:[%s1 + $0x18] sm:$0xf]
    %v74 = vld [vmem:[%s1 + $0x1c] sm:$0xf]
    %v75 = vld [vmem:[%s1 + $0x20] sm:$0xf]
    %v76 = vld [vmem:[%s1 + $0x24] sm:$0xf]
    %vm77 = vsmask.f32 3328
    %vm78 = vsmask.f32 7440
    %vm79 = vmor %vm77, %vm78
    %v81 = vshrl.u32 %v61, 16
    %v83 = vrot.slane %v81, 4
    %v84 = vshll.u32 %v61, 16
    %v86 = vrot.slane %v84, 5
    %v87 = vor.u32 %v83, %v86
    %v88 = vrot.slane %v87, 4
    %v90 = vshll.u32 %v62, 16
    %v92 = vrot.slane %v90, 5
    %v93 = vsel %vm79, %v88, %v92
    %v94 = vshrl.u32 %v62, 16
    %v96 = vrot.slane %v94, 4
    %v97 = vor.u32 %v96, %v92
    %v98 = vrot.slane %v97, 4
    %v100 = vshll.u32 %v63, 16
    %v102 = vrot.slane %v100, 5
    %v103 = vsel %vm79, %v98, %v102
    %v105 = vshrl.u32 %v64, 16
    %v107 = vrot.slane %v105, 4
    %v108 = vshll.u32 %v64, 16
    %v110 = vrot.slane %v108, 5
    %v111 = vor.u32 %v107, %v110
    %v112 = vrot.slane %v111, 4
    %v114 = vshll.u32 %v65, 16
    %v116 = vrot.slane %v114, 5
    %v117 = vsel %vm79, %v112, %v116
    %v118 = vshrl.u32 %v65, 16
    %v120 = vrot.slane %v118, 4
    %v121 = vor.u32 %v120, %v116
    %v122 = vrot.slane %v121, 4
    %v124 = vshll.u32 %v66, 16
    %v126 = vrot.slane %v124, 5
    %v127 = vsel %vm79, %v122, %v126
    %s128 = scalar_lea.vmem %s1, 40
    %v129 = vld [vmem:[%s128] sm:$0xf]
    %v130 = vld [vmem:[%s128 + $0x4] sm:$0xf]
    %v131 = vld [vmem:[%s128 + $0x8] sm:$0xf]
    %v132 = vld [vmem:[%s128 + $0xc] sm:$0xf]
    %v133 = vld [vmem:[%s128 + $0x10] sm:$0xf]
    %v134 = vld [vmem:[%s128 + $0x14] sm:$0xf]
    %v135 = vld [vmem:[%s128 + $0x18] sm:$0xf]
    %v136 = vld [vmem:[%s128 + $0x1c] sm:$0xf]
    %v137 = vld [vmem:[%s128 + $0x20] sm:$0xf]
    %v138 = vld [vmem:[%s128 + $0x24] sm:$0xf]
    %v139 = vunpack.c.l.b16 %v93
    %v140 = vunpack.c.l.b16 %v103
    %v141 = vunpack.c.l.b16 %v117
    %v142 = vunpack.c.l.b16 %v127
    %v143 = vpack.c.b16 %v140, %v139
    %v144 = vpack.c.b16 %v142, %v141
    %v155 = vunpack.c.l.b16 %v129
    %v156 = vunpack.c.l.b16 %v130
    %v157 = vunpack.c.l.b16 %v131
    %v158 = vunpack.c.l.b16 %v132
    %v159 = vunpack.c.l.b16 %v133
    %v160 = vunpack.c.l.b16 %v134
    %v161 = vunpack.c.l.b16 %v135
    %v162 = vunpack.c.l.b16 %v136
    %v163 = vunpack.c.l.b16 %v137
    %v164 = vunpack.c.l.b16 %v138
    %v165 = vpack.c.b16 %v156, %v155
    %v166 = vpack.c.b16 %v158, %v157
    %v167 = vpack.c.b16 %v160, %v159
    %v168 = vpack.c.b16 %v162, %v161
    %v169 = vpack.c.b16 %v164, %v163
    %vm175 = vcmask 654336
    %v177 = vsel %vm175, %v143, 0
    %v180 = vsel %vm175, %v144, 0
    %182 = vmatprep.subr.bf16.mxu0 0
    %183 = vmatpush1.bf16.msra.mxu0 0
    %184 = vmatprep.subr.bf16.mxu0 0
    %185 = vmatpush1.bf16.msra.mxu0 0
    %186 = vmatprep.subr.bf16.mxu0 0
    %187 = vmatpush1.bf16.msra.mxu0 0
    %188 = vmatprep.subr.bf16.mxu0 0
    %189 = vmatpush1.bf16.msra.mxu0 %v169
    %190 = vmatprep.subr.bf16.mxu0 0
    %191 = vmatpush1.bf16.msra.mxu0 %v168
    %192 = vmatprep.subr.bf16.mxu0 0
    %193 = vmatpush1.bf16.msra.mxu0 %v167
    %194 = vmatprep.subr.bf16.mxu0 0
    %195 = vmatpush1.bf16.msra.mxu0 %v166
    %196 = vmatprep.subr.bf16.mxu0 0
    %197 = vmatpush1.bf16.msra.mxu0 %v165
    %198 = vmatprep.subr.bf16.mxu0 0
    %199 = vmatpush2.bf16.msra.mxu0 0
    %200 = vmatprep.subr.bf16.mxu0 0
    %201 = vmatpush2.bf16.msra.mxu0 0
    %202 = vmatprep.subr.bf16.mxu0 0
    %203 = vmatpush2.bf16.msra.mxu0 0
    %204 = vmatprep.subr.bf16.mxu0 0
    %205 = vmatpush2.bf16.msra.mxu0 0
    %206 = vmatprep.subr.bf16.mxu0 0
    %207 = vmatpush2.bf16.msra.mxu0 0
    %208 = vmatprep.subr.bf16.mxu0 0
    %209 = vmatpush2.bf16.msra.mxu0 0
    %210 = vmatprep.subr.bf16.mxu0 0
    %211 = vmatpush2.bf16.msra.mxu0 0
    %212 = vmatprep.subr.bf16.mxu0 0
    %213 = vmatpush2.bf16.msra.mxu0 0
    %214 = vmatprep.mubr.bf16.mxu0 0
    %215 = vmatmul.mubr.bf16.gmra.mxu0 %v177
    %v216 = vpop.f32.mrf.mxu0
    %v217 = vadd.f32 0.0, %v216
    %v218 = vpop.f32.mrf.mxu0
    %v219 = vpop.f32.mrf.mxu0
    %v220 = vadd.f32 0.0, %v219
    %v221 = vpop.f32.mrf.mxu0
    %222 = vmatprep.mubr.bf16.mxu0 0
    %223 = vmatmul.mubr.bf16.gmra.mxu0 %v180
    %v224 = vpop.f32.mrf.mxu0
    %v225 = vadd.f32 0.0, %v224
    %v226 = vpop.f32.mrf.mxu0
    %v227 = vpop.f32.mrf.mxu0
    %v228 = vadd.f32 0.0, %v227
    %v229 = vpop.f32.mrf.mxu0
    %230 = vdwg.mxu0
    %v235 = vunpack.c.l.b16 %v61
    %v236 = vunpack.c.l.b16 %v62
    %v237 = vunpack.c.l.b16 %v64
    %v238 = vunpack.c.l.b16 %v65
    %v239 = vpack.c.b16 %v236, %v235
    %v240 = vpack.c.b16 %v238, %v237
    %v251 = vunpack.c.l.b16 %v67
    %v252 = vunpack.c.l.b16 %v68
    %v253 = vunpack.c.l.b16 %v69
    %v254 = vunpack.c.l.b16 %v70
    %v255 = vunpack.c.l.b16 %v71
    %v256 = vunpack.c.l.b16 %v72
    %v257 = vunpack.c.l.b16 %v73
    %v258 = vunpack.c.l.b16 %v74
    %v259 = vunpack.c.l.b16 %v75
    %v260 = vunpack.c.l.b16 %v76
    %v261 = vpack.c.b16 %v252, %v251
    %v262 = vpack.c.b16 %v254, %v253
    %v263 = vpack.c.b16 %v256, %v255
    %v264 = vpack.c.b16 %v258, %v257
    %v265 = vpack.c.b16 %v260, %v259
    %v272 = vsel %vm175, %v239, 0
    %v275 = vsel %vm175, %v240, 0
    %277 = vmatprep.subr.bf16.mxu0 0
    %278 = vmatpush1.bf16.msra.mxu0 0
    %279 = vmatprep.subr.bf16.mxu0 0
    %280 = vmatpush1.bf16.msra.mxu0 0
    %281 = vmatprep.subr.bf16.mxu0 0
    %282 = vmatpush1.bf16.msra.mxu0 0
    %283 = vmatprep.subr.bf16.mxu0 0
    %284 = vmatpush1.bf16.msra.mxu0 %v265
    %285 = vmatprep.subr.bf16.mxu0 0
    %286 = vmatpush1.bf16.msra.mxu0 %v264
    %287 = vmatprep.subr.bf16.mxu0 0
    %288 = vmatpush1.bf16.msra.mxu0 %v263
    %289 = vmatprep.subr.bf16.mxu0 0
    %290 = vmatpush1.bf16.msra.mxu0 %v262
    %291 = vmatprep.subr.bf16.mxu0 0
    %292 = vmatpush1.bf16.msra.mxu0 %v261
    %293 = vmatprep.subr.bf16.mxu0 0
    %294 = vmatpush2.bf16.msra.mxu0 0
    %295 = vmatprep.subr.bf16.mxu0 0
    %296 = vmatpush2.bf16.msra.mxu0 0
    %297 = vmatprep.subr.bf16.mxu0 0
    %298 = vmatpush2.bf16.msra.mxu0 0
    %299 = vmatprep.subr.bf16.mxu0 0
    %300 = vmatpush2.bf16.msra.mxu0 0
    %301 = vmatprep.subr.bf16.mxu0 0
    %302 = vmatpush2.bf16.msra.mxu0 0
    %303 = vmatprep.subr.bf16.mxu0 0
    %304 = vmatpush2.bf16.msra.mxu0 0
    %305 = vmatprep.subr.bf16.mxu0 0
    %306 = vmatpush2.bf16.msra.mxu0 0
    %307 = vmatprep.subr.bf16.mxu0 0
    %308 = vmatpush2.bf16.msra.mxu0 0
    %309 = vmatprep.mubr.bf16.mxu0 0
    %310 = vmatmul.mubr.bf16.gmra.mxu0 %v272
    %v311 = vpop.f32.mrf.mxu0
    %v312 = vadd.f32 %v217, %v311
    %v313 = vpop.f32.mrf.mxu0
    %v314 = vpop.f32.mrf.mxu0
    %v315 = vadd.f32 %v220, %v314
    %v316 = vpop.f32.mrf.mxu0
    %317 = vmatprep.mubr.bf16.mxu0 0
    %318 = vmatmul.mubr.bf16.gmra.mxu0 %v275
    %v319 = vpop.f32.mrf.mxu0
    %v320 = vadd.f32 %v225, %v319
    %v321 = vpop.f32.mrf.mxu0
    %v322 = vpop.f32.mrf.mxu0
    %v323 = vadd.f32 %v228, %v322
    %v324 = vpop.f32.mrf.mxu0
    %325 = vdwg.mxu0
    %vm328 = vcmask 1042432
    %vm329 = vcmask 1046532
    %vm330 = vmor %vm328, %vm329
    %v331 = vrot.slane %v61, 5
    %v332 = vrot.slane %v331, 4
    %v333 = vrot.slane %v62, 5
    %v334 = vsel %vm330, %v332, %v333
    %v335 = vrot.slane %v333, 4
    %v336 = vrot.slane %v63, 5
    %v337 = vsel %vm330, %v335, %v336
    %v338 = vrot.slane %v64, 5
    %v339 = vrot.slane %v338, 4
    %v340 = vrot.slane %v65, 5
    %v341 = vsel %vm330, %v339, %v340
    %v342 = vrot.slane %v340, 4
    %v343 = vrot.slane %v66, 5
    %v344 = vsel %vm330, %v342, %v343
    %s345 = scalar_lea.vmem %s1, 80
    %v346 = vld [vmem:[%s345] sm:$0xf]
    %v347 = vld [vmem:[%s345 + $0x4] sm:$0xf]
    %v348 = vld [vmem:[%s345 + $0x8] sm:$0xf]
    %v349 = vld [vmem:[%s345 + $0xc] sm:$0xf]
    %v350 = vld [vmem:[%s345 + $0x10] sm:$0xf]
    %v351 = vld [vmem:[%s345 + $0x14] sm:$0xf]
    %v352 = vld [vmem:[%s345 + $0x18] sm:$0xf]
    %v353 = vld [vmem:[%s345 + $0x1c] sm:$0xf]
    %v354 = vld [vmem:[%s345 + $0x20] sm:$0xf]
    %v355 = vld [vmem:[%s345 + $0x24] sm:$0xf]
    %v356 = vunpack.c.l.b16 %v334
    %v357 = vunpack.c.l.b16 %v337
    %v358 = vunpack.c.l.b16 %v341
    %v359 = vunpack.c.l.b16 %v344
    %v360 = vpack.c.b16 %v357, %v356
    %v361 = vpack.c.b16 %v359, %v358
    %v372 = vunpack.c.l.b16 %v346
    %v373 = vunpack.c.l.b16 %v347
    %v374 = vunpack.c.l.b16 %v348
    %v375 = vunpack.c.l.b16 %v349
    %v376 = vunpack.c.l.b16 %v350
    %v377 = vunpack.c.l.b16 %v351
    %v378 = vunpack.c.l.b16 %v352
    %v379 = vunpack.c.l.b16 %v353
    %v380 = vunpack.c.l.b16 %v354
    %v381 = vunpack.c.l.b16 %v355
    %v382 = vpack.c.b16 %v373, %v372
    %v383 = vpack.c.b16 %v375, %v374
    %v384 = vpack.c.b16 %v377, %v376
    %v385 = vpack.c.b16 %v379, %v378
    %v386 = vpack.c.b16 %v381, %v380
    %v393 = vsel %vm175, %v360, 0
    %v396 = vsel %vm175, %v361, 0
    %398 = vmatprep.subr.bf16.mxu0 0
    %399 = vmatpush1.bf16.msra.mxu0 0
    %400 = vmatprep.subr.bf16.mxu0 0
    %401 = vmatpush1.bf16.msra.mxu0 0
    %402 = vmatprep.subr.bf16.mxu0 0
    %403 = vmatpush1.bf16.msra.mxu0 0
    %404 = vmatprep.subr.bf16.mxu0 0
    %405 = vmatpush1.bf16.msra.mxu0 %v386
    %406 = vmatprep.subr.bf16.mxu0 0
    %407 = vmatpush1.bf16.msra.mxu0 %v385
    %408 = vmatprep.subr.bf16.mxu0 0
    %409 = vmatpush1.bf16.msra.mxu0 %v384
    %410 = vmatprep.subr.bf16.mxu0 0
    %411 = vmatpush1.bf16.msra.mxu0 %v383
    %412 = vmatprep.subr.bf16.mxu0 0
    %413 = vmatpush1.bf16.msra.mxu0 %v382
    %414 = vmatprep.subr.bf16.mxu0 0
    %415 = vmatpush2.bf16.msra.mxu0 0
    %416 = vmatprep.subr.bf16.mxu0 0
    %417 = vmatpush2.bf16.msra.mxu0 0
    %418 = vmatprep.subr.bf16.mxu0 0
    %419 = vmatpush2.bf16.msra.mxu0 0
    %420 = vmatprep.subr.bf16.mxu0 0
    %421 = vmatpush2.bf16.msra.mxu0 0
    %422 = vmatprep.subr.bf16.mxu0 0
    %423 = vmatpush2.bf16.msra.mxu0 0
    %424 = vmatprep.subr.bf16.mxu0 0
    %425 = vmatpush2.bf16.msra.mxu0 0
    %426 = vmatprep.subr.bf16.mxu0 0
    %427 = vmatpush2.bf16.msra.mxu0 0
    %428 = vmatprep.subr.bf16.mxu0 0
    %429 = vmatpush2.bf16.msra.mxu0 0
    %430 = vmatprep.mubr.bf16.mxu0 0
    %431 = vmatmul.mubr.bf16.gmra.mxu0 %v393
    %v432 = vpop.f32.mrf.mxu0
    %v433 = vadd.f32 0.0, %v432
    %v434 = vpop.f32.mrf.mxu0
    %v435 = vpop.f32.mrf.mxu0
    %v436 = vadd.f32 0.0, %v435
    %v437 = vpop.f32.mrf.mxu0
    %438 = vmatprep.mubr.bf16.mxu0 0
    %439 = vmatmul.mubr.bf16.gmra.mxu0 %v396
    %v440 = vpop.f32.mrf.mxu0
    %v441 = vadd.f32 0.0, %v440
    %v442 = vpop.f32.mrf.mxu0
    %v443 = vpop.f32.mrf.mxu0
    %v444 = vadd.f32 0.0, %v443
    %v445 = vpop.f32.mrf.mxu0
    %446 = vdwg.mxu0
    %v447 = vadd.f32 %v312, %v433
    %v448 = vadd.f32 %v315, %v436
    %v449 = vadd.f32 %v320, %v441
    %v450 = vadd.f32 %v323, %v444
    %v451 = vld [vmem:[%s2] sm:$0x1]
    %v453 = vlaneseq
    %v454 = vshrl.u32 %v453, 7
    %v455 = vsub.s32 0, %v454
    %v456 = vrot.slane %v451, %v455
    %v458 = vadd.f32 %v447, %v456
    %v459 = vadd.f32 %v448, %v456
    %v460 = vadd.f32 %v449, %v456
    %v461 = vadd.f32 %v450, %v456
    %v462 = vmul.f32 %v458, 0.5
    %v463 = vmul.f32 %v459, 0.5
    %v464 = vmul.f32 %v460, 0.5
    %v465 = vmul.f32 %v461, 0.5
    %v466 = vmul.f32 %v458, 0.70710677
    %v467 = vmul.f32 %v459, 0.70710677
    %v468 = vmul.f32 %v460, 0.70710677
    %v469 = vmul.f32 %v461, 0.70710677
    %v470 = verf.f32.pop %v466
    %v471 = verf.f32.pop %v467
    %v472 = verf.f32.pop %v468
    %v473 = verf.f32.pop %v469
    %v474 = vadd.f32 %v470, 1.0
    %v475 = vadd.f32 %v471, 1.0
    %v476 = vadd.f32 %v472, 1.0
    %v477 = vadd.f32 %v473, 1.0
    %v478 = vmul.f32 %v462, %v474
    %v479 = vmul.f32 %v463, %v475
    %v480 = vmul.f32 %v464, %v476
    %v481 = vmul.f32 %v465, %v477
    %vm482 = vcmask 253952
    %483 = vst.msk [vmem:[#allocation2] sm:$0x1] %vm482, 0.0
    %484 = vst.msk [vmem:[#allocation2 + $0x18] sm:$0x1] %vm482, 0.0
    %485 = vst.msk [vmem:[#allocation2 + $0x11] sm:$0x1] %vm482, 0.0
    %486 = vst.msk [vmem:[#allocation2 + $0x29] sm:$0x1] %vm482, 0.0
    %vm487 = vcmask 261120
    %488 = vst.msk [vmem:[#allocation2 + $0x1] sm:$0xff] %vm487, %v478
    %489 = vst.msk [vmem:[#allocation2 + $0x9] sm:$0xff] %vm487, %v479
    %490 = vst.msk [vmem:[#allocation2 + $0x19] sm:$0xff] %vm487, %v480
    %491 = vst.msk [vmem:[#allocation2 + $0x21] sm:$0xff] %vm487, %v481
    %v492 = vld [vmem:[#allocation2] ss:$2 sm:$0xff]
    %s493 = scalar_lea.vmem [#allocation2], 24
    %v494 = vld [vmem:[%s493] ss:$2 sm:$0xff]
    %v495 = vpack.c.bf16 %v494, %v492
    %v496 = vld [vmem:[%s3] sm:$0xf]
    %v497 = vld [vmem:[%s3 + $0x4] sm:$0xf]
    %v498 = vld [vmem:[%s3 + $0x8] sm:$0xf]
    %v499 = vld [vmem:[%s3 + $0xc] sm:$0xf]
    %s500 = scalar_lea.vmem [#allocation2], 1
    %v501 = vld [vmem:[%s500] ss:$2 sm:$0xff]
    %s502 = scalar_lea.vmem [#allocation2], 25
    %v503 = vld [vmem:[%s502] ss:$2 sm:$0xff]
    %v504 = vpack.c.bf16 %v503, %v501
    %s505 = scalar_lea.vmem %s3, 16
    %v506 = vld [vmem:[%s505] sm:$0xf]
    %v507 = vld [vmem:[%s505 + $0x4] sm:$0xf]
    %v508 = vld [vmem:[%s505 + $0x8] sm:$0xf]
    %v509 = vld [vmem:[%s505 + $0xc] sm:$0xf]
    %v514 = vunpack.c.l.b16 %v506
    %v515 = vunpack.c.l.b16 %v507
    %v516 = vunpack.c.l.b16 %v508
    %v517 = vunpack.c.l.b16 %v509
    %v518 = vpack.c.b16 %v515, %v514
    %v519 = vpack.c.b16 %v517, %v516
    %v523 = vsel %vm487, %v504, 0
    %525 = vmatprep.subr.bf16.mxu0 0
    %526 = vmatpush1.bf16.msra.mxu0 0
    %527 = vmatprep.subr.bf16.mxu0 0
    %528 = vmatpush1.bf16.msra.mxu0 0
    %529 = vmatprep.subr.bf16.mxu0 0
    %530 = vmatpush1.bf16.msra.mxu0 0
    %531 = vmatprep.subr.bf16.mxu0 0
    %532 = vmatpush1.bf16.msra.mxu0 0
    %533 = vmatprep.subr.bf16.mxu0 0
    %534 = vmatpush1.bf16.msra.mxu0 0
    %535 = vmatprep.subr.bf16.mxu0 0
    %536 = vmatpush1.bf16.msra.mxu0 0
    %537 = vmatprep.subr.bf16.mxu0 0
    %538 = vmatpush1.bf16.msra.mxu0 %v519
    %539 = vmatprep.subr.bf16.mxu0 0
    %540 = vmatpush1.bf16.msra.mxu0 %v518
    %541 = vmatprep.subr.bf16.mxu0 0
    %542 = vmatpush2.bf16.msra.mxu0 0
    %543 = vmatprep.subr.bf16.mxu0 0
    %544 = vmatpush2.bf16.msra.mxu0 0
    %545 = vmatprep.subr.bf16.mxu0 0
    %546 = vmatpush2.bf16.msra.mxu0 0
    %547 = vmatprep.subr.bf16.mxu0 0
    %548 = vmatpush2.bf16.msra.mxu0 0
    %549 = vmatprep.subr.bf16.mxu0 0
    %550 = vmatpush2.bf16.msra.mxu0 0
    %551 = vmatprep.subr.bf16.mxu0 0
    %552 = vmatpush2.bf16.msra.mxu0 0
    %553 = vmatprep.subr.bf16.mxu0 0
    %554 = vmatpush2.bf16.msra.mxu0 0
    %555 = vmatprep.subr.bf16.mxu0 0
    %556 = vmatpush2.bf16.msra.mxu0 0
    %557 = vmatprep.mubr.bf16.mxu0 0
    %558 = vmatmul.mubr.bf16.gmra.mxu0 %v523
    %v559 = vpop.f32.mrf.mxu0
    %v560 = vadd.f32 0.0, %v559
    %v561 = vpop.f32.mrf.mxu0
    %v562 = vpop.f32.mrf.mxu0
    %v563 = vadd.f32 0.0, %v562
    %v564 = vpop.f32.mrf.mxu0
    %565 = vdwg.mxu0
    %v570 = vunpack.c.l.b16 %v496
    %v571 = vunpack.c.l.b16 %v497
    %v572 = vunpack.c.l.b16 %v498
    %v573 = vunpack.c.l.b16 %v499
    %v574 = vpack.c.b16 %v571, %v570
    %v575 = vpack.c.b16 %v573, %v572
    %v579 = vsel %vm487, %v495, 0
    %581 = vmatprep.subr.bf16.mxu0 0
    %582 = vmatpush1.bf16.msra.mxu0 0
    %583 = vmatprep.subr.bf16.mxu0 0
    %584 = vmatpush1.bf16.msra.mxu0 0
    %585 = vmatprep.subr.bf16.mxu0 0
    %586 = vmatpush1.bf16.msra.mxu0 0
    %587 = vmatprep.subr.bf16.mxu0 0
    %588 = vmatpush1.bf16.msra.mxu0 0
    %589 = vmatprep.subr.bf16.mxu0 0
    %590 = vmatpush1.bf16.msra.mxu0 0
    %591 = vmatprep.subr.bf16.mxu0 0
    %592 = vmatpush1.bf16.msra.mxu0 0
    %593 = vmatprep.subr.bf16.mxu0 0
    %594 = vmatpush1.bf16.msra.mxu0 %v575
    %595 = vmatprep.subr.bf16.mxu0 0
    %596 = vmatpush1.bf16.msra.mxu0 %v574
    %597 = vmatprep.subr.bf16.mxu0 0
    %598 = vmatpush2.bf16.msra.mxu0 0
    %599 = vmatprep.subr.bf16.mxu0 0
    %600 = vmatpush2.bf16.msra.mxu0 0
    %601 = vmatprep.subr.bf16.mxu0 0
    %602 = vmatpush2.bf16.msra.mxu0 0
    %603 = vmatprep.subr.bf16.mxu0 0
    %604 = vmatpush2.bf16.msra.mxu0 0
    %605 = vmatprep.subr.bf16.mxu0 0
    %606 = vmatpush2.bf16.msra.mxu0 0
    %607 = vmatprep.subr.bf16.mxu0 0
    %608 = vmatpush2.bf16.msra.mxu0 0
    %609 = vmatprep.subr.bf16.mxu0 0
    %610 = vmatpush2.bf16.msra.mxu0 0
    %611 = vmatprep.subr.bf16.mxu0 0
    %612 = vmatpush2.bf16.msra.mxu0 0
    %613 = vmatprep.mubr.bf16.mxu0 0
    %614 = vmatmul.mubr.bf16.gmra.mxu0 %v579
    %v615 = vpop.f32.mrf.mxu0
    %v616 = vadd.f32 %v560, %v615
    %v617 = vpop.f32.mrf.mxu0
    %v618 = vpop.f32.mrf.mxu0
    %v619 = vadd.f32 %v563, %v618
    %v620 = vpop.f32.mrf.mxu0
    %621 = vdwg.mxu0
    %s622 = scalar_lea.vmem [#allocation2], 2
    %v623 = vld [vmem:[%s622] ss:$2 sm:$0xff]
    %s624 = scalar_lea.vmem [#allocation2], 26
    %v625 = vld [vmem:[%s624] ss:$2 sm:$0xff]
    %v626 = vpack.c.bf16 %v625, %v623
    %s627 = scalar_lea.vmem %s3, 32
    %v628 = vld [vmem:[%s627] sm:$0xf]
    %v629 = vld [vmem:[%s627 + $0x4] sm:$0xf]
    %v630 = vld [vmem:[%s627 + $0x8] sm:$0xf]
    %v631 = vld [vmem:[%s627 + $0xc] sm:$0xf]
    %v636 = vunpack.c.l.b16 %v628
    %v637 = vunpack.c.l.b16 %v629
    %v638 = vunpack.c.l.b16 %v630
    %v639 = vunpack.c.l.b16 %v631
    %v640 = vpack.c.b16 %v637, %v636
    %v641 = vpack.c.b16 %v639, %v638
    %v645 = vsel %vm487, %v626, 0
    %647 = vmatprep.subr.bf16.mxu0 0
    %648 = vmatpush1.bf16.msra.mxu0 0
    %649 = vmatprep.subr.bf16.mxu0 0
    %650 = vmatpush1.bf16.msra.mxu0 0
    %651 = vmatprep.subr.bf16.mxu0 0
    %652 = vmatpush1.bf16.msra.mxu0 0
    %653 = vmatprep.subr.bf16.mxu0 0
    %654 = vmatpush1.bf16.msra.mxu0 0
    %655 = vmatprep.subr.bf16.mxu0 0
    %656 = vmatpush1.bf16.msra.mxu0 0
    %657 = vmatprep.subr.bf16.mxu0 0
    %658 = vmatpush1.bf16.msra.mxu0 0
    %659 = vmatprep.subr.bf16.mxu0 0
    %660 = vmatpush1.bf16.msra.mxu0 %v641
    %661 = vmatprep.subr.bf16.mxu0 0
    %662 = vmatpush1.bf16.msra.mxu0 %v640
    %663 = vmatprep.subr.bf16.mxu0 0
    %664 = vmatpush2.bf16.msra.mxu0 0
    %665 = vmatprep.subr.bf16.mxu0 0
    %666 = vmatpush2.bf16.msra.mxu0 0
    %667 = vmatprep.subr.bf16.mxu0 0
    %668 = vmatpush2.bf16.msra.mxu0 0
    %669 = vmatprep.subr.bf16.mxu0 0
    %670 = vmatpush2.bf16.msra.mxu0 0
    %671 = vmatprep.subr.bf16.mxu0 0
    %672 = vmatpush2.bf16.msra.mxu0 0
    %673 = vmatprep.subr.bf16.mxu0 0
    %674 = vmatpush2.bf16.msra.mxu0 0
    %675 = vmatprep.subr.bf16.mxu0 0
    %676 = vmatpush2.bf16.msra.mxu0 0
    %677 = vmatprep.subr.bf16.mxu0 0
    %678 = vmatpush2.bf16.msra.mxu0 0
    %679 = vmatprep.mubr.bf16.mxu0 0
    %680 = vmatmul.mubr.bf16.gmra.mxu0 %v645
    %v681 = vpop.f32.mrf.mxu0
    %v682 = vadd.f32 0.0, %v681
    %v683 = vpop.f32.mrf.mxu0
    %v684 = vpop.f32.mrf.mxu0
    %v685 = vadd.f32 0.0, %v684
    %v686 = vpop.f32.mrf.mxu0
    %687 = vdwg.mxu0
    %v688 = vadd.f32 %v616, %v682
    %v689 = vadd.f32 %v619, %v685
    %v690 = vld [vmem:[%s4] sm:$0x1]
    %v692 = vlaneseq
    %v693 = vshrl.u32 %v692, 7
    %v694 = vsub.s32 0, %v693
    %v695 = vrot.slane %v690, %v694
    %v697 = vadd.f32 %v688, %v695
    %v698 = vadd.f32 %v689, %v695
    %v699 = vmul.f32 %v697, 0.5
    %v700 = vmul.f32 %v698, 0.5
    %v701 = vmul.f32 %v697, 0.70710677
    %v702 = vmul.f32 %v698, 0.70710677
    %v703 = verf.f32.pop %v701
    %v704 = verf.f32.pop %v702
    %v705 = vadd.f32 %v703, 1.0
    %v706 = vadd.f32 %v704, 1.0
    %v707 = vmul.f32 %v699, %v705
    %v708 = vmul.f32 %v700, %v706
    %v709 = vld [vmem:[%s5] sm:$0xff]
    %v710 = vld [vmem:[%s5 + $0x8] sm:$0xff]
    %v711 = vadd.f32 %v707, %v709
    %v712 = vadd.f32 %v708, %v710
    %v713 = vpack.c.bf16 %v712, %v711
    %v714 = vld [vmem:[%s6] sm:$0xf]
    %v715 = vld [vmem:[%s6 + $0x4] sm:$0xf]
    %v716 = vld [vmem:[%s6 + $0x8] sm:$0xf]
    %v717 = vld [vmem:[%s6 + $0xc] sm:$0xf]
    %v718 = vld [vmem:[%s7] sm:$0x1]
    %v720 = vlaneseq
    %v721 = vshrl.u32 %v720, 7
    %v722 = vsub.s32 0, %v721
    %v723 = vrot.slane %v718, %v722
    %v729 = vunpack.c.l.b16 %v714
    %v730 = vunpack.c.l.b16 %v715
    %v731 = vunpack.c.l.b16 %v716
    %v732 = vunpack.c.l.b16 %v717
    %v733 = vpack.c.b16 %v730, %v729
    %v734 = vpack.c.b16 %v732, %v731
    %v738 = vsel %vm487, %v713, 0
    %740 = vmatprep.subr.bf16.mxu0 0
    %741 = vmatpush1.bf16.msra.mxu0 0
    %742 = vmatprep.subr.bf16.mxu0 0
    %743 = vmatpush1.bf16.msra.mxu0 0
    %744 = vmatprep.subr.bf16.mxu0 0
    %745 = vmatpush1.bf16.msra.mxu0 0
    %746 = vmatprep.subr.bf16.mxu0 0
    %747 = vmatpush1.bf16.msra.mxu0 0
    %748 = vmatprep.subr.bf16.mxu0 0
    %749 = vmatpush1.bf16.msra.mxu0 0
    %750 = vmatprep.subr.bf16.mxu0 0
    %751 = vmatpush1.bf16.msra.mxu0 0
    %752 = vmatprep.subr.bf16.mxu0 0
    %753 = vmatpush1.bf16.msra.mxu0 %v734
    %754 = vmatprep.subr.bf16.mxu0 0
    %755 = vmatpush1.bf16.msra.mxu0 %v733
    %756 = vmatprep.subr.bf16.mxu0 0
    %757 = vmatpush2.bf16.msra.mxu0 0
    %758 = vmatprep.subr.bf16.mxu0 0
    %759 = vmatpush2.bf16.msra.mxu0 0
    %760 = vmatprep.subr.bf16.mxu0 0
    %761 = vmatpush2.bf16.msra.mxu0 0
    %762 = vmatprep.subr.bf16.mxu0 0
    %763 = vmatpush2.bf16.msra.mxu0 0
    %764 = vmatprep.subr.bf16.mxu0 0
    %765 = vmatpush2.bf16.msra.mxu0 0
    %766 = vmatprep.subr.bf16.mxu0 0
    %767 = vmatpush2.bf16.msra.mxu0 0
    %768 = vmatprep.subr.bf16.mxu0 0
    %769 = vmatpush2.bf16.msra.mxu0 0
    %770 = vmatprep.subr.bf16.mxu0 0
    %771 = vmatpush2.bf16.msra.mxu0 0
    %772 = vmatprep.mubr.bf16.mxu0 0
    %773 = vmatmul.mubr.bf16.gmra.mxu0 %v738
    %v774 = vpop.f32.mrf.mxu0
    %v775 = vadd.f32 %v723, %v774
    %v776 = vpop.f32.mrf.mxu0
    %v777 = vpop.f32.mrf.mxu0
    %v778 = vadd.f32 %v723, %v777
    %v779 = vpop.f32.mrf.mxu0
    %780 = vdwg.mxu0
    %v781 = vpack.c.bf16 %v775, %v775
    %v782 = vpack.c.bf16 %v778, %v778
    %784 = vrot.lane.b32.xlu0 %v781, 96
    %v785 = vpop.permute.xlu0 %784
    %vm786 = vcmask 64512
    %v788 = vsel %vm786, %v781, 0
    %v791 = vsel %vm786, %v785, 0
    %793 = vmatprep.subr.bf16.mxu0 0
    %794 = vmatpush1.bf16.xpose.msra.mxu0 0
    %795 = vmatprep.subr.bf16.mxu0 0
    %796 = vmatpush1.bf16.xpose.msra.mxu0 0
    %797 = vmatprep.subr.bf16.mxu0 0
    %798 = vmatpush1.bf16.xpose.msra.mxu0 0
    %799 = vmatprep.subr.bf16.mxu0 0
    %800 = vmatpush1.bf16.xpose.msra.mxu0 0
    %801 = vmatprep.subr.bf16.mxu0 0
    %802 = vmatpush1.bf16.xpose.msra.mxu0 0
    %803 = vmatprep.subr.bf16.mxu0 0
    %804 = vmatpush1.bf16.xpose.msra.mxu0 0
    %805 = vmatprep.subr.bf16.mxu0 0
    %806 = vmatpush1.bf16.xpose.msra.mxu0 0
    %807 = vmatprep.subr.bf16.mxu0 0
    %808 = vmatpush1.bf16.xpose.msra.mxu0 %v791
    %809 = vmatprep.subr.bf16.mxu0 0
    %810 = vmatpush2.bf16.xpose.msra.mxu0 0
    %811 = vmatprep.subr.bf16.mxu0 0
    %812 = vmatpush2.bf16.xpose.msra.mxu0 0
    %813 = vmatprep.subr.bf16.mxu0 0
    %814 = vmatpush2.bf16.xpose.msra.mxu0 0
    %815 = vmatprep.subr.bf16.mxu0 0
    %816 = vmatpush2.bf16.xpose.msra.mxu0 0
    %817 = vmatprep.subr.bf16.mxu0 0
    %818 = vmatpush2.bf16.xpose.msra.mxu0 0
    %819 = vmatprep.subr.bf16.mxu0 0
    %820 = vmatpush2.bf16.xpose.msra.mxu0 0
    %821 = vmatprep.subr.bf16.mxu0 0
    %822 = vmatpush2.bf16.xpose.msra.mxu0 0
    %823 = vmatprep.subr.bf16.mxu0 0
    %824 = vmatpush2.bf16.xpose.msra.mxu0 0
    %825 = vmatprep.mubr.bf16.mxu0 0
    %826 = vmatmul.mubr.bf16.gmra.mxu0 %v788
    %v827 = vpop.f32.mrf.mxu0
    %v828 = vadd.f32 0.0, %v827
    %v829 = vpop.f32.mrf.mxu0
    %v830 = vpop.f32.mrf.mxu0
    %v831 = vpop.f32.mrf.mxu0
    %832 = vdwg.mxu0
    %834 = vrot.lane.b32.xlu0 %v782, 96
    %v835 = vpop.permute.xlu0 %834
    %v837 = vsel %vm786, %v782, 0
    %v840 = vsel %vm786, %v835, 0
    %842 = vmatprep.subr.bf16.mxu0 0
    %843 = vmatpush1.bf16.xpose.msra.mxu0 0
    %844 = vmatprep.subr.bf16.mxu0 0
    %845 = vmatpush1.bf16.xpose.msra.mxu0 0
    %846 = vmatprep.subr.bf16.mxu0 0
    %847 = vmatpush1.bf16.xpose.msra.mxu0 0
    %848 = vmatprep.subr.bf16.mxu0 0
    %849 = vmatpush1.bf16.xpose.msra.mxu0 0
    %850 = vmatprep.subr.bf16.mxu0 0
    %851 = vmatpush1.bf16.xpose.msra.mxu0 0
    %852 = vmatprep.subr.bf16.mxu0 0
    %853 = vmatpush1.bf16.xpose.msra.mxu0 0
    %854 = vmatprep.subr.bf16.mxu0 0
    %855 = vmatpush1.bf16.xpose.msra.mxu0 0
    %856 = vmatprep.subr.bf16.mxu0 0
    %857 = vmatpush1.bf16.xpose.msra.mxu0 %v840
    %858 = vmatprep.subr.bf16.mxu0 0
    %859 = vmatpush2.bf16.xpose.msra.mxu0 0
    %860 = vmatprep.subr.bf16.mxu0 0
    %861 = vmatpush2.bf16.xpose.msra.mxu0 0
    %862 = vmatprep.subr.bf16.mxu0 0
    %863 = vmatpush2.bf16.xpose.msra.mxu0 0
    %864 = vmatprep.subr.bf16.mxu0 0
    %865 = vmatpush2.bf16.xpose.msra.mxu0 0
    %866 = vmatprep.subr.bf16.mxu0 0
    %867 = vmatpush2.bf16.xpose.msra.mxu0 0
    %868 = vmatprep.subr.bf16.mxu0 0
    %869 = vmatpush2.bf16.xpose.msra.mxu0 0
    %870 = vmatprep.subr.bf16.mxu0 0
    %871 = vmatpush2.bf16.xpose.msra.mxu0 0
    %872 = vmatprep.subr.bf16.mxu0 0
    %873 = vmatpush2.bf16.xpose.msra.mxu0 0
    %874 = vmatprep.mubr.bf16.mxu0 0
    %875 = vmatmul.mubr.bf16.gmra.mxu0 %v837
    %v876 = vpop.f32.mrf.mxu0
    %v877 = vadd.f32 0.0, %v876
    %v878 = vpop.f32.mrf.mxu0
    %v879 = vpop.f32.mrf.mxu0
    %v880 = vpop.f32.mrf.mxu0
    %881 = vdwg.mxu0
    %v882 = vsel %vm786, %v828, -inf
    %883 = vmax.xlane.f32.xlu0 %v882
    %v884 = vpop.xlane.xlu0 %883
    %v885 = vsel %vm786, %v877, -inf
    %886 = vmax.xlane.f32.xlu0 %v885
    %v887 = vpop.xlane.xlu0 %886
    %v888 = vsub.f32 %v828, %v884
    %v889 = vsub.f32 %v877, %v887
    %v890 = vmul.f32 %v888, 1.442695
    %v891 = vpow.pop %v890
    %v892 = vmul.f32 %v889, 1.442695
    %v893 = vpow.pop %v892
    %v894 = vsel %vm786, %v891, 0.0
    %895 = vadd.xlane.f32.xlu0 %v894
    %v896 = vpop.xlane.xlu0 %895
    %v897 = vsel %vm786, %v893, 0.0
    %898 = vadd.xlane.f32.xlu0 %v897
    %v899 = vpop.xlane.xlu0 %898
    %v900 = vrcp.pop %v896
    %v901 = vrcp.pop %v899
    %v902 = vmul.f32 %v891, %v900
    %v903 = vmul.f32 %v893, %v901
    %v904 = vpack.c.bf16 %v902, %v902
    %v905 = vpack.c.bf16 %v903, %v903
    %906 = vrot.lane.b32.xlu0 %v781, 64
    %v907 = vpop.permute.xlu0 %906
    %v909 = vsel %vm786, %v904, 0
    %vm911 = vcmask 1043456
    %v913 = vsel %vm911, %v907, 0
    %915 = vmatprep.subr.bf16.mxu0 0
    %916 = vmatpush1.bf16.msra.mxu0 0
    %917 = vmatprep.subr.bf16.mxu0 0
    %918 = vmatpush1.bf16.msra.mxu0 0
    %919 = vmatprep.subr.bf16.mxu0 0
    %920 = vmatpush1.bf16.msra.mxu0 0
    %921 = vmatprep.subr.bf16.mxu0 0
    %922 = vmatpush1.bf16.msra.mxu0 0
    %923 = vmatprep.subr.bf16.mxu0 0
    %924 = vmatpush1.bf16.msra.mxu0 0
    %925 = vmatprep.subr.bf16.mxu0 0
    %926 = vmatpush1.bf16.msra.mxu0 0
    %927 = vmatprep.subr.bf16.mxu0 0
    %928 = vmatpush1.bf16.msra.mxu0 0
    %929 = vmatprep.subr.bf16.mxu0 0
    %930 = vmatpush1.bf16.msra.mxu0 %v913
    %931 = vmatprep.subr.bf16.mxu0 0
    %932 = vmatpush2.bf16.msra.mxu0 0
    %933 = vmatprep.subr.bf16.mxu0 0
    %934 = vmatpush2.bf16.msra.mxu0 0
    %935 = vmatprep.subr.bf16.mxu0 0
    %936 = vmatpush2.bf16.msra.mxu0 0
    %937 = vmatprep.subr.bf16.mxu0 0
    %938 = vmatpush2.bf16.msra.mxu0 0
    %939 = vmatprep.subr.bf16.mxu0 0
    %940 = vmatpush2.bf16.msra.mxu0 0
    %941 = vmatprep.subr.bf16.mxu0 0
    %942 = vmatpush2.bf16.msra.mxu0 0
    %943 = vmatprep.subr.bf16.mxu0 0
    %944 = vmatpush2.bf16.msra.mxu0 0
    %945 = vmatprep.subr.bf16.mxu0 0
    %946 = vmatpush2.bf16.msra.mxu0 0
    %947 = vmatprep.mubr.bf16.mxu0 0
    %948 = vmatmul.mubr.bf16.gmra.mxu0 %v909
    %v949 = vpop.f32.mrf.mxu0
    %v950 = vadd.f32 0.0, %v949
    %v951 = vpop.f32.mrf.mxu0
    %v952 = vpop.f32.mrf.mxu0
    %v953 = vpop.f32.mrf.mxu0
    %954 = vdwg.mxu0
    %955 = vrot.lane.b32.xlu0 %v782, 64
    %v956 = vpop.permute.xlu0 %955
    %v958 = vsel %vm786, %v905, 0
    %v961 = vsel %vm911, %v956, 0
    %963 = vmatprep.subr.bf16.mxu0 0
    %964 = vmatpush1.bf16.msra.mxu0 0
    %965 = vmatprep.subr.bf16.mxu0 0
    %966 = vmatpush1.bf16.msra.mxu0 0
    %967 = vmatprep.subr.bf16.mxu0 0
    %968 = vmatpush1.bf16.msra.mxu0 0
    %969 = vmatprep.subr.bf16.mxu0 0
    %970 = vmatpush1.bf16.msra.mxu0 0
    %971 = vmatprep.subr.bf16.mxu0 0
    %972 = vmatpush1.bf16.msra.mxu0 0
    %973 = vmatprep.subr.bf16.mxu0 0
    %974 = vmatpush1.bf16.msra.mxu0 0
    %975 = vmatprep.subr.bf16.mxu0 0
    %976 = vmatpush1.bf16.msra.mxu0 0
    %977 = vmatprep.subr.bf16.mxu0 0
    %978 = vmatpush1.bf16.msra.mxu0 %v961
    %979 = vmatprep.subr.bf16.mxu0 0
    %980 = vmatpush2.bf16.msra.mxu0 0
    %981 = vmatprep.subr.bf16.mxu0 0
    %982 = vmatpush2.bf16.msra.mxu0 0
    %983 = vmatprep.subr.bf16.mxu0 0
    %984 = vmatpush2.bf16.msra.mxu0 0
    %985 = vmatprep.subr.bf16.mxu0 0
    %986 = vmatpush2.bf16.msra.mxu0 0
    %987 = vmatprep.subr.bf16.mxu0 0
    %988 = vmatpush2.bf16.msra.mxu0 0
    %989 = vmatprep.subr.bf16.mxu0 0
    %990 = vmatpush2.bf16.msra.mxu0 0
    %991 = vmatprep.subr.bf16.mxu0 0
    %992 = vmatpush2.bf16.msra.mxu0 0
    %993 = vmatprep.subr.bf16.mxu0 0
    %994 = vmatpush2.bf16.msra.mxu0 0
    %995 = vmatprep.mubr.bf16.mxu0 0
    %996 = vmatmul.mubr.bf16.gmra.mxu0 %v958
    %v997 = vpop.f32.mrf.mxu0
    %v998 = vadd.f32 0.0, %v997
    %v999 = vpop.f32.mrf.mxu0
    %v1000 = vpop.f32.mrf.mxu0
    %v1001 = vpop.f32.mrf.mxu0
    %1002 = vdwg.mxu0
    %1003 = vst.msk [vmem:[#allocation3] sm:$0xff] %vm786, %v950
    %1004 = vst.msk [vmem:[#allocation3 + $0x8] sm:$0xff] %vm786, %v998
    %1005 = vrot.lane.b32.xlu0 %v781, 120
    %v1006 = vpop.permute.xlu0 %1005
    %1007 = vrot.lane.b32.xlu0 %v781, 88
    %v1008 = vpop.permute.xlu0 %1007
    %v1010 = vsel %vm786, %v1006, 0
    %v1013 = vsel %vm786, %v1008, 0
    %1015 = vmatprep.subr.bf16.mxu0 0
    %1016 = vmatpush1.bf16.xpose.msra.mxu0 0
    %1017 = vmatprep.subr.bf16.mxu0 0
    %1018 = vmatpush1.bf16.xpose.msra.mxu0 0
    %1019 = vmatprep.subr.bf16.mxu0 0
    %1020 = vmatpush1.bf16.xpose.msra.mxu0 0
    %1021 = vmatprep.subr.bf16.mxu0 0
    %1022 = vmatpush1.bf16.xpose.msra.mxu0 0
    %1023 = vmatprep.subr.bf16.mxu0 0
    %1024 = vmatpush1.bf16.xpose.msra.mxu0 0
    %1025 = vmatprep.subr.bf16.mxu0 0
    %1026 = vmatpush1.bf16.xpose.msra.mxu0 0
    %1027 = vmatprep.subr.bf16.mxu0 0
    %1028 = vmatpush1.bf16.xpose.msra.mxu0 0
    %1029 = vmatprep.subr.bf16.mxu0 0
    %1030 = vmatpush1.bf16.xpose.msra.mxu0 %v1013
    %1031 = vmatprep.subr.bf16.mxu0 0
    %1032 = vmatpush2.bf16.xpose.msra.mxu0 0
    %1033 = vmatprep.subr.bf16.mxu0 0
    %1034 = vmatpush2.bf16.xpose.msra.mxu0 0
    %1035 = vmatprep.subr.bf16.mxu0 0
    %1036 = vmatpush2.bf16.xpose.msra.mxu0 0
    %1037 = vmatprep.subr.bf16.mxu0 0
    %1038 = vmatpush2.bf16.xpose.msra.mxu0 0
    %1039 = vmatprep.subr.bf16.mxu0 0
    %1040 = vmatpush2.bf16.xpose.msra.mxu0 0
    %1041 = vmatprep.subr.bf16.mxu0 0
    %1042 = vmatpush2.bf16.xpose.msra.mxu0 0
    %1043 = vmatprep.subr.bf16.mxu0 0
    %1044 = vmatpush2.bf16.xpose.msra.mxu0 0
    %1045 = vmatprep.subr.bf16.mxu0 0
    %1046 = vmatpush2.bf16.xpose.msra.mxu0 0
    %1047 = vmatprep.mubr.bf16.mxu0 0
    %1048 = vmatmul.mubr.bf16.gmra.mxu0 %v1010
    %v1049 = vpop.f32.mrf.mxu0
    %v1050 = vadd.f32 0.0, %v1049
    %v1051 = vpop.f32.mrf.mxu0
    %v1052 = vpop.f32.mrf.mxu0
    %v1053 = vpop.f32.mrf.mxu0
    %1054 = vdwg.mxu0
    %1055 = vrot.lane.b32.xlu0 %v782, 120
    %v1056 = vpop.permute.xlu0 %1055
    %1057 = vrot.lane.b32.xlu0 %v782, 88
    %v1058 = vpop.permute.xlu0 %1057
    %v1060 = vsel %vm786, %v1056, 0
    %v1063 = vsel %vm786, %v1058, 0
    %1065 = vmatprep.subr.bf16.mxu0 0
    %1066 = vmatpush1.bf16.xpose.msra.mxu0 0
    %1067 = vmatprep.subr.bf16.mxu0 0
    %1068 = vmatpush1.bf16.xpose.msra.mxu0 0
    %1069 = vmatprep.subr.bf16.mxu0 0
    %1070 = vmatpush1.bf16.xpose.msra.mxu0 0
    %1071 = vmatprep.subr.bf16.mxu0 0
    %1072 = vmatpush1.bf16.xpose.msra.mxu0 0
    %1073 = vmatprep.subr.bf16.mxu0 0
    %1074 = vmatpush1.bf16.xpose.msra.mxu0 0
    %1075 = vmatprep.subr.bf16.mxu0 0
    %1076 = vmatpush1.bf16.xpose.msra.mxu0 0
    %1077 = vmatprep.subr.bf16.mxu0 0
    %1078 = vmatpush1.bf16.xpose.msra.mxu0 0
    %1079 = vmatprep.subr.bf16.mxu0 0
    %1080 = vmatpush1.bf16.xpose.msra.mxu0 %v1063
    %1081 = vmatprep.subr.bf16.mxu0 0
    %1082 = vmatpush2.bf16.xpose.msra.mxu0 0
    %1083 = vmatprep.subr.bf16.mxu0 0
    %1084 = vmatpush2.bf16.xpose.msra.mxu0 0
    %1085 = vmatprep.subr.bf16.mxu0 0
    %1086 = vmatpush2.bf16.xpose.msra.mxu0 0
    %1087 = vmatprep.subr.bf16.mxu0 0
    %1088 = vmatpush2.bf16.xpose.msra.mxu0 0
    %1089 = vmatprep.subr.bf16.mxu0 0
    %1090 = vmatpush2.bf16.xpose.msra.mxu0 0
    %1091 = vmatprep.subr.bf16.mxu0 0
    %1092 = vmatpush2.bf16.xpose.msra.mxu0 0
    %1093 = vmatprep.subr.bf16.mxu0 0
    %1094 = vmatpush2.bf16.xpose.msra.mxu0 0
    %1095 = vmatprep.subr.bf16.mxu0 0
    %1096 = vmatpush2.bf16.xpose.msra.mxu0 0
    %1097 = vmatprep.mubr.bf16.mxu0 0
    %1098 = vmatmul.mubr.bf16.gmra.mxu0 %v1060
    %v1099 = vpop.f32.mrf.mxu0
    %v1100 = vadd.f32 0.0, %v1099
    %v1101 = vpop.f32.mrf.mxu0
    %v1102 = vpop.f32.mrf.mxu0
    %v1103 = vpop.f32.mrf.mxu0
    %1104 = vdwg.mxu0
    %v1105 = vsel %vm786, %v1050, -inf
    %1106 = vmax.xlane.f32.xlu0 %v1105
    %v1107 = vpop.xlane.xlu0 %1106
    %v1108 = vsel %vm786, %v1100, -inf
    %1109 = vmax.xlane.f32.xlu0 %v1108
    %v1110 = vpop.xlane.xlu0 %1109
    %v1111 = vsub.f32 %v1050, %v1107
    %v1112 = vsub.f32 %v1100, %v1110
    %v1113 = vmul.f32 %v1111, 1.442695
    %v1114 = vpow.pop %v1113
    %v1115 = vmul.f32 %v1112, 1.442695
    %v1116 = vpow.pop %v1115
    %v1117 = vsel %vm786, %v1114, 0.0
    %1118 = vadd.xlane.f32.xlu0 %v1117
    %v1119 = vpop.xlane.xlu0 %1118
    %v1120 = vsel %vm786, %v1116, 0.0
    %1121 = vadd.xlane.f32.xlu0 %v1120
    %v1122 = vpop.xlane.xlu0 %1121
    %v1123 = vrcp.pop %v1119
    %v1124 = vrcp.pop %v1122
    %v1125 = vmul.f32 %v1114, %v1123
    %v1126 = vmul.f32 %v1116, %v1124
    %v1127 = vpack.c.bf16 %v1125, %v1125
    %v1128 = vpack.c.bf16 %v1126, %v1126
    %1129 = vrot.lane.b32.xlu0 %v781, 56
    %v1130 = vpop.permute.xlu0 %1129
    %v1132 = vsel %vm786, %v1127, 0
    %v1135 = vsel %vm911, %v1130, 0
    %1137 = vmatprep.subr.bf16.mxu0 0
    %1138 = vmatpush1.bf16.msra.mxu0 0
    %1139 = vmatprep.subr.bf16.mxu0 0
    %1140 = vmatpush1.bf16.msra.mxu0 0
    %1141 = vmatprep.subr.bf16.mxu0 0
    %1142 = vmatpush1.bf16.msra.mxu0 0
    %1143 = vmatprep.subr.bf16.mxu0 0
    %1144 = vmatpush1.bf16.msra.mxu0 0
    %1145 = vmatprep.subr.bf16.mxu0 0
    %1146 = vmatpush1.bf16.msra.mxu0 0
    %1147 = vmatprep.subr.bf16.mxu0 0
    %1148 = vmatpush1.bf16.msra.mxu0 0
    %1149 = vmatprep.subr.bf16.mxu0 0
    %1150 = vmatpush1.bf16.msra.mxu0 0
    %1151 = vmatprep.subr.bf16.mxu0 0
    %1152 = vmatpush1.bf16.msra.mxu0 %v1135
    %1153 = vmatprep.subr.bf16.mxu0 0
    %1154 = vmatpush2.bf16.msra.mxu0 0
    %1155 = vmatprep.subr.bf16.mxu0 0
    %1156 = vmatpush2.bf16.msra.mxu0 0
    %1157 = vmatprep.subr.bf16.mxu0 0
    %1158 = vmatpush2.bf16.msra.mxu0 0
    %1159 = vmatprep.subr.bf16.mxu0 0
    %1160 = vmatpush2.bf16.msra.mxu0 0
    %1161 = vmatprep.subr.bf16.mxu0 0
    %1162 = vmatpush2.bf16.msra.mxu0 0
    %1163 = vmatprep.subr.bf16.mxu0 0
    %1164 = vmatpush2.bf16.msra.mxu0 0
    %1165 = vmatprep.subr.bf16.mxu0 0
    %1166 = vmatpush2.bf16.msra.mxu0 0
    %1167 = vmatprep.subr.bf16.mxu0 0
    %1168 = vmatpush2.bf16.msra.mxu0 0
    %1169 = vmatprep.mubr.bf16.mxu0 0
    %1170 = vmatmul.mubr.bf16.gmra.mxu0 %v1132
    %v1171 = vpop.f32.mrf.mxu0
    %v1172 = vadd.f32 0.0, %v1171
    %v1173 = vpop.f32.mrf.mxu0
    %v1174 = vpop.f32.mrf.mxu0
    %v1175 = vpop.f32.mrf.mxu0
    %1176 = vdwg.mxu0
    %1177 = vrot.lane.b32.xlu0 %v782, 56
    %v1178 = vpop.permute.xlu0 %1177
    %v1180 = vsel %vm786, %v1128, 0
    %v1183 = vsel %vm911, %v1178, 0
    %1185 = vmatprep.subr.bf16.mxu0 0
    %1186 = vmatpush1.bf16.msra.mxu0 0
    %1187 = vmatprep.subr.bf16.mxu0 0
    %1188 = vmatpush1.bf16.msra.mxu0 0
    %1189 = vmatprep.subr.bf16.mxu0 0
    %1190 = vmatpush1.bf16.msra.mxu0 0
    %1191 = vmatprep.subr.bf16.mxu0 0
    %1192 = vmatpush1.bf16.msra.mxu0 0
    %1193 = vmatprep.subr.bf16.mxu0 0
    %1194 = vmatpush1.bf16.msra.mxu0 0
    %1195 = vmatprep.subr.bf16.mxu0 0
    %1196 = vmatpush1.bf16.msra.mxu0 0
    %1197 = vmatprep.subr.bf16.mxu0 0
    %1198 = vmatpush1.bf16.msra.mxu0 0
    %1199 = vmatprep.subr.bf16.mxu0 0
    %1200 = vmatpush1.bf16.msra.mxu0 %v1183
    %1201 = vmatprep.subr.bf16.mxu0 0
    %1202 = vmatpush2.bf16.msra.mxu0 0
    %1203 = vmatprep.subr.bf16.mxu0 0
    %1204 = vmatpush2.bf16.msra.mxu0 0
    %1205 = vmatprep.subr.bf16.mxu0 0
    %1206 = vmatpush2.bf16.msra.mxu0 0
    %1207 = vmatprep.subr.bf16.mxu0 0
    %1208 = vmatpush2.bf16.msra.mxu0 0
    %1209 = vmatprep.subr.bf16.mxu0 0
    %1210 = vmatpush2.bf16.msra.mxu0 0
    %1211 = vmatprep.subr.bf16.mxu0 0
    %1212 = vmatpush2.bf16.msra.mxu0 0
    %1213 = vmatprep.subr.bf16.mxu0 0
    %1214 = vmatpush2.bf16.msra.mxu0 0
    %1215 = vmatprep.subr.bf16.mxu0 0
    %1216 = vmatpush2.bf16.msra.mxu0 0
    %1217 = vmatprep.mubr.bf16.mxu0 0
    %1218 = vmatmul.mubr.bf16.gmra.mxu0 %v1180
    %v1219 = vpop.f32.mrf.mxu0
    %v1220 = vadd.f32 0.0, %v1219
    %v1221 = vpop.f32.mrf.mxu0
    %v1222 = vpop.f32.mrf.mxu0
    %v1223 = vpop.f32.mrf.mxu0
    %1224 = vdwg.mxu0
    %1227 = vrot.lane.b32.xlu0 %v1172, 8
    %v1228 = vpop.permute.xlu0 %1227
    %1229 = vrot.lane.b32.xlu0 %v1220, 8
    %v1230 = vpop.permute.xlu0 %1229
    %vm1233 = vcmask 130112
    %1234 = vst.msk [vmem:[#allocation3] sm:$0xff] %vm1233, %v1228
    %1235 = vst.msk [vmem:[#allocation3 + $0x8] sm:$0xff] %vm1233, %v1230
    %1236 = vrot.lane.b32.xlu0 %v781, 112
    %v1237 = vpop.permute.xlu0 %1236
    %1238 = vrot.lane.b32.xlu0 %v781, 80
    %v1239 = vpop.permute.xlu0 %1238
    %v1241 = vsel %vm786, %v1237, 0
    %v1244 = vsel %vm786, %v1239, 0
    %1246 = vmatprep.subr.bf16.mxu0 0
    %1247 = vmatpush1.bf16.xpose.msra.mxu0 0
    %1248 = vmatprep.subr.bf16.mxu0 0
    %1249 = vmatpush1.bf16.xpose.msra.mxu0 0
    %1250 = vmatprep.subr.bf16.mxu0 0
    %1251 = vmatpush1.bf16.xpose.msra.mxu0 0
    %1252 = vmatprep.subr.bf16.mxu0 0
    %1253 = vmatpush1.bf16.xpose.msra.mxu0 0
    %1254 = vmatprep.subr.bf16.mxu0 0
    %1255 = vmatpush1.bf16.xpose.msra.mxu0 0
    %1256 = vmatprep.subr.bf16.mxu0 0
    %1257 = vmatpush1.bf16.xpose.msra.mxu0 0
    %1258 = vmatprep.subr.bf16.mxu0 0
    %1259 = vmatpush1.bf16.xpose.msra.mxu0 0
    %1260 = vmatprep.subr.bf16.mxu0 0
    %1261 = vmatpush1.bf16.xpose.msra.mxu0 %v1244
    %1262 = vmatprep.subr.bf16.mxu0 0
    %1263 = vmatpush2.bf16.xpose.msra.mxu0 0
    %1264 = vmatprep.subr.bf16.mxu0 0
    %1265 = vmatpush2.bf16.xpose.msra.mxu0 0
    %1266 = vmatprep.subr.bf16.mxu0 0
    %1267 = vmatpush2.bf16.xpose.msra.mxu0 0
    %1268 = vmatprep.subr.bf16.mxu0 0
    %1269 = vmatpush2.bf16.xpose.msra.mxu0 0
    %1270 = vmatprep.subr.bf16.mxu0 0
    %1271 = vmatpush2.bf16.xpose.msra.mxu0 0
    %1272 = vmatprep.subr.bf16.mxu0 0
    %1273 = vmatpush2.bf16.xpose.msra.mxu0 0
    %1274 = vmatprep.subr.bf16.mxu0 0
    %1275 = vmatpush2.bf16.xpose.msra.mxu0 0
    %1276 = vmatprep.subr.bf16.mxu0 0
    %1277 = vmatpush2.bf16.xpose.msra.mxu0 0
    %1278 = vmatprep.mubr.bf16.mxu0 0
    %1279 = vmatmul.mubr.bf16.gmra.mxu0 %v1241
    %v1280 = vpop.f32.mrf.mxu0
    %v1281 = vadd.f32 0.0, %v1280
    %v1282 = vpop.f32.mrf.mxu0
    %v1283 = vpop.f32.mrf.mxu0
    %v1284 = vpop.f32.mrf.mxu0
    %1285 = vdwg.mxu0
    %1286 = vrot.lane.b32.xlu0 %v782, 112
    %v1287 = vpop.permute.xlu0 %1286
    %1288 = vrot.lane.b32.xlu0 %v782, 80
    %v1289 = vpop.permute.xlu0 %1288
    %v1291 = vsel %vm786, %v1287, 0
    %v1294 = vsel %vm786, %v1289, 0
    %1296 = vmatprep.subr.bf16.mxu0 0
    %1297 = vmatpush1.bf16.xpose.msra.mxu0 0
    %1298 = vmatprep.subr.bf16.mxu0 0
    %1299 = vmatpush1.bf16.xpose.msra.mxu0 0
    %1300 = vmatprep.subr.bf16.mxu0 0
    %1301 = vmatpush1.bf16.xpose.msra.mxu0 0
    %1302 = vmatprep.subr.bf16.mxu0 0
    %1303 = vmatpush1.bf16.xpose.msra.mxu0 0
    %1304 = vmatprep.subr.bf16.mxu0 0
    %1305 = vmatpush1.bf16.xpose.msra.mxu0 0
    %1306 = vmatprep.subr.bf16.mxu0 0
    %1307 = vmatpush1.bf16.xpose.msra.mxu0 0
    %1308 = vmatprep.subr.bf16.mxu0 0
    %1309 = vmatpush1.bf16.xpose.msra.mxu0 0
    %1310 = vmatprep.subr.bf16.mxu0 0
    %1311 = vmatpush1.bf16.xpose.msra.mxu0 %v1294
    %1312 = vmatprep.subr.bf16.mxu0 0
    %1313 = vmatpush2.bf16.xpose.msra.mxu0 0
    %1314 = vmatprep.subr.bf16.mxu0 0
    %1315 = vmatpush2.bf16.xpose.msra.mxu0 0
    %1316 = vmatprep.subr.bf16.mxu0 0
    %1317 = vmatpush2.bf16.xpose.msra.mxu0 0
    %1318 = vmatprep.subr.bf16.mxu0 0
    %1319 = vmatpush2.bf16.xpose.msra.mxu0 0
    %1320 = vmatprep.subr.bf16.mxu0 0
    %1321 = vmatpush2.bf16.xpose.msra.mxu0 0
    %1322 = vmatprep.subr.bf16.mxu0 0
    %1323 = vmatpush2.bf16.xpose.msra.mxu0 0
    %1324 = vmatprep.subr.bf16.mxu0 0
    %1325 = vmatpush2.bf16.xpose.msra.mxu0 0
    %1326 = vmatprep.subr.bf16.mxu0 0
    %1327 = vmatpush2.bf16.xpose.msra.mxu0 0
    %1328 = vmatprep.mubr.bf16.mxu0 0
    %1329 = vmatmul.mubr.bf16.gmra.mxu0 %v1291
    %v1330 = vpop.f32.mrf.mxu0
    %v1331 = vadd.f32 0.0, %v1330
    %v1332 = vpop.f32.mrf.mxu0
    %v1333 = vpop.f32.mrf.mxu0
    %v1334 = vpop.f32.mrf.mxu0
    %1335 = vdwg.mxu0
    %v1336 = vsel %vm786, %v1281, -inf
    %1337 = vmax.xlane.f32.xlu0 %v1336
    %v1338 = vpop.xlane.xlu0 %1337
    %v1339 = vsel %vm786, %v1331, -inf
    %1340 = vmax.xlane.f32.xlu0 %v1339
    %v1341 = vpop.xlane.xlu0 %1340
    %v1342 = vsub.f32 %v1281, %v1338
    %v1343 = vsub.f32 %v1331, %v1341
    %v1344 = vmul.f32 %v1342, 1.442695
    %v1345 = vpow.pop %v1344
    %v1346 = vmul.f32 %v1343, 1.442695
    %v1347 = vpow.pop %v1346
    %v1348 = vsel %vm786, %v1345, 0.0
    %1349 = vadd.xlane.f32.xlu0 %v1348
    %v1350 = vpop.xlane.xlu0 %1349
    %v1351 = vsel %vm786, %v1347, 0.0
    %1352 = vadd.xlane.f32.xlu0 %v1351
    %v1353 = vpop.xlane.xlu0 %1352
    %v1354 = vrcp.pop %v1350
    %v1355 = vrcp.pop %v1353
    %v1356 = vmul.f32 %v1345, %v1354
    %v1357 = vmul.f32 %v1347, %v1355
    %v1358 = vpack.c.bf16 %v1356, %v1356
    %v1359 = vpack.c.bf16 %v1357, %v1357
    %1360 = vrot.lane.b32.xlu0 %v781, 48
    %v1361 = vpop.permute.xlu0 %1360
    %v1363 = vsel %vm786, %v1358, 0
    %v1366 = vsel %vm911, %v1361, 0
    %1368 = vmatprep.subr.bf16.mxu0 0
    %1369 = vmatpush1.bf16.msra.mxu0 0
    %1370 = vmatprep.subr.bf16.mxu0 0
    %1371 = vmatpush1.bf16.msra.mxu0 0
    %1372 = vmatprep.subr.bf16.mxu0 0
    %1373 = vmatpush1.bf16.msra.mxu0 0
    %1374 = vmatprep.subr.bf16.mxu0 0
    %1375 = vmatpush1.bf16.msra.mxu0 0
    %1376 = vmatprep.subr.bf16.mxu0 0
    %1377 = vmatpush1.bf16.msra.mxu0 0
    %1378 = vmatprep.subr.bf16.mxu0 0
    %1379 = vmatpush1.bf16.msra.mxu0 0
    %1380 = vmatprep.subr.bf16.mxu0 0
    %1381 = vmatpush1.bf16.msra.mxu0 0
    %1382 = vmatprep.subr.bf16.mxu0 0
    %1383 = vmatpush1.bf16.msra.mxu0 %v1366
    %1384 = vmatprep.subr.bf16.mxu0 0
    %1385 = vmatpush2.bf16.msra.mxu0 0
    %1386 = vmatprep.subr.bf16.mxu0 0
    %1387 = vmatpush2.bf16.msra.mxu0 0
    %1388 = vmatprep.subr.bf16.mxu0 0
    %1389 = vmatpush2.bf16.msra.mxu0 0
    %1390 = vmatprep.subr.bf16.mxu0 0
    %1391 = vmatpush2.bf16.msra.mxu0 0
    %1392 = vmatprep.subr.bf16.mxu0 0
    %1393 = vmatpush2.bf16.msra.mxu0 0
    %1394 = vmatprep.subr.bf16.mxu0 0
    %1395 = vmatpush2.bf16.msra.mxu0 0
    %1396 = vmatprep.subr.bf16.mxu0 0
    %1397 = vmatpush2.bf16.msra.mxu0 0
    %1398 = vmatprep.subr.bf16.mxu0 0
    %1399 = vmatpush2.bf16.msra.mxu0 0
    %1400 = vmatprep.mubr.bf16.mxu0 0
    %1401 = vmatmul.mubr.bf16.gmra.mxu0 %v1363
    %v1402 = vpop.f32.mrf.mxu0
    %v1403 = vadd.f32 0.0, %v1402
    %v1404 = vpop.f32.mrf.mxu0
    %v1405 = vpop.f32.mrf.mxu0
    %v1406 = vpop.f32.mrf.mxu0
    %1407 = vdwg.mxu0
    %1408 = vrot.lane.b32.xlu0 %v782, 48
    %v1409 = vpop.permute.xlu0 %1408
    %v1411 = vsel %vm786, %v1359, 0
    %v1414 = vsel %vm911, %v1409, 0
    %1416 = vmatprep.subr.bf16.mxu0 0
    %1417 = vmatpush1.bf16.msra.mxu0 0
    %1418 = vmatprep.subr.bf16.mxu0 0
    %1419 = vmatpush1.bf16.msra.mxu0 0
    %1420 = vmatprep.subr.bf16.mxu0 0
    %1421 = vmatpush1.bf16.msra.mxu0 0
    %1422 = vmatprep.subr.bf16.mxu0 0
    %1423 = vmatpush1.bf16.msra.mxu0 0
    %1424 = vmatprep.subr.bf16.mxu0 0
    %1425 = vmatpush1.bf16.msra.mxu0 0
    %1426 = vmatprep.subr.bf16.mxu0 0
    %1427 = vmatpush1.bf16.msra.mxu0 0
    %1428 = vmatprep.subr.bf16.mxu0 0
    %1429 = vmatpush1.bf16.msra.mxu0 0
    %1430 = vmatprep.subr.bf16.mxu0 0
    %1431 = vmatpush1.bf16.msra.mxu0 %v1414
    %1432 = vmatprep.subr.bf16.mxu0 0
    %1433 = vmatpush2.bf16.msra.mxu0 0
    %1434 = vmatprep.subr.bf16.mxu0 0
    %1435 = vmatpush2.bf16.msra.mxu0 0
    %1436 = vmatprep.subr.bf16.mxu0 0
    %1437 = vmatpush2.bf16.msra.mxu0 0
    %1438 = vmatprep.subr.bf16.mxu0 0
    %1439 = vmatpush2.bf16.msra.mxu0 0
    %1440 = vmatprep.subr.bf16.mxu0 0
    %1441 = vmatpush2.bf16.msra.mxu0 0
    %1442 = vmatprep.subr.bf16.mxu0 0
    %1443 = vmatpush2.bf16.msra.mxu0 0
    %1444 = vmatprep.subr.bf16.mxu0 0
    %1445 = vmatpush2.bf16.msra.mxu0 0
    %1446 = vmatprep.subr.bf16.mxu0 0
    %1447 = vmatpush2.bf16.msra.mxu0 0
    %1448 = vmatprep.mubr.bf16.mxu0 0
    %1449 = vmatmul.mubr.bf16.gmra.mxu0 %v1411
    %v1450 = vpop.f32.mrf.mxu0
    %v1451 = vadd.f32 0.0, %v1450
    %v1452 = vpop.f32.mrf.mxu0
    %v1453 = vpop.f32.mrf.mxu0
    %v1454 = vpop.f32.mrf.mxu0
    %1455 = vdwg.mxu0
    %1458 = vrot.lane.b32.xlu0 %v1403, 16
    %v1459 = vpop.permute.xlu0 %1458
    %1460 = vrot.lane.b32.xlu0 %v1451, 16
    %v1461 = vpop.permute.xlu0 %1460
    %vm1464 = vcmask 195712
    %1465 = vst.msk [vmem:[#allocation3] sm:$0xff] %vm1464, %v1459
    %1466 = vst.msk [vmem:[#allocation3 + $0x8] sm:$0xff] %vm1464, %v1461
    %1467 = vrot.lane.b32.xlu0 %v781, 104
    %v1468 = vpop.permute.xlu0 %1467
    %1469 = vrot.lane.b32.xlu0 %v781, 72
    %v1470 = vpop.permute.xlu0 %1469
    %v1472 = vsel %vm786, %v1468, 0
    %v1475 = vsel %vm786, %v1470, 0
    %1477 = vmatprep.subr.bf16.mxu0 0
    %1478 = vmatpush1.bf16.xpose.msra.mxu0 0
    %1479 = vmatprep.subr.bf16.mxu0 0
    %1480 = vmatpush1.bf16.xpose.msra.mxu0 0
    %1481 = vmatprep.subr.bf16.mxu0 0
    %1482 = vmatpush1.bf16.xpose.msra.mxu0 0
    %1483 = vmatprep.subr.bf16.mxu0 0
    %1484 = vmatpush1.bf16.xpose.msra.mxu0 0
    %1485 = vmatprep.subr.bf16.mxu0 0
    %1486 = vmatpush1.bf16.xpose.msra.mxu0 0
    %1487 = vmatprep.subr.bf16.mxu0 0
    %1488 = vmatpush1.bf16.xpose.msra.mxu0 0
    %1489 = vmatprep.subr.bf16.mxu0 0
    %1490 = vmatpush1.bf16.xpose.msra.mxu0 0
    %1491 = vmatprep.subr.bf16.mxu0 0
    %1492 = vmatpush1.bf16.xpose.msra.mxu0 %v1475
    %1493 = vmatprep.subr.bf16.mxu0 0
    %1494 = vmatpush2.bf16.xpose.msra.mxu0 0
    %1495 = vmatprep.subr.bf16.mxu0 0
    %1496 = vmatpush2.bf16.xpose.msra.mxu0 0
    %1497 = vmatprep.subr.bf16.mxu0 0
    %1498 = vmatpush2.bf16.xpose.msra.mxu0 0
    %1499 = vmatprep.subr.bf16.mxu0 0
    %1500 = vmatpush2.bf16.xpose.msra.mxu0 0
    %1501 = vmatprep.subr.bf16.mxu0 0
    %1502 = vmatpush2.bf16.xpose.msra.mxu0 0
    %1503 = vmatprep.subr.bf16.mxu0 0
    %1504 = vmatpush2.bf16.xpose.msra.mxu0 0
    %1505 = vmatprep.subr.bf16.mxu0 0
    %1506 = vmatpush2.bf16.xpose.msra.mxu0 0
    %1507 = vmatprep.subr.bf16.mxu0 0
    %1508 = vmatpush2.bf16.xpose.msra.mxu0 0
    %1509 = vmatprep.mubr.bf16.mxu0 0
    %1510 = vmatmul.mubr.bf16.gmra.mxu0 %v1472
    %v1511 = vpop.f32.mrf.mxu0
    %v1512 = vadd.f32 0.0, %v1511
    %v1513 = vpop.f32.mrf.mxu0
    %v1514 = vpop.f32.mrf.mxu0
    %v1515 = vpop.f32.mrf.mxu0
    %1516 = vdwg.mxu0
    %1517 = vrot.lane.b32.xlu0 %v782, 104
    %v1518 = vpop.permute.xlu0 %1517
    %1519 = vrot.lane.b32.xlu0 %v782, 72
    %v1520 = vpop.permute.xlu0 %1519
    %v1522 = vsel %vm786, %v1518, 0
    %v1525 = vsel %vm786, %v1520, 0
    %1527 = vmatprep.subr.bf16.mxu0 0
    %1528 = vmatpush1.bf16.xpose.msra.mxu0 0
    %1529 = vmatprep.subr.bf16.mxu0 0
    %1530 = vmatpush1.bf16.xpose.msra.mxu0 0
    %1531 = vmatprep.subr.bf16.mxu0 0
    %1532 = vmatpush1.bf16.xpose.msra.mxu0 0
    %1533 = vmatprep.subr.bf16.mxu0 0
    %1534 = vmatpush1.bf16.xpose.msra.mxu0 0
    %1535 = vmatprep.subr.bf16.mxu0 0
    %1536 = vmatpush1.bf16.xpose.msra.mxu0 0
    %1537 = vmatprep.subr.bf16.mxu0 0
    %1538 = vmatpush1.bf16.xpose.msra.mxu0 0
    %1539 = vmatprep.subr.bf16.mxu0 0
    %1540 = vmatpush1.bf16.xpose.msra.mxu0 0
    %1541 = vmatprep.subr.bf16.mxu0 0
    %1542 = vmatpush1.bf16.xpose.msra.mxu0 %v1525
    %1543 = vmatprep.subr.bf16.mxu0 0
    %1544 = vmatpush2.bf16.xpose.msra.mxu0 0
    %1545 = vmatprep.subr.bf16.mxu0 0
    %1546 = vmatpush2.bf16.xpose.msra.mxu0 0
    %1547 = vmatprep.subr.bf16.mxu0 0
    %1548 = vmatpush2.bf16.xpose.msra.mxu0 0
    %1549 = vmatprep.subr.bf16.mxu0 0
    %1550 = vmatpush2.bf16.xpose.msra.mxu0 0
    %1551 = vmatprep.subr.bf16.mxu0 0
    %1552 = vmatpush2.bf16.xpose.msra.mxu0 0
    %1553 = vmatprep.subr.bf16.mxu0 0
    %1554 = vmatpush2.bf16.xpose.msra.mxu0 0
    %1555 = vmatprep.subr.bf16.mxu0 0
    %1556 = vmatpush2.bf16.xpose.msra.mxu0 0
    %1557 = vmatprep.subr.bf16.mxu0 0
    %1558 = vmatpush2.bf16.xpose.msra.mxu0 0
    %1559 = vmatprep.mubr.bf16.mxu0 0
    %1560 = vmatmul.mubr.bf16.gmra.mxu0 %v1522
    %v1561 = vpop.f32.mrf.mxu0
    %v1562 = vadd.f32 0.0, %v1561
    %v1563 = vpop.f32.mrf.mxu0
    %v1564 = vpop.f32.mrf.mxu0
    %v1565 = vpop.f32.mrf.mxu0
    %1566 = vdwg.mxu0
    %v1567 = vsel %vm786, %v1512, -inf
    %1568 = vmax.xlane.f32.xlu0 %v1567
    %v1569 = vpop.xlane.xlu0 %1568
    %v1570 = vsel %vm786, %v1562, -inf
    %1571 = vmax.xlane.f32.xlu0 %v1570
    %v1572 = vpop.xlane.xlu0 %1571
    %v1573 = vsub.f32 %v1512, %v1569
    %v1574 = vsub.f32 %v1562, %v1572
    %v1575 = vmul.f32 %v1573, 1.442695
    %v1576 = vpow.pop %v1575
    %v1577 = vmul.f32 %v1574, 1.442695
    %v1578 = vpow.pop %v1577
    %v1579 = vsel %vm786, %v1576, 0.0
    %1580 = vadd.xlane.f32.xlu0 %v1579
    %v1581 = vpop.xlane.xlu0 %1580
    %v1582 = vsel %vm786, %v1578, 0.0
    %1583 = vadd.xlane.f32.xlu0 %v1582
    %v1584 = vpop.xlane.xlu0 %1583
    %v1585 = vrcp.pop %v1581
    %v1586 = vrcp.pop %v1584
    %v1587 = vmul.f32 %v1576, %v1585
    %v1588 = vmul.f32 %v1578, %v1586
    %v1589 = vpack.c.bf16 %v1587, %v1587
    %v1590 = vpack.c.bf16 %v1588, %v1588
    %1591 = vrot.lane.b32.xlu0 %v781, 40
    %v1592 = vpop.permute.xlu0 %1591
    %v1594 = vsel %vm786, %v1589, 0
    %v1597 = vsel %vm911, %v1592, 0
    %1599 = vmatprep.subr.bf16.mxu0 0
    %1600 = vmatpush1.bf16.msra.mxu0 0
    %1601 = vmatprep.subr.bf16.mxu0 0
    %1602 = vmatpush1.bf16.msra.mxu0 0
    %1603 = vmatprep.subr.bf16.mxu0 0
    %1604 = vmatpush1.bf16.msra.mxu0 0
    %1605 = vmatprep.subr.bf16.mxu0 0
    %1606 = vmatpush1.bf16.msra.mxu0 0
    %1607 = vmatprep.subr.bf16.mxu0 0
    %1608 = vmatpush1.bf16.msra.mxu0 0
    %1609 = vmatprep.subr.bf16.mxu0 0
    %1610 = vmatpush1.bf16.msra.mxu0 0
    %1611 = vmatprep.subr.bf16.mxu0 0
    %1612 = vmatpush1.bf16.msra.mxu0 0
    %1613 = vmatprep.subr.bf16.mxu0 0
    %1614 = vmatpush1.bf16.msra.mxu0 %v1597
    %1615 = vmatprep.subr.bf16.mxu0 0
    %1616 = vmatpush2.bf16.msra.mxu0 0
    %1617 = vmatprep.subr.bf16.mxu0 0
    %1618 = vmatpush2.bf16.msra.mxu0 0
    %1619 = vmatprep.subr.bf16.mxu0 0
    %1620 = vmatpush2.bf16.msra.mxu0 0
    %1621 = vmatprep.subr.bf16.mxu0 0
    %1622 = vmatpush2.bf16.msra.mxu0 0
    %1623 = vmatprep.subr.bf16.mxu0 0
    %1624 = vmatpush2.bf16.msra.mxu0 0
    %1625 = vmatprep.subr.bf16.mxu0 0
    %1626 = vmatpush2.bf16.msra.mxu0 0
    %1627 = vmatprep.subr.bf16.mxu0 0
    %1628 = vmatpush2.bf16.msra.mxu0 0
    %1629 = vmatprep.subr.bf16.mxu0 0
    %1630 = vmatpush2.bf16.msra.mxu0 0
    %1631 = vmatprep.mubr.bf16.mxu0 0
    %1632 = vmatmul.mubr.bf16.gmra.mxu0 %v1594
    %v1633 = vpop.f32.mrf.mxu0
    %v1634 = vadd.f32 0.0, %v1633
    %v1635 = vpop.f32.mrf.mxu0
    %v1636 = vpop.f32.mrf.mxu0
    %v1637 = vpop.f32.mrf.mxu0
    %1638 = vdwg.mxu0
    %1639 = vrot.lane.b32.xlu0 %v782, 40
    %v1640 = vpop.permute.xlu0 %1639
    %v1642 = vsel %vm786, %v1590, 0
    %v1645 = vsel %vm911, %v1640, 0
    %1647 = vmatprep.subr.bf16.mxu0 0
    %1648 = vmatpush1.bf16.msra.mxu0 0
    %1649 = vmatprep.subr.bf16.mxu0 0
    %1650 = vmatpush1.bf16.msra.mxu0 0
    %1651 = vmatprep.subr.bf16.mxu0 0
    %1652 = vmatpush1.bf16.msra.mxu0 0
    %1653 = vmatprep.subr.bf16.mxu0 0
    %1654 = vmatpush1.bf16.msra.mxu0 0
    %1655 = vmatprep.subr.bf16.mxu0 0
    %1656 = vmatpush1.bf16.msra.mxu0 0
    %1657 = vmatprep.subr.bf16.mxu0 0
    %1658 = vmatpush1.bf16.msra.mxu0 0
    %1659 = vmatprep.subr.bf16.mxu0 0
    %1660 = vmatpush1.bf16.msra.mxu0 0
    %1661 = vmatprep.subr.bf16.mxu0 0
    %1662 = vmatpush1.bf16.msra.mxu0 %v1645
    %1663 = vmatprep.subr.bf16.mxu0 0
    %1664 = vmatpush2.bf16.msra.mxu0 0
    %1665 = vmatprep.subr.bf16.mxu0 0
    %1666 = vmatpush2.bf16.msra.mxu0 0
    %1667 = vmatprep.subr.bf16.mxu0 0
    %1668 = vmatpush2.bf16.msra.mxu0 0
    %1669 = vmatprep.subr.bf16.mxu0 0
    %1670 = vmatpush2.bf16.msra.mxu0 0
    %1671 = vmatprep.subr.bf16.mxu0 0
    %1672 = vmatpush2.bf16.msra.mxu0 0
    %1673 = vmatprep.subr.bf16.mxu0 0
    %1674 = vmatpush2.bf16.msra.mxu0 0
    %1675 = vmatprep.subr.bf16.mxu0 0
    %1676 = vmatpush2.bf16.msra.mxu0 0
    %1677 = vmatprep.subr.bf16.mxu0 0
    %1678 = vmatpush2.bf16.msra.mxu0 0
    %1679 = vmatprep.mubr.bf16.mxu0 0
    %1680 = vmatmul.mubr.bf16.gmra.mxu0 %v1642
    %v1681 = vpop.f32.mrf.mxu0
    %v1682 = vadd.f32 0.0, %v1681
    %v1683 = vpop.f32.mrf.mxu0
    %v1684 = vpop.f32.mrf.mxu0
    %v1685 = vpop.f32.mrf.mxu0
    %1686 = vdwg.mxu0
    %1689 = vrot.lane.b32.xlu0 %v1634, 24
    %v1690 = vpop.permute.xlu0 %1689
    %1691 = vrot.lane.b32.xlu0 %v1682, 24
    %v1692 = vpop.permute.xlu0 %1691
    %vm1695 = vcmask 261312
    %1696 = vst.msk [vmem:[#allocation3] sm:$0xff] %vm1695, %v1690
    %1697 = vst.msk [vmem:[#allocation3 + $0x8] sm:$0xff] %vm1695, %v1692
    %v1698 = vld [vmem:[#allocation3] sm:$0xff]
    %v1699 = vld [vmem:[#allocation3 + $0x8] sm:$0xff]
    %v1700 = vpack.c.bf16 %v1699, %v1698
    %v1701 = vld [vmem:[%s8] sm:$0xf]
    %v1702 = vld [vmem:[%s8 + $0x4] sm:$0xf]
    %v1703 = vld [vmem:[%s8 + $0x8] sm:$0xf]
    %v1704 = vld [vmem:[%s8 + $0xc] sm:$0xf]
    %v1705 = vld [vmem:[%s9] sm:$0x1]
    %v1707 = vlaneseq
    %v1708 = vshrl.u32 %v1707, 7
    %v1709 = vsub.s32 0, %v1708
    %v1710 = vrot.slane %v1705, %v1709
    %v1716 = vunpack.c.l.b16 %v1701
    %v1717 = vunpack.c.l.b16 %v1702
    %v1718 = vunpack.c.l.b16 %v1703
    %v1719 = vunpack.c.l.b16 %v1704
    %v1720 = vpack.c.b16 %v1717, %v1716
    %v1721 = vpack.c.b16 %v1719, %v1718
    %v1725 = vsel %vm487, %v1700, 0
    %1727 = vmatprep.subr.bf16.mxu0 0
    %1728 = vmatpush1.bf16.msra.mxu0 0
    %1729 = vmatprep.subr.bf16.mxu0 0
    %1730 = vmatpush1.bf16.msra.mxu0 0
    %1731 = vmatprep.subr.bf16.mxu0 0
    %1732 = vmatpush1.bf16.msra.mxu0 0
    %1733 = vmatprep.subr.bf16.mxu0 0
    %1734 = vmatpush1.bf16.msra.mxu0 0
    %1735 = vmatprep.subr.bf16.mxu0 0
    %1736 = vmatpush1.bf16.msra.mxu0 0
    %1737 = vmatprep.subr.bf16.mxu0 0
    %1738 = vmatpush1.bf16.msra.mxu0 0
    %1739 = vmatprep.subr.bf16.mxu0 0
    %1740 = vmatpush1.bf16.msra.mxu0 %v1721
    %1741 = vmatprep.subr.bf16.mxu0 0
    %1742 = vmatpush1.bf16.msra.mxu0 %v1720
    %1743 = vmatprep.subr.bf16.mxu0 0
    %1744 = vmatpush2.bf16.msra.mxu0 0
    %1745 = vmatprep.subr.bf16.mxu0 0
    %1746 = vmatpush2.bf16.msra.mxu0 0
    %1747 = vmatprep.subr.bf16.mxu0 0
    %1748 = vmatpush2.bf16.msra.mxu0 0
    %1749 = vmatprep.subr.bf16.mxu0 0
    %1750 = vmatpush2.bf16.msra.mxu0 0
    %1751 = vmatprep.subr.bf16.mxu0 0
    %1752 = vmatpush2.bf16.msra.mxu0 0
    %1753 = vmatprep.subr.bf16.mxu0 0
    %1754 = vmatpush2.bf16.msra.mxu0 0
    %1755 = vmatprep.subr.bf16.mxu0 0
    %1756 = vmatpush2.bf16.msra.mxu0 0
    %1757 = vmatprep.subr.bf16.mxu0 0
    %1758 = vmatpush2.bf16.msra.mxu0 0
    %1759 = vmatprep.mubr.bf16.mxu0 0
    %1760 = vmatmul.mubr.bf16.gmra.mxu0 %v1725
    %v1761 = vpop.f32.mrf.mxu0
    %v1762 = vadd.f32 %v1710, %v1761
    %v1763 = vpop.f32.mrf.mxu0
    %v1764 = vpop.f32.mrf.mxu0
    %v1765 = vadd.f32 %v1710, %v1764
    %v1766 = vpop.f32.mrf.mxu0
    %1767 = vdwg.mxu0
    %v1768 = vld [vmem:[%s10] sm:$0x3]
    %v1769 = vadd.f32 %v711, %v1762
    %v1770 = vadd.f32 %v712, %v1765
    %v1771 = vsel %vm487, %v1769, 0.0
    %1772 = vadd.xlane.f32.xlu0 %v1771
    %v1773 = vpop.xlane.xlu0 %1772
    %v1774 = vsel %vm487, %v1770, 0.0
    %1775 = vadd.xlane.f32.xlu0 %v1774
    %v1776 = vpop.xlane.xlu0 %1775
    %v1777 = vrcp.pop 32.0
    %v1778 = vmul.f32 %v1773, %v1777
    %v1779 = vmul.f32 %v1776, %v1777
    %v1780 = vsub.f32 %v1769, %v1778
    %v1781 = vsub.f32 %v1770, %v1779
    %v1782 = vmul.f32 %v1780, %v1780
    %v1783 = vmul.f32 %v1781, %v1781
    %v1784 = vsel %vm487, %v1782, 0.0
    %1785 = vadd.xlane.f32.xlu0 %v1784
    %v1786 = vpop.xlane.xlu0 %1785
    %v1787 = vsel %vm487, %v1783, 0.0
    %1788 = vadd.xlane.f32.xlu0 %v1787
    %v1789 = vpop.xlane.xlu0 %1788
    %v1790 = vmul.f32 %v1786, %v1777
    %v1791 = vmul.f32 %v1789, %v1777
    %v1792 = vadd.f32 %v1790, 1e-05
    %v1793 = vadd.f32 %v1791, 1e-05
    %v1794 = vrsqrt.pop %v1792
    %v1795 = vrsqrt.pop %v1793
    %v1796 = vmul.f32 %v1780, %v1794
    %v1797 = vmul.f32 %v1781, %v1795
    %v1798 = vlaneseq
    %v1799 = vshrl.u32 %v1798, 7
    %v1800 = vsub.s32 0, %v1799
    %v1801 = vrot.slane %v1768, %v1800
    %v1802 = vmul.f32 %v1796, %v1801
    %v1803 = vmul.f32 %v1797, %v1801
    %v1804 = vlaneseq
    %v1805 = vshrl.u32 %v1804, 7
    %v1806 = vsub.s32 1, %v1805
    %v1807 = vrot.slane %v1768, %v1806
    %v1808 = vadd.f32 %v1802, %v1807
    %v1809 = vadd.f32 %v1803, %v1807
    %v1810 = vpack.c.bf16 %v1809, %v1808
    %v1811 = vld [vmem:[%s11] sm:$0xf]
    %v1812 = vld [vmem:[%s11 + $0x4] sm:$0xf]
    %v1813 = vld [vmem:[%s11 + $0x8] sm:$0xf]
    %v1814 = vld [vmem:[%s11 + $0xc] sm:$0xf]
    %v1815 = vld [vmem:[%s12] sm:$0x1]
    %v1817 = vlaneseq
    %v1818 = vshrl.u32 %v1817, 7
    %v1819 = vsub.s32 0, %v1818
    %v1820 = vrot.slane %v1815, %v1819
    %v1826 = vunpack.c.l.b16 %v1811
    %v1827 = vunpack.c.l.b16 %v1812
    %v1828 = vunpack.c.l.b16 %v1813
    %v1829 = vunpack.c.l.b16 %v1814
    %v1830 = vpack.c.b16 %v1827, %v1826
    %v1831 = vpack.c.b16 %v1829, %v1828
    %v1835 = vsel %vm487, %v1810, 0
    %1837 = vmatprep.subr.bf16.mxu0 0
    %1838 = vmatpush1.bf16.msra.mxu0 0
    %1839 = vmatprep.subr.bf16.mxu0 0
    %1840 = vmatpush1.bf16.msra.mxu0 0
    %1841 = vmatprep.subr.bf16.mxu0 0
    %1842 = vmatpush1.bf16.msra.mxu0 0
    %1843 = vmatprep.subr.bf16.mxu0 0
    %1844 = vmatpush1.bf16.msra.mxu0 0
    %1845 = vmatprep.subr.bf16.mxu0 0
    %1846 = vmatpush1.bf16.msra.mxu0 0
    %1847 = vmatprep.subr.bf16.mxu0 0
    %1848 = vmatpush1.bf16.msra.mxu0 0
    %1849 = vmatprep.subr.bf16.mxu0 0
    %1850 = vmatpush1.bf16.msra.mxu0 %v1831
    %1851 = vmatprep.subr.bf16.mxu0 0
    %1852 = vmatpush1.bf16.msra.mxu0 %v1830
    %1853 = vmatprep.subr.bf16.mxu0 0
    %1854 = vmatpush2.bf16.msra.mxu0 0
    %1855 = vmatprep.subr.bf16.mxu0 0
    %1856 = vmatpush2.bf16.msra.mxu0 0
    %1857 = vmatprep.subr.bf16.mxu0 0
    %1858 = vmatpush2.bf16.msra.mxu0 0
    %1859 = vmatprep.subr.bf16.mxu0 0
    %1860 = vmatpush2.bf16.msra.mxu0 0
    %1861 = vmatprep.subr.bf16.mxu0 0
    %1862 = vmatpush2.bf16.msra.mxu0 0
    %1863 = vmatprep.subr.bf16.mxu0 0
    %1864 = vmatpush2.bf16.msra.mxu0 0
    %1865 = vmatprep.subr.bf16.mxu0 0
    %1866 = vmatpush2.bf16.msra.mxu0 0
    %1867 = vmatprep.subr.bf16.mxu0 0
    %1868 = vmatpush2.bf16.msra.mxu0 0
    %1869 = vmatprep.mubr.bf16.mxu0 0
    %1870 = vmatmul.mubr.bf16.gmra.mxu0 %v1835
    %v1871 = vpop.f32.mrf.mxu0
    %v1872 = vadd.f32 %v1820, %v1871
    %v1873 = vpop.f32.mrf.mxu0
    %v1874 = vpop.f32.mrf.mxu0
    %v1875 = vadd.f32 %v1820, %v1874
    %v1876 = vpop.f32.mrf.mxu0
    %1877 = vdwg.mxu0
    %v1878 = vmul.f32 %v1872, 0.5
    %v1879 = vmul.f32 %v1875, 0.5
    %v1880 = vmul.f32 %v1872, 0.70710677
    %v1881 = vmul.f32 %v1875, 0.70710677
    %v1882 = verf.f32.pop %v1880
    %v1883 = verf.f32.pop %v1881
    %v1884 = vadd.f32 %v1882, 1.0
    %v1885 = vadd.f32 %v1883, 1.0
    %v1886 = vmul.f32 %v1878, %v1884
    %v1887 = vmul.f32 %v1879, %v1885
    %v1888 = vpack.c.bf16 %v1887, %v1886
    %v1889 = vld [vmem:[%s13] sm:$0xf]
    %v1890 = vld [vmem:[%s13 + $0x4] sm:$0xf]
    %v1891 = vld [vmem:[%s13 + $0x8] sm:$0xf]
    %v1892 = vld [vmem:[%s13 + $0xc] sm:$0xf]
    %v1893 = vld [vmem:[%s13 + $0x10] sm:$0xf]
    %v1894 = vld [vmem:[%s13 + $0x14] sm:$0xf]
    %v1895 = vld [vmem:[%s13 + $0x18] sm:$0xf]
    %v1896 = vld [vmem:[%s13 + $0x1c] sm:$0xf]
    %v1897 = vld [vmem:[%s14] sm:$0x1]
    %v1899 = vlaneseq
    %v1900 = vshrl.u32 %v1899, 7
    %v1901 = vsub.s32 0, %v1900
    %v1902 = vrot.slane %v1897, %v1901
    %v1912 = vunpack.c.l.b16 %v1889
    %v1913 = vunpack.c.l.b16 %v1890
    %v1914 = vunpack.c.l.b16 %v1891
    %v1915 = vunpack.c.l.b16 %v1892
    %v1916 = vunpack.c.l.b16 %v1893
    %v1917 = vunpack.c.l.b16 %v1894
    %v1918 = vunpack.c.l.b16 %v1895
    %v1919 = vunpack.c.l.b16 %v1896
    %v1920 = vpack.c.b16 %v1913, %v1912
    %v1921 = vpack.c.b16 %v1915, %v1914
    %v1922 = vpack.c.b16 %v1917, %v1916
    %v1923 = vpack.c.b16 %v1919, %v1918
    %vm1928 = vcmask 523264
    %v1930 = vsel %vm1928, %v1888, 0
    %1932 = vmatprep.subr.bf16.mxu0 0
    %1933 = vmatpush1.bf16.msra.mxu0 0
    %1934 = vmatprep.subr.bf16.mxu0 0
    %1935 = vmatpush1.bf16.msra.mxu0 0
    %1936 = vmatprep.subr.bf16.mxu0 0
    %1937 = vmatpush1.bf16.msra.mxu0 0
    %1938 = vmatprep.subr.bf16.mxu0 0
    %1939 = vmatpush1.bf16.msra.mxu0 0
    %1940 = vmatprep.subr.bf16.mxu0 0
    %1941 = vmatpush1.bf16.msra.mxu0 %v1923
    %1942 = vmatprep.subr.bf16.mxu0 0
    %1943 = vmatpush1.bf16.msra.mxu0 %v1922
    %1944 = vmatprep.subr.bf16.mxu0 0
    %1945 = vmatpush1.bf16.msra.mxu0 %v1921
    %1946 = vmatprep.subr.bf16.mxu0 0
    %1947 = vmatpush1.bf16.msra.mxu0 %v1920
    %1948 = vmatprep.subr.bf16.mxu0 0
    %1949 = vmatpush2.bf16.msra.mxu0 0
    %1950 = vmatprep.subr.bf16.mxu0 0
    %1951 = vmatpush2.bf16.msra.mxu0 0
    %1952 = vmatprep.subr.bf16.mxu0 0
    %1953 = vmatpush2.bf16.msra.mxu0 0
    %1954 = vmatprep.subr.bf16.mxu0 0
    %1955 = vmatpush2.bf16.msra.mxu0 0
    %1956 = vmatprep.subr.bf16.mxu0 0
    %1957 = vmatpush2.bf16.msra.mxu0 0
    %1958 = vmatprep.subr.bf16.mxu0 0
    %1959 = vmatpush2.bf16.msra.mxu0 0
    %1960 = vmatprep.subr.bf16.mxu0 0
    %1961 = vmatpush2.bf16.msra.mxu0 0
    %1962 = vmatprep.subr.bf16.mxu0 0
    %1963 = vmatpush2.bf16.msra.mxu0 0
    %1964 = vmatprep.mubr.bf16.mxu0 0
    %1965 = vmatmul.mubr.bf16.gmra.mxu0 %v1930
    %v1966 = vpop.f32.mrf.mxu0
    %v1967 = vadd.f32 %v1902, %v1966
    %v1968 = vpop.f32.mrf.mxu0
    %v1969 = vpop.f32.mrf.mxu0
    %v1970 = vadd.f32 %v1902, %v1969
    %v1971 = vpop.f32.mrf.mxu0
    %1972 = vdwg.mxu0
    %v1973 = vld [vmem:[%s15] sm:$0x3]
    %v1974 = vadd.f32 %v1808, %v1967
    %v1975 = vadd.f32 %v1809, %v1970
    %v1976 = vsel %vm487, %v1974, 0.0
    %1977 = vadd.xlane.f32.xlu0 %v1976
    %v1978 = vpop.xlane.xlu0 %1977
    %v1979 = vsel %vm487, %v1975, 0.0
    %1980 = vadd.xlane.f32.xlu0 %v1979
    %v1981 = vpop.xlane.xlu0 %1980
    %v1982 = vmul.f32 %v1978, %v1777
    %v1983 = vmul.f32 %v1981, %v1777
    %v1984 = vsub.f32 %v1974, %v1982
    %v1985 = vsub.f32 %v1975, %v1983
    %v1986 = vmul.f32 %v1984, %v1984
    %v1987 = vmul.f32 %v1985, %v1985
    %v1988 = vsel %vm487, %v1986, 0.0
    %1989 = vadd.xlane.f32.xlu0 %v1988
    %v1990 = vpop.xlane.xlu0 %1989
    %v1991 = vsel %vm487, %v1987, 0.0
    %1992 = vadd.xlane.f32.xlu0 %v1991
    %v1993 = vpop.xlane.xlu0 %1992
    %v1994 = vmul.f32 %v1990, %v1777
    %v1995 = vmul.f32 %v1993, %v1777
    %v1996 = vadd.f32 %v1994, 1e-05
    %v1997 = vadd.f32 %v1995, 1e-05
    %v1998 = vrsqrt.pop %v1996
    %v1999 = vrsqrt.pop %v1997
    %v2000 = vmul.f32 %v1984, %v1998
    %v2001 = vmul.f32 %v1985, %v1999
    %v2002 = vlaneseq
    %v2003 = vshrl.u32 %v2002, 7
    %v2004 = vsub.s32 0, %v2003
    %v2005 = vrot.slane %v1973, %v2004
    %v2006 = vmul.f32 %v2000, %v2005
    %v2007 = vmul.f32 %v2001, %v2005
    %v2008 = vlaneseq
    %v2009 = vshrl.u32 %v2008, 7
    %v2010 = vsub.s32 1, %v2009
    %v2011 = vrot.slane %v1973, %v2010
    %v2012 = vadd.f32 %v2006, %v2011
    %v2013 = vadd.f32 %v2007, %v2011
    %v2014 = vpack.c.bf16 %v2013, %v2012
    %s2015 = scalar_lea.vmem %s6, 16
    %v2016 = vld [vmem:[%s2015] sm:$0xf]
    %v2017 = vld [vmem:[%s2015 + $0x4] sm:$0xf]
    %v2018 = vld [vmem:[%s2015 + $0x8] sm:$0xf]
    %v2019 = vld [vmem:[%s2015 + $0xc] sm:$0xf]
    %s2020 = scalar_lea.vmem %s7, 1
    %v2021 = vld [vmem:[%s2020] sm:$0x1]
    %v2023 = vlaneseq
    %v2024 = vshrl.u32 %v2023, 7
    %v2025 = vsub.s32 0, %v2024
    %v2026 = vrot.slane %v2021, %v2025
    %v2032 = vunpack.c.l.b16 %v2016
    %v2033 = vunpack.c.l.b16 %v2017
    %v2034 = vunpack.c.l.b16 %v2018
    %v2035 = vunpack.c.l.b16 %v2019
    %v2036 = vpack.c.b16 %v2033, %v2032
    %v2037 = vpack.c.b16 %v2035, %v2034
    %v2041 = vsel %vm487, %v2014, 0
    %2043 = vmatprep.subr.bf16.mxu0 0
    %2044 = vmatpush1.bf16.msra.mxu0 0
    %2045 = vmatprep.subr.bf16.mxu0 0
    %2046 = vmatpush1.bf16.msra.mxu0 0
    %2047 = vmatprep.subr.bf16.mxu0 0
    %2048 = vmatpush1.bf16.msra.mxu0 0
    %2049 = vmatprep.subr.bf16.mxu0 0
    %2050 = vmatpush1.bf16.msra.mxu0 0
    %2051 = vmatprep.subr.bf16.mxu0 0
    %2052 = vmatpush1.bf16.msra.mxu0 0
    %2053 = vmatprep.subr.bf16.mxu0 0
    %2054 = vmatpush1.bf16.msra.mxu0 0
    %2055 = vmatprep.subr.bf16.mxu0 0
    %2056 = vmatpush1.bf16.msra.mxu0 %v2037
    %2057 = vmatprep.subr.bf16.mxu0 0
    %2058 = vmatpush1.bf16.msra.mxu0 %v2036
    %2059 = vmatprep.subr.bf16.mxu0 0
    %2060 = vmatpush2.bf16.msra.mxu0 0
    %2061 = vmatprep.subr.bf16.mxu0 0
    %2062 = vmatpush2.bf16.msra.mxu0 0
    %2063 = vmatprep.subr.bf16.mxu0 0
    %2064 = vmatpush2.bf16.msra.mxu0 0
    %2065 = vmatprep.subr.bf16.mxu0 0
    %2066 = vmatpush2.bf16.msra.mxu0 0
    %2067 = vmatprep.subr.bf16.mxu0 0
    %2068 = vmatpush2.bf16.msra.mxu0 0
    %2069 = vmatprep.subr.bf16.mxu0 0
    %2070 = vmatpush2.bf16.msra.mxu0 0
    %2071 = vmatprep.subr.bf16.mxu0 0
    %2072 = vmatpush2.bf16.msra.mxu0 0
    %2073 = vmatprep.subr.bf16.mxu0 0
    %2074 = vmatpush2.bf16.msra.mxu0 0
    %2075 = vmatprep.mubr.bf16.mxu0 0
    %2076 = vmatmul.mubr.bf16.gmra.mxu0 %v2041
    %v2077 = vpop.f32.mrf.mxu0
    %v2078 = vadd.f32 %v2026, %v2077
    %v2079 = vpop.f32.mrf.mxu0
    %v2080 = vpop.f32.mrf.mxu0
    %v2081 = vadd.f32 %v2026, %v2080
    %v2082 = vpop.f32.mrf.mxu0
    %2083 = vdwg.mxu0
    %v2084 = vpack.c.bf16 %v2078, %v2078
    %v2085 = vpack.c.bf16 %v2081, %v2081
    %2087 = vrot.lane.b32.xlu0 %v2084, 96
    %v2088 = vpop.permute.xlu0 %2087
    %v2090 = vsel %vm786, %v2084, 0
    %v2093 = vsel %vm786, %v2088, 0
    %2095 = vmatprep.subr.bf16.mxu0 0
    %2096 = vmatpush1.bf16.xpose.msra.mxu0 0
    %2097 = vmatprep.subr.bf16.mxu0 0
    %2098 = vmatpush1.bf16.xpose.msra.mxu0 0
    %2099 = vmatprep.subr.bf16.mxu0 0
    %2100 = vmatpush1.bf16.xpose.msra.mxu0 0
    %2101 = vmatprep.subr.bf16.mxu0 0
    %2102 = vmatpush1.bf16.xpose.msra.mxu0 0
    %2103 = vmatprep.subr.bf16.mxu0 0
    %2104 = vmatpush1.bf16.xpose.msra.mxu0 0
    %2105 = vmatprep.subr.bf16.mxu0 0
    %2106 = vmatpush1.bf16.xpose.msra.mxu0 0
    %2107 = vmatprep.subr.bf16.mxu0 0
    %2108 = vmatpush1.bf16.xpose.msra.mxu0 0
    %2109 = vmatprep.subr.bf16.mxu0 0
    %2110 = vmatpush1.bf16.xpose.msra.mxu0 %v2093
    %2111 = vmatprep.subr.bf16.mxu0 0
    %2112 = vmatpush2.bf16.xpose.msra.mxu0 0
    %2113 = vmatprep.subr.bf16.mxu0 0
    %2114 = vmatpush2.bf16.xpose.msra.mxu0 0
    %2115 = vmatprep.subr.bf16.mxu0 0
    %2116 = vmatpush2.bf16.xpose.msra.mxu0 0
    %2117 = vmatprep.subr.bf16.mxu0 0
    %2118 = vmatpush2.bf16.xpose.msra.mxu0 0
    %2119 = vmatprep.subr.bf16.mxu0 0
    %2120 = vmatpush2.bf16.xpose.msra.mxu0 0
    %2121 = vmatprep.subr.bf16.mxu0 0
    %2122 = vmatpush2.bf16.xpose.msra.mxu0 0
    %2123 = vmatprep.subr.bf16.mxu0 0
    %2124 = vmatpush2.bf16.xpose.msra.mxu0 0
    %2125 = vmatprep.subr.bf16.mxu0 0
    %2126 = vmatpush2.bf16.xpose.msra.mxu0 0
    %2127 = vmatprep.mubr.bf16.mxu0 0
    %2128 = vmatmul.mubr.bf16.gmra.mxu0 %v2090
    %v2129 = vpop.f32.mrf.mxu0
    %v2130 = vadd.f32 0.0, %v2129
    %v2131 = vpop.f32.mrf.mxu0
    %v2132 = vpop.f32.mrf.mxu0
    %v2133 = vpop.f32.mrf.mxu0
    %2134 = vdwg.mxu0
    %2136 = vrot.lane.b32.xlu0 %v2085, 96
    %v2137 = vpop.permute.xlu0 %2136
    %v2139 = vsel %vm786, %v2085, 0
    %v2142 = vsel %vm786, %v2137, 0
    %2144 = vmatprep.subr.bf16.mxu0 0
    %2145 = vmatpush1.bf16.xpose.msra.mxu0 0
    %2146 = vmatprep.subr.bf16.mxu0 0
    %2147 = vmatpush1.bf16.xpose.msra.mxu0 0
    %2148 = vmatprep.subr.bf16.mxu0 0
    %2149 = vmatpush1.bf16.xpose.msra.mxu0 0
    %2150 = vmatprep.subr.bf16.mxu0 0
    %2151 = vmatpush1.bf16.xpose.msra.mxu0 0
    %2152 = vmatprep.subr.bf16.mxu0 0
    %2153 = vmatpush1.bf16.xpose.msra.mxu0 0
    %2154 = vmatprep.subr.bf16.mxu0 0
    %2155 = vmatpush1.bf16.xpose.msra.mxu0 0
    %2156 = vmatprep.subr.bf16.mxu0 0
    %2157 = vmatpush1.bf16.xpose.msra.mxu0 0
    %2158 = vmatprep.subr.bf16.mxu0 0
    %2159 = vmatpush1.bf16.xpose.msra.mxu0 %v2142
    %2160 = vmatprep.subr.bf16.mxu0 0
    %2161 = vmatpush2.bf16.xpose.msra.mxu0 0
    %2162 = vmatprep.subr.bf16.mxu0 0
    %2163 = vmatpush2.bf16.xpose.msra.mxu0 0
    %2164 = vmatprep.subr.bf16.mxu0 0
    %2165 = vmatpush2.bf16.xpose.msra.mxu0 0
    %2166 = vmatprep.subr.bf16.mxu0 0
    %2167 = vmatpush2.bf16.xpose.msra.mxu0 0
    %2168 = vmatprep.subr.bf16.mxu0 0
    %2169 = vmatpush2.bf16.xpose.msra.mxu0 0
    %2170 = vmatprep.subr.bf16.mxu0 0
    %2171 = vmatpush2.bf16.xpose.msra.mxu0 0
    %2172 = vmatprep.subr.bf16.mxu0 0
    %2173 = vmatpush2.bf16.xpose.msra.mxu0 0
    %2174 = vmatprep.subr.bf16.mxu0 0
    %2175 = vmatpush2.bf16.xpose.msra.mxu0 0
    %2176 = vmatprep.mubr.bf16.mxu0 0
    %2177 = vmatmul.mubr.bf16.gmra.mxu0 %v2139
    %v2178 = vpop.f32.mrf.mxu0
    %v2179 = vadd.f32 0.0, %v2178
    %v2180 = vpop.f32.mrf.mxu0
    %v2181 = vpop.f32.mrf.mxu0
    %v2182 = vpop.f32.mrf.mxu0
    %2183 = vdwg.mxu0
    %v2184 = vsel %vm786, %v2130, -inf
    %2185 = vmax.xlane.f32.xlu0 %v2184
    %v2186 = vpop.xlane.xlu0 %2185
    %v2187 = vsel %vm786, %v2179, -inf
    %2188 = vmax.xlane.f32.xlu0 %v2187
    %v2189 = vpop.xlane.xlu0 %2188
    %v2190 = vsub.f32 %v2130, %v2186
    %v2191 = vsub.f32 %v2179, %v2189
    %v2192 = vmul.f32 %v2190, 1.442695
    %v2193 = vpow.pop %v2192
    %v2194 = vmul.f32 %v2191, 1.442695
    %v2195 = vpow.pop %v2194
    %v2196 = vsel %vm786, %v2193, 0.0
    %2197 = vadd.xlane.f32.xlu0 %v2196
    %v2198 = vpop.xlane.xlu0 %2197
    %v2199 = vsel %vm786, %v2195, 0.0
    %2200 = vadd.xlane.f32.xlu0 %v2199
    %v2201 = vpop.xlane.xlu0 %2200
    %v2202 = vrcp.pop %v2198
    %v2203 = vrcp.pop %v2201
    %v2204 = vmul.f32 %v2193, %v2202
    %v2205 = vmul.f32 %v2195, %v2203
    %v2206 = vpack.c.bf16 %v2204, %v2204
    %v2207 = vpack.c.bf16 %v2205, %v2205
    %2208 = vrot.lane.b32.xlu0 %v2084, 64
    %v2209 = vpop.permute.xlu0 %2208
    %v2211 = vsel %vm786, %v2206, 0
    %v2214 = vsel %vm911, %v2209, 0
    %2216 = vmatprep.subr.bf16.mxu0 0
    %2217 = vmatpush1.bf16.msra.mxu0 0
    %2218 = vmatprep.subr.bf16.mxu0 0
    %2219 = vmatpush1.bf16.msra.mxu0 0
    %2220 = vmatprep.subr.bf16.mxu0 0
    %2221 = vmatpush1.bf16.msra.mxu0 0
    %2222 = vmatprep.subr.bf16.mxu0 0
    %2223 = vmatpush1.bf16.msra.mxu0 0
    %2224 = vmatprep.subr.bf16.mxu0 0
    %2225 = vmatpush1.bf16.msra.mxu0 0
    %2226 = vmatprep.subr.bf16.mxu0 0
    %2227 = vmatpush1.bf16.msra.mxu0 0
    %2228 = vmatprep.subr.bf16.mxu0 0
    %2229 = vmatpush1.bf16.msra.mxu0 0
    %2230 = vmatprep.subr.bf16.mxu0 0
    %2231 = vmatpush1.bf16.msra.mxu0 %v2214
    %2232 = vmatprep.subr.bf16.mxu0 0
    %2233 = vmatpush2.bf16.msra.mxu0 0
    %2234 = vmatprep.subr.bf16.mxu0 0
    %2235 = vmatpush2.bf16.msra.mxu0 0
    %2236 = vmatprep.subr.bf16.mxu0 0
    %2237 = vmatpush2.bf16.msra.mxu0 0
    %2238 = vmatprep.subr.bf16.mxu0 0
    %2239 = vmatpush2.bf16.msra.mxu0 0
    %2240 = vmatprep.subr.bf16.mxu0 0
    %2241 = vmatpush2.bf16.msra.mxu0 0
    %2242 = vmatprep.subr.bf16.mxu0 0
    %2243 = vmatpush2.bf16.msra.mxu0 0
    %2244 = vmatprep.subr.bf16.mxu0 0
    %2245 = vmatpush2.bf16.msra.mxu0 0
    %2246 = vmatprep.subr.bf16.mxu0 0
    %2247 = vmatpush2.bf16.msra.mxu0 0
    %2248 = vmatprep.mubr.bf16.mxu0 0
    %2249 = vmatmul.mubr.bf16.gmra.mxu0 %v2211
    %v2250 = vpop.f32.mrf.mxu0
    %v2251 = vadd.f32 0.0, %v2250
    %v2252 = vpop.f32.mrf.mxu0
    %v2253 = vpop.f32.mrf.mxu0
    %v2254 = vpop.f32.mrf.mxu0
    %2255 = vdwg.mxu0
    %2256 = vrot.lane.b32.xlu0 %v2085, 64
    %v2257 = vpop.permute.xlu0 %2256
    %v2259 = vsel %vm786, %v2207, 0
    %v2262 = vsel %vm911, %v2257, 0
    %2264 = vmatprep.subr.bf16.mxu0 0
    %2265 = vmatpush1.bf16.msra.mxu0 0
    %2266 = vmatprep.subr.bf16.mxu0 0
    %2267 = vmatpush1.bf16.msra.mxu0 0
    %2268 = vmatprep.subr.bf16.mxu0 0
    %2269 = vmatpush1.bf16.msra.mxu0 0
    %2270 = vmatprep.subr.bf16.mxu0 0
    %2271 = vmatpush1.bf16.msra.mxu0 0
    %2272 = vmatprep.subr.bf16.mxu0 0
    %2273 = vmatpush1.bf16.msra.mxu0 0
    %2274 = vmatprep.subr.bf16.mxu0 0
    %2275 = vmatpush1.bf16.msra.mxu0 0
    %2276 = vmatprep.subr.bf16.mxu0 0
    %2277 = vmatpush1.bf16.msra.mxu0 0
    %2278 = vmatprep.subr.bf16.mxu0 0
    %2279 = vmatpush1.bf16.msra.mxu0 %v2262
    %2280 = vmatprep.subr.bf16.mxu0 0
    %2281 = vmatpush2.bf16.msra.mxu0 0
    %2282 = vmatprep.subr.bf16.mxu0 0
    %2283 = vmatpush2.bf16.msra.mxu0 0
    %2284 = vmatprep.subr.bf16.mxu0 0
    %2285 = vmatpush2.bf16.msra.mxu0 0
    %2286 = vmatprep.subr.bf16.mxu0 0
    %2287 = vmatpush2.bf16.msra.mxu0 0
    %2288 = vmatprep.subr.bf16.mxu0 0
    %2289 = vmatpush2.bf16.msra.mxu0 0
    %2290 = vmatprep.subr.bf16.mxu0 0
    %2291 = vmatpush2.bf16.msra.mxu0 0
    %2292 = vmatprep.subr.bf16.mxu0 0
    %2293 = vmatpush2.bf16.msra.mxu0 0
    %2294 = vmatprep.subr.bf16.mxu0 0
    %2295 = vmatpush2.bf16.msra.mxu0 0
    %2296 = vmatprep.mubr.bf16.mxu0 0
    %2297 = vmatmul.mubr.bf16.gmra.mxu0 %v2259
    %v2298 = vpop.f32.mrf.mxu0
    %v2299 = vadd.f32 0.0, %v2298
    %v2300 = vpop.f32.mrf.mxu0
    %v2301 = vpop.f32.mrf.mxu0
    %v2302 = vpop.f32.mrf.mxu0
    %2303 = vdwg.mxu0
    %2304 = vst.msk [vmem:[#allocation3] sm:$0xff] %vm786, %v2251
    %2305 = vst.msk [vmem:[#allocation3 + $0x8] sm:$0xff] %vm786, %v2299
    %2306 = vrot.lane.b32.xlu0 %v2084, 120
    %v2307 = vpop.permute.xlu0 %2306
    %2308 = vrot.lane.b32.xlu0 %v2084, 88
    %v2309 = vpop.permute.xlu0 %2308
    %v2311 = vsel %vm786, %v2307, 0
    %v2314 = vsel %vm786, %v2309, 0
    %2316 = vmatprep.subr.bf16.mxu0 0
    %2317 = vmatpush1.bf16.xpose.msra.mxu0 0
    %2318 = vmatprep.subr.bf16.mxu0 0
    %2319 = vmatpush1.bf16.xpose.msra.mxu0 0
    %2320 = vmatprep.subr.bf16.mxu0 0
    %2321 = vmatpush1.bf16.xpose.msra.mxu0 0
    %2322 = vmatprep.subr.bf16.mxu0 0
    %2323 = vmatpush1.bf16.xpose.msra.mxu0 0
    %2324 = vmatprep.subr.bf16.mxu0 0
    %2325 = vmatpush1.bf16.xpose.msra.mxu0 0
    %2326 = vmatprep.subr.bf16.mxu0 0
    %2327 = vmatpush1.bf16.xpose.msra.mxu0 0
    %2328 = vmatprep.subr.bf16.mxu0 0
    %2329 = vmatpush1.bf16.xpose.msra.mxu0 0
    %2330 = vmatprep.subr.bf16.mxu0 0
    %2331 = vmatpush1.bf16.xpose.msra.mxu0 %v2314
    %2332 = vmatprep.subr.bf16.mxu0 0
    %2333 = vmatpush2.bf16.xpose.msra.mxu0 0
    %2334 = vmatprep.subr.bf16.mxu0 0
    %2335 = vmatpush2.bf16.xpose.msra.mxu0 0
    %2336 = vmatprep.subr.bf16.mxu0 0
    %2337 = vmatpush2.bf16.xpose.msra.mxu0 0
    %2338 = vmatprep.subr.bf16.mxu0 0
    %2339 = vmatpush2.bf16.xpose.msra.mxu0 0
    %2340 = vmatprep.subr.bf16.mxu0 0
    %2341 = vmatpush2.bf16.xpose.msra.mxu0 0
    %2342 = vmatprep.subr.bf16.mxu0 0
    %2343 = vmatpush2.bf16.xpose.msra.mxu0 0
    %2344 = vmatprep.subr.bf16.mxu0 0
    %2345 = vmatpush2.bf16.xpose.msra.mxu0 0
    %2346 = vmatprep.subr.bf16.mxu0 0
    %2347 = vmatpush2.bf16.xpose.msra.mxu0 0
    %2348 = vmatprep.mubr.bf16.mxu0 0
    %2349 = vmatmul.mubr.bf16.gmra.mxu0 %v2311
    %v2350 = vpop.f32.mrf.mxu0
    %v2351 = vadd.f32 0.0, %v2350
    %v2352 = vpop.f32.mrf.mxu0
    %v2353 = vpop.f32.mrf.mxu0
    %v2354 = vpop.f32.mrf.mxu0
    %2355 = vdwg.mxu0
    %2356 = vrot.lane.b32.xlu0 %v2085, 120
    %v2357 = vpop.permute.xlu0 %2356
    %2358 = vrot.lane.b32.xlu0 %v2085, 88
    %v2359 = vpop.permute.xlu0 %2358
    %v2361 = vsel %vm786, %v2357, 0
    %v2364 = vsel %vm786, %v2359, 0
    %2366 = vmatprep.subr.bf16.mxu0 0
    %2367 = vmatpush1.bf16.xpose.msra.mxu0 0
    %2368 = vmatprep.subr.bf16.mxu0 0
    %2369 = vmatpush1.bf16.xpose.msra.mxu0 0
    %2370 = vmatprep.subr.bf16.mxu0 0
    %2371 = vmatpush1.bf16.xpose.msra.mxu0 0
    %2372 = vmatprep.subr.bf16.mxu0 0
    %2373 = vmatpush1.bf16.xpose.msra.mxu0 0
    %2374 = vmatprep.subr.bf16.mxu0 0
    %2375 = vmatpush1.bf16.xpose.msra.mxu0 0
    %2376 = vmatprep.subr.bf16.mxu0 0
    %2377 = vmatpush1.bf16.xpose.msra.mxu0 0
    %2378 = vmatprep.subr.bf16.mxu0 0
    %2379 = vmatpush1.bf16.xpose.msra.mxu0 0
    %2380 = vmatprep.subr.bf16.mxu0 0
    %2381 = vmatpush1.bf16.xpose.msra.mxu0 %v2364
    %2382 = vmatprep.subr.bf16.mxu0 0
    %2383 = vmatpush2.bf16.xpose.msra.mxu0 0
    %2384 = vmatprep.subr.bf16.mxu0 0
    %2385 = vmatpush2.bf16.xpose.msra.mxu0 0
    %2386 = vmatprep.subr.bf16.mxu0 0
    %2387 = vmatpush2.bf16.xpose.msra.mxu0 0
    %2388 = vmatprep.subr.bf16.mxu0 0
    %2389 = vmatpush2.bf16.xpose.msra.mxu0 0
    %2390 = vmatprep.subr.bf16.mxu0 0
    %2391 = vmatpush2.bf16.xpose.msra.mxu0 0
    %2392 = vmatprep.subr.bf16.mxu0 0
    %2393 = vmatpush2.bf16.xpose.msra.mxu0 0
    %2394 = vmatprep.subr.bf16.mxu0 0
    %2395 = vmatpush2.bf16.xpose.msra.mxu0 0
    %2396 = vmatprep.subr.bf16.mxu0 0
    %2397 = vmatpush2.bf16.xpose.msra.mxu0 0
    %2398 = vmatprep.mubr.bf16.mxu0 0
    %2399 = vmatmul.mubr.bf16.gmra.mxu0 %v2361
    %v2400 = vpop.f32.mrf.mxu0
    %v2401 = vadd.f32 0.0, %v2400
    %v2402 = vpop.f32.mrf.mxu0
    %v2403 = vpop.f32.mrf.mxu0
    %v2404 = vpop.f32.mrf.mxu0
    %2405 = vdwg.mxu0
    %v2406 = vsel %vm786, %v2351, -inf
    %2407 = vmax.xlane.f32.xlu0 %v2406
    %v2408 = vpop.xlane.xlu0 %2407
    %v2409 = vsel %vm786, %v2401, -inf
    %2410 = vmax.xlane.f32.xlu0 %v2409
    %v2411 = vpop.xlane.xlu0 %2410
    %v2412 = vsub.f32 %v2351, %v2408
    %v2413 = vsub.f32 %v2401, %v2411
    %v2414 = vmul.f32 %v2412, 1.442695
    %v2415 = vpow.pop %v2414
    %v2416 = vmul.f32 %v2413, 1.442695
    %v2417 = vpow.pop %v2416
    %v2418 = vsel %vm786, %v2415, 0.0
    %2419 = vadd.xlane.f32.xlu0 %v2418
    %v2420 = vpop.xlane.xlu0 %2419
    %v2421 = vsel %vm786, %v2417, 0.0
    %2422 = vadd.xlane.f32.xlu0 %v2421
    %v2423 = vpop.xlane.xlu0 %2422
    %v2424 = vrcp.pop %v2420
    %v2425 = vrcp.pop %v2423
    %v2426 = vmul.f32 %v2415, %v2424
    %v2427 = vmul.f32 %v2417, %v2425
    %v2428 = vpack.c.bf16 %v2426, %v2426
    %v2429 = vpack.c.bf16 %v2427, %v2427
    %2430 = vrot.lane.b32.xlu0 %v2084, 56
    %v2431 = vpop.permute.xlu0 %2430
    %v2433 = vsel %vm786, %v2428, 0
    %v2436 = vsel %vm911, %v2431, 0
    %2438 = vmatprep.subr.bf16.mxu0 0
    %2439 = vmatpush1.bf16.msra.mxu0 0
    %2440 = vmatprep.subr.bf16.mxu0 0
    %2441 = vmatpush1.bf16.msra.mxu0 0
    %2442 = vmatprep.subr.bf16.mxu0 0
    %2443 = vmatpush1.bf16.msra.mxu0 0
    %2444 = vmatprep.subr.bf16.mxu0 0
    %2445 = vmatpush1.bf16.msra.mxu0 0
    %2446 = vmatprep.subr.bf16.mxu0 0
    %2447 = vmatpush1.bf16.msra.mxu0 0
    %2448 = vmatprep.subr.bf16.mxu0 0
    %2449 = vmatpush1.bf16.msra.mxu0 0
    %2450 = vmatprep.subr.bf16.mxu0 0
    %2451 = vmatpush1.bf16.msra.mxu0 0
    %2452 = vmatprep.subr.bf16.mxu0 0
    %2453 = vmatpush1.bf16.msra.mxu0 %v2436
    %2454 = vmatprep.subr.bf16.mxu0 0
    %2455 = vmatpush2.bf16.msra.mxu0 0
    %2456 = vmatprep.subr.bf16.mxu0 0
    %2457 = vmatpush2.bf16.msra.mxu0 0
    %2458 = vmatprep.subr.bf16.mxu0 0
    %2459 = vmatpush2.bf16.msra.mxu0 0
    %2460 = vmatprep.subr.bf16.mxu0 0
    %2461 = vmatpush2.bf16.msra.mxu0 0
    %2462 = vmatprep.subr.bf16.mxu0 0
    %2463 = vmatpush2.bf16.msra.mxu0 0
    %2464 = vmatprep.subr.bf16.mxu0 0
    %2465 = vmatpush2.bf16.msra.mxu0 0
    %2466 = vmatprep.subr.bf16.mxu0 0
    %2467 = vmatpush2.bf16.msra.mxu0 0
    %2468 = vmatprep.subr.bf16.mxu0 0
    %2469 = vmatpush2.bf16.msra.mxu0 0
    %2470 = vmatprep.mubr.bf16.mxu0 0
    %2471 = vmatmul.mubr.bf16.gmra.mxu0 %v2433
    %v2472 = vpop.f32.mrf.mxu0
    %v2473 = vadd.f32 0.0, %v2472
    %v2474 = vpop.f32.mrf.mxu0
    %v2475 = vpop.f32.mrf.mxu0
    %v2476 = vpop.f32.mrf.mxu0
    %2477 = vdwg.mxu0
    %2478 = vrot.lane.b32.xlu0 %v2085, 56
    %v2479 = vpop.permute.xlu0 %2478
    %v2481 = vsel %vm786, %v2429, 0
    %v2484 = vsel %vm911, %v2479, 0
    %2486 = vmatprep.subr.bf16.mxu0 0
    %2487 = vmatpush1.bf16.msra.mxu0 0
    %2488 = vmatprep.subr.bf16.mxu0 0
    %2489 = vmatpush1.bf16.msra.mxu0 0
    %2490 = vmatprep.subr.bf16.mxu0 0
    %2491 = vmatpush1.bf16.msra.mxu0 0
    %2492 = vmatprep.subr.bf16.mxu0 0
    %2493 = vmatpush1.bf16.msra.mxu0 0
    %2494 = vmatprep.subr.bf16.mxu0 0
    %2495 = vmatpush1.bf16.msra.mxu0 0
    %2496 = vmatprep.subr.bf16.mxu0 0
    %2497 = vmatpush1.bf16.msra.mxu0 0
    %2498 = vmatprep.subr.bf16.mxu0 0
    %2499 = vmatpush1.bf16.msra.mxu0 0
    %2500 = vmatprep.subr.bf16.mxu0 0
    %2501 = vmatpush1.bf16.msra.mxu0 %v2484
    %2502 = vmatprep.subr.bf16.mxu0 0
    %2503 = vmatpush2.bf16.msra.mxu0 0
    %2504 = vmatprep.subr.bf16.mxu0 0
    %2505 = vmatpush2.bf16.msra.mxu0 0
    %2506 = vmatprep.subr.bf16.mxu0 0
    %2507 = vmatpush2.bf16.msra.mxu0 0
    %2508 = vmatprep.subr.bf16.mxu0 0
    %2509 = vmatpush2.bf16.msra.mxu0 0
    %2510 = vmatprep.subr.bf16.mxu0 0
    %2511 = vmatpush2.bf16.msra.mxu0 0
    %2512 = vmatprep.subr.bf16.mxu0 0
    %2513 = vmatpush2.bf16.msra.mxu0 0
    %2514 = vmatprep.subr.bf16.mxu0 0
    %2515 = vmatpush2.bf16.msra.mxu0 0
    %2516 = vmatprep.subr.bf16.mxu0 0
    %2517 = vmatpush2.bf16.msra.mxu0 0
    %2518 = vmatprep.mubr.bf16.mxu0 0
    %2519 = vmatmul.mubr.bf16.gmra.mxu0 %v2481
    %v2520 = vpop.f32.mrf.mxu0
    %v2521 = vadd.f32 0.0, %v2520
    %v2522 = vpop.f32.mrf.mxu0
    %v2523 = vpop.f32.mrf.mxu0
    %v2524 = vpop.f32.mrf.mxu0
    %2525 = vdwg.mxu0
    %2528 = vrot.lane.b32.xlu0 %v2473, 8
    %v2529 = vpop.permute.xlu0 %2528
    %2530 = vrot.lane.b32.xlu0 %v2521, 8
    %v2531 = vpop.permute.xlu0 %2530
    %2534 = vst.msk [vmem:[#allocation3] sm:$0xff] %vm1233, %v2529
    %2535 = vst.msk [vmem:[#allocation3 + $0x8] sm:$0xff] %vm1233, %v2531
    %2536 = vrot.lane.b32.xlu0 %v2084, 112
    %v2537 = vpop.permute.xlu0 %2536
    %2538 = vrot.lane.b32.xlu0 %v2084, 80
    %v2539 = vpop.permute.xlu0 %2538
    %v2541 = vsel %vm786, %v2537, 0
    %v2544 = vsel %vm786, %v2539, 0
    %2546 = vmatprep.subr.bf16.mxu0 0
    %2547 = vmatpush1.bf16.xpose.msra.mxu0 0
    %2548 = vmatprep.subr.bf16.mxu0 0
    %2549 = vmatpush1.bf16.xpose.msra.mxu0 0
    %2550 = vmatprep.subr.bf16.mxu0 0
    %2551 = vmatpush1.bf16.xpose.msra.mxu0 0
    %2552 = vmatprep.subr.bf16.mxu0 0
    %2553 = vmatpush1.bf16.xpose.msra.mxu0 0
    %2554 = vmatprep.subr.bf16.mxu0 0
    %2555 = vmatpush1.bf16.xpose.msra.mxu0 0
    %2556 = vmatprep.subr.bf16.mxu0 0
    %2557 = vmatpush1.bf16.xpose.msra.mxu0 0
    %2558 = vmatprep.subr.bf16.mxu0 0
    %2559 = vmatpush1.bf16.xpose.msra.mxu0 0
    %2560 = vmatprep.subr.bf16.mxu0 0
    %2561 = vmatpush1.bf16.xpose.msra.mxu0 %v2544
    %2562 = vmatprep.subr.bf16.mxu0 0
    %2563 = vmatpush2.bf16.xpose.msra.mxu0 0
    %2564 = vmatprep.subr.bf16.mxu0 0
    %2565 = vmatpush2.bf16.xpose.msra.mxu0 0
    %2566 = vmatprep.subr.bf16.mxu0 0
    %2567 = vmatpush2.bf16.xpose.msra.mxu0 0
    %2568 = vmatprep.subr.bf16.mxu0 0
    %2569 = vmatpush2.bf16.xpose.msra.mxu0 0
    %2570 = vmatprep.subr.bf16.mxu0 0
    %2571 = vmatpush2.bf16.xpose.msra.mxu0 0
    %2572 = vmatprep.subr.bf16.mxu0 0
    %2573 = vmatpush2.bf16.xpose.msra.mxu0 0
    %2574 = vmatprep.subr.bf16.mxu0 0
    %2575 = vmatpush2.bf16.xpose.msra.mxu0 0
    %2576 = vmatprep.subr.bf16.mxu0 0
    %2577 = vmatpush2.bf16.xpose.msra.mxu0 0
    %2578 = vmatprep.mubr.bf16.mxu0 0
    %2579 = vmatmul.mubr.bf16.gmra.mxu0 %v2541
    %v2580 = vpop.f32.mrf.mxu0
    %v2581 = vadd.f32 0.0, %v2580
    %v2582 = vpop.f32.mrf.mxu0
    %v2583 = vpop.f32.mrf.mxu0
    %v2584 = vpop.f32.mrf.mxu0
    %2585 = vdwg.mxu0
    %2586 = vrot.lane.b32.xlu0 %v2085, 112
    %v2587 = vpop.permute.xlu0 %2586
    %2588 = vrot.lane.b32.xlu0 %v2085, 80
    %v2589 = vpop.permute.xlu0 %2588
    %v2591 = vsel %vm786, %v2587, 0
    %v2594 = vsel %vm786, %v2589, 0
    %2596 = vmatprep.subr.bf16.mxu0 0
    %2597 = vmatpush1.bf16.xpose.msra.mxu0 0
    %2598 = vmatprep.subr.bf16.mxu0 0
    %2599 = vmatpush1.bf16.xpose.msra.mxu0 0
    %2600 = vmatprep.subr.bf16.mxu0 0
    %2601 = vmatpush1.bf16.xpose.msra.mxu0 0
    %2602 = vmatprep.subr.bf16.mxu0 0
    %2603 = vmatpush1.bf16.xpose.msra.mxu0 0
    %2604 = vmatprep.subr.bf16.mxu0 0
    %2605 = vmatpush1.bf16.xpose.msra.mxu0 0
    %2606 = vmatprep.subr.bf16.mxu0 0
    %2607 = vmatpush1.bf16.xpose.msra.mxu0 0
    %2608 = vmatprep.subr.bf16.mxu0 0
    %2609 = vmatpush1.bf16.xpose.msra.mxu0 0
    %2610 = vmatprep.subr.bf16.mxu0 0
    %2611 = vmatpush1.bf16.xpose.msra.mxu0 %v2594
    %2612 = vmatprep.subr.bf16.mxu0 0
    %2613 = vmatpush2.bf16.xpose.msra.mxu0 0
    %2614 = vmatprep.subr.bf16.mxu0 0
    %2615 = vmatpush2.bf16.xpose.msra.mxu0 0
    %2616 = vmatprep.subr.bf16.mxu0 0
    %2617 = vmatpush2.bf16.xpose.msra.mxu0 0
    %2618 = vmatprep.subr.bf16.mxu0 0
    %2619 = vmatpush2.bf16.xpose.msra.mxu0 0
    %2620 = vmatprep.subr.bf16.mxu0 0
    %2621 = vmatpush2.bf16.xpose.msra.mxu0 0
    %2622 = vmatprep.subr.bf16.mxu0 0
    %2623 = vmatpush2.bf16.xpose.msra.mxu0 0
    %2624 = vmatprep.subr.bf16.mxu0 0
    %2625 = vmatpush2.bf16.xpose.msra.mxu0 0
    %2626 = vmatprep.subr.bf16.mxu0 0
    %2627 = vmatpush2.bf16.xpose.msra.mxu0 0
    %2628 = vmatprep.mubr.bf16.mxu0 0
    %2629 = vmatmul.mubr.bf16.gmra.mxu0 %v2591
    %v2630 = vpop.f32.mrf.mxu0
    %v2631 = vadd.f32 0.0, %v2630
    %v2632 = vpop.f32.mrf.mxu0
    %v2633 = vpop.f32.mrf.mxu0
    %v2634 = vpop.f32.mrf.mxu0
    %2635 = vdwg.mxu0
    %v2636 = vsel %vm786, %v2581, -inf
    %2637 = vmax.xlane.f32.xlu0 %v2636
    %v2638 = vpop.xlane.xlu0 %2637
    %v2639 = vsel %vm786, %v2631, -inf
    %2640 = vmax.xlane.f32.xlu0 %v2639
    %v2641 = vpop.xlane.xlu0 %2640
    %v2642 = vsub.f32 %v2581, %v2638
    %v2643 = vsub.f32 %v2631, %v2641
    %v2644 = vmul.f32 %v2642, 1.442695
    %v2645 = vpow.pop %v2644
    %v2646 = vmul.f32 %v2643, 1.442695
    %v2647 = vpow.pop %v2646
    %v2648 = vsel %vm786, %v2645, 0.0
    %2649 = vadd.xlane.f32.xlu0 %v2648
    %v2650 = vpop.xlane.xlu0 %2649
    %v2651 = vsel %vm786, %v2647, 0.0
    %2652 = vadd.xlane.f32.xlu0 %v2651
    %v2653 = vpop.xlane.xlu0 %2652
    %v2654 = vrcp.pop %v2650
    %v2655 = vrcp.pop %v2653
    %v2656 = vmul.f32 %v2645, %v2654
    %v2657 = vmul.f32 %v2647, %v2655
    %v2658 = vpack.c.bf16 %v2656, %v2656
    %v2659 = vpack.c.bf16 %v2657, %v2657
    %2660 = vrot.lane.b32.xlu0 %v2084, 48
    %v2661 = vpop.permute.xlu0 %2660
    %v2663 = vsel %vm786, %v2658, 0
    %v2666 = vsel %vm911, %v2661, 0
    %2668 = vmatprep.subr.bf16.mxu0 0
    %2669 = vmatpush1.bf16.msra.mxu0 0
    %2670 = vmatprep.subr.bf16.mxu0 0
    %2671 = vmatpush1.bf16.msra.mxu0 0
    %2672 = vmatprep.subr.bf16.mxu0 0
    %2673 = vmatpush1.bf16.msra.mxu0 0
    %2674 = vmatprep.subr.bf16.mxu0 0
    %2675 = vmatpush1.bf16.msra.mxu0 0
    %2676 = vmatprep.subr.bf16.mxu0 0
    %2677 = vmatpush1.bf16.msra.mxu0 0
    %2678 = vmatprep.subr.bf16.mxu0 0
    %2679 = vmatpush1.bf16.msra.mxu0 0
    %2680 = vmatprep.subr.bf16.mxu0 0
    %2681 = vmatpush1.bf16.msra.mxu0 0
    %2682 = vmatprep.subr.bf16.mxu0 0
    %2683 = vmatpush1.bf16.msra.mxu0 %v2666
    %2684 = vmatprep.subr.bf16.mxu0 0
    %2685 = vmatpush2.bf16.msra.mxu0 0
    %2686 = vmatprep.subr.bf16.mxu0 0
    %2687 = vmatpush2.bf16.msra.mxu0 0
    %2688 = vmatprep.subr.bf16.mxu0 0
    %2689 = vmatpush2.bf16.msra.mxu0 0
    %2690 = vmatprep.subr.bf16.mxu0 0
    %2691 = vmatpush2.bf16.msra.mxu0 0
    %2692 = vmatprep.subr.bf16.mxu0 0
    %2693 = vmatpush2.bf16.msra.mxu0 0
    %2694 = vmatprep.subr.bf16.mxu0 0
    %2695 = vmatpush2.bf16.msra.mxu0 0
    %2696 = vmatprep.subr.bf16.mxu0 0
    %2697 = vmatpush2.bf16.msra.mxu0 0
    %2698 = vmatprep.subr.bf16.mxu0 0
    %2699 = vmatpush2.bf16.msra.mxu0 0
    %2700 = vmatprep.mubr.bf16.mxu0 0
    %2701 = vmatmul.mubr.bf16.gmra.mxu0 %v2663
    %v2702 = vpop.f32.mrf.mxu0
    %v2703 = vadd.f32 0.0, %v2702
    %v2704 = vpop.f32.mrf.mxu0
    %v2705 = vpop.f32.mrf.mxu0
    %v2706 = vpop.f32.mrf.mxu0
    %2707 = vdwg.mxu0
    %2708 = vrot.lane.b32.xlu0 %v2085, 48
    %v2709 = vpop.permute.xlu0 %2708
    %v2711 = vsel %vm786, %v2659, 0
    %v2714 = vsel %vm911, %v2709, 0
    %2716 = vmatprep.subr.bf16.mxu0 0
    %2717 = vmatpush1.bf16.msra.mxu0 0
    %2718 = vmatprep.subr.bf16.mxu0 0
    %2719 = vmatpush1.bf16.msra.mxu0 0
    %2720 = vmatprep.subr.bf16.mxu0 0
    %2721 = vmatpush1.bf16.msra.mxu0 0
    %2722 = vmatprep.subr.bf16.mxu0 0
    %2723 = vmatpush1.bf16.msra.mxu0 0
    %2724 = vmatprep.subr.bf16.mxu0 0
    %2725 = vmatpush1.bf16.msra.mxu0 0
    %2726 = vmatprep.subr.bf16.mxu0 0
    %2727 = vmatpush1.bf16.msra.mxu0 0
    %2728 = vmatprep.subr.bf16.mxu0 0
    %2729 = vmatpush1.bf16.msra.mxu0 0
    %2730 = vmatprep.subr.bf16.mxu0 0
    %2731 = vmatpush1.bf16.msra.mxu0 %v2714
    %2732 = vmatprep.subr.bf16.mxu0 0
    %2733 = vmatpush2.bf16.msra.mxu0 0
    %2734 = vmatprep.subr.bf16.mxu0 0
    %2735 = vmatpush2.bf16.msra.mxu0 0
    %2736 = vmatprep.subr.bf16.mxu0 0
    %2737 = vmatpush2.bf16.msra.mxu0 0
    %2738 = vmatprep.subr.bf16.mxu0 0
    %2739 = vmatpush2.bf16.msra.mxu0 0
    %2740 = vmatprep.subr.bf16.mxu0 0
    %2741 = vmatpush2.bf16.msra.mxu0 0
    %2742 = vmatprep.subr.bf16.mxu0 0
    %2743 = vmatpush2.bf16.msra.mxu0 0
    %2744 = vmatprep.subr.bf16.mxu0 0
    %2745 = vmatpush2.bf16.msra.mxu0 0
    %2746 = vmatprep.subr.bf16.mxu0 0
    %2747 = vmatpush2.bf16.msra.mxu0 0
    %2748 = vmatprep.mubr.bf16.mxu0 0
    %2749 = vmatmul.mubr.bf16.gmra.mxu0 %v2711
    %v2750 = vpop.f32.mrf.mxu0
    %v2751 = vadd.f32 0.0, %v2750
    %v2752 = vpop.f32.mrf.mxu0
    %v2753 = vpop.f32.mrf.mxu0
    %v2754 = vpop.f32.mrf.mxu0
    %2755 = vdwg.mxu0
    %2758 = vrot.lane.b32.xlu0 %v2703, 16
    %v2759 = vpop.permute.xlu0 %2758
    %2760 = vrot.lane.b32.xlu0 %v2751, 16
    %v2761 = vpop.permute.xlu0 %2760
    %2764 = vst.msk [vmem:[#allocation3] sm:$0xff] %vm1464, %v2759
    %2765 = vst.msk [vmem:[#allocation3 + $0x8] sm:$0xff] %vm1464, %v2761
    %2766 = vrot.lane.b32.xlu0 %v2084, 104
    %v2767 = vpop.permute.xlu0 %2766
    %2768 = vrot.lane.b32.xlu0 %v2084, 72
    %v2769 = vpop.permute.xlu0 %2768
    %v2771 = vsel %vm786, %v2767, 0
    %v2774 = vsel %vm786, %v2769, 0
    %2776 = vmatprep.subr.bf16.mxu0 0
    %2777 = vmatpush1.bf16.xpose.msra.mxu0 0
    %2778 = vmatprep.subr.bf16.mxu0 0
    %2779 = vmatpush1.bf16.xpose.msra.mxu0 0
    %2780 = vmatprep.subr.bf16.mxu0 0
    %2781 = vmatpush1.bf16.xpose.msra.mxu0 0
    %2782 = vmatprep.subr.bf16.mxu0 0
    %2783 = vmatpush1.bf16.xpose.msra.mxu0 0
    %2784 = vmatprep.subr.bf16.mxu0 0
    %2785 = vmatpush1.bf16.xpose.msra.mxu0 0
    %2786 = vmatprep.subr.bf16.mxu0 0
    %2787 = vmatpush1.bf16.xpose.msra.mxu0 0
    %2788 = vmatprep.subr.bf16.mxu0 0
    %2789 = vmatpush1.bf16.xpose.msra.mxu0 0
    %2790 = vmatprep.subr.bf16.mxu0 0
    %2791 = vmatpush1.bf16.xpose.msra.mxu0 %v2774
    %2792 = vmatprep.subr.bf16.mxu0 0
    %2793 = vmatpush2.bf16.xpose.msra.mxu0 0
    %2794 = vmatprep.subr.bf16.mxu0 0
    %2795 = vmatpush2.bf16.xpose.msra.mxu0 0
    %2796 = vmatprep.subr.bf16.mxu0 0
    %2797 = vmatpush2.bf16.xpose.msra.mxu0 0
    %2798 = vmatprep.subr.bf16.mxu0 0
    %2799 = vmatpush2.bf16.xpose.msra.mxu0 0
    %2800 = vmatprep.subr.bf16.mxu0 0
    %2801 = vmatpush2.bf16.xpose.msra.mxu0 0
    %2802 = vmatprep.subr.bf16.mxu0 0
    %2803 = vmatpush2.bf16.xpose.msra.mxu0 0
    %2804 = vmatprep.subr.bf16.mxu0 0
    %2805 = vmatpush2.bf16.xpose.msra.mxu0 0
    %2806 = vmatprep.subr.bf16.mxu0 0
    %2807 = vmatpush2.bf16.xpose.msra.mxu0 0
    %2808 = vmatprep.mubr.bf16.mxu0 0
    %2809 = vmatmul.mubr.bf16.gmra.mxu0 %v2771
    %v2810 = vpop.f32.mrf.mxu0
    %v2811 = vadd.f32 0.0, %v2810
    %v2812 = vpop.f32.mrf.mxu0
    %v2813 = vpop.f32.mrf.mxu0
    %v2814 = vpop.f32.mrf.mxu0
    %2815 = vdwg.mxu0
    %2816 = vrot.lane.b32.xlu0 %v2085, 104
    %v2817 = vpop.permute.xlu0 %2816
    %2818 = vrot.lane.b32.xlu0 %v2085, 72
    %v2819 = vpop.permute.xlu0 %2818
    %v2821 = vsel %vm786, %v2817, 0
    %v2824 = vsel %vm786, %v2819, 0
    %2826 = vmatprep.subr.bf16.mxu0 0
    %2827 = vmatpush1.bf16.xpose.msra.mxu0 0
    %2828 = vmatprep.subr.bf16.mxu0 0
    %2829 = vmatpush1.bf16.xpose.msra.mxu0 0
    %2830 = vmatprep.subr.bf16.mxu0 0
    %2831 = vmatpush1.bf16.xpose.msra.mxu0 0
    %2832 = vmatprep.subr.bf16.mxu0 0
    %2833 = vmatpush1.bf16.xpose.msra.mxu0 0
    %2834 = vmatprep.subr.bf16.mxu0 0
    %2835 = vmatpush1.bf16.xpose.msra.mxu0 0
    %2836 = vmatprep.subr.bf16.mxu0 0
    %2837 = vmatpush1.bf16.xpose.msra.mxu0 0
    %2838 = vmatprep.subr.bf16.mxu0 0
    %2839 = vmatpush1.bf16.xpose.msra.mxu0 0
    %2840 = vmatprep.subr.bf16.mxu0 0
    %2841 = vmatpush1.bf16.xpose.msra.mxu0 %v2824
    %2842 = vmatprep.subr.bf16.mxu0 0
    %2843 = vmatpush2.bf16.xpose.msra.mxu0 0
    %2844 = vmatprep.subr.bf16.mxu0 0
    %2845 = vmatpush2.bf16.xpose.msra.mxu0 0
    %2846 = vmatprep.subr.bf16.mxu0 0
    %2847 = vmatpush2.bf16.xpose.msra.mxu0 0
    %2848 = vmatprep.subr.bf16.mxu0 0
    %2849 = vmatpush2.bf16.xpose.msra.mxu0 0
    %2850 = vmatprep.subr.bf16.mxu0 0
    %2851 = vmatpush2.bf16.xpose.msra.mxu0 0
    %2852 = vmatprep.subr.bf16.mxu0 0
    %2853 = vmatpush2.bf16.xpose.msra.mxu0 0
    %2854 = vmatprep.subr.bf16.mxu0 0
    %2855 = vmatpush2.bf16.xpose.msra.mxu0 0
    %2856 = vmatprep.subr.bf16.mxu0 0
    %2857 = vmatpush2.bf16.xpose.msra.mxu0 0
    %2858 = vmatprep.mubr.bf16.mxu0 0
    %2859 = vmatmul.mubr.bf16.gmra.mxu0 %v2821
    %v2860 = vpop.f32.mrf.mxu0
    %v2861 = vadd.f32 0.0, %v2860
    %v2862 = vpop.f32.mrf.mxu0
    %v2863 = vpop.f32.mrf.mxu0
    %v2864 = vpop.f32.mrf.mxu0
    %2865 = vdwg.mxu0
    %v2866 = vsel %vm786, %v2811, -inf
    %2867 = vmax.xlane.f32.xlu0 %v2866
    %v2868 = vpop.xlane.xlu0 %2867
    %v2869 = vsel %vm786, %v2861, -inf
    %2870 = vmax.xlane.f32.xlu0 %v2869
    %v2871 = vpop.xlane.xlu0 %2870
    %v2872 = vsub.f32 %v2811, %v2868
    %v2873 = vsub.f32 %v2861, %v2871
    %v2874 = vmul.f32 %v2872, 1.442695
    %v2875 = vpow.pop %v2874
    %v2876 = vmul.f32 %v2873, 1.442695
    %v2877 = vpow.pop %v2876
    %v2878 = vsel %vm786, %v2875, 0.0
    %2879 = vadd.xlane.f32.xlu0 %v2878
    %v2880 = vpop.xlane.xlu0 %2879
    %v2881 = vsel %vm786, %v2877, 0.0
    %2882 = vadd.xlane.f32.xlu0 %v2881
    %v2883 = vpop.xlane.xlu0 %2882
    %v2884 = vrcp.pop %v2880
    %v2885 = vrcp.pop %v2883
    %v2886 = vmul.f32 %v2875, %v2884
    %v2887 = vmul.f32 %v2877, %v2885
    %v2888 = vpack.c.bf16 %v2886, %v2886
    %v2889 = vpack.c.bf16 %v2887, %v2887
    %2890 = vrot.lane.b32.xlu0 %v2084, 40
    %v2891 = vpop.permute.xlu0 %2890
    %v2893 = vsel %vm786, %v2888, 0
    %v2896 = vsel %vm911, %v2891, 0
    %2898 = vmatprep.subr.bf16.mxu0 0
    %2899 = vmatpush1.bf16.msra.mxu0 0
    %2900 = vmatprep.subr.bf16.mxu0 0
    %2901 = vmatpush1.bf16.msra.mxu0 0
    %2902 = vmatprep.subr.bf16.mxu0 0
    %2903 = vmatpush1.bf16.msra.mxu0 0
    %2904 = vmatprep.subr.bf16.mxu0 0
    %2905 = vmatpush1.bf16.msra.mxu0 0
    %2906 = vmatprep.subr.bf16.mxu0 0
    %2907 = vmatpush1.bf16.msra.mxu0 0
    %2908 = vmatprep.subr.bf16.mxu0 0
    %2909 = vmatpush1.bf16.msra.mxu0 0
    %2910 = vmatprep.subr.bf16.mxu0 0
    %2911 = vmatpush1.bf16.msra.mxu0 0
    %2912 = vmatprep.subr.bf16.mxu0 0
    %2913 = vmatpush1.bf16.msra.mxu0 %v2896
    %2914 = vmatprep.subr.bf16.mxu0 0
    %2915 = vmatpush2.bf16.msra.mxu0 0
    %2916 = vmatprep.subr.bf16.mxu0 0
    %2917 = vmatpush2.bf16.msra.mxu0 0
    %2918 = vmatprep.subr.bf16.mxu0 0
    %2919 = vmatpush2.bf16.msra.mxu0 0
    %2920 = vmatprep.subr.bf16.mxu0 0
    %2921 = vmatpush2.bf16.msra.mxu0 0
    %2922 = vmatprep.subr.bf16.mxu0 0
    %2923 = vmatpush2.bf16.msra.mxu0 0
    %2924 = vmatprep.subr.bf16.mxu0 0
    %2925 = vmatpush2.bf16.msra.mxu0 0
    %2926 = vmatprep.subr.bf16.mxu0 0
    %2927 = vmatpush2.bf16.msra.mxu0 0
    %2928 = vmatprep.subr.bf16.mxu0 0
    %2929 = vmatpush2.bf16.msra.mxu0 0
    %2930 = vmatprep.mubr.bf16.mxu0 0
    %2931 = vmatmul.mubr.bf16.gmra.mxu0 %v2893
    %v2932 = vpop.f32.mrf.mxu0
    %v2933 = vadd.f32 0.0, %v2932
    %v2934 = vpop.f32.mrf.mxu0
    %v2935 = vpop.f32.mrf.mxu0
    %v2936 = vpop.f32.mrf.mxu0
    %2937 = vdwg.mxu0
    %2938 = vrot.lane.b32.xlu0 %v2085, 40
    %v2939 = vpop.permute.xlu0 %2938
    %v2941 = vsel %vm786, %v2889, 0
    %v2944 = vsel %vm911, %v2939, 0
    %2946 = vmatprep.subr.bf16.mxu0 0
    %2947 = vmatpush1.bf16.msra.mxu0 0
    %2948 = vmatprep.subr.bf16.mxu0 0
    %2949 = vmatpush1.bf16.msra.mxu0 0
    %2950 = vmatprep.subr.bf16.mxu0 0
    %2951 = vmatpush1.bf16.msra.mxu0 0
    %2952 = vmatprep.subr.bf16.mxu0 0
    %2953 = vmatpush1.bf16.msra.mxu0 0
    %2954 = vmatprep.subr.bf16.mxu0 0
    %2955 = vmatpush1.bf16.msra.mxu0 0
    %2956 = vmatprep.subr.bf16.mxu0 0
    %2957 = vmatpush1.bf16.msra.mxu0 0
    %2958 = vmatprep.subr.bf16.mxu0 0
    %2959 = vmatpush1.bf16.msra.mxu0 0
    %2960 = vmatprep.subr.bf16.mxu0 0
    %2961 = vmatpush1.bf16.msra.mxu0 %v2944
    %2962 = vmatprep.subr.bf16.mxu0 0
    %2963 = vmatpush2.bf16.msra.mxu0 0
    %2964 = vmatprep.subr.bf16.mxu0 0
    %2965 = vmatpush2.bf16.msra.mxu0 0
    %2966 = vmatprep.subr.bf16.mxu0 0
    %2967 = vmatpush2.bf16.msra.mxu0 0
    %2968 = vmatprep.subr.bf16.mxu0 0
    %2969 = vmatpush2.bf16.msra.mxu0 0
    %2970 = vmatprep.subr.bf16.mxu0 0
    %2971 = vmatpush2.bf16.msra.mxu0 0
    %2972 = vmatprep.subr.bf16.mxu0 0
    %2973 = vmatpush2.bf16.msra.mxu0 0
    %2974 = vmatprep.subr.bf16.mxu0 0
    %2975 = vmatpush2.bf16.msra.mxu0 0
    %2976 = vmatprep.subr.bf16.mxu0 0
    %2977 = vmatpush2.bf16.msra.mxu0 0
    %2978 = vmatprep.mubr.bf16.mxu0 0
    %2979 = vmatmul.mubr.bf16.gmra.mxu0 %v2941
    %v2980 = vpop.f32.mrf.mxu0
    %v2981 = vadd.f32 0.0, %v2980
    %v2982 = vpop.f32.mrf.mxu0
    %v2983 = vpop.f32.mrf.mxu0
    %v2984 = vpop.f32.mrf.mxu0
    %2985 = vdwg.mxu0
    %2988 = vrot.lane.b32.xlu0 %v2933, 24
    %v2989 = vpop.permute.xlu0 %2988
    %2990 = vrot.lane.b32.xlu0 %v2981, 24
    %v2991 = vpop.permute.xlu0 %2990
    %2994 = vst.msk [vmem:[#allocation3] sm:$0xff] %vm1695, %v2989
    %2995 = vst.msk [vmem:[#allocation3 + $0x8] sm:$0xff] %vm1695, %v2991
    %v2996 = vld [vmem:[#allocation3] sm:$0xff]
    %v2997 = vld [vmem:[#allocation3 + $0x8] sm:$0xff]
    %v2998 = vpack.c.bf16 %v2997, %v2996
    %s2999 = scalar_lea.vmem %s8, 16
    %v3000 = vld [vmem:[%s2999] sm:$0xf]
    %v3001 = vld [vmem:[%s2999 + $0x4] sm:$0xf]
    %v3002 = vld [vmem:[%s2999 + $0x8] sm:$0xf]
    %v3003 = vld [vmem:[%s2999 + $0xc] sm:$0xf]
    %s3004 = scalar_lea.vmem %s9, 1
    %v3005 = vld [vmem:[%s3004] sm:$0x1]
    %v3007 = vlaneseq
    %v3008 = vshrl.u32 %v3007, 7
    %v3009 = vsub.s32 0, %v3008
    %v3010 = vrot.slane %v3005, %v3009
    %v3016 = vunpack.c.l.b16 %v3000
    %v3017 = vunpack.c.l.b16 %v3001
    %v3018 = vunpack.c.l.b16 %v3002
    %v3019 = vunpack.c.l.b16 %v3003
    %v3020 = vpack.c.b16 %v3017, %v3016
    %v3021 = vpack.c.b16 %v3019, %v3018
    %v3025 = vsel %vm487, %v2998, 0
    %3027 = vmatprep.subr.bf16.mxu0 0
    %3028 = vmatpush1.bf16.msra.mxu0 0
    %3029 = vmatprep.subr.bf16.mxu0 0
    %3030 = vmatpush1.bf16.msra.mxu0 0
    %3031 = vmatprep.subr.bf16.mxu0 0
    %3032 = vmatpush1.bf16.msra.mxu0 0
    %3033 = vmatprep.subr.bf16.mxu0 0
    %3034 = vmatpush1.bf16.msra.mxu0 0
    %3035 = vmatprep.subr.bf16.mxu0 0
    %3036 = vmatpush1.bf16.msra.mxu0 0
    %3037 = vmatprep.subr.bf16.mxu0 0
    %3038 = vmatpush1.bf16.msra.mxu0 0
    %3039 = vmatprep.subr.bf16.mxu0 0
    %3040 = vmatpush1.bf16.msra.mxu0 %v3021
    %3041 = vmatprep.subr.bf16.mxu0 0
    %3042 = vmatpush1.bf16.msra.mxu0 %v3020
    %3043 = vmatprep.subr.bf16.mxu0 0
    %3044 = vmatpush2.bf16.msra.mxu0 0
    %3045 = vmatprep.subr.bf16.mxu0 0
    %3046 = vmatpush2.bf16.msra.mxu0 0
    %3047 = vmatprep.subr.bf16.mxu0 0
    %3048 = vmatpush2.bf16.msra.mxu0 0
    %3049 = vmatprep.subr.bf16.mxu0 0
    %3050 = vmatpush2.bf16.msra.mxu0 0
    %3051 = vmatprep.subr.bf16.mxu0 0
    %3052 = vmatpush2.bf16.msra.mxu0 0
    %3053 = vmatprep.subr.bf16.mxu0 0
    %3054 = vmatpush2.bf16.msra.mxu0 0
    %3055 = vmatprep.subr.bf16.mxu0 0
    %3056 = vmatpush2.bf16.msra.mxu0 0
    %3057 = vmatprep.subr.bf16.mxu0 0
    %3058 = vmatpush2.bf16.msra.mxu0 0
    %3059 = vmatprep.mubr.bf16.mxu0 0
    %3060 = vmatmul.mubr.bf16.gmra.mxu0 %v3025
    %v3061 = vpop.f32.mrf.mxu0
    %v3062 = vadd.f32 %v3010, %v3061
    %v3063 = vpop.f32.mrf.mxu0
    %v3064 = vpop.f32.mrf.mxu0
    %v3065 = vadd.f32 %v3010, %v3064
    %v3066 = vpop.f32.mrf.mxu0
    %3067 = vdwg.mxu0
    %s3068 = scalar_lea.vmem %s10, 2
    %v3069 = vld [vmem:[%s3068] sm:$0x3]
    %v3070 = vadd.f32 %v2012, %v3062
    %v3071 = vadd.f32 %v2013, %v3065
    %v3072 = vsel %vm487, %v3070, 0.0
    %3073 = vadd.xlane.f32.xlu0 %v3072
    %v3074 = vpop.xlane.xlu0 %3073
    %v3075 = vsel %vm487, %v3071, 0.0
    %3076 = vadd.xlane.f32.xlu0 %v3075
    %v3077 = vpop.xlane.xlu0 %3076
    %v3078 = vmul.f32 %v3074, %v1777
    %v3079 = vmul.f32 %v3077, %v1777
    %v3080 = vsub.f32 %v3070, %v3078
    %v3081 = vsub.f32 %v3071, %v3079
    %v3082 = vmul.f32 %v3080, %v3080
    %v3083 = vmul.f32 %v3081, %v3081
    %v3084 = vsel %vm487, %v3082, 0.0
    %3085 = vadd.xlane.f32.xlu0 %v3084
    %v3086 = vpop.xlane.xlu0 %3085
    %v3087 = vsel %vm487, %v3083, 0.0
    %3088 = vadd.xlane.f32.xlu0 %v3087
    %v3089 = vpop.xlane.xlu0 %3088
    %v3090 = vmul.f32 %v3086, %v1777
    %v3091 = vmul.f32 %v3089, %v1777
    %v3092 = vadd.f32 %v3090, 1e-05
    %v3093 = vadd.f32 %v3091, 1e-05
    %v3094 = vrsqrt.pop %v3092
    %v3095 = vrsqrt.pop %v3093
    %v3096 = vmul.f32 %v3080, %v3094
    %v3097 = vmul.f32 %v3081, %v3095
    %v3098 = vlaneseq
    %v3099 = vshrl.u32 %v3098, 7
    %v3100 = vsub.s32 0, %v3099
    %v3101 = vrot.slane %v3069, %v3100
    %v3102 = vmul.f32 %v3096, %v3101
    %v3103 = vmul.f32 %v3097, %v3101
    %v3104 = vlaneseq
    %v3105 = vshrl.u32 %v3104, 7
    %v3106 = vsub.s32 1, %v3105
    %v3107 = vrot.slane %v3069, %v3106
    %v3108 = vadd.f32 %v3102, %v3107
    %v3109 = vadd.f32 %v3103, %v3107
    %v3110 = vpack.c.bf16 %v3109, %v3108
    %s3111 = scalar_lea.vmem %s11, 16
    %v3112 = vld [vmem:[%s3111] sm:$0xf]
    %v3113 = vld [vmem:[%s3111 + $0x4] sm:$0xf]
    %v3114 = vld [vmem:[%s3111 + $0x8] sm:$0xf]
    %v3115 = vld [vmem:[%s3111 + $0xc] sm:$0xf]
    %s3116 = scalar_lea.vmem %s12, 1
    %v3117 = vld [vmem:[%s3116] sm:$0x1]
    %v3119 = vlaneseq
    %v3120 = vshrl.u32 %v3119, 7
    %v3121 = vsub.s32 0, %v3120
    %v3122 = vrot.slane %v3117, %v3121
    %v3128 = vunpack.c.l.b16 %v3112
    %v3129 = vunpack.c.l.b16 %v3113
    %v3130 = vunpack.c.l.b16 %v3114
    %v3131 = vunpack.c.l.b16 %v3115
    %v3132 = vpack.c.b16 %v3129, %v3128
    %v3133 = vpack.c.b16 %v3131, %v3130
    %v3137 = vsel %vm487, %v3110, 0
    %3139 = vmatprep.subr.bf16.mxu0 0
    %3140 = vmatpush1.bf16.msra.mxu0 0
    %3141 = vmatprep.subr.bf16.mxu0 0
    %3142 = vmatpush1.bf16.msra.mxu0 0
    %3143 = vmatprep.subr.bf16.mxu0 0
    %3144 = vmatpush1.bf16.msra.mxu0 0
    %3145 = vmatprep.subr.bf16.mxu0 0
    %3146 = vmatpush1.bf16.msra.mxu0 0
    %3147 = vmatprep.subr.bf16.mxu0 0
    %3148 = vmatpush1.bf16.msra.mxu0 0
    %3149 = vmatprep.subr.bf16.mxu0 0
    %3150 = vmatpush1.bf16.msra.mxu0 0
    %3151 = vmatprep.subr.bf16.mxu0 0
    %3152 = vmatpush1.bf16.msra.mxu0 %v3133
    %3153 = vmatprep.subr.bf16.mxu0 0
    %3154 = vmatpush1.bf16.msra.mxu0 %v3132
    %3155 = vmatprep.subr.bf16.mxu0 0
    %3156 = vmatpush2.bf16.msra.mxu0 0
    %3157 = vmatprep.subr.bf16.mxu0 0
    %3158 = vmatpush2.bf16.msra.mxu0 0
    %3159 = vmatprep.subr.bf16.mxu0 0
    %3160 = vmatpush2.bf16.msra.mxu0 0
    %3161 = vmatprep.subr.bf16.mxu0 0
    %3162 = vmatpush2.bf16.msra.mxu0 0
    %3163 = vmatprep.subr.bf16.mxu0 0
    %3164 = vmatpush2.bf16.msra.mxu0 0
    %3165 = vmatprep.subr.bf16.mxu0 0
    %3166 = vmatpush2.bf16.msra.mxu0 0
    %3167 = vmatprep.subr.bf16.mxu0 0
    %3168 = vmatpush2.bf16.msra.mxu0 0
    %3169 = vmatprep.subr.bf16.mxu0 0
    %3170 = vmatpush2.bf16.msra.mxu0 0
    %3171 = vmatprep.mubr.bf16.mxu0 0
    %3172 = vmatmul.mubr.bf16.gmra.mxu0 %v3137
    %v3173 = vpop.f32.mrf.mxu0
    %v3174 = vadd.f32 %v3122, %v3173
    %v3175 = vpop.f32.mrf.mxu0
    %v3176 = vpop.f32.mrf.mxu0
    %v3177 = vadd.f32 %v3122, %v3176
    %v3178 = vpop.f32.mrf.mxu0
    %3179 = vdwg.mxu0
    %v3180 = vmul.f32 %v3174, 0.5
    %v3181 = vmul.f32 %v3177, 0.5
    %v3182 = vmul.f32 %v3174, 0.70710677
    %v3183 = vmul.f32 %v3177, 0.70710677
    %v3184 = verf.f32.pop %v3182
    %v3185 = verf.f32.pop %v3183
    %v3186 = vadd.f32 %v3184, 1.0
    %v3187 = vadd.f32 %v3185, 1.0
    %v3188 = vmul.f32 %v3180, %v3186
    %v3189 = vmul.f32 %v3181, %v3187
    %v3190 = vpack.c.bf16 %v3189, %v3188
    %s3191 = scalar_lea.vmem %s13, 32
    %v3192 = vld [vmem:[%s3191] sm:$0xf]
    %v3193 = vld [vmem:[%s3191 + $0x4] sm:$0xf]
    %v3194 = vld [vmem:[%s3191 + $0x8] sm:$0xf]
    %v3195 = vld [vmem:[%s3191 + $0xc] sm:$0xf]
    %v3196 = vld [vmem:[%s3191 + $0x10] sm:$0xf]
    %v3197 = vld [vmem:[%s3191 + $0x14] sm:$0xf]
    %v3198 = vld [vmem:[%s3191 + $0x18] sm:$0xf]
    %v3199 = vld [vmem:[%s3191 + $0x1c] sm:$0xf]
    %s3200 = scalar_lea.vmem %s14, 1
    %v3201 = vld [vmem:[%s3200] sm:$0x1]
    %v3203 = vlaneseq
    %v3204 = vshrl.u32 %v3203, 7
    %v3205 = vsub.s32 0, %v3204
    %v3206 = vrot.slane %v3201, %v3205
    %v3216 = vunpack.c.l.b16 %v3192
    %v3217 = vunpack.c.l.b16 %v3193
    %v3218 = vunpack.c.l.b16 %v3194
    %v3219 = vunpack.c.l.b16 %v3195
    %v3220 = vunpack.c.l.b16 %v3196
    %v3221 = vunpack.c.l.b16 %v3197
    %v3222 = vunpack.c.l.b16 %v3198
    %v3223 = vunpack.c.l.b16 %v3199
    %v3224 = vpack.c.b16 %v3217, %v3216
    %v3225 = vpack.c.b16 %v3219, %v3218
    %v3226 = vpack.c.b16 %v3221, %v3220
    %v3227 = vpack.c.b16 %v3223, %v3222
    %v3233 = vsel %vm1928, %v3190, 0
    %3235 = vmatprep.subr.bf16.mxu0 0
    %3236 = vmatpush1.bf16.msra.mxu0 0
    %3237 = vmatprep.subr.bf16.mxu0 0
    %3238 = vmatpush1.bf16.msra.mxu0 0
    %3239 = vmatprep.subr.bf16.mxu0 0
    %3240 = vmatpush1.bf16.msra.mxu0 0
    %3241 = vmatprep.subr.bf16.mxu0 0
    %3242 = vmatpush1.bf16.msra.mxu0 0
    %3243 = vmatprep.subr.bf16.mxu0 0
    %3244 = vmatpush1.bf16.msra.mxu0 %v3227
    %3245 = vmatprep.subr.bf16.mxu0 0
    %3246 = vmatpush1.bf16.msra.mxu0 %v3226
    %3247 = vmatprep.subr.bf16.mxu0 0
    %3248 = vmatpush1.bf16.msra.mxu0 %v3225
    %3249 = vmatprep.subr.bf16.mxu0 0
    %3250 = vmatpush1.bf16.msra.mxu0 %v3224
    %3251 = vmatprep.subr.bf16.mxu0 0
    %3252 = vmatpush2.bf16.msra.mxu0 0
    %3253 = vmatprep.subr.bf16.mxu0 0
    %3254 = vmatpush2.bf16.msra.mxu0 0
    %3255 = vmatprep.subr.bf16.mxu0 0
    %3256 = vmatpush2.bf16.msra.mxu0 0
    %3257 = vmatprep.subr.bf16.mxu0 0
    %3258 = vmatpush2.bf16.msra.mxu0 0
    %3259 = vmatprep.subr.bf16.mxu0 0
    %3260 = vmatpush2.bf16.msra.mxu0 0
    %3261 = vmatprep.subr.bf16.mxu0 0
    %3262 = vmatpush2.bf16.msra.mxu0 0
    %3263 = vmatprep.subr.bf16.mxu0 0
    %3264 = vmatpush2.bf16.msra.mxu0 0
    %3265 = vmatprep.subr.bf16.mxu0 0
    %3266 = vmatpush2.bf16.msra.mxu0 0
    %3267 = vmatprep.mubr.bf16.mxu0 0
    %3268 = vmatmul.mubr.bf16.gmra.mxu0 %v3233
    %v3269 = vpop.f32.mrf.mxu0
    %v3270 = vadd.f32 %v3206, %v3269
    %v3271 = vpop.f32.mrf.mxu0
    %v3272 = vpop.f32.mrf.mxu0
    %v3273 = vadd.f32 %v3206, %v3272
    %v3274 = vpop.f32.mrf.mxu0
    %3275 = vdwg.mxu0
    %s3276 = scalar_lea.vmem %s15, 2
    %v3277 = vld [vmem:[%s3276] sm:$0x3]
    %v3278 = vadd.f32 %v3108, %v3270
    %v3279 = vadd.f32 %v3109, %v3273
    %v3280 = vsel %vm487, %v3278, 0.0
    %3281 = vadd.xlane.f32.xlu0 %v3280
    %v3282 = vpop.xlane.xlu0 %3281
    %v3283 = vsel %vm487, %v3279, 0.0
    %3284 = vadd.xlane.f32.xlu0 %v3283
    %v3285 = vpop.xlane.xlu0 %3284
    %v3286 = vmul.f32 %v3282, %v1777
    %v3287 = vmul.f32 %v3285, %v1777
    %v3288 = vsub.f32 %v3278, %v3286
    %v3289 = vsub.f32 %v3279, %v3287
    %v3290 = vmul.f32 %v3288, %v3288
    %v3291 = vmul.f32 %v3289, %v3289
    %v3292 = vsel %vm487, %v3290, 0.0
    %3293 = vadd.xlane.f32.xlu0 %v3292
    %v3294 = vpop.xlane.xlu0 %3293
    %v3295 = vsel %vm487, %v3291, 0.0
    %3296 = vadd.xlane.f32.xlu0 %v3295
    %v3297 = vpop.xlane.xlu0 %3296
    %v3298 = vmul.f32 %v3294, %v1777
    %v3299 = vmul.f32 %v3297, %v1777
    %v3300 = vadd.f32 %v3298, 1e-05
    %v3301 = vadd.f32 %v3299, 1e-05
    %v3302 = vrsqrt.pop %v3300
    %v3303 = vrsqrt.pop %v3301
    %v3304 = vmul.f32 %v3288, %v3302
    %v3305 = vmul.f32 %v3289, %v3303
    %v3306 = vlaneseq
    %v3307 = vshrl.u32 %v3306, 7
    %v3308 = vsub.s32 0, %v3307
    %v3309 = vrot.slane %v3277, %v3308
    %v3310 = vmul.f32 %v3304, %v3309
    %v3311 = vmul.f32 %v3305, %v3309
    %v3312 = vlaneseq
    %v3313 = vshrl.u32 %v3312, 7
    %v3314 = vsub.s32 1, %v3313
    %v3315 = vrot.slane %v3277, %v3314
    %v3316 = vadd.f32 %v3310, %v3315
    %v3317 = vadd.f32 %v3311, %v3315
    %v3318 = vpack.c.bf16 %v3317, %v3316
    %s3319 = scalar_lea.vmem %s6, 32
    %v3320 = vld [vmem:[%s3319] sm:$0xf]
    %v3321 = vld [vmem:[%s3319 + $0x4] sm:$0xf]
    %v3322 = vld [vmem:[%s3319 + $0x8] sm:$0xf]
    %v3323 = vld [vmem:[%s3319 + $0xc] sm:$0xf]
    %s3324 = scalar_lea.vmem %s7, 2
    %v3325 = vld [vmem:[%s3324] sm:$0x1]
    %v3327 = vlaneseq
    %v3328 = vshrl.u32 %v3327, 7
    %v3329 = vsub.s32 0, %v3328
    %v3330 = vrot.slane %v3325, %v3329
    %v3336 = vunpack.c.l.b16 %v3320
    %v3337 = vunpack.c.l.b16 %v3321
    %v3338 = vunpack.c.l.b16 %v3322
    %v3339 = vunpack.c.l.b16 %v3323
    %v3340 = vpack.c.b16 %v3337, %v3336
    %v3341 = vpack.c.b16 %v3339, %v3338
    %v3345 = vsel %vm487, %v3318, 0
    %3347 = vmatprep.subr.bf16.mxu0 0
    %3348 = vmatpush1.bf16.msra.mxu0 0
    %3349 = vmatprep.subr.bf16.mxu0 0
    %3350 = vmatpush1.bf16.msra.mxu0 0
    %3351 = vmatprep.subr.bf16.mxu0 0
    %3352 = vmatpush1.bf16.msra.mxu0 0
    %3353 = vmatprep.subr.bf16.mxu0 0
    %3354 = vmatpush1.bf16.msra.mxu0 0
    %3355 = vmatprep.subr.bf16.mxu0 0
    %3356 = vmatpush1.bf16.msra.mxu0 0
    %3357 = vmatprep.subr.bf16.mxu0 0
    %3358 = vmatpush1.bf16.msra.mxu0 0
    %3359 = vmatprep.subr.bf16.mxu0 0
    %3360 = vmatpush1.bf16.msra.mxu0 %v3341
    %3361 = vmatprep.subr.bf16.mxu0 0
    %3362 = vmatpush1.bf16.msra.mxu0 %v3340
    %3363 = vmatprep.subr.bf16.mxu0 0
    %3364 = vmatpush2.bf16.msra.mxu0 0
    %3365 = vmatprep.subr.bf16.mxu0 0
    %3366 = vmatpush2.bf16.msra.mxu0 0
    %3367 = vmatprep.subr.bf16.mxu0 0
    %3368 = vmatpush2.bf16.msra.mxu0 0
    %3369 = vmatprep.subr.bf16.mxu0 0
    %3370 = vmatpush2.bf16.msra.mxu0 0
    %3371 = vmatprep.subr.bf16.mxu0 0
    %3372 = vmatpush2.bf16.msra.mxu0 0
    %3373 = vmatprep.subr.bf16.mxu0 0
    %3374 = vmatpush2.bf16.msra.mxu0 0
    %3375 = vmatprep.subr.bf16.mxu0 0
    %3376 = vmatpush2.bf16.msra.mxu0 0
    %3377 = vmatprep.subr.bf16.mxu0 0
    %3378 = vmatpush2.bf16.msra.mxu0 0
    %3379 = vmatprep.mubr.bf16.mxu0 0
    %3380 = vmatmul.mubr.bf16.gmra.mxu0 %v3345
    %v3381 = vpop.f32.mrf.mxu0
    %v3382 = vadd.f32 %v3330, %v3381
    %v3383 = vpop.f32.mrf.mxu0
    %v3384 = vpop.f32.mrf.mxu0
    %v3385 = vadd.f32 %v3330, %v3384
    %v3386 = vpop.f32.mrf.mxu0
    %3387 = vdwg.mxu0
    %v3388 = vpack.c.bf16 %v3382, %v3382
    %v3389 = vpack.c.bf16 %v3385, %v3385
    %3391 = vrot.lane.b32.xlu0 %v3388, 96
    %v3392 = vpop.permute.xlu0 %3391
    %v3394 = vsel %vm786, %v3388, 0
    %v3397 = vsel %vm786, %v3392, 0
    %3399 = vmatprep.subr.bf16.mxu0 0
    %3400 = vmatpush1.bf16.xpose.msra.mxu0 0
    %3401 = vmatprep.subr.bf16.mxu0 0
    %3402 = vmatpush1.bf16.xpose.msra.mxu0 0
    %3403 = vmatprep.subr.bf16.mxu0 0
    %3404 = vmatpush1.bf16.xpose.msra.mxu0 0
    %3405 = vmatprep.subr.bf16.mxu0 0
    %3406 = vmatpush1.bf16.xpose.msra.mxu0 0
    %3407 = vmatprep.subr.bf16.mxu0 0
    %3408 = vmatpush1.bf16.xpose.msra.mxu0 0
    %3409 = vmatprep.subr.bf16.mxu0 0
    %3410 = vmatpush1.bf16.xpose.msra.mxu0 0
    %3411 = vmatprep.subr.bf16.mxu0 0
    %3412 = vmatpush1.bf16.xpose.msra.mxu0 0
    %3413 = vmatprep.subr.bf16.mxu0 0
    %3414 = vmatpush1.bf16.xpose.msra.mxu0 %v3397
    %3415 = vmatprep.subr.bf16.mxu0 0
    %3416 = vmatpush2.bf16.xpose.msra.mxu0 0
    %3417 = vmatprep.subr.bf16.mxu0 0
    %3418 = vmatpush2.bf16.xpose.msra.mxu0 0
    %3419 = vmatprep.subr.bf16.mxu0 0
    %3420 = vmatpush2.bf16.xpose.msra.mxu0 0
    %3421 = vmatprep.subr.bf16.mxu0 0
    %3422 = vmatpush2.bf16.xpose.msra.mxu0 0
    %3423 = vmatprep.subr.bf16.mxu0 0
    %3424 = vmatpush2.bf16.xpose.msra.mxu0 0
    %3425 = vmatprep.subr.bf16.mxu0 0
    %3426 = vmatpush2.bf16.xpose.msra.mxu0 0
    %3427 = vmatprep.subr.bf16.mxu0 0
    %3428 = vmatpush2.bf16.xpose.msra.mxu0 0
    %3429 = vmatprep.subr.bf16.mxu0 0
    %3430 = vmatpush2.bf16.xpose.msra.mxu0 0
    %3431 = vmatprep.mubr.bf16.mxu0 0
    %3432 = vmatmul.mubr.bf16.gmra.mxu0 %v3394
    %v3433 = vpop.f32.mrf.mxu0
    %v3434 = vadd.f32 0.0, %v3433
    %v3435 = vpop.f32.mrf.mxu0
    %v3436 = vpop.f32.mrf.mxu0
    %v3437 = vpop.f32.mrf.mxu0
    %3438 = vdwg.mxu0
    %3440 = vrot.lane.b32.xlu0 %v3389, 96
    %v3441 = vpop.permute.xlu0 %3440
    %v3443 = vsel %vm786, %v3389, 0
    %v3446 = vsel %vm786, %v3441, 0
    %3448 = vmatprep.subr.bf16.mxu0 0
    %3449 = vmatpush1.bf16.xpose.msra.mxu0 0
    %3450 = vmatprep.subr.bf16.mxu0 0
    %3451 = vmatpush1.bf16.xpose.msra.mxu0 0
    %3452 = vmatprep.subr.bf16.mxu0 0
    %3453 = vmatpush1.bf16.xpose.msra.mxu0 0
    %3454 = vmatprep.subr.bf16.mxu0 0
    %3455 = vmatpush1.bf16.xpose.msra.mxu0 0
    %3456 = vmatprep.subr.bf16.mxu0 0
    %3457 = vmatpush1.bf16.xpose.msra.mxu0 0
    %3458 = vmatprep.subr.bf16.mxu0 0
    %3459 = vmatpush1.bf16.xpose.msra.mxu0 0
    %3460 = vmatprep.subr.bf16.mxu0 0
    %3461 = vmatpush1.bf16.xpose.msra.mxu0 0
    %3462 = vmatprep.subr.bf16.mxu0 0
    %3463 = vmatpush1.bf16.xpose.msra.mxu0 %v3446
    %3464 = vmatprep.subr.bf16.mxu0 0
    %3465 = vmatpush2.bf16.xpose.msra.mxu0 0
    %3466 = vmatprep.subr.bf16.mxu0 0
    %3467 = vmatpush2.bf16.xpose.msra.mxu0 0
    %3468 = vmatprep.subr.bf16.mxu0 0
    %3469 = vmatpush2.bf16.xpose.msra.mxu0 0
    %3470 = vmatprep.subr.bf16.mxu0 0
    %3471 = vmatpush2.bf16.xpose.msra.mxu0 0
    %3472 = vmatprep.subr.bf16.mxu0 0
    %3473 = vmatpush2.bf16.xpose.msra.mxu0 0
    %3474 = vmatprep.subr.bf16.mxu0 0
    %3475 = vmatpush2.bf16.xpose.msra.mxu0 0
    %3476 = vmatprep.subr.bf16.mxu0 0
    %3477 = vmatpush2.bf16.xpose.msra.mxu0 0
    %3478 = vmatprep.subr.bf16.mxu0 0
    %3479 = vmatpush2.bf16.xpose.msra.mxu0 0
    %3480 = vmatprep.mubr.bf16.mxu0 0
    %3481 = vmatmul.mubr.bf16.gmra.mxu0 %v3443
    %v3482 = vpop.f32.mrf.mxu0
    %v3483 = vadd.f32 0.0, %v3482
    %v3484 = vpop.f32.mrf.mxu0
    %v3485 = vpop.f32.mrf.mxu0
    %v3486 = vpop.f32.mrf.mxu0
    %3487 = vdwg.mxu0
    %v3488 = vsel %vm786, %v3434, -inf
    %3489 = vmax.xlane.f32.xlu0 %v3488
    %v3490 = vpop.xlane.xlu0 %3489
    %v3491 = vsel %vm786, %v3483, -inf
    %3492 = vmax.xlane.f32.xlu0 %v3491
    %v3493 = vpop.xlane.xlu0 %3492
    %v3494 = vsub.f32 %v3434, %v3490
    %v3495 = vsub.f32 %v3483, %v3493
    %v3496 = vmul.f32 %v3494, 1.442695
    %v3497 = vpow.pop %v3496
    %v3498 = vmul.f32 %v3495, 1.442695
    %v3499 = vpow.pop %v3498
    %v3500 = vsel %vm786, %v3497, 0.0
    %3501 = vadd.xlane.f32.xlu0 %v3500
    %v3502 = vpop.xlane.xlu0 %3501
    %v3503 = vsel %vm786, %v3499, 0.0
    %3504 = vadd.xlane.f32.xlu0 %v3503
    %v3505 = vpop.xlane.xlu0 %3504
    %v3506 = vrcp.pop %v3502
    %v3507 = vrcp.pop %v3505
    %v3508 = vmul.f32 %v3497, %v3506
    %v3509 = vmul.f32 %v3499, %v3507
    %v3510 = vpack.c.bf16 %v3508, %v3508
    %v3511 = vpack.c.bf16 %v3509, %v3509
    %3512 = vrot.lane.b32.xlu0 %v3388, 64
    %v3513 = vpop.permute.xlu0 %3512
    %v3515 = vsel %vm786, %v3510, 0
    %v3518 = vsel %vm911, %v3513, 0
    %3520 = vmatprep.subr.bf16.mxu0 0
    %3521 = vmatpush1.bf16.msra.mxu0 0
    %3522 = vmatprep.subr.bf16.mxu0 0
    %3523 = vmatpush1.bf16.msra.mxu0 0
    %3524 = vmatprep.subr.bf16.mxu0 0
    %3525 = vmatpush1.bf16.msra.mxu0 0
    %3526 = vmatprep.subr.bf16.mxu0 0
    %3527 = vmatpush1.bf16.msra.mxu0 0
    %3528 = vmatprep.subr.bf16.mxu0 0
    %3529 = vmatpush1.bf16.msra.mxu0 0
    %3530 = vmatprep.subr.bf16.mxu0 0
    %3531 = vmatpush1.bf16.msra.mxu0 0
    %3532 = vmatprep.subr.bf16.mxu0 0
    %3533 = vmatpush1.bf16.msra.mxu0 0
    %3534 = vmatprep.subr.bf16.mxu0 0
    %3535 = vmatpush1.bf16.msra.mxu0 %v3518
    %3536 = vmatprep.subr.bf16.mxu0 0
    %3537 = vmatpush2.bf16.msra.mxu0 0
    %3538 = vmatprep.subr.bf16.mxu0 0
    %3539 = vmatpush2.bf16.msra.mxu0 0
    %3540 = vmatprep.subr.bf16.mxu0 0
    %3541 = vmatpush2.bf16.msra.mxu0 0
    %3542 = vmatprep.subr.bf16.mxu0 0
    %3543 = vmatpush2.bf16.msra.mxu0 0
    %3544 = vmatprep.subr.bf16.mxu0 0
    %3545 = vmatpush2.bf16.msra.mxu0 0
    %3546 = vmatprep.subr.bf16.mxu0 0
    %3547 = vmatpush2.bf16.msra.mxu0 0
    %3548 = vmatprep.subr.bf16.mxu0 0
    %3549 = vmatpush2.bf16.msra.mxu0 0
    %3550 = vmatprep.subr.bf16.mxu0 0
    %3551 = vmatpush2.bf16.msra.mxu0 0
    %3552 = vmatprep.mubr.bf16.mxu0 0
    %3553 = vmatmul.mubr.bf16.gmra.mxu0 %v3515
    %v3554 = vpop.f32.mrf.mxu0
    %v3555 = vadd.f32 0.0, %v3554
    %v3556 = vpop.f32.mrf.mxu0
    %v3557 = vpop.f32.mrf.mxu0
    %v3558 = vpop.f32.mrf.mxu0
    %3559 = vdwg.mxu0
    %3560 = vrot.lane.b32.xlu0 %v3389, 64
    %v3561 = vpop.permute.xlu0 %3560
    %v3563 = vsel %vm786, %v3511, 0
    %v3566 = vsel %vm911, %v3561, 0
    %3568 = vmatprep.subr.bf16.mxu0 0
    %3569 = vmatpush1.bf16.msra.mxu0 0
    %3570 = vmatprep.subr.bf16.mxu0 0
    %3571 = vmatpush1.bf16.msra.mxu0 0
    %3572 = vmatprep.subr.bf16.mxu0 0
    %3573 = vmatpush1.bf16.msra.mxu0 0
    %3574 = vmatprep.subr.bf16.mxu0 0
    %3575 = vmatpush1.bf16.msra.mxu0 0
    %3576 = vmatprep.subr.bf16.mxu0 0
    %3577 = vmatpush1.bf16.msra.mxu0 0
    %3578 = vmatprep.subr.bf16.mxu0 0
    %3579 = vmatpush1.bf16.msra.mxu0 0
    %3580 = vmatprep.subr.bf16.mxu0 0
    %3581 = vmatpush1.bf16.msra.mxu0 0
    %3582 = vmatprep.subr.bf16.mxu0 0
    %3583 = vmatpush1.bf16.msra.mxu0 %v3566
    %3584 = vmatprep.subr.bf16.mxu0 0
    %3585 = vmatpush2.bf16.msra.mxu0 0
    %3586 = vmatprep.subr.bf16.mxu0 0
    %3587 = vmatpush2.bf16.msra.mxu0 0
    %3588 = vmatprep.subr.bf16.mxu0 0
    %3589 = vmatpush2.bf16.msra.mxu0 0
    %3590 = vmatprep.subr.bf16.mxu0 0
    %3591 = vmatpush2.bf16.msra.mxu0 0
    %3592 = vmatprep.subr.bf16.mxu0 0
    %3593 = vmatpush2.bf16.msra.mxu0 0
    %3594 = vmatprep.subr.bf16.mxu0 0
    %3595 = vmatpush2.bf16.msra.mxu0 0
    %3596 = vmatprep.subr.bf16.mxu0 0
    %3597 = vmatpush2.bf16.msra.mxu0 0
    %3598 = vmatprep.subr.bf16.mxu0 0
    %3599 = vmatpush2.bf16.msra.mxu0 0
    %3600 = vmatprep.mubr.bf16.mxu0 0
    %3601 = vmatmul.mubr.bf16.gmra.mxu0 %v3563
    %v3602 = vpop.f32.mrf.mxu0
    %v3603 = vadd.f32 0.0, %v3602
    %v3604 = vpop.f32.mrf.mxu0
    %v3605 = vpop.f32.mrf.mxu0
    %v3606 = vpop.f32.mrf.mxu0
    %3607 = vdwg.mxu0
    %3608 = vst.msk [vmem:[#allocation3] sm:$0xff] %vm786, %v3555
    %3609 = vst.msk [vmem:[#allocation3 + $0x8] sm:$0xff] %vm786, %v3603
    %3610 = vrot.lane.b32.xlu0 %v3388, 120
    %v3611 = vpop.permute.xlu0 %3610
    %3612 = vrot.lane.b32.xlu0 %v3388, 88
    %v3613 = vpop.permute.xlu0 %3612
    %v3615 = vsel %vm786, %v3611, 0
    %v3618 = vsel %vm786, %v3613, 0
    %3620 = vmatprep.subr.bf16.mxu0 0
    %3621 = vmatpush1.bf16.xpose.msra.mxu0 0
    %3622 = vmatprep.subr.bf16.mxu0 0
    %3623 = vmatpush1.bf16.xpose.msra.mxu0 0
    %3624 = vmatprep.subr.bf16.mxu0 0
    %3625 = vmatpush1.bf16.xpose.msra.mxu0 0
    %3626 = vmatprep.subr.bf16.mxu0 0
    %3627 = vmatpush1.bf16.xpose.msra.mxu0 0
    %3628 = vmatprep.subr.bf16.mxu0 0
    %3629 = vmatpush1.bf16.xpose.msra.mxu0 0
    %3630 = vmatprep.subr.bf16.mxu0 0
    %3631 = vmatpush1.bf16.xpose.msra.mxu0 0
    %3632 = vmatprep.subr.bf16.mxu0 0
    %3633 = vmatpush1.bf16.xpose.msra.mxu0 0
    %3634 = vmatprep.subr.bf16.mxu0 0
    %3635 = vmatpush1.bf16.xpose.msra.mxu0 %v3618
    %3636 = vmatprep.subr.bf16.mxu0 0
    %3637 = vmatpush2.bf16.xpose.msra.mxu0 0
    %3638 = vmatprep.subr.bf16.mxu0 0
    %3639 = vmatpush2.bf16.xpose.msra.mxu0 0
    %3640 = vmatprep.subr.bf16.mxu0 0
    %3641 = vmatpush2.bf16.xpose.msra.mxu0 0
    %3642 = vmatprep.subr.bf16.mxu0 0
    %3643 = vmatpush2.bf16.xpose.msra.mxu0 0
    %3644 = vmatprep.subr.bf16.mxu0 0
    %3645 = vmatpush2.bf16.xpose.msra.mxu0 0
    %3646 = vmatprep.subr.bf16.mxu0 0
    %3647 = vmatpush2.bf16.xpose.msra.mxu0 0
    %3648 = vmatprep.subr.bf16.mxu0 0
    %3649 = vmatpush2.bf16.xpose.msra.mxu0 0
    %3650 = vmatprep.subr.bf16.mxu0 0
    %3651 = vmatpush2.bf16.xpose.msra.mxu0 0
    %3652 = vmatprep.mubr.bf16.mxu0 0
    %3653 = vmatmul.mubr.bf16.gmra.mxu0 %v3615
    %v3654 = vpop.f32.mrf.mxu0
    %v3655 = vadd.f32 0.0, %v3654
    %v3656 = vpop.f32.mrf.mxu0
    %v3657 = vpop.f32.mrf.mxu0
    %v3658 = vpop.f32.mrf.mxu0
    %3659 = vdwg.mxu0
    %3660 = vrot.lane.b32.xlu0 %v3389, 120
    %v3661 = vpop.permute.xlu0 %3660
    %3662 = vrot.lane.b32.xlu0 %v3389, 88
    %v3663 = vpop.permute.xlu0 %3662
    %v3665 = vsel %vm786, %v3661, 0
    %v3668 = vsel %vm786, %v3663, 0
    %3670 = vmatprep.subr.bf16.mxu0 0
    %3671 = vmatpush1.bf16.xpose.msra.mxu0 0
    %3672 = vmatprep.subr.bf16.mxu0 0
    %3673 = vmatpush1.bf16.xpose.msra.mxu0 0
    %3674 = vmatprep.subr.bf16.mxu0 0
    %3675 = vmatpush1.bf16.xpose.msra.mxu0 0
    %3676 = vmatprep.subr.bf16.mxu0 0
    %3677 = vmatpush1.bf16.xpose.msra.mxu0 0
    %3678 = vmatprep.subr.bf16.mxu0 0
    %3679 = vmatpush1.bf16.xpose.msra.mxu0 0
    %3680 = vmatprep.subr.bf16.mxu0 0
    %3681 = vmatpush1.bf16.xpose.msra.mxu0 0
    %3682 = vmatprep.subr.bf16.mxu0 0
    %3683 = vmatpush1.bf16.xpose.msra.mxu0 0
    %3684 = vmatprep.subr.bf16.mxu0 0
    %3685 = vmatpush1.bf16.xpose.msra.mxu0 %v3668
    %3686 = vmatprep.subr.bf16.mxu0 0
    %3687 = vmatpush2.bf16.xpose.msra.mxu0 0
    %3688 = vmatprep.subr.bf16.mxu0 0
    %3689 = vmatpush2.bf16.xpose.msra.mxu0 0
    %3690 = vmatprep.subr.bf16.mxu0 0
    %3691 = vmatpush2.bf16.xpose.msra.mxu0 0
    %3692 = vmatprep.subr.bf16.mxu0 0
    %3693 = vmatpush2.bf16.xpose.msra.mxu0 0
    %3694 = vmatprep.subr.bf16.mxu0 0
    %3695 = vmatpush2.bf16.xpose.msra.mxu0 0
    %3696 = vmatprep.subr.bf16.mxu0 0
    %3697 = vmatpush2.bf16.xpose.msra.mxu0 0
    %3698 = vmatprep.subr.bf16.mxu0 0
    %3699 = vmatpush2.bf16.xpose.msra.mxu0 0
    %3700 = vmatprep.subr.bf16.mxu0 0
    %3701 = vmatpush2.bf16.xpose.msra.mxu0 0
    %3702 = vmatprep.mubr.bf16.mxu0 0
    %3703 = vmatmul.mubr.bf16.gmra.mxu0 %v3665
    %v3704 = vpop.f32.mrf.mxu0
    %v3705 = vadd.f32 0.0, %v3704
    %v3706 = vpop.f32.mrf.mxu0
    %v3707 = vpop.f32.mrf.mxu0
    %v3708 = vpop.f32.mrf.mxu0
    %3709 = vdwg.mxu0
    %v3710 = vsel %vm786, %v3655, -inf
    %3711 = vmax.xlane.f32.xlu0 %v3710
    %v3712 = vpop.xlane.xlu0 %3711
    %v3713 = vsel %vm786, %v3705, -inf
    %3714 = vmax.xlane.f32.xlu0 %v3713
    %v3715 = vpop.xlane.xlu0 %3714
    %v3716 = vsub.f32 %v3655, %v3712
    %v3717 = vsub.f32 %v3705, %v3715
    %v3718 = vmul.f32 %v3716, 1.442695
    %v3719 = vpow.pop %v3718
    %v3720 = vmul.f32 %v3717, 1.442695
    %v3721 = vpow.pop %v3720
    %v3722 = vsel %vm786, %v3719, 0.0
    %3723 = vadd.xlane.f32.xlu0 %v3722
    %v3724 = vpop.xlane.xlu0 %3723
    %v3725 = vsel %vm786, %v3721, 0.0
    %3726 = vadd.xlane.f32.xlu0 %v3725
    %v3727 = vpop.xlane.xlu0 %3726
    %v3728 = vrcp.pop %v3724
    %v3729 = vrcp.pop %v3727
    %v3730 = vmul.f32 %v3719, %v3728
    %v3731 = vmul.f32 %v3721, %v3729
    %v3732 = vpack.c.bf16 %v3730, %v3730
    %v3733 = vpack.c.bf16 %v3731, %v3731
    %3734 = vrot.lane.b32.xlu0 %v3388, 56
    %v3735 = vpop.permute.xlu0 %3734
    %v3737 = vsel %vm786, %v3732, 0
    %v3740 = vsel %vm911, %v3735, 0
    %3742 = vmatprep.subr.bf16.mxu0 0
    %3743 = vmatpush1.bf16.msra.mxu0 0
    %3744 = vmatprep.subr.bf16.mxu0 0
    %3745 = vmatpush1.bf16.msra.mxu0 0
    %3746 = vmatprep.subr.bf16.mxu0 0
    %3747 = vmatpush1.bf16.msra.mxu0 0
    %3748 = vmatprep.subr.bf16.mxu0 0
    %3749 = vmatpush1.bf16.msra.mxu0 0
    %3750 = vmatprep.subr.bf16.mxu0 0
    %3751 = vmatpush1.bf16.msra.mxu0 0
    %3752 = vmatprep.subr.bf16.mxu0 0
    %3753 = vmatpush1.bf16.msra.mxu0 0
    %3754 = vmatprep.subr.bf16.mxu0 0
    %3755 = vmatpush1.bf16.msra.mxu0 0
    %3756 = vmatprep.subr.bf16.mxu0 0
    %3757 = vmatpush1.bf16.msra.mxu0 %v3740
    %3758 = vmatprep.subr.bf16.mxu0 0
    %3759 = vmatpush2.bf16.msra.mxu0 0
    %3760 = vmatprep.subr.bf16.mxu0 0
    %3761 = vmatpush2.bf16.msra.mxu0 0
    %3762 = vmatprep.subr.bf16.mxu0 0
    %3763 = vmatpush2.bf16.msra.mxu0 0
    %3764 = vmatprep.subr.bf16.mxu0 0
    %3765 = vmatpush2.bf16.msra.mxu0 0
    %3766 = vmatprep.subr.bf16.mxu0 0
    %3767 = vmatpush2.bf16.msra.mxu0 0
    %3768 = vmatprep.subr.bf16.mxu0 0
    %3769 = vmatpush2.bf16.msra.mxu0 0
    %3770 = vmatprep.subr.bf16.mxu0 0
    %3771 = vmatpush2.bf16.msra.mxu0 0
    %3772 = vmatprep.subr.bf16.mxu0 0
    %3773 = vmatpush2.bf16.msra.mxu0 0
    %3774 = vmatprep.mubr.bf16.mxu0 0
    %3775 = vmatmul.mubr.bf16.gmra.mxu0 %v3737
    %v3776 = vpop.f32.mrf.mxu0
    %v3777 = vadd.f32 0.0, %v3776
    %v3778 = vpop.f32.mrf.mxu0
    %v3779 = vpop.f32.mrf.mxu0
    %v3780 = vpop.f32.mrf.mxu0
    %3781 = vdwg.mxu0
    %3782 = vrot.lane.b32.xlu0 %v3389, 56
    %v3783 = vpop.permute.xlu0 %3782
    %v3785 = vsel %vm786, %v3733, 0
    %v3788 = vsel %vm911, %v3783, 0
    %3790 = vmatprep.subr.bf16.mxu0 0
    %3791 = vmatpush1.bf16.msra.mxu0 0
    %3792 = vmatprep.subr.bf16.mxu0 0
    %3793 = vmatpush1.bf16.msra.mxu0 0
    %3794 = vmatprep.subr.bf16.mxu0 0
    %3795 = vmatpush1.bf16.msra.mxu0 0
    %3796 = vmatprep.subr.bf16.mxu0 0
    %3797 = vmatpush1.bf16.msra.mxu0 0
    %3798 = vmatprep.subr.bf16.mxu0 0
    %3799 = vmatpush1.bf16.msra.mxu0 0
    %3800 = vmatprep.subr.bf16.mxu0 0
    %3801 = vmatpush1.bf16.msra.mxu0 0
    %3802 = vmatprep.subr.bf16.mxu0 0
    %3803 = vmatpush1.bf16.msra.mxu0 0
    %3804 = vmatprep.subr.bf16.mxu0 0
    %3805 = vmatpush1.bf16.msra.mxu0 %v3788
    %3806 = vmatprep.subr.bf16.mxu0 0
    %3807 = vmatpush2.bf16.msra.mxu0 0
    %3808 = vmatprep.subr.bf16.mxu0 0
    %3809 = vmatpush2.bf16.msra.mxu0 0
    %3810 = vmatprep.subr.bf16.mxu0 0
    %3811 = vmatpush2.bf16.msra.mxu0 0
    %3812 = vmatprep.subr.bf16.mxu0 0
    %3813 = vmatpush2.bf16.msra.mxu0 0
    %3814 = vmatprep.subr.bf16.mxu0 0
    %3815 = vmatpush2.bf16.msra.mxu0 0
    %3816 = vmatprep.subr.bf16.mxu0 0
    %3817 = vmatpush2.bf16.msra.mxu0 0
    %3818 = vmatprep.subr.bf16.mxu0 0
    %3819 = vmatpush2.bf16.msra.mxu0 0
    %3820 = vmatprep.subr.bf16.mxu0 0
    %3821 = vmatpush2.bf16.msra.mxu0 0
    %3822 = vmatprep.mubr.bf16.mxu0 0
    %3823 = vmatmul.mubr.bf16.gmra.mxu0 %v3785
    %v3824 = vpop.f32.mrf.mxu0
    %v3825 = vadd.f32 0.0, %v3824
    %v3826 = vpop.f32.mrf.mxu0
    %v3827 = vpop.f32.mrf.mxu0
    %v3828 = vpop.f32.mrf.mxu0
    %3829 = vdwg.mxu0
    %3832 = vrot.lane.b32.xlu0 %v3777, 8
    %v3833 = vpop.permute.xlu0 %3832
    %3834 = vrot.lane.b32.xlu0 %v3825, 8
    %v3835 = vpop.permute.xlu0 %3834
    %3838 = vst.msk [vmem:[#allocation3] sm:$0xff] %vm1233, %v3833
    %3839 = vst.msk [vmem:[#allocation3 + $0x8] sm:$0xff] %vm1233, %v3835
    %3840 = vrot.lane.b32.xlu0 %v3388, 112
    %v3841 = vpop.permute.xlu0 %3840
    %3842 = vrot.lane.b32.xlu0 %v3388, 80
    %v3843 = vpop.permute.xlu0 %3842
    %v3845 = vsel %vm786, %v3841, 0
    %v3848 = vsel %vm786, %v3843, 0
    %3850 = vmatprep.subr.bf16.mxu0 0
    %3851 = vmatpush1.bf16.xpose.msra.mxu0 0
    %3852 = vmatprep.subr.bf16.mxu0 0
    %3853 = vmatpush1.bf16.xpose.msra.mxu0 0
    %3854 = vmatprep.subr.bf16.mxu0 0
    %3855 = vmatpush1.bf16.xpose.msra.mxu0 0
    %3856 = vmatprep.subr.bf16.mxu0 0
    %3857 = vmatpush1.bf16.xpose.msra.mxu0 0
    %3858 = vmatprep.subr.bf16.mxu0 0
    %3859 = vmatpush1.bf16.xpose.msra.mxu0 0
    %3860 = vmatprep.subr.bf16.mxu0 0
    %3861 = vmatpush1.bf16.xpose.msra.mxu0 0
    %3862 = vmatprep.subr.bf16.mxu0 0
    %3863 = vmatpush1.bf16.xpose.msra.mxu0 0
    %3864 = vmatprep.subr.bf16.mxu0 0
    %3865 = vmatpush1.bf16.xpose.msra.mxu0 %v3848
    %3866 = vmatprep.subr.bf16.mxu0 0
    %3867 = vmatpush2.bf16.xpose.msra.mxu0 0
    %3868 = vmatprep.subr.bf16.mxu0 0
    %3869 = vmatpush2.bf16.xpose.msra.mxu0 0
    %3870 = vmatprep.subr.bf16.mxu0 0
    %3871 = vmatpush2.bf16.xpose.msra.mxu0 0
    %3872 = vmatprep.subr.bf16.mxu0 0
    %3873 = vmatpush2.bf16.xpose.msra.mxu0 0
    %3874 = vmatprep.subr.bf16.mxu0 0
    %3875 = vmatpush2.bf16.xpose.msra.mxu0 0
    %3876 = vmatprep.subr.bf16.mxu0 0
    %3877 = vmatpush2.bf16.xpose.msra.mxu0 0
    %3878 = vmatprep.subr.bf16.mxu0 0
    %3879 = vmatpush2.bf16.xpose.msra.mxu0 0
    %3880 = vmatprep.subr.bf16.mxu0 0
    %3881 = vmatpush2.bf16.xpose.msra.mxu0 0
    %3882 = vmatprep.mubr.bf16.mxu0 0
    %3883 = vmatmul.mubr.bf16.gmra.mxu0 %v3845
    %v3884 = vpop.f32.mrf.mxu0
    %v3885 = vadd.f32 0.0, %v3884
    %v3886 = vpop.f32.mrf.mxu0
    %v3887 = vpop.f32.mrf.mxu0
    %v3888 = vpop.f32.mrf.mxu0
    %3889 = vdwg.mxu0
    %3890 = vrot.lane.b32.xlu0 %v3389, 112
    %v3891 = vpop.permute.xlu0 %3890
    %3892 = vrot.lane.b32.xlu0 %v3389, 80
    %v3893 = vpop.permute.xlu0 %3892
    %v3895 = vsel %vm786, %v3891, 0
    %v3898 = vsel %vm786, %v3893, 0
    %3900 = vmatprep.subr.bf16.mxu0 0
    %3901 = vmatpush1.bf16.xpose.msra.mxu0 0
    %3902 = vmatprep.subr.bf16.mxu0 0
    %3903 = vmatpush1.bf16.xpose.msra.mxu0 0
    %3904 = vmatprep.subr.bf16.mxu0 0
    %3905 = vmatpush1.bf16.xpose.msra.mxu0 0
    %3906 = vmatprep.subr.bf16.mxu0 0
    %3907 = vmatpush1.bf16.xpose.msra.mxu0 0
    %3908 = vmatprep.subr.bf16.mxu0 0
    %3909 = vmatpush1.bf16.xpose.msra.mxu0 0
    %3910 = vmatprep.subr.bf16.mxu0 0
    %3911 = vmatpush1.bf16.xpose.msra.mxu0 0
    %3912 = vmatprep.subr.bf16.mxu0 0
    %3913 = vmatpush1.bf16.xpose.msra.mxu0 0
    %3914 = vmatprep.subr.bf16.mxu0 0
    %3915 = vmatpush1.bf16.xpose.msra.mxu0 %v3898
    %3916 = vmatprep.subr.bf16.mxu0 0
    %3917 = vmatpush2.bf16.xpose.msra.mxu0 0
    %3918 = vmatprep.subr.bf16.mxu0 0
    %3919 = vmatpush2.bf16.xpose.msra.mxu0 0
    %3920 = vmatprep.subr.bf16.mxu0 0
    %3921 = vmatpush2.bf16.xpose.msra.mxu0 0
    %3922 = vmatprep.subr.bf16.mxu0 0
    %3923 = vmatpush2.bf16.xpose.msra.mxu0 0
    %3924 = vmatprep.subr.bf16.mxu0 0
    %3925 = vmatpush2.bf16.xpose.msra.mxu0 0
    %3926 = vmatprep.subr.bf16.mxu0 0
    %3927 = vmatpush2.bf16.xpose.msra.mxu0 0
    %3928 = vmatprep.subr.bf16.mxu0 0
    %3929 = vmatpush2.bf16.xpose.msra.mxu0 0
    %3930 = vmatprep.subr.bf16.mxu0 0
    %3931 = vmatpush2.bf16.xpose.msra.mxu0 0
    %3932 = vmatprep.mubr.bf16.mxu0 0
    %3933 = vmatmul.mubr.bf16.gmra.mxu0 %v3895
    %v3934 = vpop.f32.mrf.mxu0
    %v3935 = vadd.f32 0.0, %v3934
    %v3936 = vpop.f32.mrf.mxu0
    %v3937 = vpop.f32.mrf.mxu0
    %v3938 = vpop.f32.mrf.mxu0
    %3939 = vdwg.mxu0
    %v3940 = vsel %vm786, %v3885, -inf
    %3941 = vmax.xlane.f32.xlu0 %v3940
    %v3942 = vpop.xlane.xlu0 %3941
    %v3943 = vsel %vm786, %v3935, -inf
    %3944 = vmax.xlane.f32.xlu0 %v3943
    %v3945 = vpop.xlane.xlu0 %3944
    %v3946 = vsub.f32 %v3885, %v3942
    %v3947 = vsub.f32 %v3935, %v3945
    %v3948 = vmul.f32 %v3946, 1.442695
    %v3949 = vpow.pop %v3948
    %v3950 = vmul.f32 %v3947, 1.442695
    %v3951 = vpow.pop %v3950
    %v3952 = vsel %vm786, %v3949, 0.0
    %3953 = vadd.xlane.f32.xlu0 %v3952
    %v3954 = vpop.xlane.xlu0 %3953
    %v3955 = vsel %vm786, %v3951, 0.0
    %3956 = vadd.xlane.f32.xlu0 %v3955
    %v3957 = vpop.xlane.xlu0 %3956
    %v3958 = vrcp.pop %v3954
    %v3959 = vrcp.pop %v3957
    %v3960 = vmul.f32 %v3949, %v3958
    %v3961 = vmul.f32 %v3951, %v3959
    %v3962 = vpack.c.bf16 %v3960, %v3960
    %v3963 = vpack.c.bf16 %v3961, %v3961
    %3964 = vrot.lane.b32.xlu0 %v3388, 48
    %v3965 = vpop.permute.xlu0 %3964
    %v3967 = vsel %vm786, %v3962, 0
    %v3970 = vsel %vm911, %v3965, 0
    %3972 = vmatprep.subr.bf16.mxu0 0
    %3973 = vmatpush1.bf16.msra.mxu0 0
    %3974 = vmatprep.subr.bf16.mxu0 0
    %3975 = vmatpush1.bf16.msra.mxu0 0
    %3976 = vmatprep.subr.bf16.mxu0 0
    %3977 = vmatpush1.bf16.msra.mxu0 0
    %3978 = vmatprep.subr.bf16.mxu0 0
    %3979 = vmatpush1.bf16.msra.mxu0 0
    %3980 = vmatprep.subr.bf16.mxu0 0
    %3981 = vmatpush1.bf16.msra.mxu0 0
    %3982 = vmatprep.subr.bf16.mxu0 0
    %3983 = vmatpush1.bf16.msra.mxu0 0
    %3984 = vmatprep.subr.bf16.mxu0 0
    %3985 = vmatpush1.bf16.msra.mxu0 0
    %3986 = vmatprep.subr.bf16.mxu0 0
    %3987 = vmatpush1.bf16.msra.mxu0 %v3970
    %3988 = vmatprep.subr.bf16.mxu0 0
    %3989 = vmatpush2.bf16.msra.mxu0 0
    %3990 = vmatprep.subr.bf16.mxu0 0
    %3991 = vmatpush2.bf16.msra.mxu0 0
    %3992 = vmatprep.subr.bf16.mxu0 0
    %3993 = vmatpush2.bf16.msra.mxu0 0
    %3994 = vmatprep.subr.bf16.mxu0 0
    %3995 = vmatpush2.bf16.msra.mxu0 0
    %3996 = vmatprep.subr.bf16.mxu0 0
    %3997 = vmatpush2.bf16.msra.mxu0 0
    %3998 = vmatprep.subr.bf16.mxu0 0
    %3999 = vmatpush2.bf16.msra.mxu0 0
    %4000 = vmatprep.subr.bf16.mxu0 0
    %4001 = vmatpush2.bf16.msra.mxu0 0
    %4002 = vmatprep.subr.bf16.mxu0 0
    %4003 = vmatpush2.bf16.msra.mxu0 0
    %4004 = vmatprep.mubr.bf16.mxu0 0
    %4005 = vmatmul.mubr.bf16.gmra.mxu0 %v3967
    %v4006 = vpop.f32.mrf.mxu0
    %v4007 = vadd.f32 0.0, %v4006
    %v4008 = vpop.f32.mrf.mxu0
    %v4009 = vpop.f32.mrf.mxu0
    %v4010 = vpop.f32.mrf.mxu0
    %4011 = vdwg.mxu0
    %4012 = vrot.lane.b32.xlu0 %v3389, 48
    %v4013 = vpop.permute.xlu0 %4012
    %v4015 = vsel %vm786, %v3963, 0
    %v4018 = vsel %vm911, %v4013, 0
    %4020 = vmatprep.subr.bf16.mxu0 0
    %4021 = vmatpush1.bf16.msra.mxu0 0
    %4022 = vmatprep.subr.bf16.mxu0 0
    %4023 = vmatpush1.bf16.msra.mxu0 0
    %4024 = vmatprep.subr.bf16.mxu0 0
    %4025 = vmatpush1.bf16.msra.mxu0 0
    %4026 = vmatprep.subr.bf16.mxu0 0
    %4027 = vmatpush1.bf16.msra.mxu0 0
    %4028 = vmatprep.subr.bf16.mxu0 0
    %4029 = vmatpush1.bf16.msra.mxu0 0
    %4030 = vmatprep.subr.bf16.mxu0 0
    %4031 = vmatpush1.bf16.msra.mxu0 0
    %4032 = vmatprep.subr.bf16.mxu0 0
    %4033 = vmatpush1.bf16.msra.mxu0 0
    %4034 = vmatprep.subr.bf16.mxu0 0
    %4035 = vmatpush1.bf16.msra.mxu0 %v4018
    %4036 = vmatprep.subr.bf16.mxu0 0
    %4037 = vmatpush2.bf16.msra.mxu0 0
    %4038 = vmatprep.subr.bf16.mxu0 0
    %4039 = vmatpush2.bf16.msra.mxu0 0
    %4040 = vmatprep.subr.bf16.mxu0 0
    %4041 = vmatpush2.bf16.msra.mxu0 0
    %4042 = vmatprep.subr.bf16.mxu0 0
    %4043 = vmatpush2.bf16.msra.mxu0 0
    %4044 = vmatprep.subr.bf16.mxu0 0
    %4045 = vmatpush2.bf16.msra.mxu0 0
    %4046 = vmatprep.subr.bf16.mxu0 0
    %4047 = vmatpush2.bf16.msra.mxu0 0
    %4048 = vmatprep.subr.bf16.mxu0 0
    %4049 = vmatpush2.bf16.msra.mxu0 0
    %4050 = vmatprep.subr.bf16.mxu0 0
    %4051 = vmatpush2.bf16.msra.mxu0 0
    %4052 = vmatprep.mubr.bf16.mxu0 0
    %4053 = vmatmul.mubr.bf16.gmra.mxu0 %v4015
    %v4054 = vpop.f32.mrf.mxu0
    %v4055 = vadd.f32 0.0, %v4054
    %v4056 = vpop.f32.mrf.mxu0
    %v4057 = vpop.f32.mrf.mxu0
    %v4058 = vpop.f32.mrf.mxu0
    %4059 = vdwg.mxu0
    %4062 = vrot.lane.b32.xlu0 %v4007, 16
    %v4063 = vpop.permute.xlu0 %4062
    %4064 = vrot.lane.b32.xlu0 %v4055, 16
    %v4065 = vpop.permute.xlu0 %4064
    %4068 = vst.msk [vmem:[#allocation3] sm:$0xff] %vm1464, %v4063
    %4069 = vst.msk [vmem:[#allocation3 + $0x8] sm:$0xff] %vm1464, %v4065
    %4070 = vrot.lane.b32.xlu0 %v3388, 104
    %v4071 = vpop.permute.xlu0 %4070
    %4072 = vrot.lane.b32.xlu0 %v3388, 72
    %v4073 = vpop.permute.xlu0 %4072
    %v4075 = vsel %vm786, %v4071, 0
    %v4078 = vsel %vm786, %v4073, 0
    %4080 = vmatprep.subr.bf16.mxu0 0
    %4081 = vmatpush1.bf16.xpose.msra.mxu0 0
    %4082 = vmatprep.subr.bf16.mxu0 0
    %4083 = vmatpush1.bf16.xpose.msra.mxu0 0
    %4084 = vmatprep.subr.bf16.mxu0 0
    %4085 = vmatpush1.bf16.xpose.msra.mxu0 0
    %4086 = vmatprep.subr.bf16.mxu0 0
    %4087 = vmatpush1.bf16.xpose.msra.mxu0 0
    %4088 = vmatprep.subr.bf16.mxu0 0
    %4089 = vmatpush1.bf16.xpose.msra.mxu0 0
    %4090 = vmatprep.subr.bf16.mxu0 0
    %4091 = vmatpush1.bf16.xpose.msra.mxu0 0
    %4092 = vmatprep.subr.bf16.mxu0 0
    %4093 = vmatpush1.bf16.xpose.msra.mxu0 0
    %4094 = vmatprep.subr.bf16.mxu0 0
    %4095 = vmatpush1.bf16.xpose.msra.mxu0 %v4078
    %4096 = vmatprep.subr.bf16.mxu0 0
    %4097 = vmatpush2.bf16.xpose.msra.mxu0 0
    %4098 = vmatprep.subr.bf16.mxu0 0
    %4099 = vmatpush2.bf16.xpose.msra.mxu0 0
    %4100 = vmatprep.subr.bf16.mxu0 0
    %4101 = vmatpush2.bf16.xpose.msra.mxu0 0
    %4102 = vmatprep.subr.bf16.mxu0 0
    %4103 = vmatpush2.bf16.xpose.msra.mxu0 0
    %4104 = vmatprep.subr.bf16.mxu0 0
    %4105 = vmatpush2.bf16.xpose.msra.mxu0 0
    %4106 = vmatprep.subr.bf16.mxu0 0
    %4107 = vmatpush2.bf16.xpose.msra.mxu0 0
    %4108 = vmatprep.subr.bf16.mxu0 0
    %4109 = vmatpush2.bf16.xpose.msra.mxu0 0
    %4110 = vmatprep.subr.bf16.mxu0 0
    %4111 = vmatpush2.bf16.xpose.msra.mxu0 0
    %4112 = vmatprep.mubr.bf16.mxu0 0
    %4113 = vmatmul.mubr.bf16.gmra.mxu0 %v4075
    %v4114 = vpop.f32.mrf.mxu0
    %v4115 = vadd.f32 0.0, %v4114
    %v4116 = vpop.f32.mrf.mxu0
    %v4117 = vpop.f32.mrf.mxu0
    %v4118 = vpop.f32.mrf.mxu0
    %4119 = vdwg.mxu0
    %4120 = vrot.lane.b32.xlu0 %v3389, 104
    %v4121 = vpop.permute.xlu0 %4120
    %4122 = vrot.lane.b32.xlu0 %v3389, 72
    %v4123 = vpop.permute.xlu0 %4122
    %v4125 = vsel %vm786, %v4121, 0
    %v4128 = vsel %vm786, %v4123, 0
    %4130 = vmatprep.subr.bf16.mxu0 0
    %4131 = vmatpush1.bf16.xpose.msra.mxu0 0
    %4132 = vmatprep.subr.bf16.mxu0 0
    %4133 = vmatpush1.bf16.xpose.msra.mxu0 0
    %4134 = vmatprep.subr.bf16.mxu0 0
    %4135 = vmatpush1.bf16.xpose.msra.mxu0 0
    %4136 = vmatprep.subr.bf16.mxu0 0
    %4137 = vmatpush1.bf16.xpose.msra.mxu0 0
    %4138 = vmatprep.subr.bf16.mxu0 0
    %4139 = vmatpush1.bf16.xpose.msra.mxu0 0
    %4140 = vmatprep.subr.bf16.mxu0 0
    %4141 = vmatpush1.bf16.xpose.msra.mxu0 0
    %4142 = vmatprep.subr.bf16.mxu0 0
    %4143 = vmatpush1.bf16.xpose.msra.mxu0 0
    %4144 = vmatprep.subr.bf16.mxu0 0
    %4145 = vmatpush1.bf16.xpose.msra.mxu0 %v4128
    %4146 = vmatprep.subr.bf16.mxu0 0
    %4147 = vmatpush2.bf16.xpose.msra.mxu0 0
    %4148 = vmatprep.subr.bf16.mxu0 0
    %4149 = vmatpush2.bf16.xpose.msra.mxu0 0
    %4150 = vmatprep.subr.bf16.mxu0 0
    %4151 = vmatpush2.bf16.xpose.msra.mxu0 0
    %4152 = vmatprep.subr.bf16.mxu0 0
    %4153 = vmatpush2.bf16.xpose.msra.mxu0 0
    %4154 = vmatprep.subr.bf16.mxu0 0
    %4155 = vmatpush2.bf16.xpose.msra.mxu0 0
    %4156 = vmatprep.subr.bf16.mxu0 0
    %4157 = vmatpush2.bf16.xpose.msra.mxu0 0
    %4158 = vmatprep.subr.bf16.mxu0 0
    %4159 = vmatpush2.bf16.xpose.msra.mxu0 0
    %4160 = vmatprep.subr.bf16.mxu0 0
    %4161 = vmatpush2.bf16.xpose.msra.mxu0 0
    %4162 = vmatprep.mubr.bf16.mxu0 0
    %4163 = vmatmul.mubr.bf16.gmra.mxu0 %v4125
    %v4164 = vpop.f32.mrf.mxu0
    %v4165 = vadd.f32 0.0, %v4164
    %v4166 = vpop.f32.mrf.mxu0
    %v4167 = vpop.f32.mrf.mxu0
    %v4168 = vpop.f32.mrf.mxu0
    %4169 = vdwg.mxu0
    %v4170 = vsel %vm786, %v4115, -inf
    %4171 = vmax.xlane.f32.xlu0 %v4170
    %v4172 = vpop.xlane.xlu0 %4171
    %v4173 = vsel %vm786, %v4165, -inf
    %4174 = vmax.xlane.f32.xlu0 %v4173
    %v4175 = vpop.xlane.xlu0 %4174
    %v4176 = vsub.f32 %v4115, %v4172
    %v4177 = vsub.f32 %v4165, %v4175
    %v4178 = vmul.f32 %v4176, 1.442695
    %v4179 = vpow.pop %v4178
    %v4180 = vmul.f32 %v4177, 1.442695
    %v4181 = vpow.pop %v4180
    %v4182 = vsel %vm786, %v4179, 0.0
    %4183 = vadd.xlane.f32.xlu0 %v4182
    %v4184 = vpop.xlane.xlu0 %4183
    %v4185 = vsel %vm786, %v4181, 0.0
    %4186 = vadd.xlane.f32.xlu0 %v4185
    %v4187 = vpop.xlane.xlu0 %4186
    %v4188 = vrcp.pop %v4184
    %v4189 = vrcp.pop %v4187
    %v4190 = vmul.f32 %v4179, %v4188
    %v4191 = vmul.f32 %v4181, %v4189
    %v4192 = vpack.c.bf16 %v4190, %v4190
    %v4193 = vpack.c.bf16 %v4191, %v4191
    %4194 = vrot.lane.b32.xlu0 %v3388, 40
    %v4195 = vpop.permute.xlu0 %4194
    %v4197 = vsel %vm786, %v4192, 0
    %v4200 = vsel %vm911, %v4195, 0
    %4202 = vmatprep.subr.bf16.mxu0 0
    %4203 = vmatpush1.bf16.msra.mxu0 0
    %4204 = vmatprep.subr.bf16.mxu0 0
    %4205 = vmatpush1.bf16.msra.mxu0 0
    %4206 = vmatprep.subr.bf16.mxu0 0
    %4207 = vmatpush1.bf16.msra.mxu0 0
    %4208 = vmatprep.subr.bf16.mxu0 0
    %4209 = vmatpush1.bf16.msra.mxu0 0
    %4210 = vmatprep.subr.bf16.mxu0 0
    %4211 = vmatpush1.bf16.msra.mxu0 0
    %4212 = vmatprep.subr.bf16.mxu0 0
    %4213 = vmatpush1.bf16.msra.mxu0 0
    %4214 = vmatprep.subr.bf16.mxu0 0
    %4215 = vmatpush1.bf16.msra.mxu0 0
    %4216 = vmatprep.subr.bf16.mxu0 0
    %4217 = vmatpush1.bf16.msra.mxu0 %v4200
    %4218 = vmatprep.subr.bf16.mxu0 0
    %4219 = vmatpush2.bf16.msra.mxu0 0
    %4220 = vmatprep.subr.bf16.mxu0 0
    %4221 = vmatpush2.bf16.msra.mxu0 0
    %4222 = vmatprep.subr.bf16.mxu0 0
    %4223 = vmatpush2.bf16.msra.mxu0 0
    %4224 = vmatprep.subr.bf16.mxu0 0
    %4225 = vmatpush2.bf16.msra.mxu0 0
    %4226 = vmatprep.subr.bf16.mxu0 0
    %4227 = vmatpush2.bf16.msra.mxu0 0
    %4228 = vmatprep.subr.bf16.mxu0 0
    %4229 = vmatpush2.bf16.msra.mxu0 0
    %4230 = vmatprep.subr.bf16.mxu0 0
    %4231 = vmatpush2.bf16.msra.mxu0 0
    %4232 = vmatprep.subr.bf16.mxu0 0
    %4233 = vmatpush2.bf16.msra.mxu0 0
    %4234 = vmatprep.mubr.bf16.mxu0 0
    %4235 = vmatmul.mubr.bf16.gmra.mxu0 %v4197
    %v4236 = vpop.f32.mrf.mxu0
    %v4237 = vadd.f32 0.0, %v4236
    %v4238 = vpop.f32.mrf.mxu0
    %v4239 = vpop.f32.mrf.mxu0
    %v4240 = vpop.f32.mrf.mxu0
    %4241 = vdwg.mxu0
    %4242 = vrot.lane.b32.xlu0 %v3389, 40
    %v4243 = vpop.permute.xlu0 %4242
    %v4245 = vsel %vm786, %v4193, 0
    %v4248 = vsel %vm911, %v4243, 0
    %4250 = vmatprep.subr.bf16.mxu0 0
    %4251 = vmatpush1.bf16.msra.mxu0 0
    %4252 = vmatprep.subr.bf16.mxu0 0
    %4253 = vmatpush1.bf16.msra.mxu0 0
    %4254 = vmatprep.subr.bf16.mxu0 0
    %4255 = vmatpush1.bf16.msra.mxu0 0
    %4256 = vmatprep.subr.bf16.mxu0 0
    %4257 = vmatpush1.bf16.msra.mxu0 0
    %4258 = vmatprep.subr.bf16.mxu0 0
    %4259 = vmatpush1.bf16.msra.mxu0 0
    %4260 = vmatprep.subr.bf16.mxu0 0
    %4261 = vmatpush1.bf16.msra.mxu0 0
    %4262 = vmatprep.subr.bf16.mxu0 0
    %4263 = vmatpush1.bf16.msra.mxu0 0
    %4264 = vmatprep.subr.bf16.mxu0 0
    %4265 = vmatpush1.bf16.msra.mxu0 %v4248
    %4266 = vmatprep.subr.bf16.mxu0 0
    %4267 = vmatpush2.bf16.msra.mxu0 0
    %4268 = vmatprep.subr.bf16.mxu0 0
    %4269 = vmatpush2.bf16.msra.mxu0 0
    %4270 = vmatprep.subr.bf16.mxu0 0
    %4271 = vmatpush2.bf16.msra.mxu0 0
    %4272 = vmatprep.subr.bf16.mxu0 0
    %4273 = vmatpush2.bf16.msra.mxu0 0
    %4274 = vmatprep.subr.bf16.mxu0 0
    %4275 = vmatpush2.bf16.msra.mxu0 0
    %4276 = vmatprep.subr.bf16.mxu0 0
    %4277 = vmatpush2.bf16.msra.mxu0 0
    %4278 = vmatprep.subr.bf16.mxu0 0
    %4279 = vmatpush2.bf16.msra.mxu0 0
    %4280 = vmatprep.subr.bf16.mxu0 0
    %4281 = vmatpush2.bf16.msra.mxu0 0
    %4282 = vmatprep.mubr.bf16.mxu0 0
    %4283 = vmatmul.mubr.bf16.gmra.mxu0 %v4245
    %v4284 = vpop.f32.mrf.mxu0
    %v4285 = vadd.f32 0.0, %v4284
    %v4286 = vpop.f32.mrf.mxu0
    %v4287 = vpop.f32.mrf.mxu0
    %v4288 = vpop.f32.mrf.mxu0
    %4289 = vdwg.mxu0
    %4292 = vrot.lane.b32.xlu0 %v4237, 24
    %v4293 = vpop.permute.xlu0 %4292
    %4294 = vrot.lane.b32.xlu0 %v4285, 24
    %v4295 = vpop.permute.xlu0 %4294
    %4298 = vst.msk [vmem:[#allocation3] sm:$0xff] %vm1695, %v4293
    %4299 = vst.msk [vmem:[#allocation3 + $0x8] sm:$0xff] %vm1695, %v4295
    %v4300 = vld [vmem:[#allocation3] sm:$0xff]
    %v4301 = vld [vmem:[#allocation3 + $0x8] sm:$0xff]
    %v4302 = vpack.c.bf16 %v4301, %v4300
    %s4303 = scalar_lea.vmem %s8, 32
    %v4304 = vld [vmem:[%s4303] sm:$0xf]
    %v4305 = vld [vmem:[%s4303 + $0x4] sm:$0xf]
    %v4306 = vld [vmem:[%s4303 + $0x8] sm:$0xf]
    %v4307 = vld [vmem:[%s4303 + $0xc] sm:$0xf]
    %s4308 = scalar_lea.vmem %s9, 2
    %v4309 = vld [vmem:[%s4308] sm:$0x1]
    %v4311 = vlaneseq
    %v4312 = vshrl.u32 %v4311, 7
    %v4313 = vsub.s32 0, %v4312
    %v4314 = vrot.slane %v4309, %v4313
    %v4320 = vunpack.c.l.b16 %v4304
    %v4321 = vunpack.c.l.b16 %v4305
    %v4322 = vunpack.c.l.b16 %v4306
    %v4323 = vunpack.c.l.b16 %v4307
    %v4324 = vpack.c.b16 %v4321, %v4320
    %v4325 = vpack.c.b16 %v4323, %v4322
    %v4329 = vsel %vm487, %v4302, 0
    %4331 = vmatprep.subr.bf16.mxu0 0
    %4332 = vmatpush1.bf16.msra.mxu0 0
    %4333 = vmatprep.subr.bf16.mxu0 0
    %4334 = vmatpush1.bf16.msra.mxu0 0
    %4335 = vmatprep.subr.bf16.mxu0 0
    %4336 = vmatpush1.bf16.msra.mxu0 0
    %4337 = vmatprep.subr.bf16.mxu0 0
    %4338 = vmatpush1.bf16.msra.mxu0 0
    %4339 = vmatprep.subr.bf16.mxu0 0
    %4340 = vmatpush1.bf16.msra.mxu0 0
    %4341 = vmatprep.subr.bf16.mxu0 0
    %4342 = vmatpush1.bf16.msra.mxu0 0
    %4343 = vmatprep.subr.bf16.mxu0 0
    %4344 = vmatpush1.bf16.msra.mxu0 %v4325
    %4345 = vmatprep.subr.bf16.mxu0 0
    %4346 = vmatpush1.bf16.msra.mxu0 %v4324
    %4347 = vmatprep.subr.bf16.mxu0 0
    %4348 = vmatpush2.bf16.msra.mxu0 0
    %4349 = vmatprep.subr.bf16.mxu0 0
    %4350 = vmatpush2.bf16.msra.mxu0 0
    %4351 = vmatprep.subr.bf16.mxu0 0
    %4352 = vmatpush2.bf16.msra.mxu0 0
    %4353 = vmatprep.subr.bf16.mxu0 0
    %4354 = vmatpush2.bf16.msra.mxu0 0
    %4355 = vmatprep.subr.bf16.mxu0 0
    %4356 = vmatpush2.bf16.msra.mxu0 0
    %4357 = vmatprep.subr.bf16.mxu0 0
    %4358 = vmatpush2.bf16.msra.mxu0 0
    %4359 = vmatprep.subr.bf16.mxu0 0
    %4360 = vmatpush2.bf16.msra.mxu0 0
    %4361 = vmatprep.subr.bf16.mxu0 0
    %4362 = vmatpush2.bf16.msra.mxu0 0
    %4363 = vmatprep.mubr.bf16.mxu0 0
    %4364 = vmatmul.mubr.bf16.gmra.mxu0 %v4329
    %v4365 = vpop.f32.mrf.mxu0
    %v4366 = vadd.f32 %v4314, %v4365
    %v4367 = vpop.f32.mrf.mxu0
    %v4368 = vpop.f32.mrf.mxu0
    %v4369 = vadd.f32 %v4314, %v4368
    %v4370 = vpop.f32.mrf.mxu0
    %4371 = vdwg.mxu0
    %s4372 = scalar_lea.vmem %s10, 4
    %v4373 = vld [vmem:[%s4372] sm:$0x3]
    %v4374 = vadd.f32 %v3316, %v4366
    %v4375 = vadd.f32 %v3317, %v4369
    %v4376 = vsel %vm487, %v4374, 0.0
    %4377 = vadd.xlane.f32.xlu0 %v4376
    %v4378 = vpop.xlane.xlu0 %4377
    %v4379 = vsel %vm487, %v4375, 0.0
    %4380 = vadd.xlane.f32.xlu0 %v4379
    %v4381 = vpop.xlane.xlu0 %4380
    %v4382 = vmul.f32 %v4378, %v1777
    %v4383 = vmul.f32 %v4381, %v1777
    %v4384 = vsub.f32 %v4374, %v4382
    %v4385 = vsub.f32 %v4375, %v4383
    %v4386 = vmul.f32 %v4384, %v4384
    %v4387 = vmul.f32 %v4385, %v4385
    %v4388 = vsel %vm487, %v4386, 0.0
    %4389 = vadd.xlane.f32.xlu0 %v4388
    %v4390 = vpop.xlane.xlu0 %4389
    %v4391 = vsel %vm487, %v4387, 0.0
    %4392 = vadd.xlane.f32.xlu0 %v4391
    %v4393 = vpop.xlane.xlu0 %4392
    %v4394 = vmul.f32 %v4390, %v1777
    %v4395 = vmul.f32 %v4393, %v1777
    %v4396 = vadd.f32 %v4394, 1e-05
    %v4397 = vadd.f32 %v4395, 1e-05
    %v4398 = vrsqrt.pop %v4396
    %v4399 = vrsqrt.pop %v4397
    %v4400 = vmul.f32 %v4384, %v4398
    %v4401 = vmul.f32 %v4385, %v4399
    %v4402 = vlaneseq
    %v4403 = vshrl.u32 %v4402, 7
    %v4404 = vsub.s32 0, %v4403
    %v4405 = vrot.slane %v4373, %v4404
    %v4406 = vmul.f32 %v4400, %v4405
    %v4407 = vmul.f32 %v4401, %v4405
    %v4408 = vlaneseq
    %v4409 = vshrl.u32 %v4408, 7
    %v4410 = vsub.s32 1, %v4409
    %v4411 = vrot.slane %v4373, %v4410
    %v4412 = vadd.f32 %v4406, %v4411
    %v4413 = vadd.f32 %v4407, %v4411
    %v4414 = vpack.c.bf16 %v4413, %v4412
    %s4415 = scalar_lea.vmem %s11, 32
    %v4416 = vld [vmem:[%s4415] sm:$0xf]
    %v4417 = vld [vmem:[%s4415 + $0x4] sm:$0xf]
    %v4418 = vld [vmem:[%s4415 + $0x8] sm:$0xf]
    %v4419 = vld [vmem:[%s4415 + $0xc] sm:$0xf]
    %s4420 = scalar_lea.vmem %s12, 2
    %v4421 = vld [vmem:[%s4420] sm:$0x1]
    %v4423 = vlaneseq
    %v4424 = vshrl.u32 %v4423, 7
    %v4425 = vsub.s32 0, %v4424
    %v4426 = vrot.slane %v4421, %v4425
    %v4432 = vunpack.c.l.b16 %v4416
    %v4433 = vunpack.c.l.b16 %v4417
    %v4434 = vunpack.c.l.b16 %v4418
    %v4435 = vunpack.c.l.b16 %v4419
    %v4436 = vpack.c.b16 %v4433, %v4432
    %v4437 = vpack.c.b16 %v4435, %v4434
    %v4441 = vsel %vm487, %v4414, 0
    %4443 = vmatprep.subr.bf16.mxu0 0
    %4444 = vmatpush1.bf16.msra.mxu0 0
    %4445 = vmatprep.subr.bf16.mxu0 0
    %4446 = vmatpush1.bf16.msra.mxu0 0
    %4447 = vmatprep.subr.bf16.mxu0 0
    %4448 = vmatpush1.bf16.msra.mxu0 0
    %4449 = vmatprep.subr.bf16.mxu0 0
    %4450 = vmatpush1.bf16.msra.mxu0 0
    %4451 = vmatprep.subr.bf16.mxu0 0
    %4452 = vmatpush1.bf16.msra.mxu0 0
    %4453 = vmatprep.subr.bf16.mxu0 0
    %4454 = vmatpush1.bf16.msra.mxu0 0
    %4455 = vmatprep.subr.bf16.mxu0 0
    %4456 = vmatpush1.bf16.msra.mxu0 %v4437
    %4457 = vmatprep.subr.bf16.mxu0 0
    %4458 = vmatpush1.bf16.msra.mxu0 %v4436
    %4459 = vmatprep.subr.bf16.mxu0 0
    %4460 = vmatpush2.bf16.msra.mxu0 0
    %4461 = vmatprep.subr.bf16.mxu0 0
    %4462 = vmatpush2.bf16.msra.mxu0 0
    %4463 = vmatprep.subr.bf16.mxu0 0
    %4464 = vmatpush2.bf16.msra.mxu0 0
    %4465 = vmatprep.subr.bf16.mxu0 0
    %4466 = vmatpush2.bf16.msra.mxu0 0
    %4467 = vmatprep.subr.bf16.mxu0 0
    %4468 = vmatpush2.bf16.msra.mxu0 0
    %4469 = vmatprep.subr.bf16.mxu0 0
    %4470 = vmatpush2.bf16.msra.mxu0 0
    %4471 = vmatprep.subr.bf16.mxu0 0
    %4472 = vmatpush2.bf16.msra.mxu0 0
    %4473 = vmatprep.subr.bf16.mxu0 0
    %4474 = vmatpush2.bf16.msra.mxu0 0
    %4475 = vmatprep.mubr.bf16.mxu0 0
    %4476 = vmatmul.mubr.bf16.gmra.mxu0 %v4441
    %v4477 = vpop.f32.mrf.mxu0
    %v4478 = vadd.f32 %v4426, %v4477
    %v4479 = vpop.f32.mrf.mxu0
    %v4480 = vpop.f32.mrf.mxu0
    %v4481 = vadd.f32 %v4426, %v4480
    %v4482 = vpop.f32.mrf.mxu0
    %4483 = vdwg.mxu0
    %v4484 = vmul.f32 %v4478, 0.5
    %v4485 = vmul.f32 %v4481, 0.5
    %v4486 = vmul.f32 %v4478, 0.70710677
    %v4487 = vmul.f32 %v4481, 0.70710677
    %v4488 = verf.f32.pop %v4486
    %v4489 = verf.f32.pop %v4487
    %v4490 = vadd.f32 %v4488, 1.0
    %v4491 = vadd.f32 %v4489, 1.0
    %v4492 = vmul.f32 %v4484, %v4490
    %v4493 = vmul.f32 %v4485, %v4491
    %v4494 = vpack.c.bf16 %v4493, %v4492
    %s4495 = scalar_lea.vmem %s13, 64
    %v4496 = vld [vmem:[%s4495] sm:$0xf]
    %v4497 = vld [vmem:[%s4495 + $0x4] sm:$0xf]
    %v4498 = vld [vmem:[%s4495 + $0x8] sm:$0xf]
    %v4499 = vld [vmem:[%s4495 + $0xc] sm:$0xf]
    %v4500 = vld [vmem:[%s4495 + $0x10] sm:$0xf]
    %v4501 = vld [vmem:[%s4495 + $0x14] sm:$0xf]
    %v4502 = vld [vmem:[%s4495 + $0x18] sm:$0xf]
    %v4503 = vld [vmem:[%s4495 + $0x1c] sm:$0xf]
    %s4504 = scalar_lea.vmem %s14, 2
    %v4505 = vld [vmem:[%s4504] sm:$0x1]
    %v4507 = vlaneseq
    %v4508 = vshrl.u32 %v4507, 7
    %v4509 = vsub.s32 0, %v4508
    %v4510 = vrot.slane %v4505, %v4509
    %v4520 = vunpack.c.l.b16 %v4496
    %v4521 = vunpack.c.l.b16 %v4497
    %v4522 = vunpack.c.l.b16 %v4498
    %v4523 = vunpack.c.l.b16 %v4499
    %v4524 = vunpack.c.l.b16 %v4500
    %v4525 = vunpack.c.l.b16 %v4501
    %v4526 = vunpack.c.l.b16 %v4502
    %v4527 = vunpack.c.l.b16 %v4503
    %v4528 = vpack.c.b16 %v4521, %v4520
    %v4529 = vpack.c.b16 %v4523, %v4522
    %v4530 = vpack.c.b16 %v4525, %v4524
    %v4531 = vpack.c.b16 %v4527, %v4526
    %v4537 = vsel %vm1928, %v4494, 0
    %4539 = vmatprep.subr.bf16.mxu0 0
    %4540 = vmatpush1.bf16.msra.mxu0 0
    %4541 = vmatprep.subr.bf16.mxu0 0
    %4542 = vmatpush1.bf16.msra.mxu0 0
    %4543 = vmatprep.subr.bf16.mxu0 0
    %4544 = vmatpush1.bf16.msra.mxu0 0
    %4545 = vmatprep.subr.bf16.mxu0 0
    %4546 = vmatpush1.bf16.msra.mxu0 0
    %4547 = vmatprep.subr.bf16.mxu0 0
    %4548 = vmatpush1.bf16.msra.mxu0 %v4531
    %4549 = vmatprep.subr.bf16.mxu0 0
    %4550 = vmatpush1.bf16.msra.mxu0 %v4530
    %4551 = vmatprep.subr.bf16.mxu0 0
    %4552 = vmatpush1.bf16.msra.mxu0 %v4529
    %4553 = vmatprep.subr.bf16.mxu0 0
    %4554 = vmatpush1.bf16.msra.mxu0 %v4528
    %4555 = vmatprep.subr.bf16.mxu0 0
    %4556 = vmatpush2.bf16.msra.mxu0 0
    %4557 = vmatprep.subr.bf16.mxu0 0
    %4558 = vmatpush2.bf16.msra.mxu0 0
    %4559 = vmatprep.subr.bf16.mxu0 0
    %4560 = vmatpush2.bf16.msra.mxu0 0
    %4561 = vmatprep.subr.bf16.mxu0 0
    %4562 = vmatpush2.bf16.msra.mxu0 0
    %4563 = vmatprep.subr.bf16.mxu0 0
    %4564 = vmatpush2.bf16.msra.mxu0 0
    %4565 = vmatprep.subr.bf16.mxu0 0
    %4566 = vmatpush2.bf16.msra.mxu0 0
    %4567 = vmatprep.subr.bf16.mxu0 0
    %4568 = vmatpush2.bf16.msra.mxu0 0
    %4569 = vmatprep.subr.bf16.mxu0 0
    %4570 = vmatpush2.bf16.msra.mxu0 0
    %4571 = vmatprep.mubr.bf16.mxu0 0
    %4572 = vmatmul.mubr.bf16.gmra.mxu0 %v4537
    %v4573 = vpop.f32.mrf.mxu0
    %v4574 = vadd.f32 %v4510, %v4573
    %v4575 = vpop.f32.mrf.mxu0
    %v4576 = vpop.f32.mrf.mxu0
    %v4577 = vadd.f32 %v4510, %v4576
    %v4578 = vpop.f32.mrf.mxu0
    %4579 = vdwg.mxu0
    %s4580 = scalar_lea.vmem %s15, 4
    %v4581 = vld [vmem:[%s4580] sm:$0x3]
    %v4582 = vadd.f32 %v4412, %v4574
    %v4583 = vadd.f32 %v4413, %v4577
    %v4584 = vsel %vm487, %v4582, 0.0
    %4585 = vadd.xlane.f32.xlu0 %v4584
    %v4586 = vpop.xlane.xlu0 %4585
    %v4587 = vsel %vm487, %v4583, 0.0
    %4588 = vadd.xlane.f32.xlu0 %v4587
    %v4589 = vpop.xlane.xlu0 %4588
    %v4590 = vmul.f32 %v4586, %v1777
    %v4591 = vmul.f32 %v4589, %v1777
    %v4592 = vsub.f32 %v4582, %v4590
    %v4593 = vsub.f32 %v4583, %v4591
    %v4594 = vmul.f32 %v4592, %v4592
    %v4595 = vmul.f32 %v4593, %v4593
    %v4596 = vsel %vm487, %v4594, 0.0
    %4597 = vadd.xlane.f32.xlu0 %v4596
    %v4598 = vpop.xlane.xlu0 %4597
    %v4599 = vsel %vm487, %v4595, 0.0
    %4600 = vadd.xlane.f32.xlu0 %v4599
    %v4601 = vpop.xlane.xlu0 %4600
    %v4602 = vmul.f32 %v4598, %v1777
    %v4603 = vmul.f32 %v4601, %v1777
    %v4604 = vadd.f32 %v4602, 1e-05
    %v4605 = vadd.f32 %v4603, 1e-05
    %v4606 = vrsqrt.pop %v4604
    %v4607 = vrsqrt.pop %v4605
    %v4608 = vmul.f32 %v4592, %v4606
    %v4609 = vmul.f32 %v4593, %v4607
    %v4610 = vlaneseq
    %v4611 = vshrl.u32 %v4610, 7
    %v4612 = vsub.s32 0, %v4611
    %v4613 = vrot.slane %v4581, %v4612
    %v4614 = vmul.f32 %v4608, %v4613
    %v4615 = vmul.f32 %v4609, %v4613
    %v4616 = vlaneseq
    %v4617 = vshrl.u32 %v4616, 7
    %v4618 = vsub.s32 1, %v4617
    %v4619 = vrot.slane %v4581, %v4618
    %v4620 = vadd.f32 %v4614, %v4619
    %v4621 = vadd.f32 %v4615, %v4619
    %v4622 = vpack.c.bf16 %v4621, %v4620
    %s4623 = scalar_lea.vmem %s6, 48
    %v4624 = vld [vmem:[%s4623] sm:$0xf]
    %v4625 = vld [vmem:[%s4623 + $0x4] sm:$0xf]
    %v4626 = vld [vmem:[%s4623 + $0x8] sm:$0xf]
    %v4627 = vld [vmem:[%s4623 + $0xc] sm:$0xf]
    %s4628 = scalar_lea.vmem %s7, 3
    %v4629 = vld [vmem:[%s4628] sm:$0x1]
    %v4631 = vlaneseq
    %v4632 = vshrl.u32 %v4631, 7
    %v4633 = vsub.s32 0, %v4632
    %v4634 = vrot.slane %v4629, %v4633
    %v4640 = vunpack.c.l.b16 %v4624
    %v4641 = vunpack.c.l.b16 %v4625
    %v4642 = vunpack.c.l.b16 %v4626
    %v4643 = vunpack.c.l.b16 %v4627
    %v4644 = vpack.c.b16 %v4641, %v4640
    %v4645 = vpack.c.b16 %v4643, %v4642
    %v4649 = vsel %vm487, %v4622, 0
    %4651 = vmatprep.subr.bf16.mxu0 0
    %4652 = vmatpush1.bf16.msra.mxu0 0
    %4653 = vmatprep.subr.bf16.mxu0 0
    %4654 = vmatpush1.bf16.msra.mxu0 0
    %4655 = vmatprep.subr.bf16.mxu0 0
    %4656 = vmatpush1.bf16.msra.mxu0 0
    %4657 = vmatprep.subr.bf16.mxu0 0
    %4658 = vmatpush1.bf16.msra.mxu0 0
    %4659 = vmatprep.subr.bf16.mxu0 0
    %4660 = vmatpush1.bf16.msra.mxu0 0
    %4661 = vmatprep.subr.bf16.mxu0 0
    %4662 = vmatpush1.bf16.msra.mxu0 0
    %4663 = vmatprep.subr.bf16.mxu0 0
    %4664 = vmatpush1.bf16.msra.mxu0 %v4645
    %4665 = vmatprep.subr.bf16.mxu0 0
    %4666 = vmatpush1.bf16.msra.mxu0 %v4644
    %4667 = vmatprep.subr.bf16.mxu0 0
    %4668 = vmatpush2.bf16.msra.mxu0 0
    %4669 = vmatprep.subr.bf16.mxu0 0
    %4670 = vmatpush2.bf16.msra.mxu0 0
    %4671 = vmatprep.subr.bf16.mxu0 0
    %4672 = vmatpush2.bf16.msra.mxu0 0
    %4673 = vmatprep.subr.bf16.mxu0 0
    %4674 = vmatpush2.bf16.msra.mxu0 0
    %4675 = vmatprep.subr.bf16.mxu0 0
    %4676 = vmatpush2.bf16.msra.mxu0 0
    %4677 = vmatprep.subr.bf16.mxu0 0
    %4678 = vmatpush2.bf16.msra.mxu0 0
    %4679 = vmatprep.subr.bf16.mxu0 0
    %4680 = vmatpush2.bf16.msra.mxu0 0
    %4681 = vmatprep.subr.bf16.mxu0 0
    %4682 = vmatpush2.bf16.msra.mxu0 0
    %4683 = vmatprep.mubr.bf16.mxu0 0
    %4684 = vmatmul.mubr.bf16.gmra.mxu0 %v4649
    %v4685 = vpop.f32.mrf.mxu0
    %v4686 = vadd.f32 %v4634, %v4685
    %v4687 = vpop.f32.mrf.mxu0
    %v4688 = vpop.f32.mrf.mxu0
    %v4689 = vadd.f32 %v4634, %v4688
    %v4690 = vpop.f32.mrf.mxu0
    %4691 = vdwg.mxu0
    %v4692 = vpack.c.bf16 %v4686, %v4686
    %v4693 = vpack.c.bf16 %v4689, %v4689
    %4695 = vrot.lane.b32.xlu0 %v4692, 96
    %v4696 = vpop.permute.xlu0 %4695
    %v4698 = vsel %vm786, %v4692, 0
    %v4701 = vsel %vm786, %v4696, 0
    %4703 = vmatprep.subr.bf16.mxu0 0
    %4704 = vmatpush1.bf16.xpose.msra.mxu0 0
    %4705 = vmatprep.subr.bf16.mxu0 0
    %4706 = vmatpush1.bf16.xpose.msra.mxu0 0
    %4707 = vmatprep.subr.bf16.mxu0 0
    %4708 = vmatpush1.bf16.xpose.msra.mxu0 0
    %4709 = vmatprep.subr.bf16.mxu0 0
    %4710 = vmatpush1.bf16.xpose.msra.mxu0 0
    %4711 = vmatprep.subr.bf16.mxu0 0
    %4712 = vmatpush1.bf16.xpose.msra.mxu0 0
    %4713 = vmatprep.subr.bf16.mxu0 0
    %4714 = vmatpush1.bf16.xpose.msra.mxu0 0
    %4715 = vmatprep.subr.bf16.mxu0 0
    %4716 = vmatpush1.bf16.xpose.msra.mxu0 0
    %4717 = vmatprep.subr.bf16.mxu0 0
    %4718 = vmatpush1.bf16.xpose.msra.mxu0 %v4701
    %4719 = vmatprep.subr.bf16.mxu0 0
    %4720 = vmatpush2.bf16.xpose.msra.mxu0 0
    %4721 = vmatprep.subr.bf16.mxu0 0
    %4722 = vmatpush2.bf16.xpose.msra.mxu0 0
    %4723 = vmatprep.subr.bf16.mxu0 0
    %4724 = vmatpush2.bf16.xpose.msra.mxu0 0
    %4725 = vmatprep.subr.bf16.mxu0 0
    %4726 = vmatpush2.bf16.xpose.msra.mxu0 0
    %4727 = vmatprep.subr.bf16.mxu0 0
    %4728 = vmatpush2.bf16.xpose.msra.mxu0 0
    %4729 = vmatprep.subr.bf16.mxu0 0
    %4730 = vmatpush2.bf16.xpose.msra.mxu0 0
    %4731 = vmatprep.subr.bf16.mxu0 0
    %4732 = vmatpush2.bf16.xpose.msra.mxu0 0
    %4733 = vmatprep.subr.bf16.mxu0 0
    %4734 = vmatpush2.bf16.xpose.msra.mxu0 0
    %4735 = vmatprep.mubr.bf16.mxu0 0
    %4736 = vmatmul.mubr.bf16.gmra.mxu0 %v4698
    %v4737 = vpop.f32.mrf.mxu0
    %v4738 = vadd.f32 0.0, %v4737
    %v4739 = vpop.f32.mrf.mxu0
    %v4740 = vpop.f32.mrf.mxu0
    %v4741 = vpop.f32.mrf.mxu0
    %4742 = vdwg.mxu0
    %4744 = vrot.lane.b32.xlu0 %v4693, 96
    %v4745 = vpop.permute.xlu0 %4744
    %v4747 = vsel %vm786, %v4693, 0
    %v4750 = vsel %vm786, %v4745, 0
    %4752 = vmatprep.subr.bf16.mxu0 0
    %4753 = vmatpush1.bf16.xpose.msra.mxu0 0
    %4754 = vmatprep.subr.bf16.mxu0 0
    %4755 = vmatpush1.bf16.xpose.msra.mxu0 0
    %4756 = vmatprep.subr.bf16.mxu0 0
    %4757 = vmatpush1.bf16.xpose.msra.mxu0 0
    %4758 = vmatprep.subr.bf16.mxu0 0
    %4759 = vmatpush1.bf16.xpose.msra.mxu0 0
    %4760 = vmatprep.subr.bf16.mxu0 0
    %4761 = vmatpush1.bf16.xpose.msra.mxu0 0
    %4762 = vmatprep.subr.bf16.mxu0 0
    %4763 = vmatpush1.bf16.xpose.msra.mxu0 0
    %4764 = vmatprep.subr.bf16.mxu0 0
    %4765 = vmatpush1.bf16.xpose.msra.mxu0 0
    %4766 = vmatprep.subr.bf16.mxu0 0
    %4767 = vmatpush1.bf16.xpose.msra.mxu0 %v4750
    %4768 = vmatprep.subr.bf16.mxu0 0
    %4769 = vmatpush2.bf16.xpose.msra.mxu0 0
    %4770 = vmatprep.subr.bf16.mxu0 0
    %4771 = vmatpush2.bf16.xpose.msra.mxu0 0
    %4772 = vmatprep.subr.bf16.mxu0 0
    %4773 = vmatpush2.bf16.xpose.msra.mxu0 0
    %4774 = vmatprep.subr.bf16.mxu0 0
    %4775 = vmatpush2.bf16.xpose.msra.mxu0 0
    %4776 = vmatprep.subr.bf16.mxu0 0
    %4777 = vmatpush2.bf16.xpose.msra.mxu0 0
    %4778 = vmatprep.subr.bf16.mxu0 0
    %4779 = vmatpush2.bf16.xpose.msra.mxu0 0
    %4780 = vmatprep.subr.bf16.mxu0 0
    %4781 = vmatpush2.bf16.xpose.msra.mxu0 0
    %4782 = vmatprep.subr.bf16.mxu0 0
    %4783 = vmatpush2.bf16.xpose.msra.mxu0 0
    %4784 = vmatprep.mubr.bf16.mxu0 0
    %4785 = vmatmul.mubr.bf16.gmra.mxu0 %v4747
    %v4786 = vpop.f32.mrf.mxu0
    %v4787 = vadd.f32 0.0, %v4786
    %v4788 = vpop.f32.mrf.mxu0
    %v4789 = vpop.f32.mrf.mxu0
    %v4790 = vpop.f32.mrf.mxu0
    %4791 = vdwg.mxu0
    %v4792 = vsel %vm786, %v4738, -inf
    %4793 = vmax.xlane.f32.xlu0 %v4792
    %v4794 = vpop.xlane.xlu0 %4793
    %v4795 = vsel %vm786, %v4787, -inf
    %4796 = vmax.xlane.f32.xlu0 %v4795
    %v4797 = vpop.xlane.xlu0 %4796
    %v4798 = vsub.f32 %v4738, %v4794
    %v4799 = vsub.f32 %v4787, %v4797
    %v4800 = vmul.f32 %v4798, 1.442695
    %v4801 = vpow.pop %v4800
    %v4802 = vmul.f32 %v4799, 1.442695
    %v4803 = vpow.pop %v4802
    %v4804 = vsel %vm786, %v4801, 0.0
    %4805 = vadd.xlane.f32.xlu0 %v4804
    %v4806 = vpop.xlane.xlu0 %4805
    %v4807 = vsel %vm786, %v4803, 0.0
    %4808 = vadd.xlane.f32.xlu0 %v4807
    %v4809 = vpop.xlane.xlu0 %4808
    %v4810 = vrcp.pop %v4806
    %v4811 = vrcp.pop %v4809
    %v4812 = vmul.f32 %v4801, %v4810
    %v4813 = vmul.f32 %v4803, %v4811
    %v4814 = vpack.c.bf16 %v4812, %v4812
    %v4815 = vpack.c.bf16 %v4813, %v4813
    %4816 = vrot.lane.b32.xlu0 %v4692, 64
    %v4817 = vpop.permute.xlu0 %4816
    %v4819 = vsel %vm786, %v4814, 0
    %v4822 = vsel %vm911, %v4817, 0
    %4824 = vmatprep.subr.bf16.mxu0 0
    %4825 = vmatpush1.bf16.msra.mxu0 0
    %4826 = vmatprep.subr.bf16.mxu0 0
    %4827 = vmatpush1.bf16.msra.mxu0 0
    %4828 = vmatprep.subr.bf16.mxu0 0
    %4829 = vmatpush1.bf16.msra.mxu0 0
    %4830 = vmatprep.subr.bf16.mxu0 0
    %4831 = vmatpush1.bf16.msra.mxu0 0
    %4832 = vmatprep.subr.bf16.mxu0 0
    %4833 = vmatpush1.bf16.msra.mxu0 0
    %4834 = vmatprep.subr.bf16.mxu0 0
    %4835 = vmatpush1.bf16.msra.mxu0 0
    %4836 = vmatprep.subr.bf16.mxu0 0
    %4837 = vmatpush1.bf16.msra.mxu0 0
    %4838 = vmatprep.subr.bf16.mxu0 0
    %4839 = vmatpush1.bf16.msra.mxu0 %v4822
    %4840 = vmatprep.subr.bf16.mxu0 0
    %4841 = vmatpush2.bf16.msra.mxu0 0
    %4842 = vmatprep.subr.bf16.mxu0 0
    %4843 = vmatpush2.bf16.msra.mxu0 0
    %4844 = vmatprep.subr.bf16.mxu0 0
    %4845 = vmatpush2.bf16.msra.mxu0 0
    %4846 = vmatprep.subr.bf16.mxu0 0
    %4847 = vmatpush2.bf16.msra.mxu0 0
    %4848 = vmatprep.subr.bf16.mxu0 0
    %4849 = vmatpush2.bf16.msra.mxu0 0
    %4850 = vmatprep.subr.bf16.mxu0 0
    %4851 = vmatpush2.bf16.msra.mxu0 0
    %4852 = vmatprep.subr.bf16.mxu0 0
    %4853 = vmatpush2.bf16.msra.mxu0 0
    %4854 = vmatprep.subr.bf16.mxu0 0
    %4855 = vmatpush2.bf16.msra.mxu0 0
    %4856 = vmatprep.mubr.bf16.mxu0 0
    %4857 = vmatmul.mubr.bf16.gmra.mxu0 %v4819
    %v4858 = vpop.f32.mrf.mxu0
    %v4859 = vadd.f32 0.0, %v4858
    %v4860 = vpop.f32.mrf.mxu0
    %v4861 = vpop.f32.mrf.mxu0
    %v4862 = vpop.f32.mrf.mxu0
    %4863 = vdwg.mxu0
    %4864 = vrot.lane.b32.xlu0 %v4693, 64
    %v4865 = vpop.permute.xlu0 %4864
    %v4867 = vsel %vm786, %v4815, 0
    %v4870 = vsel %vm911, %v4865, 0
    %4872 = vmatprep.subr.bf16.mxu0 0
    %4873 = vmatpush1.bf16.msra.mxu0 0
    %4874 = vmatprep.subr.bf16.mxu0 0
    %4875 = vmatpush1.bf16.msra.mxu0 0
    %4876 = vmatprep.subr.bf16.mxu0 0
    %4877 = vmatpush1.bf16.msra.mxu0 0
    %4878 = vmatprep.subr.bf16.mxu0 0
    %4879 = vmatpush1.bf16.msra.mxu0 0
    %4880 = vmatprep.subr.bf16.mxu0 0
    %4881 = vmatpush1.bf16.msra.mxu0 0
    %4882 = vmatprep.subr.bf16.mxu0 0
    %4883 = vmatpush1.bf16.msra.mxu0 0
    %4884 = vmatprep.subr.bf16.mxu0 0
    %4885 = vmatpush1.bf16.msra.mxu0 0
    %4886 = vmatprep.subr.bf16.mxu0 0
    %4887 = vmatpush1.bf16.msra.mxu0 %v4870
    %4888 = vmatprep.subr.bf16.mxu0 0
    %4889 = vmatpush2.bf16.msra.mxu0 0
    %4890 = vmatprep.subr.bf16.mxu0 0
    %4891 = vmatpush2.bf16.msra.mxu0 0
    %4892 = vmatprep.subr.bf16.mxu0 0
    %4893 = vmatpush2.bf16.msra.mxu0 0
    %4894 = vmatprep.subr.bf16.mxu0 0
    %4895 = vmatpush2.bf16.msra.mxu0 0
    %4896 = vmatprep.subr.bf16.mxu0 0
    %4897 = vmatpush2.bf16.msra.mxu0 0
    %4898 = vmatprep.subr.bf16.mxu0 0
    %4899 = vmatpush2.bf16.msra.mxu0 0
    %4900 = vmatprep.subr.bf16.mxu0 0
    %4901 = vmatpush2.bf16.msra.mxu0 0
    %4902 = vmatprep.subr.bf16.mxu0 0
    %4903 = vmatpush2.bf16.msra.mxu0 0
    %4904 = vmatprep.mubr.bf16.mxu0 0
    %4905 = vmatmul.mubr.bf16.gmra.mxu0 %v4867
    %v4906 = vpop.f32.mrf.mxu0
    %v4907 = vadd.f32 0.0, %v4906
    %v4908 = vpop.f32.mrf.mxu0
    %v4909 = vpop.f32.mrf.mxu0
    %v4910 = vpop.f32.mrf.mxu0
    %4911 = vdwg.mxu0
    %4912 = vst.msk [vmem:[#allocation3] sm:$0xff] %vm786, %v4859
    %4913 = vst.msk [vmem:[#allocation3 + $0x8] sm:$0xff] %vm786, %v4907
    %4914 = vrot.lane.b32.xlu0 %v4692, 120
    %v4915 = vpop.permute.xlu0 %4914
    %4916 = vrot.lane.b32.xlu0 %v4692, 88
    %v4917 = vpop.permute.xlu0 %4916
    %v4919 = vsel %vm786, %v4915, 0
    %v4922 = vsel %vm786, %v4917, 0
    %4924 = vmatprep.subr.bf16.mxu0 0
    %4925 = vmatpush1.bf16.xpose.msra.mxu0 0
    %4926 = vmatprep.subr.bf16.mxu0 0
    %4927 = vmatpush1.bf16.xpose.msra.mxu0 0
    %4928 = vmatprep.subr.bf16.mxu0 0
    %4929 = vmatpush1.bf16.xpose.msra.mxu0 0
    %4930 = vmatprep.subr.bf16.mxu0 0
    %4931 = vmatpush1.bf16.xpose.msra.mxu0 0
    %4932 = vmatprep.subr.bf16.mxu0 0
    %4933 = vmatpush1.bf16.xpose.msra.mxu0 0
    %4934 = vmatprep.subr.bf16.mxu0 0
    %4935 = vmatpush1.bf16.xpose.msra.mxu0 0
    %4936 = vmatprep.subr.bf16.mxu0 0
    %4937 = vmatpush1.bf16.xpose.msra.mxu0 0
    %4938 = vmatprep.subr.bf16.mxu0 0
    %4939 = vmatpush1.bf16.xpose.msra.mxu0 %v4922
    %4940 = vmatprep.subr.bf16.mxu0 0
    %4941 = vmatpush2.bf16.xpose.msra.mxu0 0
    %4942 = vmatprep.subr.bf16.mxu0 0
    %4943 = vmatpush2.bf16.xpose.msra.mxu0 0
    %4944 = vmatprep.subr.bf16.mxu0 0
    %4945 = vmatpush2.bf16.xpose.msra.mxu0 0
    %4946 = vmatprep.subr.bf16.mxu0 0
    %4947 = vmatpush2.bf16.xpose.msra.mxu0 0
    %4948 = vmatprep.subr.bf16.mxu0 0
    %4949 = vmatpush2.bf16.xpose.msra.mxu0 0
    %4950 = vmatprep.subr.bf16.mxu0 0
    %4951 = vmatpush2.bf16.xpose.msra.mxu0 0
    %4952 = vmatprep.subr.bf16.mxu0 0
    %4953 = vmatpush2.bf16.xpose.msra.mxu0 0
    %4954 = vmatprep.subr.bf16.mxu0 0
    %4955 = vmatpush2.bf16.xpose.msra.mxu0 0
    %4956 = vmatprep.mubr.bf16.mxu0 0
    %4957 = vmatmul.mubr.bf16.gmra.mxu0 %v4919
    %v4958 = vpop.f32.mrf.mxu0
    %v4959 = vadd.f32 0.0, %v4958
    %v4960 = vpop.f32.mrf.mxu0
    %v4961 = vpop.f32.mrf.mxu0
    %v4962 = vpop.f32.mrf.mxu0
    %4963 = vdwg.mxu0
    %4964 = vrot.lane.b32.xlu0 %v4693, 120
    %v4965 = vpop.permute.xlu0 %4964
    %4966 = vrot.lane.b32.xlu0 %v4693, 88
    %v4967 = vpop.permute.xlu0 %4966
    %v4969 = vsel %vm786, %v4965, 0
    %v4972 = vsel %vm786, %v4967, 0
    %4974 = vmatprep.subr.bf16.mxu0 0
    %4975 = vmatpush1.bf16.xpose.msra.mxu0 0
    %4976 = vmatprep.subr.bf16.mxu0 0
    %4977 = vmatpush1.bf16.xpose.msra.mxu0 0
    %4978 = vmatprep.subr.bf16.mxu0 0
    %4979 = vmatpush1.bf16.xpose.msra.mxu0 0
    %4980 = vmatprep.subr.bf16.mxu0 0
    %4981 = vmatpush1.bf16.xpose.msra.mxu0 0
    %4982 = vmatprep.subr.bf16.mxu0 0
    %4983 = vmatpush1.bf16.xpose.msra.mxu0 0
    %4984 = vmatprep.subr.bf16.mxu0 0
    %4985 = vmatpush1.bf16.xpose.msra.mxu0 0
    %4986 = vmatprep.subr.bf16.mxu0 0
    %4987 = vmatpush1.bf16.xpose.msra.mxu0 0
    %4988 = vmatprep.subr.bf16.mxu0 0
    %4989 = vmatpush1.bf16.xpose.msra.mxu0 %v4972
    %4990 = vmatprep.subr.bf16.mxu0 0
    %4991 = vmatpush2.bf16.xpose.msra.mxu0 0
    %4992 = vmatprep.subr.bf16.mxu0 0
    %4993 = vmatpush2.bf16.xpose.msra.mxu0 0
    %4994 = vmatprep.subr.bf16.mxu0 0
    %4995 = vmatpush2.bf16.xpose.msra.mxu0 0
    %4996 = vmatprep.subr.bf16.mxu0 0
    %4997 = vmatpush2.bf16.xpose.msra.mxu0 0
    %4998 = vmatprep.subr.bf16.mxu0 0
    %4999 = vmatpush2.bf16.xpose.msra.mxu0 0
    %5000 = vmatprep.subr.bf16.mxu0 0
    %5001 = vmatpush2.bf16.xpose.msra.mxu0 0
    %5002 = vmatprep.subr.bf16.mxu0 0
    %5003 = vmatpush2.bf16.xpose.msra.mxu0 0
    %5004 = vmatprep.subr.bf16.mxu0 0
    %5005 = vmatpush2.bf16.xpose.msra.mxu0 0
    %5006 = vmatprep.mubr.bf16.mxu0 0
    %5007 = vmatmul.mubr.bf16.gmra.mxu0 %v4969
    %v5008 = vpop.f32.mrf.mxu0
    %v5009 = vadd.f32 0.0, %v5008
    %v5010 = vpop.f32.mrf.mxu0
    %v5011 = vpop.f32.mrf.mxu0
    %v5012 = vpop.f32.mrf.mxu0
    %5013 = vdwg.mxu0
    %v5014 = vsel %vm786, %v4959, -inf
    %5015 = vmax.xlane.f32.xlu0 %v5014
    %v5016 = vpop.xlane.xlu0 %5015
    %v5017 = vsel %vm786, %v5009, -inf
    %5018 = vmax.xlane.f32.xlu0 %v5017
    %v5019 = vpop.xlane.xlu0 %5018
    %v5020 = vsub.f32 %v4959, %v5016
    %v5021 = vsub.f32 %v5009, %v5019
    %v5022 = vmul.f32 %v5020, 1.442695
    %v5023 = vpow.pop %v5022
    %v5024 = vmul.f32 %v5021, 1.442695
    %v5025 = vpow.pop %v5024
    %v5026 = vsel %vm786, %v5023, 0.0
    %5027 = vadd.xlane.f32.xlu0 %v5026
    %v5028 = vpop.xlane.xlu0 %5027
    %v5029 = vsel %vm786, %v5025, 0.0
    %5030 = vadd.xlane.f32.xlu0 %v5029
    %v5031 = vpop.xlane.xlu0 %5030
    %v5032 = vrcp.pop %v5028
    %v5033 = vrcp.pop %v5031
    %v5034 = vmul.f32 %v5023, %v5032
    %v5035 = vmul.f32 %v5025, %v5033
    %v5036 = vpack.c.bf16 %v5034, %v5034
    %v5037 = vpack.c.bf16 %v5035, %v5035
    %5038 = vrot.lane.b32.xlu0 %v4692, 56
    %v5039 = vpop.permute.xlu0 %5038
    %v5041 = vsel %vm786, %v5036, 0
    %v5044 = vsel %vm911, %v5039, 0
    %5046 = vmatprep.subr.bf16.mxu0 0
    %5047 = vmatpush1.bf16.msra.mxu0 0
    %5048 = vmatprep.subr.bf16.mxu0 0
    %5049 = vmatpush1.bf16.msra.mxu0 0
    %5050 = vmatprep.subr.bf16.mxu0 0
    %5051 = vmatpush1.bf16.msra.mxu0 0
    %5052 = vmatprep.subr.bf16.mxu0 0
    %5053 = vmatpush1.bf16.msra.mxu0 0
    %5054 = vmatprep.subr.bf16.mxu0 0
    %5055 = vmatpush1.bf16.msra.mxu0 0
    %5056 = vmatprep.subr.bf16.mxu0 0
    %5057 = vmatpush1.bf16.msra.mxu0 0
    %5058 = vmatprep.subr.bf16.mxu0 0
    %5059 = vmatpush1.bf16.msra.mxu0 0
    %5060 = vmatprep.subr.bf16.mxu0 0
    %5061 = vmatpush1.bf16.msra.mxu0 %v5044
    %5062 = vmatprep.subr.bf16.mxu0 0
    %5063 = vmatpush2.bf16.msra.mxu0 0
    %5064 = vmatprep.subr.bf16.mxu0 0
    %5065 = vmatpush2.bf16.msra.mxu0 0
    %5066 = vmatprep.subr.bf16.mxu0 0
    %5067 = vmatpush2.bf16.msra.mxu0 0
    %5068 = vmatprep.subr.bf16.mxu0 0
    %5069 = vmatpush2.bf16.msra.mxu0 0
    %5070 = vmatprep.subr.bf16.mxu0 0
    %5071 = vmatpush2.bf16.msra.mxu0 0
    %5072 = vmatprep.subr.bf16.mxu0 0
    %5073 = vmatpush2.bf16.msra.mxu0 0
    %5074 = vmatprep.subr.bf16.mxu0 0
    %5075 = vmatpush2.bf16.msra.mxu0 0
    %5076 = vmatprep.subr.bf16.mxu0 0
    %5077 = vmatpush2.bf16.msra.mxu0 0
    %5078 = vmatprep.mubr.bf16.mxu0 0
    %5079 = vmatmul.mubr.bf16.gmra.mxu0 %v5041
    %v5080 = vpop.f32.mrf.mxu0
    %v5081 = vadd.f32 0.0, %v5080
    %v5082 = vpop.f32.mrf.mxu0
    %v5083 = vpop.f32.mrf.mxu0
    %v5084 = vpop.f32.mrf.mxu0
    %5085 = vdwg.mxu0
    %5086 = vrot.lane.b32.xlu0 %v4693, 56
    %v5087 = vpop.permute.xlu0 %5086
    %v5089 = vsel %vm786, %v5037, 0
    %v5092 = vsel %vm911, %v5087, 0
    %5094 = vmatprep.subr.bf16.mxu0 0
    %5095 = vmatpush1.bf16.msra.mxu0 0
    %5096 = vmatprep.subr.bf16.mxu0 0
    %5097 = vmatpush1.bf16.msra.mxu0 0
    %5098 = vmatprep.subr.bf16.mxu0 0
    %5099 = vmatpush1.bf16.msra.mxu0 0
    %5100 = vmatprep.subr.bf16.mxu0 0
    %5101 = vmatpush1.bf16.msra.mxu0 0
    %5102 = vmatprep.subr.bf16.mxu0 0
    %5103 = vmatpush1.bf16.msra.mxu0 0
    %5104 = vmatprep.subr.bf16.mxu0 0
    %5105 = vmatpush1.bf16.msra.mxu0 0
    %5106 = vmatprep.subr.bf16.mxu0 0
    %5107 = vmatpush1.bf16.msra.mxu0 0
    %5108 = vmatprep.subr.bf16.mxu0 0
    %5109 = vmatpush1.bf16.msra.mxu0 %v5092
    %5110 = vmatprep.subr.bf16.mxu0 0
    %5111 = vmatpush2.bf16.msra.mxu0 0
    %5112 = vmatprep.subr.bf16.mxu0 0
    %5113 = vmatpush2.bf16.msra.mxu0 0
    %5114 = vmatprep.subr.bf16.mxu0 0
    %5115 = vmatpush2.bf16.msra.mxu0 0
    %5116 = vmatprep.subr.bf16.mxu0 0
    %5117 = vmatpush2.bf16.msra.mxu0 0
    %5118 = vmatprep.subr.bf16.mxu0 0
    %5119 = vmatpush2.bf16.msra.mxu0 0
    %5120 = vmatprep.subr.bf16.mxu0 0
    %5121 = vmatpush2.bf16.msra.mxu0 0
    %5122 = vmatprep.subr.bf16.mxu0 0
    %5123 = vmatpush2.bf16.msra.mxu0 0
    %5124 = vmatprep.subr.bf16.mxu0 0
    %5125 = vmatpush2.bf16.msra.mxu0 0
    %5126 = vmatprep.mubr.bf16.mxu0 0
    %5127 = vmatmul.mubr.bf16.gmra.mxu0 %v5089
    %v5128 = vpop.f32.mrf.mxu0
    %v5129 = vadd.f32 0.0, %v5128
    %v5130 = vpop.f32.mrf.mxu0
    %v5131 = vpop.f32.mrf.mxu0
    %v5132 = vpop.f32.mrf.mxu0
    %5133 = vdwg.mxu0
    %5136 = vrot.lane.b32.xlu0 %v5081, 8
    %v5137 = vpop.permute.xlu0 %5136
    %5138 = vrot.lane.b32.xlu0 %v5129, 8
    %v5139 = vpop.permute.xlu0 %5138
    %5142 = vst.msk [vmem:[#allocation3] sm:$0xff] %vm1233, %v5137
    %5143 = vst.msk [vmem:[#allocation3 + $0x8] sm:$0xff] %vm1233, %v5139
    %5144 = vrot.lane.b32.xlu0 %v4692, 112
    %v5145 = vpop.permute.xlu0 %5144
    %5146 = vrot.lane.b32.xlu0 %v4692, 80
    %v5147 = vpop.permute.xlu0 %5146
    %v5149 = vsel %vm786, %v5145, 0
    %v5152 = vsel %vm786, %v5147, 0
    %5154 = vmatprep.subr.bf16.mxu0 0
    %5155 = vmatpush1.bf16.xpose.msra.mxu0 0
    %5156 = vmatprep.subr.bf16.mxu0 0
    %5157 = vmatpush1.bf16.xpose.msra.mxu0 0
    %5158 = vmatprep.subr.bf16.mxu0 0
    %5159 = vmatpush1.bf16.xpose.msra.mxu0 0
    %5160 = vmatprep.subr.bf16.mxu0 0
    %5161 = vmatpush1.bf16.xpose.msra.mxu0 0
    %5162 = vmatprep.subr.bf16.mxu0 0
    %5163 = vmatpush1.bf16.xpose.msra.mxu0 0
    %5164 = vmatprep.subr.bf16.mxu0 0
    %5165 = vmatpush1.bf16.xpose.msra.mxu0 0
    %5166 = vmatprep.subr.bf16.mxu0 0
    %5167 = vmatpush1.bf16.xpose.msra.mxu0 0
    %5168 = vmatprep.subr.bf16.mxu0 0
    %5169 = vmatpush1.bf16.xpose.msra.mxu0 %v5152
    %5170 = vmatprep.subr.bf16.mxu0 0
    %5171 = vmatpush2.bf16.xpose.msra.mxu0 0
    %5172 = vmatprep.subr.bf16.mxu0 0
    %5173 = vmatpush2.bf16.xpose.msra.mxu0 0
    %5174 = vmatprep.subr.bf16.mxu0 0
    %5175 = vmatpush2.bf16.xpose.msra.mxu0 0
    %5176 = vmatprep.subr.bf16.mxu0 0
    %5177 = vmatpush2.bf16.xpose.msra.mxu0 0
    %5178 = vmatprep.subr.bf16.mxu0 0
    %5179 = vmatpush2.bf16.xpose.msra.mxu0 0
    %5180 = vmatprep.subr.bf16.mxu0 0
    %5181 = vmatpush2.bf16.xpose.msra.mxu0 0
    %5182 = vmatprep.subr.bf16.mxu0 0
    %5183 = vmatpush2.bf16.xpose.msra.mxu0 0
    %5184 = vmatprep.subr.bf16.mxu0 0
    %5185 = vmatpush2.bf16.xpose.msra.mxu0 0
    %5186 = vmatprep.mubr.bf16.mxu0 0
    %5187 = vmatmul.mubr.bf16.gmra.mxu0 %v5149
    %v5188 = vpop.f32.mrf.mxu0
    %v5189 = vadd.f32 0.0, %v5188
    %v5190 = vpop.f32.mrf.mxu0
    %v5191 = vpop.f32.mrf.mxu0
    %v5192 = vpop.f32.mrf.mxu0
    %5193 = vdwg.mxu0
    %5194 = vrot.lane.b32.xlu0 %v4693, 112
    %v5195 = vpop.permute.xlu0 %5194
    %5196 = vrot.lane.b32.xlu0 %v4693, 80
    %v5197 = vpop.permute.xlu0 %5196
    %v5199 = vsel %vm786, %v5195, 0
    %v5202 = vsel %vm786, %v5197, 0
    %5204 = vmatprep.subr.bf16.mxu0 0
    %5205 = vmatpush1.bf16.xpose.msra.mxu0 0
    %5206 = vmatprep.subr.bf16.mxu0 0
    %5207 = vmatpush1.bf16.xpose.msra.mxu0 0
    %5208 = vmatprep.subr.bf16.mxu0 0
    %5209 = vmatpush1.bf16.xpose.msra.mxu0 0
    %5210 = vmatprep.subr.bf16.mxu0 0
    %5211 = vmatpush1.bf16.xpose.msra.mxu0 0
    %5212 = vmatprep.subr.bf16.mxu0 0
    %5213 = vmatpush1.bf16.xpose.msra.mxu0 0
    %5214 = vmatprep.subr.bf16.mxu0 0
    %5215 = vmatpush1.bf16.xpose.msra.mxu0 0
    %5216 = vmatprep.subr.bf16.mxu0 0
    %5217 = vmatpush1.bf16.xpose.msra.mxu0 0
    %5218 = vmatprep.subr.bf16.mxu0 0
    %5219 = vmatpush1.bf16.xpose.msra.mxu0 %v5202
    %5220 = vmatprep.subr.bf16.mxu0 0
    %5221 = vmatpush2.bf16.xpose.msra.mxu0 0
    %5222 = vmatprep.subr.bf16.mxu0 0
    %5223 = vmatpush2.bf16.xpose.msra.mxu0 0
    %5224 = vmatprep.subr.bf16.mxu0 0
    %5225 = vmatpush2.bf16.xpose.msra.mxu0 0
    %5226 = vmatprep.subr.bf16.mxu0 0
    %5227 = vmatpush2.bf16.xpose.msra.mxu0 0
    %5228 = vmatprep.subr.bf16.mxu0 0
    %5229 = vmatpush2.bf16.xpose.msra.mxu0 0
    %5230 = vmatprep.subr.bf16.mxu0 0
    %5231 = vmatpush2.bf16.xpose.msra.mxu0 0
    %5232 = vmatprep.subr.bf16.mxu0 0
    %5233 = vmatpush2.bf16.xpose.msra.mxu0 0
    %5234 = vmatprep.subr.bf16.mxu0 0
    %5235 = vmatpush2.bf16.xpose.msra.mxu0 0
    %5236 = vmatprep.mubr.bf16.mxu0 0
    %5237 = vmatmul.mubr.bf16.gmra.mxu0 %v5199
    %v5238 = vpop.f32.mrf.mxu0
    %v5239 = vadd.f32 0.0, %v5238
    %v5240 = vpop.f32.mrf.mxu0
    %v5241 = vpop.f32.mrf.mxu0
    %v5242 = vpop.f32.mrf.mxu0
    %5243 = vdwg.mxu0
    %v5244 = vsel %vm786, %v5189, -inf
    %5245 = vmax.xlane.f32.xlu0 %v5244
    %v5246 = vpop.xlane.xlu0 %5245
    %v5247 = vsel %vm786, %v5239, -inf
    %5248 = vmax.xlane.f32.xlu0 %v5247
    %v5249 = vpop.xlane.xlu0 %5248
    %v5250 = vsub.f32 %v5189, %v5246
    %v5251 = vsub.f32 %v5239, %v5249
    %v5252 = vmul.f32 %v5250, 1.442695
    %v5253 = vpow.pop %v5252
    %v5254 = vmul.f32 %v5251, 1.442695
    %v5255 = vpow.pop %v5254
    %v5256 = vsel %vm786, %v5253, 0.0
    %5257 = vadd.xlane.f32.xlu0 %v5256
    %v5258 = vpop.xlane.xlu0 %5257
    %v5259 = vsel %vm786, %v5255, 0.0
    %5260 = vadd.xlane.f32.xlu0 %v5259
    %v5261 = vpop.xlane.xlu0 %5260
    %v5262 = vrcp.pop %v5258
    %v5263 = vrcp.pop %v5261
    %v5264 = vmul.f32 %v5253, %v5262
    %v5265 = vmul.f32 %v5255, %v5263
    %v5266 = vpack.c.bf16 %v5264, %v5264
    %v5267 = vpack.c.bf16 %v5265, %v5265
    %5268 = vrot.lane.b32.xlu0 %v4692, 48
    %v5269 = vpop.permute.xlu0 %5268
    %v5271 = vsel %vm786, %v5266, 0
    %v5274 = vsel %vm911, %v5269, 0
    %5276 = vmatprep.subr.bf16.mxu0 0
    %5277 = vmatpush1.bf16.msra.mxu0 0
    %5278 = vmatprep.subr.bf16.mxu0 0
    %5279 = vmatpush1.bf16.msra.mxu0 0
    %5280 = vmatprep.subr.bf16.mxu0 0
    %5281 = vmatpush1.bf16.msra.mxu0 0
    %5282 = vmatprep.subr.bf16.mxu0 0
    %5283 = vmatpush1.bf16.msra.mxu0 0
    %5284 = vmatprep.subr.bf16.mxu0 0
    %5285 = vmatpush1.bf16.msra.mxu0 0
    %5286 = vmatprep.subr.bf16.mxu0 0
    %5287 = vmatpush1.bf16.msra.mxu0 0
    %5288 = vmatprep.subr.bf16.mxu0 0
    %5289 = vmatpush1.bf16.msra.mxu0 0
    %5290 = vmatprep.subr.bf16.mxu0 0
    %5291 = vmatpush1.bf16.msra.mxu0 %v5274
    %5292 = vmatprep.subr.bf16.mxu0 0
    %5293 = vmatpush2.bf16.msra.mxu0 0
    %5294 = vmatprep.subr.bf16.mxu0 0
    %5295 = vmatpush2.bf16.msra.mxu0 0
    %5296 = vmatprep.subr.bf16.mxu0 0
    %5297 = vmatpush2.bf16.msra.mxu0 0
    %5298 = vmatprep.subr.bf16.mxu0 0
    %5299 = vmatpush2.bf16.msra.mxu0 0
    %5300 = vmatprep.subr.bf16.mxu0 0
    %5301 = vmatpush2.bf16.msra.mxu0 0
    %5302 = vmatprep.subr.bf16.mxu0 0
    %5303 = vmatpush2.bf16.msra.mxu0 0
    %5304 = vmatprep.subr.bf16.mxu0 0
    %5305 = vmatpush2.bf16.msra.mxu0 0
    %5306 = vmatprep.subr.bf16.mxu0 0
    %5307 = vmatpush2.bf16.msra.mxu0 0
    %5308 = vmatprep.mubr.bf16.mxu0 0
    %5309 = vmatmul.mubr.bf16.gmra.mxu0 %v5271
    %v5310 = vpop.f32.mrf.mxu0
    %v5311 = vadd.f32 0.0, %v5310
    %v5312 = vpop.f32.mrf.mxu0
    %v5313 = vpop.f32.mrf.mxu0
    %v5314 = vpop.f32.mrf.mxu0
    %5315 = vdwg.mxu0
    %5316 = vrot.lane.b32.xlu0 %v4693, 48
    %v5317 = vpop.permute.xlu0 %5316
    %v5319 = vsel %vm786, %v5267, 0
    %v5322 = vsel %vm911, %v5317, 0
    %5324 = vmatprep.subr.bf16.mxu0 0
    %5325 = vmatpush1.bf16.msra.mxu0 0
    %5326 = vmatprep.subr.bf16.mxu0 0
    %5327 = vmatpush1.bf16.msra.mxu0 0
    %5328 = vmatprep.subr.bf16.mxu0 0
    %5329 = vmatpush1.bf16.msra.mxu0 0
    %5330 = vmatprep.subr.bf16.mxu0 0
    %5331 = vmatpush1.bf16.msra.mxu0 0
    %5332 = vmatprep.subr.bf16.mxu0 0
    %5333 = vmatpush1.bf16.msra.mxu0 0
    %5334 = vmatprep.subr.bf16.mxu0 0
    %5335 = vmatpush1.bf16.msra.mxu0 0
    %5336 = vmatprep.subr.bf16.mxu0 0
    %5337 = vmatpush1.bf16.msra.mxu0 0
    %5338 = vmatprep.subr.bf16.mxu0 0
    %5339 = vmatpush1.bf16.msra.mxu0 %v5322
    %5340 = vmatprep.subr.bf16.mxu0 0
    %5341 = vmatpush2.bf16.msra.mxu0 0
    %5342 = vmatprep.subr.bf16.mxu0 0
    %5343 = vmatpush2.bf16.msra.mxu0 0
    %5344 = vmatprep.subr.bf16.mxu0 0
    %5345 = vmatpush2.bf16.msra.mxu0 0
    %5346 = vmatprep.subr.bf16.mxu0 0
    %5347 = vmatpush2.bf16.msra.mxu0 0
    %5348 = vmatprep.subr.bf16.mxu0 0
    %5349 = vmatpush2.bf16.msra.mxu0 0
    %5350 = vmatprep.subr.bf16.mxu0 0
    %5351 = vmatpush2.bf16.msra.mxu0 0
    %5352 = vmatprep.subr.bf16.mxu0 0
    %5353 = vmatpush2.bf16.msra.mxu0 0
    %5354 = vmatprep.subr.bf16.mxu0 0
    %5355 = vmatpush2.bf16.msra.mxu0 0
    %5356 = vmatprep.mubr.bf16.mxu0 0
    %5357 = vmatmul.mubr.bf16.gmra.mxu0 %v5319
    %v5358 = vpop.f32.mrf.mxu0
    %v5359 = vadd.f32 0.0, %v5358
    %v5360 = vpop.f32.mrf.mxu0
    %v5361 = vpop.f32.mrf.mxu0
    %v5362 = vpop.f32.mrf.mxu0
    %5363 = vdwg.mxu0
    %5366 = vrot.lane.b32.xlu0 %v5311, 16
    %v5367 = vpop.permute.xlu0 %5366
    %5368 = vrot.lane.b32.xlu0 %v5359, 16
    %v5369 = vpop.permute.xlu0 %5368
    %5372 = vst.msk [vmem:[#allocation3] sm:$0xff] %vm1464, %v5367
    %5373 = vst.msk [vmem:[#allocation3 + $0x8] sm:$0xff] %vm1464, %v5369
    %5374 = vrot.lane.b32.xlu0 %v4692, 104
    %v5375 = vpop.permute.xlu0 %5374
    %5376 = vrot.lane.b32.xlu0 %v4692, 72
    %v5377 = vpop.permute.xlu0 %5376
    %v5379 = vsel %vm786, %v5375, 0
    %v5382 = vsel %vm786, %v5377, 0
    %5384 = vmatprep.subr.bf16.mxu0 0
    %5385 = vmatpush1.bf16.xpose.msra.mxu0 0
    %5386 = vmatprep.subr.bf16.mxu0 0
    %5387 = vmatpush1.bf16.xpose.msra.mxu0 0
    %5388 = vmatprep.subr.bf16.mxu0 0
    %5389 = vmatpush1.bf16.xpose.msra.mxu0 0
    %5390 = vmatprep.subr.bf16.mxu0 0
    %5391 = vmatpush1.bf16.xpose.msra.mxu0 0
    %5392 = vmatprep.subr.bf16.mxu0 0
    %5393 = vmatpush1.bf16.xpose.msra.mxu0 0
    %5394 = vmatprep.subr.bf16.mxu0 0
    %5395 = vmatpush1.bf16.xpose.msra.mxu0 0
    %5396 = vmatprep.subr.bf16.mxu0 0
    %5397 = vmatpush1.bf16.xpose.msra.mxu0 0
    %5398 = vmatprep.subr.bf16.mxu0 0
    %5399 = vmatpush1.bf16.xpose.msra.mxu0 %v5382
    %5400 = vmatprep.subr.bf16.mxu0 0
    %5401 = vmatpush2.bf16.xpose.msra.mxu0 0
    %5402 = vmatprep.subr.bf16.mxu0 0
    %5403 = vmatpush2.bf16.xpose.msra.mxu0 0
    %5404 = vmatprep.subr.bf16.mxu0 0
    %5405 = vmatpush2.bf16.xpose.msra.mxu0 0
    %5406 = vmatprep.subr.bf16.mxu0 0
    %5407 = vmatpush2.bf16.xpose.msra.mxu0 0
    %5408 = vmatprep.subr.bf16.mxu0 0
    %5409 = vmatpush2.bf16.xpose.msra.mxu0 0
    %5410 = vmatprep.subr.bf16.mxu0 0
    %5411 = vmatpush2.bf16.xpose.msra.mxu0 0
    %5412 = vmatprep.subr.bf16.mxu0 0
    %5413 = vmatpush2.bf16.xpose.msra.mxu0 0
    %5414 = vmatprep.subr.bf16.mxu0 0
    %5415 = vmatpush2.bf16.xpose.msra.mxu0 0
    %5416 = vmatprep.mubr.bf16.mxu0 0
    %5417 = vmatmul.mubr.bf16.gmra.mxu0 %v5379
    %v5418 = vpop.f32.mrf.mxu0
    %v5419 = vadd.f32 0.0, %v5418
    %v5420 = vpop.f32.mrf.mxu0
    %v5421 = vpop.f32.mrf.mxu0
    %v5422 = vpop.f32.mrf.mxu0
    %5423 = vdwg.mxu0
    %5424 = vrot.lane.b32.xlu0 %v4693, 104
    %v5425 = vpop.permute.xlu0 %5424
    %5426 = vrot.lane.b32.xlu0 %v4693, 72
    %v5427 = vpop.permute.xlu0 %5426
    %v5429 = vsel %vm786, %v5425, 0
    %v5432 = vsel %vm786, %v5427, 0
    %5434 = vmatprep.subr.bf16.mxu0 0
    %5435 = vmatpush1.bf16.xpose.msra.mxu0 0
    %5436 = vmatprep.subr.bf16.mxu0 0
    %5437 = vmatpush1.bf16.xpose.msra.mxu0 0
    %5438 = vmatprep.subr.bf16.mxu0 0
    %5439 = vmatpush1.bf16.xpose.msra.mxu0 0
    %5440 = vmatprep.subr.bf16.mxu0 0
    %5441 = vmatpush1.bf16.xpose.msra.mxu0 0
    %5442 = vmatprep.subr.bf16.mxu0 0
    %5443 = vmatpush1.bf16.xpose.msra.mxu0 0
    %5444 = vmatprep.subr.bf16.mxu0 0
    %5445 = vmatpush1.bf16.xpose.msra.mxu0 0
    %5446 = vmatprep.subr.bf16.mxu0 0
    %5447 = vmatpush1.bf16.xpose.msra.mxu0 0
    %5448 = vmatprep.subr.bf16.mxu0 0
    %5449 = vmatpush1.bf16.xpose.msra.mxu0 %v5432
    %5450 = vmatprep.subr.bf16.mxu0 0
    %5451 = vmatpush2.bf16.xpose.msra.mxu0 0
    %5452 = vmatprep.subr.bf16.mxu0 0
    %5453 = vmatpush2.bf16.xpose.msra.mxu0 0
    %5454 = vmatprep.subr.bf16.mxu0 0
    %5455 = vmatpush2.bf16.xpose.msra.mxu0 0
    %5456 = vmatprep.subr.bf16.mxu0 0
    %5457 = vmatpush2.bf16.xpose.msra.mxu0 0
    %5458 = vmatprep.subr.bf16.mxu0 0
    %5459 = vmatpush2.bf16.xpose.msra.mxu0 0
    %5460 = vmatprep.subr.bf16.mxu0 0
    %5461 = vmatpush2.bf16.xpose.msra.mxu0 0
    %5462 = vmatprep.subr.bf16.mxu0 0
    %5463 = vmatpush2.bf16.xpose.msra.mxu0 0
    %5464 = vmatprep.subr.bf16.mxu0 0
    %5465 = vmatpush2.bf16.xpose.msra.mxu0 0
    %5466 = vmatprep.mubr.bf16.mxu0 0
    %5467 = vmatmul.mubr.bf16.gmra.mxu0 %v5429
    %v5468 = vpop.f32.mrf.mxu0
    %v5469 = vadd.f32 0.0, %v5468
    %v5470 = vpop.f32.mrf.mxu0
    %v5471 = vpop.f32.mrf.mxu0
    %v5472 = vpop.f32.mrf.mxu0
    %5473 = vdwg.mxu0
    %v5474 = vsel %vm786, %v5419, -inf
    %5475 = vmax.xlane.f32.xlu0 %v5474
    %v5476 = vpop.xlane.xlu0 %5475
    %v5477 = vsel %vm786, %v5469, -inf
    %5478 = vmax.xlane.f32.xlu0 %v5477
    %v5479 = vpop.xlane.xlu0 %5478
    %v5480 = vsub.f32 %v5419, %v5476
    %v5481 = vsub.f32 %v5469, %v5479
    %v5482 = vmul.f32 %v5480, 1.442695
    %v5483 = vpow.pop %v5482
    %v5484 = vmul.f32 %v5481, 1.442695
    %v5485 = vpow.pop %v5484
    %v5486 = vsel %vm786, %v5483, 0.0
    %5487 = vadd.xlane.f32.xlu0 %v5486
    %v5488 = vpop.xlane.xlu0 %5487
    %v5489 = vsel %vm786, %v5485, 0.0
    %5490 = vadd.xlane.f32.xlu0 %v5489
    %v5491 = vpop.xlane.xlu0 %5490
    %v5492 = vrcp.pop %v5488
    %v5493 = vrcp.pop %v5491
    %v5494 = vmul.f32 %v5483, %v5492
    %v5495 = vmul.f32 %v5485, %v5493
    %v5496 = vpack.c.bf16 %v5494, %v5494
    %v5497 = vpack.c.bf16 %v5495, %v5495
    %5498 = vrot.lane.b32.xlu0 %v4692, 40
    %v5499 = vpop.permute.xlu0 %5498
    %v5501 = vsel %vm786, %v5496, 0
    %v5504 = vsel %vm911, %v5499, 0
    %5506 = vmatprep.subr.bf16.mxu0 0
    %5507 = vmatpush1.bf16.msra.mxu0 0
    %5508 = vmatprep.subr.bf16.mxu0 0
    %5509 = vmatpush1.bf16.msra.mxu0 0
    %5510 = vmatprep.subr.bf16.mxu0 0
    %5511 = vmatpush1.bf16.msra.mxu0 0
    %5512 = vmatprep.subr.bf16.mxu0 0
    %5513 = vmatpush1.bf16.msra.mxu0 0
    %5514 = vmatprep.subr.bf16.mxu0 0
    %5515 = vmatpush1.bf16.msra.mxu0 0
    %5516 = vmatprep.subr.bf16.mxu0 0
    %5517 = vmatpush1.bf16.msra.mxu0 0
    %5518 = vmatprep.subr.bf16.mxu0 0
    %5519 = vmatpush1.bf16.msra.mxu0 0
    %5520 = vmatprep.subr.bf16.mxu0 0
    %5521 = vmatpush1.bf16.msra.mxu0 %v5504
    %5522 = vmatprep.subr.bf16.mxu0 0
    %5523 = vmatpush2.bf16.msra.mxu0 0
    %5524 = vmatprep.subr.bf16.mxu0 0
    %5525 = vmatpush2.bf16.msra.mxu0 0
    %5526 = vmatprep.subr.bf16.mxu0 0
    %5527 = vmatpush2.bf16.msra.mxu0 0
    %5528 = vmatprep.subr.bf16.mxu0 0
    %5529 = vmatpush2.bf16.msra.mxu0 0
    %5530 = vmatprep.subr.bf16.mxu0 0
    %5531 = vmatpush2.bf16.msra.mxu0 0
    %5532 = vmatprep.subr.bf16.mxu0 0
    %5533 = vmatpush2.bf16.msra.mxu0 0
    %5534 = vmatprep.subr.bf16.mxu0 0
    %5535 = vmatpush2.bf16.msra.mxu0 0
    %5536 = vmatprep.subr.bf16.mxu0 0
    %5537 = vmatpush2.bf16.msra.mxu0 0
    %5538 = vmatprep.mubr.bf16.mxu0 0
    %5539 = vmatmul.mubr.bf16.gmra.mxu0 %v5501
    %v5540 = vpop.f32.mrf.mxu0
    %v5541 = vadd.f32 0.0, %v5540
    %v5542 = vpop.f32.mrf.mxu0
    %v5543 = vpop.f32.mrf.mxu0
    %v5544 = vpop.f32.mrf.mxu0
    %5545 = vdwg.mxu0
    %5546 = vrot.lane.b32.xlu0 %v4693, 40
    %v5547 = vpop.permute.xlu0 %5546
    %v5549 = vsel %vm786, %v5497, 0
    %v5552 = vsel %vm911, %v5547, 0
    %5554 = vmatprep.subr.bf16.mxu0 0
    %5555 = vmatpush1.bf16.msra.mxu0 0
    %5556 = vmatprep.subr.bf16.mxu0 0
    %5557 = vmatpush1.bf16.msra.mxu0 0
    %5558 = vmatprep.subr.bf16.mxu0 0
    %5559 = vmatpush1.bf16.msra.mxu0 0
    %5560 = vmatprep.subr.bf16.mxu0 0
    %5561 = vmatpush1.bf16.msra.mxu0 0
    %5562 = vmatprep.subr.bf16.mxu0 0
    %5563 = vmatpush1.bf16.msra.mxu0 0
    %5564 = vmatprep.subr.bf16.mxu0 0
    %5565 = vmatpush1.bf16.msra.mxu0 0
    %5566 = vmatprep.subr.bf16.mxu0 0
    %5567 = vmatpush1.bf16.msra.mxu0 0
    %5568 = vmatprep.subr.bf16.mxu0 0
    %5569 = vmatpush1.bf16.msra.mxu0 %v5552
    %5570 = vmatprep.subr.bf16.mxu0 0
    %5571 = vmatpush2.bf16.msra.mxu0 0
    %5572 = vmatprep.subr.bf16.mxu0 0
    %5573 = vmatpush2.bf16.msra.mxu0 0
    %5574 = vmatprep.subr.bf16.mxu0 0
    %5575 = vmatpush2.bf16.msra.mxu0 0
    %5576 = vmatprep.subr.bf16.mxu0 0
    %5577 = vmatpush2.bf16.msra.mxu0 0
    %5578 = vmatprep.subr.bf16.mxu0 0
    %5579 = vmatpush2.bf16.msra.mxu0 0
    %5580 = vmatprep.subr.bf16.mxu0 0
    %5581 = vmatpush2.bf16.msra.mxu0 0
    %5582 = vmatprep.subr.bf16.mxu0 0
    %5583 = vmatpush2.bf16.msra.mxu0 0
    %5584 = vmatprep.subr.bf16.mxu0 0
    %5585 = vmatpush2.bf16.msra.mxu0 0
    %5586 = vmatprep.mubr.bf16.mxu0 0
    %5587 = vmatmul.mubr.bf16.gmra.mxu0 %v5549
    %v5588 = vpop.f32.mrf.mxu0
    %v5589 = vadd.f32 0.0, %v5588
    %v5590 = vpop.f32.mrf.mxu0
    %v5591 = vpop.f32.mrf.mxu0
    %v5592 = vpop.f32.mrf.mxu0
    %5593 = vdwg.mxu0
    %5596 = vrot.lane.b32.xlu0 %v5541, 24
    %v5597 = vpop.permute.xlu0 %5596
    %5598 = vrot.lane.b32.xlu0 %v5589, 24
    %v5599 = vpop.permute.xlu0 %5598
    %5602 = vst.msk [vmem:[#allocation3] sm:$0xff] %vm1695, %v5597
    %5603 = vst.msk [vmem:[#allocation3 + $0x8] sm:$0xff] %vm1695, %v5599
    %v5604 = vld [vmem:[#allocation3] sm:$0xff]
    %v5605 = vld [vmem:[#allocation3 + $0x8] sm:$0xff]
    %v5606 = vpack.c.bf16 %v5605, %v5604
    %s5607 = scalar_lea.vmem %s8, 48
    %v5608 = vld [vmem:[%s5607] sm:$0xf]
    %v5609 = vld [vmem:[%s5607 + $0x4] sm:$0xf]
    %v5610 = vld [vmem:[%s5607 + $0x8] sm:$0xf]
    %v5611 = vld [vmem:[%s5607 + $0xc] sm:$0xf]
    %s5612 = scalar_lea.vmem %s9, 3
    %v5613 = vld [vmem:[%s5612] sm:$0x1]
    %v5615 = vlaneseq
    %v5616 = vshrl.u32 %v5615, 7
    %v5617 = vsub.s32 0, %v5616
    %v5618 = vrot.slane %v5613, %v5617
    %v5624 = vunpack.c.l.b16 %v5608
    %v5625 = vunpack.c.l.b16 %v5609
    %v5626 = vunpack.c.l.b16 %v5610
    %v5627 = vunpack.c.l.b16 %v5611
    %v5628 = vpack.c.b16 %v5625, %v5624
    %v5629 = vpack.c.b16 %v5627, %v5626
    %v5633 = vsel %vm487, %v5606, 0
    %5635 = vmatprep.subr.bf16.mxu0 0
    %5636 = vmatpush1.bf16.msra.mxu0 0
    %5637 = vmatprep.subr.bf16.mxu0 0
    %5638 = vmatpush1.bf16.msra.mxu0 0
    %5639 = vmatprep.subr.bf16.mxu0 0
    %5640 = vmatpush1.bf16.msra.mxu0 0
    %5641 = vmatprep.subr.bf16.mxu0 0
    %5642 = vmatpush1.bf16.msra.mxu0 0
    %5643 = vmatprep.subr.bf16.mxu0 0
    %5644 = vmatpush1.bf16.msra.mxu0 0
    %5645 = vmatprep.subr.bf16.mxu0 0
    %5646 = vmatpush1.bf16.msra.mxu0 0
    %5647 = vmatprep.subr.bf16.mxu0 0
    %5648 = vmatpush1.bf16.msra.mxu0 %v5629
    %5649 = vmatprep.subr.bf16.mxu0 0
    %5650 = vmatpush1.bf16.msra.mxu0 %v5628
    %5651 = vmatprep.subr.bf16.mxu0 0
    %5652 = vmatpush2.bf16.msra.mxu0 0
    %5653 = vmatprep.subr.bf16.mxu0 0
    %5654 = vmatpush2.bf16.msra.mxu0 0
    %5655 = vmatprep.subr.bf16.mxu0 0
    %5656 = vmatpush2.bf16.msra.mxu0 0
    %5657 = vmatprep.subr.bf16.mxu0 0
    %5658 = vmatpush2.bf16.msra.mxu0 0
    %5659 = vmatprep.subr.bf16.mxu0 0
    %5660 = vmatpush2.bf16.msra.mxu0 0
    %5661 = vmatprep.subr.bf16.mxu0 0
    %5662 = vmatpush2.bf16.msra.mxu0 0
    %5663 = vmatprep.subr.bf16.mxu0 0
    %5664 = vmatpush2.bf16.msra.mxu0 0
    %5665 = vmatprep.subr.bf16.mxu0 0
    %5666 = vmatpush2.bf16.msra.mxu0 0
    %5667 = vmatprep.mubr.bf16.mxu0 0
    %5668 = vmatmul.mubr.bf16.gmra.mxu0 %v5633
    %v5669 = vpop.f32.mrf.mxu0
    %v5670 = vadd.f32 %v5618, %v5669
    %v5671 = vpop.f32.mrf.mxu0
    %v5672 = vpop.f32.mrf.mxu0
    %v5673 = vadd.f32 %v5618, %v5672
    %v5674 = vpop.f32.mrf.mxu0
    %5675 = vdwg.mxu0
    %s5676 = scalar_lea.vmem %s10, 6
    %v5677 = vld [vmem:[%s5676] sm:$0x3]
    %v5678 = vadd.f32 %v4620, %v5670
    %v5679 = vadd.f32 %v4621, %v5673
    %v5680 = vsel %vm487, %v5678, 0.0
    %5681 = vadd.xlane.f32.xlu0 %v5680
    %v5682 = vpop.xlane.xlu0 %5681
    %v5683 = vsel %vm487, %v5679, 0.0
    %5684 = vadd.xlane.f32.xlu0 %v5683
    %v5685 = vpop.xlane.xlu0 %5684
    %v5686 = vmul.f32 %v5682, %v1777
    %v5687 = vmul.f32 %v5685, %v1777
    %v5688 = vsub.f32 %v5678, %v5686
    %v5689 = vsub.f32 %v5679, %v5687
    %v5690 = vmul.f32 %v5688, %v5688
    %v5691 = vmul.f32 %v5689, %v5689
    %v5692 = vsel %vm487, %v5690, 0.0
    %5693 = vadd.xlane.f32.xlu0 %v5692
    %v5694 = vpop.xlane.xlu0 %5693
    %v5695 = vsel %vm487, %v5691, 0.0
    %5696 = vadd.xlane.f32.xlu0 %v5695
    %v5697 = vpop.xlane.xlu0 %5696
    %v5698 = vmul.f32 %v5694, %v1777
    %v5699 = vmul.f32 %v5697, %v1777
    %v5700 = vadd.f32 %v5698, 1e-05
    %v5701 = vadd.f32 %v5699, 1e-05
    %v5702 = vrsqrt.pop %v5700
    %v5703 = vrsqrt.pop %v5701
    %v5704 = vmul.f32 %v5688, %v5702
    %v5705 = vmul.f32 %v5689, %v5703
    %v5706 = vlaneseq
    %v5707 = vshrl.u32 %v5706, 7
    %v5708 = vsub.s32 0, %v5707
    %v5709 = vrot.slane %v5677, %v5708
    %v5710 = vmul.f32 %v5704, %v5709
    %v5711 = vmul.f32 %v5705, %v5709
    %v5712 = vlaneseq
    %v5713 = vshrl.u32 %v5712, 7
    %v5714 = vsub.s32 1, %v5713
    %v5715 = vrot.slane %v5677, %v5714
    %v5716 = vadd.f32 %v5710, %v5715
    %v5717 = vadd.f32 %v5711, %v5715
    %v5718 = vpack.c.bf16 %v5717, %v5716
    %s5719 = scalar_lea.vmem %s11, 48
    %v5720 = vld [vmem:[%s5719] sm:$0xf]
    %v5721 = vld [vmem:[%s5719 + $0x4] sm:$0xf]
    %v5722 = vld [vmem:[%s5719 + $0x8] sm:$0xf]
    %v5723 = vld [vmem:[%s5719 + $0xc] sm:$0xf]
    %s5724 = scalar_lea.vmem %s12, 3
    %v5725 = vld [vmem:[%s5724] sm:$0x1]
    %v5727 = vlaneseq
    %v5728 = vshrl.u32 %v5727, 7
    %v5729 = vsub.s32 0, %v5728
    %v5730 = vrot.slane %v5725, %v5729
    %v5736 = vunpack.c.l.b16 %v5720
    %v5737 = vunpack.c.l.b16 %v5721
    %v5738 = vunpack.c.l.b16 %v5722
    %v5739 = vunpack.c.l.b16 %v5723
    %v5740 = vpack.c.b16 %v5737, %v5736
    %v5741 = vpack.c.b16 %v5739, %v5738
    %v5745 = vsel %vm487, %v5718, 0
    %5747 = vmatprep.subr.bf16.mxu0 0
    %5748 = vmatpush1.bf16.msra.mxu0 0
    %5749 = vmatprep.subr.bf16.mxu0 0
    %5750 = vmatpush1.bf16.msra.mxu0 0
    %5751 = vmatprep.subr.bf16.mxu0 0
    %5752 = vmatpush1.bf16.msra.mxu0 0
    %5753 = vmatprep.subr.bf16.mxu0 0
    %5754 = vmatpush1.bf16.msra.mxu0 0
    %5755 = vmatprep.subr.bf16.mxu0 0
    %5756 = vmatpush1.bf16.msra.mxu0 0
    %5757 = vmatprep.subr.bf16.mxu0 0
    %5758 = vmatpush1.bf16.msra.mxu0 0
    %5759 = vmatprep.subr.bf16.mxu0 0
    %5760 = vmatpush1.bf16.msra.mxu0 %v5741
    %5761 = vmatprep.subr.bf16.mxu0 0
    %5762 = vmatpush1.bf16.msra.mxu0 %v5740
    %5763 = vmatprep.subr.bf16.mxu0 0
    %5764 = vmatpush2.bf16.msra.mxu0 0
    %5765 = vmatprep.subr.bf16.mxu0 0
    %5766 = vmatpush2.bf16.msra.mxu0 0
    %5767 = vmatprep.subr.bf16.mxu0 0
    %5768 = vmatpush2.bf16.msra.mxu0 0
    %5769 = vmatprep.subr.bf16.mxu0 0
    %5770 = vmatpush2.bf16.msra.mxu0 0
    %5771 = vmatprep.subr.bf16.mxu0 0
    %5772 = vmatpush2.bf16.msra.mxu0 0
    %5773 = vmatprep.subr.bf16.mxu0 0
    %5774 = vmatpush2.bf16.msra.mxu0 0
    %5775 = vmatprep.subr.bf16.mxu0 0
    %5776 = vmatpush2.bf16.msra.mxu0 0
    %5777 = vmatprep.subr.bf16.mxu0 0
    %5778 = vmatpush2.bf16.msra.mxu0 0
    %5779 = vmatprep.mubr.bf16.mxu0 0
    %5780 = vmatmul.mubr.bf16.gmra.mxu0 %v5745
    %v5781 = vpop.f32.mrf.mxu0
    %v5782 = vadd.f32 %v5730, %v5781
    %v5783 = vpop.f32.mrf.mxu0
    %v5784 = vpop.f32.mrf.mxu0
    %v5785 = vadd.f32 %v5730, %v5784
    %v5786 = vpop.f32.mrf.mxu0
    %5787 = vdwg.mxu0
    %v5788 = vmul.f32 %v5782, 0.5
    %v5789 = vmul.f32 %v5785, 0.5
    %v5790 = vmul.f32 %v5782, 0.70710677
    %v5791 = vmul.f32 %v5785, 0.70710677
    %v5792 = verf.f32.pop %v5790
    %v5793 = verf.f32.pop %v5791
    %v5794 = vadd.f32 %v5792, 1.0
    %v5795 = vadd.f32 %v5793, 1.0
    %v5796 = vmul.f32 %v5788, %v5794
    %v5797 = vmul.f32 %v5789, %v5795
    %v5798 = vpack.c.bf16 %v5797, %v5796
    %s5799 = scalar_lea.vmem %s13, 96
    %v5800 = vld [vmem:[%s5799] sm:$0xf]
    %v5801 = vld [vmem:[%s5799 + $0x4] sm:$0xf]
    %v5802 = vld [vmem:[%s5799 + $0x8] sm:$0xf]
    %v5803 = vld [vmem:[%s5799 + $0xc] sm:$0xf]
    %v5804 = vld [vmem:[%s5799 + $0x10] sm:$0xf]
    %v5805 = vld [vmem:[%s5799 + $0x14] sm:$0xf]
    %v5806 = vld [vmem:[%s5799 + $0x18] sm:$0xf]
    %v5807 = vld [vmem:[%s5799 + $0x1c] sm:$0xf]
    %s5808 = scalar_lea.vmem %s14, 3
    %v5809 = vld [vmem:[%s5808] sm:$0x1]
    %v5811 = vlaneseq
    %v5812 = vshrl.u32 %v5811, 7
    %v5813 = vsub.s32 0, %v5812
    %v5814 = vrot.slane %v5809, %v5813
    %v5824 = vunpack.c.l.b16 %v5800
    %v5825 = vunpack.c.l.b16 %v5801
    %v5826 = vunpack.c.l.b16 %v5802
    %v5827 = vunpack.c.l.b16 %v5803
    %v5828 = vunpack.c.l.b16 %v5804
    %v5829 = vunpack.c.l.b16 %v5805
    %v5830 = vunpack.c.l.b16 %v5806
    %v5831 = vunpack.c.l.b16 %v5807
    %v5832 = vpack.c.b16 %v5825, %v5824
    %v5833 = vpack.c.b16 %v5827, %v5826
    %v5834 = vpack.c.b16 %v5829, %v5828
    %v5835 = vpack.c.b16 %v5831, %v5830
    %v5841 = vsel %vm1928, %v5798, 0
    %5843 = vmatprep.subr.bf16.mxu0 0
    %5844 = vmatpush1.bf16.msra.mxu0 0
    %5845 = vmatprep.subr.bf16.mxu0 0
    %5846 = vmatpush1.bf16.msra.mxu0 0
    %5847 = vmatprep.subr.bf16.mxu0 0
    %5848 = vmatpush1.bf16.msra.mxu0 0
    %5849 = vmatprep.subr.bf16.mxu0 0
    %5850 = vmatpush1.bf16.msra.mxu0 0
    %5851 = vmatprep.subr.bf16.mxu0 0
    %5852 = vmatpush1.bf16.msra.mxu0 %v5835
    %5853 = vmatprep.subr.bf16.mxu0 0
    %5854 = vmatpush1.bf16.msra.mxu0 %v5834
    %5855 = vmatprep.subr.bf16.mxu0 0
    %5856 = vmatpush1.bf16.msra.mxu0 %v5833
    %5857 = vmatprep.subr.bf16.mxu0 0
    %5858 = vmatpush1.bf16.msra.mxu0 %v5832
    %5859 = vmatprep.subr.bf16.mxu0 0
    %5860 = vmatpush2.bf16.msra.mxu0 0
    %5861 = vmatprep.subr.bf16.mxu0 0
    %5862 = vmatpush2.bf16.msra.mxu0 0
    %5863 = vmatprep.subr.bf16.mxu0 0
    %5864 = vmatpush2.bf16.msra.mxu0 0
    %5865 = vmatprep.subr.bf16.mxu0 0
    %5866 = vmatpush2.bf16.msra.mxu0 0
    %5867 = vmatprep.subr.bf16.mxu0 0
    %5868 = vmatpush2.bf16.msra.mxu0 0
    %5869 = vmatprep.subr.bf16.mxu0 0
    %5870 = vmatpush2.bf16.msra.mxu0 0
    %5871 = vmatprep.subr.bf16.mxu0 0
    %5872 = vmatpush2.bf16.msra.mxu0 0
    %5873 = vmatprep.subr.bf16.mxu0 0
    %5874 = vmatpush2.bf16.msra.mxu0 0
    %5875 = vmatprep.mubr.bf16.mxu0 0
    %5876 = vmatmul.mubr.bf16.gmra.mxu0 %v5841
    %v5877 = vpop.f32.mrf.mxu0
    %v5878 = vadd.f32 %v5814, %v5877
    %v5879 = vpop.f32.mrf.mxu0
    %v5880 = vpop.f32.mrf.mxu0
    %v5881 = vadd.f32 %v5814, %v5880
    %v5882 = vpop.f32.mrf.mxu0
    %5883 = vdwg.mxu0
    %s5884 = scalar_lea.vmem %s15, 6
    %v5885 = vld [vmem:[%s5884] sm:$0x3]
    %v5886 = vadd.f32 %v5716, %v5878
    %v5887 = vadd.f32 %v5717, %v5881
    %v5888 = vsel %vm487, %v5886, 0.0
    %5889 = vadd.xlane.f32.xlu0 %v5888
    %v5890 = vpop.xlane.xlu0 %5889
    %v5891 = vsel %vm487, %v5887, 0.0
    %5892 = vadd.xlane.f32.xlu0 %v5891
    %v5893 = vpop.xlane.xlu0 %5892
    %v5894 = vmul.f32 %v5890, %v1777
    %v5895 = vmul.f32 %v5893, %v1777
    %v5896 = vsub.f32 %v5886, %v5894
    %v5897 = vsub.f32 %v5887, %v5895
    %v5898 = vmul.f32 %v5896, %v5896
    %v5899 = vmul.f32 %v5897, %v5897
    %v5900 = vsel %vm487, %v5898, 0.0
    %5901 = vadd.xlane.f32.xlu0 %v5900
    %v5902 = vpop.xlane.xlu0 %5901
    %v5903 = vsel %vm487, %v5899, 0.0
    %5904 = vadd.xlane.f32.xlu0 %v5903
    %v5905 = vpop.xlane.xlu0 %5904
    %v5906 = vmul.f32 %v5902, %v1777
    %v5907 = vmul.f32 %v5905, %v1777
    %v5908 = vadd.f32 %v5906, 1e-05
    %v5909 = vadd.f32 %v5907, 1e-05
    %v5910 = vrsqrt.pop %v5908
    %v5911 = vrsqrt.pop %v5909
    %v5912 = vmul.f32 %v5896, %v5910
    %v5913 = vmul.f32 %v5897, %v5911
    %v5914 = vlaneseq
    %v5915 = vshrl.u32 %v5914, 7
    %v5916 = vsub.s32 0, %v5915
    %v5917 = vrot.slane %v5885, %v5916
    %v5918 = vmul.f32 %v5912, %v5917
    %v5919 = vmul.f32 %v5913, %v5917
    %v5920 = vlaneseq
    %v5921 = vshrl.u32 %v5920, 7
    %v5922 = vsub.s32 1, %v5921
    %v5923 = vrot.slane %v5885, %v5922
    %v5924 = vadd.f32 %v5918, %v5923
    %v5925 = vadd.f32 %v5919, %v5923
    %v5926 = vpack.c.bf16 %v5925, %v5924
    %s5927 = scalar_lea.vmem %s6, 64
    %v5928 = vld [vmem:[%s5927] sm:$0xf]
    %v5929 = vld [vmem:[%s5927 + $0x4] sm:$0xf]
    %v5930 = vld [vmem:[%s5927 + $0x8] sm:$0xf]
    %v5931 = vld [vmem:[%s5927 + $0xc] sm:$0xf]
    %s5932 = scalar_lea.vmem %s7, 4
    %v5933 = vld [vmem:[%s5932] sm:$0x1]
    %v5935 = vlaneseq
    %v5936 = vshrl.u32 %v5935, 7
    %v5937 = vsub.s32 0, %v5936
    %v5938 = vrot.slane %v5933, %v5937
    %v5944 = vunpack.c.l.b16 %v5928
    %v5945 = vunpack.c.l.b16 %v5929
    %v5946 = vunpack.c.l.b16 %v5930
    %v5947 = vunpack.c.l.b16 %v5931
    %v5948 = vpack.c.b16 %v5945, %v5944
    %v5949 = vpack.c.b16 %v5947, %v5946
    %v5953 = vsel %vm487, %v5926, 0
    %5955 = vmatprep.subr.bf16.mxu0 0
    %5956 = vmatpush1.bf16.msra.mxu0 0
    %5957 = vmatprep.subr.bf16.mxu0 0
    %5958 = vmatpush1.bf16.msra.mxu0 0
    %5959 = vmatprep.subr.bf16.mxu0 0
    %5960 = vmatpush1.bf16.msra.mxu0 0
    %5961 = vmatprep.subr.bf16.mxu0 0
    %5962 = vmatpush1.bf16.msra.mxu0 0
    %5963 = vmatprep.subr.bf16.mxu0 0
    %5964 = vmatpush1.bf16.msra.mxu0 0
    %5965 = vmatprep.subr.bf16.mxu0 0
    %5966 = vmatpush1.bf16.msra.mxu0 0
    %5967 = vmatprep.subr.bf16.mxu0 0
    %5968 = vmatpush1.bf16.msra.mxu0 %v5949
    %5969 = vmatprep.subr.bf16.mxu0 0
    %5970 = vmatpush1.bf16.msra.mxu0 %v5948
    %5971 = vmatprep.subr.bf16.mxu0 0
    %5972 = vmatpush2.bf16.msra.mxu0 0
    %5973 = vmatprep.subr.bf16.mxu0 0
    %5974 = vmatpush2.bf16.msra.mxu0 0
    %5975 = vmatprep.subr.bf16.mxu0 0
    %5976 = vmatpush2.bf16.msra.mxu0 0
    %5977 = vmatprep.subr.bf16.mxu0 0
    %5978 = vmatpush2.bf16.msra.mxu0 0
    %5979 = vmatprep.subr.bf16.mxu0 0
    %5980 = vmatpush2.bf16.msra.mxu0 0
    %5981 = vmatprep.subr.bf16.mxu0 0
    %5982 = vmatpush2.bf16.msra.mxu0 0
    %5983 = vmatprep.subr.bf16.mxu0 0
    %5984 = vmatpush2.bf16.msra.mxu0 0
    %5985 = vmatprep.subr.bf16.mxu0 0
    %5986 = vmatpush2.bf16.msra.mxu0 0
    %5987 = vmatprep.mubr.bf16.mxu0 0
    %5988 = vmatmul.mubr.bf16.gmra.mxu0 %v5953
    %v5989 = vpop.f32.mrf.mxu0
    %v5990 = vadd.f32 %v5938, %v5989
    %v5991 = vpop.f32.mrf.mxu0
    %v5992 = vpop.f32.mrf.mxu0
    %v5993 = vadd.f32 %v5938, %v5992
    %v5994 = vpop.f32.mrf.mxu0
    %5995 = vdwg.mxu0
    %v5996 = vpack.c.bf16 %v5990, %v5990
    %v5997 = vpack.c.bf16 %v5993, %v5993
    %5999 = vrot.lane.b32.xlu0 %v5996, 96
    %v6000 = vpop.permute.xlu0 %5999
    %v6002 = vsel %vm786, %v5996, 0
    %v6005 = vsel %vm786, %v6000, 0
    %6007 = vmatprep.subr.bf16.mxu0 0
    %6008 = vmatpush1.bf16.xpose.msra.mxu0 0
    %6009 = vmatprep.subr.bf16.mxu0 0
    %6010 = vmatpush1.bf16.xpose.msra.mxu0 0
    %6011 = vmatprep.subr.bf16.mxu0 0
    %6012 = vmatpush1.bf16.xpose.msra.mxu0 0
    %6013 = vmatprep.subr.bf16.mxu0 0
    %6014 = vmatpush1.bf16.xpose.msra.mxu0 0
    %6015 = vmatprep.subr.bf16.mxu0 0
    %6016 = vmatpush1.bf16.xpose.msra.mxu0 0
    %6017 = vmatprep.subr.bf16.mxu0 0
    %6018 = vmatpush1.bf16.xpose.msra.mxu0 0
    %6019 = vmatprep.subr.bf16.mxu0 0
    %6020 = vmatpush1.bf16.xpose.msra.mxu0 0
    %6021 = vmatprep.subr.bf16.mxu0 0
    %6022 = vmatpush1.bf16.xpose.msra.mxu0 %v6005
    %6023 = vmatprep.subr.bf16.mxu0 0
    %6024 = vmatpush2.bf16.xpose.msra.mxu0 0
    %6025 = vmatprep.subr.bf16.mxu0 0
    %6026 = vmatpush2.bf16.xpose.msra.mxu0 0
    %6027 = vmatprep.subr.bf16.mxu0 0
    %6028 = vmatpush2.bf16.xpose.msra.mxu0 0
    %6029 = vmatprep.subr.bf16.mxu0 0
    %6030 = vmatpush2.bf16.xpose.msra.mxu0 0
    %6031 = vmatprep.subr.bf16.mxu0 0
    %6032 = vmatpush2.bf16.xpose.msra.mxu0 0
    %6033 = vmatprep.subr.bf16.mxu0 0
    %6034 = vmatpush2.bf16.xpose.msra.mxu0 0
    %6035 = vmatprep.subr.bf16.mxu0 0
    %6036 = vmatpush2.bf16.xpose.msra.mxu0 0
    %6037 = vmatprep.subr.bf16.mxu0 0
    %6038 = vmatpush2.bf16.xpose.msra.mxu0 0
    %6039 = vmatprep.mubr.bf16.mxu0 0
    %6040 = vmatmul.mubr.bf16.gmra.mxu0 %v6002
    %v6041 = vpop.f32.mrf.mxu0
    %v6042 = vadd.f32 0.0, %v6041
    %v6043 = vpop.f32.mrf.mxu0
    %v6044 = vpop.f32.mrf.mxu0
    %v6045 = vpop.f32.mrf.mxu0
    %6046 = vdwg.mxu0
    %6048 = vrot.lane.b32.xlu0 %v5997, 96
    %v6049 = vpop.permute.xlu0 %6048
    %v6051 = vsel %vm786, %v5997, 0
    %v6054 = vsel %vm786, %v6049, 0
    %6056 = vmatprep.subr.bf16.mxu0 0
    %6057 = vmatpush1.bf16.xpose.msra.mxu0 0
    %6058 = vmatprep.subr.bf16.mxu0 0
    %6059 = vmatpush1.bf16.xpose.msra.mxu0 0
    %6060 = vmatprep.subr.bf16.mxu0 0
    %6061 = vmatpush1.bf16.xpose.msra.mxu0 0
    %6062 = vmatprep.subr.bf16.mxu0 0
    %6063 = vmatpush1.bf16.xpose.msra.mxu0 0
    %6064 = vmatprep.subr.bf16.mxu0 0
    %6065 = vmatpush1.bf16.xpose.msra.mxu0 0
    %6066 = vmatprep.subr.bf16.mxu0 0
    %6067 = vmatpush1.bf16.xpose.msra.mxu0 0
    %6068 = vmatprep.subr.bf16.mxu0 0
    %6069 = vmatpush1.bf16.xpose.msra.mxu0 0
    %6070 = vmatprep.subr.bf16.mxu0 0
    %6071 = vmatpush1.bf16.xpose.msra.mxu0 %v6054
    %6072 = vmatprep.subr.bf16.mxu0 0
    %6073 = vmatpush2.bf16.xpose.msra.mxu0 0
    %6074 = vmatprep.subr.bf16.mxu0 0
    %6075 = vmatpush2.bf16.xpose.msra.mxu0 0
    %6076 = vmatprep.subr.bf16.mxu0 0
    %6077 = vmatpush2.bf16.xpose.msra.mxu0 0
    %6078 = vmatprep.subr.bf16.mxu0 0
    %6079 = vmatpush2.bf16.xpose.msra.mxu0 0
    %6080 = vmatprep.subr.bf16.mxu0 0
    %6081 = vmatpush2.bf16.xpose.msra.mxu0 0
    %6082 = vmatprep.subr.bf16.mxu0 0
    %6083 = vmatpush2.bf16.xpose.msra.mxu0 0
    %6084 = vmatprep.subr.bf16.mxu0 0
    %6085 = vmatpush2.bf16.xpose.msra.mxu0 0
    %6086 = vmatprep.subr.bf16.mxu0 0
    %6087 = vmatpush2.bf16.xpose.msra.mxu0 0
    %6088 = vmatprep.mubr.bf16.mxu0 0
    %6089 = vmatmul.mubr.bf16.gmra.mxu0 %v6051
    %v6090 = vpop.f32.mrf.mxu0
    %v6091 = vadd.f32 0.0, %v6090
    %v6092 = vpop.f32.mrf.mxu0
    %v6093 = vpop.f32.mrf.mxu0
    %v6094 = vpop.f32.mrf.mxu0
    %6095 = vdwg.mxu0
    %v6096 = vsel %vm786, %v6042, -inf
    %6097 = vmax.xlane.f32.xlu0 %v6096
    %v6098 = vpop.xlane.xlu0 %6097
    %v6099 = vsel %vm786, %v6091, -inf
    %6100 = vmax.xlane.f32.xlu0 %v6099
    %v6101 = vpop.xlane.xlu0 %6100
    %v6102 = vsub.f32 %v6042, %v6098
    %v6103 = vsub.f32 %v6091, %v6101
    %v6104 = vmul.f32 %v6102, 1.442695
    %v6105 = vpow.pop %v6104
    %v6106 = vmul.f32 %v6103, 1.442695
    %v6107 = vpow.pop %v6106
    %v6108 = vsel %vm786, %v6105, 0.0
    %6109 = vadd.xlane.f32.xlu0 %v6108
    %v6110 = vpop.xlane.xlu0 %6109
    %v6111 = vsel %vm786, %v6107, 0.0
    %6112 = vadd.xlane.f32.xlu0 %v6111
    %v6113 = vpop.xlane.xlu0 %6112
    %v6114 = vrcp.pop %v6110
    %v6115 = vrcp.pop %v6113
    %v6116 = vmul.f32 %v6105, %v6114
    %v6117 = vmul.f32 %v6107, %v6115
    %v6118 = vpack.c.bf16 %v6116, %v6116
    %v6119 = vpack.c.bf16 %v6117, %v6117
    %6120 = vrot.lane.b32.xlu0 %v5996, 64
    %v6121 = vpop.permute.xlu0 %6120
    %v6123 = vsel %vm786, %v6118, 0
    %v6126 = vsel %vm911, %v6121, 0
    %6128 = vmatprep.subr.bf16.mxu0 0
    %6129 = vmatpush1.bf16.msra.mxu0 0
    %6130 = vmatprep.subr.bf16.mxu0 0
    %6131 = vmatpush1.bf16.msra.mxu0 0
    %6132 = vmatprep.subr.bf16.mxu0 0
    %6133 = vmatpush1.bf16.msra.mxu0 0
    %6134 = vmatprep.subr.bf16.mxu0 0
    %6135 = vmatpush1.bf16.msra.mxu0 0
    %6136 = vmatprep.subr.bf16.mxu0 0
    %6137 = vmatpush1.bf16.msra.mxu0 0
    %6138 = vmatprep.subr.bf16.mxu0 0
    %6139 = vmatpush1.bf16.msra.mxu0 0
    %6140 = vmatprep.subr.bf16.mxu0 0
    %6141 = vmatpush1.bf16.msra.mxu0 0
    %6142 = vmatprep.subr.bf16.mxu0 0
    %6143 = vmatpush1.bf16.msra.mxu0 %v6126
    %6144 = vmatprep.subr.bf16.mxu0 0
    %6145 = vmatpush2.bf16.msra.mxu0 0
    %6146 = vmatprep.subr.bf16.mxu0 0
    %6147 = vmatpush2.bf16.msra.mxu0 0
    %6148 = vmatprep.subr.bf16.mxu0 0
    %6149 = vmatpush2.bf16.msra.mxu0 0
    %6150 = vmatprep.subr.bf16.mxu0 0
    %6151 = vmatpush2.bf16.msra.mxu0 0
    %6152 = vmatprep.subr.bf16.mxu0 0
    %6153 = vmatpush2.bf16.msra.mxu0 0
    %6154 = vmatprep.subr.bf16.mxu0 0
    %6155 = vmatpush2.bf16.msra.mxu0 0
    %6156 = vmatprep.subr.bf16.mxu0 0
    %6157 = vmatpush2.bf16.msra.mxu0 0
    %6158 = vmatprep.subr.bf16.mxu0 0
    %6159 = vmatpush2.bf16.msra.mxu0 0
    %6160 = vmatprep.mubr.bf16.mxu0 0
    %6161 = vmatmul.mubr.bf16.gmra.mxu0 %v6123
    %v6162 = vpop.f32.mrf.mxu0
    %v6163 = vadd.f32 0.0, %v6162
    %v6164 = vpop.f32.mrf.mxu0
    %v6165 = vpop.f32.mrf.mxu0
    %v6166 = vpop.f32.mrf.mxu0
    %6167 = vdwg.mxu0
    %6168 = vrot.lane.b32.xlu0 %v5997, 64
    %v6169 = vpop.permute.xlu0 %6168
    %v6171 = vsel %vm786, %v6119, 0
    %v6174 = vsel %vm911, %v6169, 0
    %6176 = vmatprep.subr.bf16.mxu0 0
    %6177 = vmatpush1.bf16.msra.mxu0 0
    %6178 = vmatprep.subr.bf16.mxu0 0
    %6179 = vmatpush1.bf16.msra.mxu0 0
    %6180 = vmatprep.subr.bf16.mxu0 0
    %6181 = vmatpush1.bf16.msra.mxu0 0
    %6182 = vmatprep.subr.bf16.mxu0 0
    %6183 = vmatpush1.bf16.msra.mxu0 0
    %6184 = vmatprep.subr.bf16.mxu0 0
    %6185 = vmatpush1.bf16.msra.mxu0 0
    %6186 = vmatprep.subr.bf16.mxu0 0
    %6187 = vmatpush1.bf16.msra.mxu0 0
    %6188 = vmatprep.subr.bf16.mxu0 0
    %6189 = vmatpush1.bf16.msra.mxu0 0
    %6190 = vmatprep.subr.bf16.mxu0 0
    %6191 = vmatpush1.bf16.msra.mxu0 %v6174
    %6192 = vmatprep.subr.bf16.mxu0 0
    %6193 = vmatpush2.bf16.msra.mxu0 0
    %6194 = vmatprep.subr.bf16.mxu0 0
    %6195 = vmatpush2.bf16.msra.mxu0 0
    %6196 = vmatprep.subr.bf16.mxu0 0
    %6197 = vmatpush2.bf16.msra.mxu0 0
    %6198 = vmatprep.subr.bf16.mxu0 0
    %6199 = vmatpush2.bf16.msra.mxu0 0
    %6200 = vmatprep.subr.bf16.mxu0 0
    %6201 = vmatpush2.bf16.msra.mxu0 0
    %6202 = vmatprep.subr.bf16.mxu0 0
    %6203 = vmatpush2.bf16.msra.mxu0 0
    %6204 = vmatprep.subr.bf16.mxu0 0
    %6205 = vmatpush2.bf16.msra.mxu0 0
    %6206 = vmatprep.subr.bf16.mxu0 0
    %6207 = vmatpush2.bf16.msra.mxu0 0
    %6208 = vmatprep.mubr.bf16.mxu0 0
    %6209 = vmatmul.mubr.bf16.gmra.mxu0 %v6171
    %v6210 = vpop.f32.mrf.mxu0
    %v6211 = vadd.f32 0.0, %v6210
    %v6212 = vpop.f32.mrf.mxu0
    %v6213 = vpop.f32.mrf.mxu0
    %v6214 = vpop.f32.mrf.mxu0
    %6215 = vdwg.mxu0
    %6216 = vst.msk [vmem:[#allocation3] sm:$0xff] %vm786, %v6163
    %6217 = vst.msk [vmem:[#allocation3 + $0x8] sm:$0xff] %vm786, %v6211
    %6218 = vrot.lane.b32.xlu0 %v5996, 120
    %v6219 = vpop.permute.xlu0 %6218
    %6220 = vrot.lane.b32.xlu0 %v5996, 88
    %v6221 = vpop.permute.xlu0 %6220
    %v6223 = vsel %vm786, %v6219, 0
    %v6226 = vsel %vm786, %v6221, 0
    %6228 = vmatprep.subr.bf16.mxu0 0
    %6229 = vmatpush1.bf16.xpose.msra.mxu0 0
    %6230 = vmatprep.subr.bf16.mxu0 0
    %6231 = vmatpush1.bf16.xpose.msra.mxu0 0
    %6232 = vmatprep.subr.bf16.mxu0 0
    %6233 = vmatpush1.bf16.xpose.msra.mxu0 0
    %6234 = vmatprep.subr.bf16.mxu0 0
    %6235 = vmatpush1.bf16.xpose.msra.mxu0 0
    %6236 = vmatprep.subr.bf16.mxu0 0
    %6237 = vmatpush1.bf16.xpose.msra.mxu0 0
    %6238 = vmatprep.subr.bf16.mxu0 0
    %6239 = vmatpush1.bf16.xpose.msra.mxu0 0
    %6240 = vmatprep.subr.bf16.mxu0 0
    %6241 = vmatpush1.bf16.xpose.msra.mxu0 0
    %6242 = vmatprep.subr.bf16.mxu0 0
    %6243 = vmatpush1.bf16.xpose.msra.mxu0 %v6226
    %6244 = vmatprep.subr.bf16.mxu0 0
    %6245 = vmatpush2.bf16.xpose.msra.mxu0 0
    %6246 = vmatprep.subr.bf16.mxu0 0
    %6247 = vmatpush2.bf16.xpose.msra.mxu0 0
    %6248 = vmatprep.subr.bf16.mxu0 0
    %6249 = vmatpush2.bf16.xpose.msra.mxu0 0
    %6250 = vmatprep.subr.bf16.mxu0 0
    %6251 = vmatpush2.bf16.xpose.msra.mxu0 0
    %6252 = vmatprep.subr.bf16.mxu0 0
    %6253 = vmatpush2.bf16.xpose.msra.mxu0 0
    %6254 = vmatprep.subr.bf16.mxu0 0
    %6255 = vmatpush2.bf16.xpose.msra.mxu0 0
    %6256 = vmatprep.subr.bf16.mxu0 0
    %6257 = vmatpush2.bf16.xpose.msra.mxu0 0
    %6258 = vmatprep.subr.bf16.mxu0 0
    %6259 = vmatpush2.bf16.xpose.msra.mxu0 0
    %6260 = vmatprep.mubr.bf16.mxu0 0
    %6261 = vmatmul.mubr.bf16.gmra.mxu0 %v6223
    %v6262 = vpop.f32.mrf.mxu0
    %v6263 = vadd.f32 0.0, %v6262
    %v6264 = vpop.f32.mrf.mxu0
    %v6265 = vpop.f32.mrf.mxu0
    %v6266 = vpop.f32.mrf.mxu0
    %6267 = vdwg.mxu0
    %6268 = vrot.lane.b32.xlu0 %v5997, 120
    %v6269 = vpop.permute.xlu0 %6268
    %6270 = vrot.lane.b32.xlu0 %v5997, 88
    %v6271 = vpop.permute.xlu0 %6270
    %v6273 = vsel %vm786, %v6269, 0
    %v6276 = vsel %vm786, %v6271, 0
    %6278 = vmatprep.subr.bf16.mxu0 0
    %6279 = vmatpush1.bf16.xpose.msra.mxu0 0
    %6280 = vmatprep.subr.bf16.mxu0 0
    %6281 = vmatpush1.bf16.xpose.msra.mxu0 0
    %6282 = vmatprep.subr.bf16.mxu0 0
    %6283 = vmatpush1.bf16.xpose.msra.mxu0 0
    %6284 = vmatprep.subr.bf16.mxu0 0
    %6285 = vmatpush1.bf16.xpose.msra.mxu0 0
    %6286 = vmatprep.subr.bf16.mxu0 0
    %6287 = vmatpush1.bf16.xpose.msra.mxu0 0
    %6288 = vmatprep.subr.bf16.mxu0 0
    %6289 = vmatpush1.bf16.xpose.msra.mxu0 0
    %6290 = vmatprep.subr.bf16.mxu0 0
    %6291 = vmatpush1.bf16.xpose.msra.mxu0 0
    %6292 = vmatprep.subr.bf16.mxu0 0
    %6293 = vmatpush1.bf16.xpose.msra.mxu0 %v6276
    %6294 = vmatprep.subr.bf16.mxu0 0
    %6295 = vmatpush2.bf16.xpose.msra.mxu0 0
    %6296 = vmatprep.subr.bf16.mxu0 0
    %6297 = vmatpush2.bf16.xpose.msra.mxu0 0
    %6298 = vmatprep.subr.bf16.mxu0 0
    %6299 = vmatpush2.bf16.xpose.msra.mxu0 0
    %6300 = vmatprep.subr.bf16.mxu0 0
    %6301 = vmatpush2.bf16.xpose.msra.mxu0 0
    %6302 = vmatprep.subr.bf16.mxu0 0
    %6303 = vmatpush2.bf16.xpose.msra.mxu0 0
    %6304 = vmatprep.subr.bf16.mxu0 0
    %6305 = vmatpush2.bf16.xpose.msra.mxu0 0
    %6306 = vmatprep.subr.bf16.mxu0 0
    %6307 = vmatpush2.bf16.xpose.msra.mxu0 0
    %6308 = vmatprep.subr.bf16.mxu0 0
    %6309 = vmatpush2.bf16.xpose.msra.mxu0 0
    %6310 = vmatprep.mubr.bf16.mxu0 0
    %6311 = vmatmul.mubr.bf16.gmra.mxu0 %v6273
    %v6312 = vpop.f32.mrf.mxu0
    %v6313 = vadd.f32 0.0, %v6312
    %v6314 = vpop.f32.mrf.mxu0
    %v6315 = vpop.f32.mrf.mxu0
    %v6316 = vpop.f32.mrf.mxu0
    %6317 = vdwg.mxu0
    %v6318 = vsel %vm786, %v6263, -inf
    %6319 = vmax.xlane.f32.xlu0 %v6318
    %v6320 = vpop.xlane.xlu0 %6319
    %v6321 = vsel %vm786, %v6313, -inf
    %6322 = vmax.xlane.f32.xlu0 %v6321
    %v6323 = vpop.xlane.xlu0 %6322
    %v6324 = vsub.f32 %v6263, %v6320
    %v6325 = vsub.f32 %v6313, %v6323
    %v6326 = vmul.f32 %v6324, 1.442695
    %v6327 = vpow.pop %v6326
    %v6328 = vmul.f32 %v6325, 1.442695
    %v6329 = vpow.pop %v6328
    %v6330 = vsel %vm786, %v6327, 0.0
    %6331 = vadd.xlane.f32.xlu0 %v6330
    %v6332 = vpop.xlane.xlu0 %6331
    %v6333 = vsel %vm786, %v6329, 0.0
    %6334 = vadd.xlane.f32.xlu0 %v6333
    %v6335 = vpop.xlane.xlu0 %6334
    %v6336 = vrcp.pop %v6332
    %v6337 = vrcp.pop %v6335
    %v6338 = vmul.f32 %v6327, %v6336
    %v6339 = vmul.f32 %v6329, %v6337
    %v6340 = vpack.c.bf16 %v6338, %v6338
    %v6341 = vpack.c.bf16 %v6339, %v6339
    %6342 = vrot.lane.b32.xlu0 %v5996, 56
    %v6343 = vpop.permute.xlu0 %6342
    %v6345 = vsel %vm786, %v6340, 0
    %v6348 = vsel %vm911, %v6343, 0
    %6350 = vmatprep.subr.bf16.mxu0 0
    %6351 = vmatpush1.bf16.msra.mxu0 0
    %6352 = vmatprep.subr.bf16.mxu0 0
    %6353 = vmatpush1.bf16.msra.mxu0 0
    %6354 = vmatprep.subr.bf16.mxu0 0
    %6355 = vmatpush1.bf16.msra.mxu0 0
    %6356 = vmatprep.subr.bf16.mxu0 0
    %6357 = vmatpush1.bf16.msra.mxu0 0
    %6358 = vmatprep.subr.bf16.mxu0 0
    %6359 = vmatpush1.bf16.msra.mxu0 0
    %6360 = vmatprep.subr.bf16.mxu0 0
    %6361 = vmatpush1.bf16.msra.mxu0 0
    %6362 = vmatprep.subr.bf16.mxu0 0
    %6363 = vmatpush1.bf16.msra.mxu0 0
    %6364 = vmatprep.subr.bf16.mxu0 0
    %6365 = vmatpush1.bf16.msra.mxu0 %v6348
    %6366 = vmatprep.subr.bf16.mxu0 0
    %6367 = vmatpush2.bf16.msra.mxu0 0
    %6368 = vmatprep.subr.bf16.mxu0 0
    %6369 = vmatpush2.bf16.msra.mxu0 0
    %6370 = vmatprep.subr.bf16.mxu0 0
    %6371 = vmatpush2.bf16.msra.mxu0 0
    %6372 = vmatprep.subr.bf16.mxu0 0
    %6373 = vmatpush2.bf16.msra.mxu0 0
    %6374 = vmatprep.subr.bf16.mxu0 0
    %6375 = vmatpush2.bf16.msra.mxu0 0
    %6376 = vmatprep.subr.bf16.mxu0 0
    %6377 = vmatpush2.bf16.msra.mxu0 0
    %6378 = vmatprep.subr.bf16.mxu0 0
    %6379 = vmatpush2.bf16.msra.mxu0 0
    %6380 = vmatprep.subr.bf16.mxu0 0
    %6381 = vmatpush2.bf16.msra.mxu0 0
    %6382 = vmatprep.mubr.bf16.mxu0 0
    %6383 = vmatmul.mubr.bf16.gmra.mxu0 %v6345
    %v6384 = vpop.f32.mrf.mxu0
    %v6385 = vadd.f32 0.0, %v6384
    %v6386 = vpop.f32.mrf.mxu0
    %v6387 = vpop.f32.mrf.mxu0
    %v6388 = vpop.f32.mrf.mxu0
    %6389 = vdwg.mxu0
    %6390 = vrot.lane.b32.xlu0 %v5997, 56
    %v6391 = vpop.permute.xlu0 %6390
    %v6393 = vsel %vm786, %v6341, 0
    %v6396 = vsel %vm911, %v6391, 0
    %6398 = vmatprep.subr.bf16.mxu0 0
    %6399 = vmatpush1.bf16.msra.mxu0 0
    %6400 = vmatprep.subr.bf16.mxu0 0
    %6401 = vmatpush1.bf16.msra.mxu0 0
    %6402 = vmatprep.subr.bf16.mxu0 0
    %6403 = vmatpush1.bf16.msra.mxu0 0
    %6404 = vmatprep.subr.bf16.mxu0 0
    %6405 = vmatpush1.bf16.msra.mxu0 0
    %6406 = vmatprep.subr.bf16.mxu0 0
    %6407 = vmatpush1.bf16.msra.mxu0 0
    %6408 = vmatprep.subr.bf16.mxu0 0
    %6409 = vmatpush1.bf16.msra.mxu0 0
    %6410 = vmatprep.subr.bf16.mxu0 0
    %6411 = vmatpush1.bf16.msra.mxu0 0
    %6412 = vmatprep.subr.bf16.mxu0 0
    %6413 = vmatpush1.bf16.msra.mxu0 %v6396
    %6414 = vmatprep.subr.bf16.mxu0 0
    %6415 = vmatpush2.bf16.msra.mxu0 0
    %6416 = vmatprep.subr.bf16.mxu0 0
    %6417 = vmatpush2.bf16.msra.mxu0 0
    %6418 = vmatprep.subr.bf16.mxu0 0
    %6419 = vmatpush2.bf16.msra.mxu0 0
    %6420 = vmatprep.subr.bf16.mxu0 0
    %6421 = vmatpush2.bf16.msra.mxu0 0
    %6422 = vmatprep.subr.bf16.mxu0 0
    %6423 = vmatpush2.bf16.msra.mxu0 0
    %6424 = vmatprep.subr.bf16.mxu0 0
    %6425 = vmatpush2.bf16.msra.mxu0 0
    %6426 = vmatprep.subr.bf16.mxu0 0
    %6427 = vmatpush2.bf16.msra.mxu0 0
    %6428 = vmatprep.subr.bf16.mxu0 0
    %6429 = vmatpush2.bf16.msra.mxu0 0
    %6430 = vmatprep.mubr.bf16.mxu0 0
    %6431 = vmatmul.mubr.bf16.gmra.mxu0 %v6393
    %v6432 = vpop.f32.mrf.mxu0
    %v6433 = vadd.f32 0.0, %v6432
    %v6434 = vpop.f32.mrf.mxu0
    %v6435 = vpop.f32.mrf.mxu0
    %v6436 = vpop.f32.mrf.mxu0
    %6437 = vdwg.mxu0
    %6440 = vrot.lane.b32.xlu0 %v6385, 8
    %v6441 = vpop.permute.xlu0 %6440
    %6442 = vrot.lane.b32.xlu0 %v6433, 8
    %v6443 = vpop.permute.xlu0 %6442
    %6446 = vst.msk [vmem:[#allocation3] sm:$0xff] %vm1233, %v6441
    %6447 = vst.msk [vmem:[#allocation3 + $0x8] sm:$0xff] %vm1233, %v6443
    %6448 = vrot.lane.b32.xlu0 %v5996, 112
    %v6449 = vpop.permute.xlu0 %6448
    %6450 = vrot.lane.b32.xlu0 %v5996, 80
    %v6451 = vpop.permute.xlu0 %6450
    %v6453 = vsel %vm786, %v6449, 0
    %v6456 = vsel %vm786, %v6451, 0
    %6458 = vmatprep.subr.bf16.mxu0 0
    %6459 = vmatpush1.bf16.xpose.msra.mxu0 0
    %6460 = vmatprep.subr.bf16.mxu0 0
    %6461 = vmatpush1.bf16.xpose.msra.mxu0 0
    %6462 = vmatprep.subr.bf16.mxu0 0
    %6463 = vmatpush1.bf16.xpose.msra.mxu0 0
    %6464 = vmatprep.subr.bf16.mxu0 0
    %6465 = vmatpush1.bf16.xpose.msra.mxu0 0
    %6466 = vmatprep.subr.bf16.mxu0 0
    %6467 = vmatpush1.bf16.xpose.msra.mxu0 0
    %6468 = vmatprep.subr.bf16.mxu0 0
    %6469 = vmatpush1.bf16.xpose.msra.mxu0 0
    %6470 = vmatprep.subr.bf16.mxu0 0
    %6471 = vmatpush1.bf16.xpose.msra.mxu0 0
    %6472 = vmatprep.subr.bf16.mxu0 0
    %6473 = vmatpush1.bf16.xpose.msra.mxu0 %v6456
    %6474 = vmatprep.subr.bf16.mxu0 0
    %6475 = vmatpush2.bf16.xpose.msra.mxu0 0
    %6476 = vmatprep.subr.bf16.mxu0 0
    %6477 = vmatpush2.bf16.xpose.msra.mxu0 0
    %6478 = vmatprep.subr.bf16.mxu0 0
    %6479 = vmatpush2.bf16.xpose.msra.mxu0 0
    %6480 = vmatprep.subr.bf16.mxu0 0
    %6481 = vmatpush2.bf16.xpose.msra.mxu0 0
    %6482 = vmatprep.subr.bf16.mxu0 0
    %6483 = vmatpush2.bf16.xpose.msra.mxu0 0
    %6484 = vmatprep.subr.bf16.mxu0 0
    %6485 = vmatpush2.bf16.xpose.msra.mxu0 0
    %6486 = vmatprep.subr.bf16.mxu0 0
    %6487 = vmatpush2.bf16.xpose.msra.mxu0 0
    %6488 = vmatprep.subr.bf16.mxu0 0
    %6489 = vmatpush2.bf16.xpose.msra.mxu0 0
    %6490 = vmatprep.mubr.bf16.mxu0 0
    %6491 = vmatmul.mubr.bf16.gmra.mxu0 %v6453
    %v6492 = vpop.f32.mrf.mxu0
    %v6493 = vadd.f32 0.0, %v6492
    %v6494 = vpop.f32.mrf.mxu0
    %v6495 = vpop.f32.mrf.mxu0
    %v6496 = vpop.f32.mrf.mxu0
    %6497 = vdwg.mxu0
    %6498 = vrot.lane.b32.xlu0 %v5997, 112
    %v6499 = vpop.permute.xlu0 %6498
    %6500 = vrot.lane.b32.xlu0 %v5997, 80
    %v6501 = vpop.permute.xlu0 %6500
    %v6503 = vsel %vm786, %v6499, 0
    %v6506 = vsel %vm786, %v6501, 0
    %6508 = vmatprep.subr.bf16.mxu0 0
    %6509 = vmatpush1.bf16.xpose.msra.mxu0 0
    %6510 = vmatprep.subr.bf16.mxu0 0
    %6511 = vmatpush1.bf16.xpose.msra.mxu0 0
    %6512 = vmatprep.subr.bf16.mxu0 0
    %6513 = vmatpush1.bf16.xpose.msra.mxu0 0
    %6514 = vmatprep.subr.bf16.mxu0 0
    %6515 = vmatpush1.bf16.xpose.msra.mxu0 0
    %6516 = vmatprep.subr.bf16.mxu0 0
    %6517 = vmatpush1.bf16.xpose.msra.mxu0 0
    %6518 = vmatprep.subr.bf16.mxu0 0
    %6519 = vmatpush1.bf16.xpose.msra.mxu0 0
    %6520 = vmatprep.subr.bf16.mxu0 0
    %6521 = vmatpush1.bf16.xpose.msra.mxu0 0
    %6522 = vmatprep.subr.bf16.mxu0 0
    %6523 = vmatpush1.bf16.xpose.msra.mxu0 %v6506
    %6524 = vmatprep.subr.bf16.mxu0 0
    %6525 = vmatpush2.bf16.xpose.msra.mxu0 0
    %6526 = vmatprep.subr.bf16.mxu0 0
    %6527 = vmatpush2.bf16.xpose.msra.mxu0 0
    %6528 = vmatprep.subr.bf16.mxu0 0
    %6529 = vmatpush2.bf16.xpose.msra.mxu0 0
    %6530 = vmatprep.subr.bf16.mxu0 0
    %6531 = vmatpush2.bf16.xpose.msra.mxu0 0
    %6532 = vmatprep.subr.bf16.mxu0 0
    %6533 = vmatpush2.bf16.xpose.msra.mxu0 0
    %6534 = vmatprep.subr.bf16.mxu0 0
    %6535 = vmatpush2.bf16.xpose.msra.mxu0 0
    %6536 = vmatprep.subr.bf16.mxu0 0
    %6537 = vmatpush2.bf16.xpose.msra.mxu0 0
    %6538 = vmatprep.subr.bf16.mxu0 0
    %6539 = vmatpush2.bf16.xpose.msra.mxu0 0
    %6540 = vmatprep.mubr.bf16.mxu0 0
    %6541 = vmatmul.mubr.bf16.gmra.mxu0 %v6503
    %v6542 = vpop.f32.mrf.mxu0
    %v6543 = vadd.f32 0.0, %v6542
    %v6544 = vpop.f32.mrf.mxu0
    %v6545 = vpop.f32.mrf.mxu0
    %v6546 = vpop.f32.mrf.mxu0
    %6547 = vdwg.mxu0
    %v6548 = vsel %vm786, %v6493, -inf
    %6549 = vmax.xlane.f32.xlu0 %v6548
    %v6550 = vpop.xlane.xlu0 %6549
    %v6551 = vsel %vm786, %v6543, -inf
    %6552 = vmax.xlane.f32.xlu0 %v6551
    %v6553 = vpop.xlane.xlu0 %6552
    %v6554 = vsub.f32 %v6493, %v6550
    %v6555 = vsub.f32 %v6543, %v6553
    %v6556 = vmul.f32 %v6554, 1.442695
    %v6557 = vpow.pop %v6556
    %v6558 = vmul.f32 %v6555, 1.442695
    %v6559 = vpow.pop %v6558
    %v6560 = vsel %vm786, %v6557, 0.0
    %6561 = vadd.xlane.f32.xlu0 %v6560
    %v6562 = vpop.xlane.xlu0 %6561
    %v6563 = vsel %vm786, %v6559, 0.0
    %6564 = vadd.xlane.f32.xlu0 %v6563
    %v6565 = vpop.xlane.xlu0 %6564
    %v6566 = vrcp.pop %v6562
    %v6567 = vrcp.pop %v6565
    %v6568 = vmul.f32 %v6557, %v6566
    %v6569 = vmul.f32 %v6559, %v6567
    %v6570 = vpack.c.bf16 %v6568, %v6568
    %v6571 = vpack.c.bf16 %v6569, %v6569
    %6572 = vrot.lane.b32.xlu0 %v5996, 48
    %v6573 = vpop.permute.xlu0 %6572
    %v6575 = vsel %vm786, %v6570, 0
    %v6578 = vsel %vm911, %v6573, 0
    %6580 = vmatprep.subr.bf16.mxu0 0
    %6581 = vmatpush1.bf16.msra.mxu0 0
    %6582 = vmatprep.subr.bf16.mxu0 0
    %6583 = vmatpush1.bf16.msra.mxu0 0
    %6584 = vmatprep.subr.bf16.mxu0 0
    %6585 = vmatpush1.bf16.msra.mxu0 0
    %6586 = vmatprep.subr.bf16.mxu0 0
    %6587 = vmatpush1.bf16.msra.mxu0 0
    %6588 = vmatprep.subr.bf16.mxu0 0
    %6589 = vmatpush1.bf16.msra.mxu0 0
    %6590 = vmatprep.subr.bf16.mxu0 0
    %6591 = vmatpush1.bf16.msra.mxu0 0
    %6592 = vmatprep.subr.bf16.mxu0 0
    %6593 = vmatpush1.bf16.msra.mxu0 0
    %6594 = vmatprep.subr.bf16.mxu0 0
    %6595 = vmatpush1.bf16.msra.mxu0 %v6578
    %6596 = vmatprep.subr.bf16.mxu0 0
    %6597 = vmatpush2.bf16.msra.mxu0 0
    %6598 = vmatprep.subr.bf16.mxu0 0
    %6599 = vmatpush2.bf16.msra.mxu0 0
    %6600 = vmatprep.subr.bf16.mxu0 0
    %6601 = vmatpush2.bf16.msra.mxu0 0
    %6602 = vmatprep.subr.bf16.mxu0 0
    %6603 = vmatpush2.bf16.msra.mxu0 0
    %6604 = vmatprep.subr.bf16.mxu0 0
    %6605 = vmatpush2.bf16.msra.mxu0 0
    %6606 = vmatprep.subr.bf16.mxu0 0
    %6607 = vmatpush2.bf16.msra.mxu0 0
    %6608 = vmatprep.subr.bf16.mxu0 0
    %6609 = vmatpush2.bf16.msra.mxu0 0
    %6610 = vmatprep.subr.bf16.mxu0 0
    %6611 = vmatpush2.bf16.msra.mxu0 0
    %6612 = vmatprep.mubr.bf16.mxu0 0
    %6613 = vmatmul.mubr.bf16.gmra.mxu0 %v6575
    %v6614 = vpop.f32.mrf.mxu0
    %v6615 = vadd.f32 0.0, %v6614
    %v6616 = vpop.f32.mrf.mxu0
    %v6617 = vpop.f32.mrf.mxu0
    %v6618 = vpop.f32.mrf.mxu0
    %6619 = vdwg.mxu0
    %6620 = vrot.lane.b32.xlu0 %v5997, 48
    %v6621 = vpop.permute.xlu0 %6620
    %v6623 = vsel %vm786, %v6571, 0
    %v6626 = vsel %vm911, %v6621, 0
    %6628 = vmatprep.subr.bf16.mxu0 0
    %6629 = vmatpush1.bf16.msra.mxu0 0
    %6630 = vmatprep.subr.bf16.mxu0 0
    %6631 = vmatpush1.bf16.msra.mxu0 0
    %6632 = vmatprep.subr.bf16.mxu0 0
    %6633 = vmatpush1.bf16.msra.mxu0 0
    %6634 = vmatprep.subr.bf16.mxu0 0
    %6635 = vmatpush1.bf16.msra.mxu0 0
    %6636 = vmatprep.subr.bf16.mxu0 0
    %6637 = vmatpush1.bf16.msra.mxu0 0
    %6638 = vmatprep.subr.bf16.mxu0 0
    %6639 = vmatpush1.bf16.msra.mxu0 0
    %6640 = vmatprep.subr.bf16.mxu0 0
    %6641 = vmatpush1.bf16.msra.mxu0 0
    %6642 = vmatprep.subr.bf16.mxu0 0
    %6643 = vmatpush1.bf16.msra.mxu0 %v6626
    %6644 = vmatprep.subr.bf16.mxu0 0
    %6645 = vmatpush2.bf16.msra.mxu0 0
    %6646 = vmatprep.subr.bf16.mxu0 0
    %6647 = vmatpush2.bf16.msra.mxu0 0
    %6648 = vmatprep.subr.bf16.mxu0 0
    %6649 = vmatpush2.bf16.msra.mxu0 0
    %6650 = vmatprep.subr.bf16.mxu0 0
    %6651 = vmatpush2.bf16.msra.mxu0 0
    %6652 = vmatprep.subr.bf16.mxu0 0
    %6653 = vmatpush2.bf16.msra.mxu0 0
    %6654 = vmatprep.subr.bf16.mxu0 0
    %6655 = vmatpush2.bf16.msra.mxu0 0
    %6656 = vmatprep.subr.bf16.mxu0 0
    %6657 = vmatpush2.bf16.msra.mxu0 0
    %6658 = vmatprep.subr.bf16.mxu0 0
    %6659 = vmatpush2.bf16.msra.mxu0 0
    %6660 = vmatprep.mubr.bf16.mxu0 0
    %6661 = vmatmul.mubr.bf16.gmra.mxu0 %v6623
    %v6662 = vpop.f32.mrf.mxu0
    %v6663 = vadd.f32 0.0, %v6662
    %v6664 = vpop.f32.mrf.mxu0
    %v6665 = vpop.f32.mrf.mxu0
    %v6666 = vpop.f32.mrf.mxu0
    %6667 = vdwg.mxu0
    %6670 = vrot.lane.b32.xlu0 %v6615, 16
    %v6671 = vpop.permute.xlu0 %6670
    %6672 = vrot.lane.b32.xlu0 %v6663, 16
    %v6673 = vpop.permute.xlu0 %6672
    %6676 = vst.msk [vmem:[#allocation3] sm:$0xff] %vm1464, %v6671
    %6677 = vst.msk [vmem:[#allocation3 + $0x8] sm:$0xff] %vm1464, %v6673
    %6678 = vrot.lane.b32.xlu0 %v5996, 104
    %v6679 = vpop.permute.xlu0 %6678
    %6680 = vrot.lane.b32.xlu0 %v5996, 72
    %v6681 = vpop.permute.xlu0 %6680
    %v6683 = vsel %vm786, %v6679, 0
    %v6686 = vsel %vm786, %v6681, 0
    %6688 = vmatprep.subr.bf16.mxu0 0
    %6689 = vmatpush1.bf16.xpose.msra.mxu0 0
    %6690 = vmatprep.subr.bf16.mxu0 0
    %6691 = vmatpush1.bf16.xpose.msra.mxu0 0
    %6692 = vmatprep.subr.bf16.mxu0 0
    %6693 = vmatpush1.bf16.xpose.msra.mxu0 0
    %6694 = vmatprep.subr.bf16.mxu0 0
    %6695 = vmatpush1.bf16.xpose.msra.mxu0 0
    %6696 = vmatprep.subr.bf16.mxu0 0
    %6697 = vmatpush1.bf16.xpose.msra.mxu0 0
    %6698 = vmatprep.subr.bf16.mxu0 0
    %6699 = vmatpush1.bf16.xpose.msra.mxu0 0
    %6700 = vmatprep.subr.bf16.mxu0 0
    %6701 = vmatpush1.bf16.xpose.msra.mxu0 0
    %6702 = vmatprep.subr.bf16.mxu0 0
    %6703 = vmatpush1.bf16.xpose.msra.mxu0 %v6686
    %6704 = vmatprep.subr.bf16.mxu0 0
    %6705 = vmatpush2.bf16.xpose.msra.mxu0 0
    %6706 = vmatprep.subr.bf16.mxu0 0
    %6707 = vmatpush2.bf16.xpose.msra.mxu0 0
    %6708 = vmatprep.subr.bf16.mxu0 0
    %6709 = vmatpush2.bf16.xpose.msra.mxu0 0
    %6710 = vmatprep.subr.bf16.mxu0 0
    %6711 = vmatpush2.bf16.xpose.msra.mxu0 0
    %6712 = vmatprep.subr.bf16.mxu0 0
    %6713 = vmatpush2.bf16.xpose.msra.mxu0 0
    %6714 = vmatprep.subr.bf16.mxu0 0
    %6715 = vmatpush2.bf16.xpose.msra.mxu0 0
    %6716 = vmatprep.subr.bf16.mxu0 0
    %6717 = vmatpush2.bf16.xpose.msra.mxu0 0
    %6718 = vmatprep.subr.bf16.mxu0 0
    %6719 = vmatpush2.bf16.xpose.msra.mxu0 0
    %6720 = vmatprep.mubr.bf16.mxu0 0
    %6721 = vmatmul.mubr.bf16.gmra.mxu0 %v6683
    %v6722 = vpop.f32.mrf.mxu0
    %v6723 = vadd.f32 0.0, %v6722
    %v6724 = vpop.f32.mrf.mxu0
    %v6725 = vpop.f32.mrf.mxu0
    %v6726 = vpop.f32.mrf.mxu0
    %6727 = vdwg.mxu0
    %6728 = vrot.lane.b32.xlu0 %v5997, 104
    %v6729 = vpop.permute.xlu0 %6728
    %6730 = vrot.lane.b32.xlu0 %v5997, 72
    %v6731 = vpop.permute.xlu0 %6730
    %v6733 = vsel %vm786, %v6729, 0
    %v6736 = vsel %vm786, %v6731, 0
    %6738 = vmatprep.subr.bf16.mxu0 0
    %6739 = vmatpush1.bf16.xpose.msra.mxu0 0
    %6740 = vmatprep.subr.bf16.mxu0 0
    %6741 = vmatpush1.bf16.xpose.msra.mxu0 0
    %6742 = vmatprep.subr.bf16.mxu0 0
    %6743 = vmatpush1.bf16.xpose.msra.mxu0 0
    %6744 = vmatprep.subr.bf16.mxu0 0
    %6745 = vmatpush1.bf16.xpose.msra.mxu0 0
    %6746 = vmatprep.subr.bf16.mxu0 0
    %6747 = vmatpush1.bf16.xpose.msra.mxu0 0
    %6748 = vmatprep.subr.bf16.mxu0 0
    %6749 = vmatpush1.bf16.xpose.msra.mxu0 0
    %6750 = vmatprep.subr.bf16.mxu0 0
    %6751 = vmatpush1.bf16.xpose.msra.mxu0 0
    %6752 = vmatprep.subr.bf16.mxu0 0
    %6753 = vmatpush1.bf16.xpose.msra.mxu0 %v6736
    %6754 = vmatprep.subr.bf16.mxu0 0
    %6755 = vmatpush2.bf16.xpose.msra.mxu0 0
    %6756 = vmatprep.subr.bf16.mxu0 0
    %6757 = vmatpush2.bf16.xpose.msra.mxu0 0
    %6758 = vmatprep.subr.bf16.mxu0 0
    %6759 = vmatpush2.bf16.xpose.msra.mxu0 0
    %6760 = vmatprep.subr.bf16.mxu0 0
    %6761 = vmatpush2.bf16.xpose.msra.mxu0 0
    %6762 = vmatprep.subr.bf16.mxu0 0
    %6763 = vmatpush2.bf16.xpose.msra.mxu0 0
    %6764 = vmatprep.subr.bf16.mxu0 0
    %6765 = vmatpush2.bf16.xpose.msra.mxu0 0
    %6766 = vmatprep.subr.bf16.mxu0 0
    %6767 = vmatpush2.bf16.xpose.msra.mxu0 0
    %6768 = vmatprep.subr.bf16.mxu0 0
    %6769 = vmatpush2.bf16.xpose.msra.mxu0 0
    %6770 = vmatprep.mubr.bf16.mxu0 0
    %6771 = vmatmul.mubr.bf16.gmra.mxu0 %v6733
    %v6772 = vpop.f32.mrf.mxu0
    %v6773 = vadd.f32 0.0, %v6772
    %v6774 = vpop.f32.mrf.mxu0
    %v6775 = vpop.f32.mrf.mxu0
    %v6776 = vpop.f32.mrf.mxu0
    %6777 = vdwg.mxu0
    %v6778 = vsel %vm786, %v6723, -inf
    %6779 = vmax.xlane.f32.xlu0 %v6778
    %v6780 = vpop.xlane.xlu0 %6779
    %v6781 = vsel %vm786, %v6773, -inf
    %6782 = vmax.xlane.f32.xlu0 %v6781
    %v6783 = vpop.xlane.xlu0 %6782
    %v6784 = vsub.f32 %v6723, %v6780
    %v6785 = vsub.f32 %v6773, %v6783
    %v6786 = vmul.f32 %v6784, 1.442695
    %v6787 = vpow.pop %v6786
    %v6788 = vmul.f32 %v6785, 1.442695
    %v6789 = vpow.pop %v6788
    %v6790 = vsel %vm786, %v6787, 0.0
    %6791 = vadd.xlane.f32.xlu0 %v6790
    %v6792 = vpop.xlane.xlu0 %6791
    %v6793 = vsel %vm786, %v6789, 0.0
    %6794 = vadd.xlane.f32.xlu0 %v6793
    %v6795 = vpop.xlane.xlu0 %6794
    %v6796 = vrcp.pop %v6792
    %v6797 = vrcp.pop %v6795
    %v6798 = vmul.f32 %v6787, %v6796
    %v6799 = vmul.f32 %v6789, %v6797
    %v6800 = vpack.c.bf16 %v6798, %v6798
    %v6801 = vpack.c.bf16 %v6799, %v6799
    %6802 = vrot.lane.b32.xlu0 %v5996, 40
    %v6803 = vpop.permute.xlu0 %6802
    %v6805 = vsel %vm786, %v6800, 0
    %v6808 = vsel %vm911, %v6803, 0
    %6810 = vmatprep.subr.bf16.mxu0 0
    %6811 = vmatpush1.bf16.msra.mxu0 0
    %6812 = vmatprep.subr.bf16.mxu0 0
    %6813 = vmatpush1.bf16.msra.mxu0 0
    %6814 = vmatprep.subr.bf16.mxu0 0
    %6815 = vmatpush1.bf16.msra.mxu0 0
    %6816 = vmatprep.subr.bf16.mxu0 0
    %6817 = vmatpush1.bf16.msra.mxu0 0
    %6818 = vmatprep.subr.bf16.mxu0 0
    %6819 = vmatpush1.bf16.msra.mxu0 0
    %6820 = vmatprep.subr.bf16.mxu0 0
    %6821 = vmatpush1.bf16.msra.mxu0 0
    %6822 = vmatprep.subr.bf16.mxu0 0
    %6823 = vmatpush1.bf16.msra.mxu0 0
    %6824 = vmatprep.subr.bf16.mxu0 0
    %6825 = vmatpush1.bf16.msra.mxu0 %v6808
    %6826 = vmatprep.subr.bf16.mxu0 0
    %6827 = vmatpush2.bf16.msra.mxu0 0
    %6828 = vmatprep.subr.bf16.mxu0 0
    %6829 = vmatpush2.bf16.msra.mxu0 0
    %6830 = vmatprep.subr.bf16.mxu0 0
    %6831 = vmatpush2.bf16.msra.mxu0 0
    %6832 = vmatprep.subr.bf16.mxu0 0
    %6833 = vmatpush2.bf16.msra.mxu0 0
    %6834 = vmatprep.subr.bf16.mxu0 0
    %6835 = vmatpush2.bf16.msra.mxu0 0
    %6836 = vmatprep.subr.bf16.mxu0 0
    %6837 = vmatpush2.bf16.msra.mxu0 0
    %6838 = vmatprep.subr.bf16.mxu0 0
    %6839 = vmatpush2.bf16.msra.mxu0 0
    %6840 = vmatprep.subr.bf16.mxu0 0
    %6841 = vmatpush2.bf16.msra.mxu0 0
    %6842 = vmatprep.mubr.bf16.mxu0 0
    %6843 = vmatmul.mubr.bf16.gmra.mxu0 %v6805
    %v6844 = vpop.f32.mrf.mxu0
    %v6845 = vadd.f32 0.0, %v6844
    %v6846 = vpop.f32.mrf.mxu0
    %v6847 = vpop.f32.mrf.mxu0
    %v6848 = vpop.f32.mrf.mxu0
    %6849 = vdwg.mxu0
    %6850 = vrot.lane.b32.xlu0 %v5997, 40
    %v6851 = vpop.permute.xlu0 %6850
    %v6853 = vsel %vm786, %v6801, 0
    %v6856 = vsel %vm911, %v6851, 0
    %6858 = vmatprep.subr.bf16.mxu0 0
    %6859 = vmatpush1.bf16.msra.mxu0 0
    %6860 = vmatprep.subr.bf16.mxu0 0
    %6861 = vmatpush1.bf16.msra.mxu0 0
    %6862 = vmatprep.subr.bf16.mxu0 0
    %6863 = vmatpush1.bf16.msra.mxu0 0
    %6864 = vmatprep.subr.bf16.mxu0 0
    %6865 = vmatpush1.bf16.msra.mxu0 0
    %6866 = vmatprep.subr.bf16.mxu0 0
    %6867 = vmatpush1.bf16.msra.mxu0 0
    %6868 = vmatprep.subr.bf16.mxu0 0
    %6869 = vmatpush1.bf16.msra.mxu0 0
    %6870 = vmatprep.subr.bf16.mxu0 0
    %6871 = vmatpush1.bf16.msra.mxu0 0
    %6872 = vmatprep.subr.bf16.mxu0 0
    %6873 = vmatpush1.bf16.msra.mxu0 %v6856
    %6874 = vmatprep.subr.bf16.mxu0 0
    %6875 = vmatpush2.bf16.msra.mxu0 0
    %6876 = vmatprep.subr.bf16.mxu0 0
    %6877 = vmatpush2.bf16.msra.mxu0 0
    %6878 = vmatprep.subr.bf16.mxu0 0
    %6879 = vmatpush2.bf16.msra.mxu0 0
    %6880 = vmatprep.subr.bf16.mxu0 0
    %6881 = vmatpush2.bf16.msra.mxu0 0
    %6882 = vmatprep.subr.bf16.mxu0 0
    %6883 = vmatpush2.bf16.msra.mxu0 0
    %6884 = vmatprep.subr.bf16.mxu0 0
    %6885 = vmatpush2.bf16.msra.mxu0 0
    %6886 = vmatprep.subr.bf16.mxu0 0
    %6887 = vmatpush2.bf16.msra.mxu0 0
    %6888 = vmatprep.subr.bf16.mxu0 0
    %6889 = vmatpush2.bf16.msra.mxu0 0
    %6890 = vmatprep.mubr.bf16.mxu0 0
    %6891 = vmatmul.mubr.bf16.gmra.mxu0 %v6853
    %v6892 = vpop.f32.mrf.mxu0
    %v6893 = vadd.f32 0.0, %v6892
    %v6894 = vpop.f32.mrf.mxu0
    %v6895 = vpop.f32.mrf.mxu0
    %v6896 = vpop.f32.mrf.mxu0
    %6897 = vdwg.mxu0
    %6900 = vrot.lane.b32.xlu0 %v6845, 24
    %v6901 = vpop.permute.xlu0 %6900
    %6902 = vrot.lane.b32.xlu0 %v6893, 24
    %v6903 = vpop.permute.xlu0 %6902
    %6906 = vst.msk [vmem:[#allocation3] sm:$0xff] %vm1695, %v6901
    %6907 = vst.msk [vmem:[#allocation3 + $0x8] sm:$0xff] %vm1695, %v6903
    %v6908 = vld [vmem:[#allocation3] sm:$0xff]
    %v6909 = vld [vmem:[#allocation3 + $0x8] sm:$0xff]
    %v6910 = vpack.c.bf16 %v6909, %v6908
    %s6911 = scalar_lea.vmem %s8, 64
    %v6912 = vld [vmem:[%s6911] sm:$0xf]
    %v6913 = vld [vmem:[%s6911 + $0x4] sm:$0xf]
    %v6914 = vld [vmem:[%s6911 + $0x8] sm:$0xf]
    %v6915 = vld [vmem:[%s6911 + $0xc] sm:$0xf]
    %s6916 = scalar_lea.vmem %s9, 4
    %v6917 = vld [vmem:[%s6916] sm:$0x1]
    %v6919 = vlaneseq
    %v6920 = vshrl.u32 %v6919, 7
    %v6921 = vsub.s32 0, %v6920
    %v6922 = vrot.slane %v6917, %v6921
    %v6928 = vunpack.c.l.b16 %v6912
    %v6929 = vunpack.c.l.b16 %v6913
    %v6930 = vunpack.c.l.b16 %v6914
    %v6931 = vunpack.c.l.b16 %v6915
    %v6932 = vpack.c.b16 %v6929, %v6928
    %v6933 = vpack.c.b16 %v6931, %v6930
    %v6937 = vsel %vm487, %v6910, 0
    %6939 = vmatprep.subr.bf16.mxu0 0
    %6940 = vmatpush1.bf16.msra.mxu0 0
    %6941 = vmatprep.subr.bf16.mxu0 0
    %6942 = vmatpush1.bf16.msra.mxu0 0
    %6943 = vmatprep.subr.bf16.mxu0 0
    %6944 = vmatpush1.bf16.msra.mxu0 0
    %6945 = vmatprep.subr.bf16.mxu0 0
    %6946 = vmatpush1.bf16.msra.mxu0 0
    %6947 = vmatprep.subr.bf16.mxu0 0
    %6948 = vmatpush1.bf16.msra.mxu0 0
    %6949 = vmatprep.subr.bf16.mxu0 0
    %6950 = vmatpush1.bf16.msra.mxu0 0
    %6951 = vmatprep.subr.bf16.mxu0 0
    %6952 = vmatpush1.bf16.msra.mxu0 %v6933
    %6953 = vmatprep.subr.bf16.mxu0 0
    %6954 = vmatpush1.bf16.msra.mxu0 %v6932
    %6955 = vmatprep.subr.bf16.mxu0 0
    %6956 = vmatpush2.bf16.msra.mxu0 0
    %6957 = vmatprep.subr.bf16.mxu0 0
    %6958 = vmatpush2.bf16.msra.mxu0 0
    %6959 = vmatprep.subr.bf16.mxu0 0
    %6960 = vmatpush2.bf16.msra.mxu0 0
    %6961 = vmatprep.subr.bf16.mxu0 0
    %6962 = vmatpush2.bf16.msra.mxu0 0
    %6963 = vmatprep.subr.bf16.mxu0 0
    %6964 = vmatpush2.bf16.msra.mxu0 0
    %6965 = vmatprep.subr.bf16.mxu0 0
    %6966 = vmatpush2.bf16.msra.mxu0 0
    %6967 = vmatprep.subr.bf16.mxu0 0
    %6968 = vmatpush2.bf16.msra.mxu0 0
    %6969 = vmatprep.subr.bf16.mxu0 0
    %6970 = vmatpush2.bf16.msra.mxu0 0
    %6971 = vmatprep.mubr.bf16.mxu0 0
    %6972 = vmatmul.mubr.bf16.gmra.mxu0 %v6937
    %v6973 = vpop.f32.mrf.mxu0
    %v6974 = vadd.f32 %v6922, %v6973
    %v6975 = vpop.f32.mrf.mxu0
    %v6976 = vpop.f32.mrf.mxu0
    %v6977 = vadd.f32 %v6922, %v6976
    %v6978 = vpop.f32.mrf.mxu0
    %6979 = vdwg.mxu0
    %s6980 = scalar_lea.vmem %s10, 8
    %v6981 = vld [vmem:[%s6980] sm:$0x3]
    %v6982 = vadd.f32 %v5924, %v6974
    %v6983 = vadd.f32 %v5925, %v6977
    %v6984 = vsel %vm487, %v6982, 0.0
    %6985 = vadd.xlane.f32.xlu0 %v6984
    %v6986 = vpop.xlane.xlu0 %6985
    %v6987 = vsel %vm487, %v6983, 0.0
    %6988 = vadd.xlane.f32.xlu0 %v6987
    %v6989 = vpop.xlane.xlu0 %6988
    %v6990 = vmul.f32 %v6986, %v1777
    %v6991 = vmul.f32 %v6989, %v1777
    %v6992 = vsub.f32 %v6982, %v6990
    %v6993 = vsub.f32 %v6983, %v6991
    %v6994 = vmul.f32 %v6992, %v6992
    %v6995 = vmul.f32 %v6993, %v6993
    %v6996 = vsel %vm487, %v6994, 0.0
    %6997 = vadd.xlane.f32.xlu0 %v6996
    %v6998 = vpop.xlane.xlu0 %6997
    %v6999 = vsel %vm487, %v6995, 0.0
    %7000 = vadd.xlane.f32.xlu0 %v6999
    %v7001 = vpop.xlane.xlu0 %7000
    %v7002 = vmul.f32 %v6998, %v1777
    %v7003 = vmul.f32 %v7001, %v1777
    %v7004 = vadd.f32 %v7002, 1e-05
    %v7005 = vadd.f32 %v7003, 1e-05
    %v7006 = vrsqrt.pop %v7004
    %v7007 = vrsqrt.pop %v7005
    %v7008 = vmul.f32 %v6992, %v7006
    %v7009 = vmul.f32 %v6993, %v7007
    %v7010 = vlaneseq
    %v7011 = vshrl.u32 %v7010, 7
    %v7012 = vsub.s32 0, %v7011
    %v7013 = vrot.slane %v6981, %v7012
    %v7014 = vmul.f32 %v7008, %v7013
    %v7015 = vmul.f32 %v7009, %v7013
    %v7016 = vlaneseq
    %v7017 = vshrl.u32 %v7016, 7
    %v7018 = vsub.s32 1, %v7017
    %v7019 = vrot.slane %v6981, %v7018
    %v7020 = vadd.f32 %v7014, %v7019
    %v7021 = vadd.f32 %v7015, %v7019
    %v7022 = vpack.c.bf16 %v7021, %v7020
    %s7023 = scalar_lea.vmem %s11, 64
    %v7024 = vld [vmem:[%s7023] sm:$0xf]
    %v7025 = vld [vmem:[%s7023 + $0x4] sm:$0xf]
    %v7026 = vld [vmem:[%s7023 + $0x8] sm:$0xf]
    %v7027 = vld [vmem:[%s7023 + $0xc] sm:$0xf]
    %s7028 = scalar_lea.vmem %s12, 4
    %v7029 = vld [vmem:[%s7028] sm:$0x1]
    %v7031 = vlaneseq
    %v7032 = vshrl.u32 %v7031, 7
    %v7033 = vsub.s32 0, %v7032
    %v7034 = vrot.slane %v7029, %v7033
    %v7040 = vunpack.c.l.b16 %v7024
    %v7041 = vunpack.c.l.b16 %v7025
    %v7042 = vunpack.c.l.b16 %v7026
    %v7043 = vunpack.c.l.b16 %v7027
    %v7044 = vpack.c.b16 %v7041, %v7040
    %v7045 = vpack.c.b16 %v7043, %v7042
    %v7049 = vsel %vm487, %v7022, 0
    %7051 = vmatprep.subr.bf16.mxu0 0
    %7052 = vmatpush1.bf16.msra.mxu0 0
    %7053 = vmatprep.subr.bf16.mxu0 0
    %7054 = vmatpush1.bf16.msra.mxu0 0
    %7055 = vmatprep.subr.bf16.mxu0 0
    %7056 = vmatpush1.bf16.msra.mxu0 0
    %7057 = vmatprep.subr.bf16.mxu0 0
    %7058 = vmatpush1.bf16.msra.mxu0 0
    %7059 = vmatprep.subr.bf16.mxu0 0
    %7060 = vmatpush1.bf16.msra.mxu0 0
    %7061 = vmatprep.subr.bf16.mxu0 0
    %7062 = vmatpush1.bf16.msra.mxu0 0
    %7063 = vmatprep.subr.bf16.mxu0 0
    %7064 = vmatpush1.bf16.msra.mxu0 %v7045
    %7065 = vmatprep.subr.bf16.mxu0 0
    %7066 = vmatpush1.bf16.msra.mxu0 %v7044
    %7067 = vmatprep.subr.bf16.mxu0 0
    %7068 = vmatpush2.bf16.msra.mxu0 0
    %7069 = vmatprep.subr.bf16.mxu0 0
    %7070 = vmatpush2.bf16.msra.mxu0 0
    %7071 = vmatprep.subr.bf16.mxu0 0
    %7072 = vmatpush2.bf16.msra.mxu0 0
    %7073 = vmatprep.subr.bf16.mxu0 0
    %7074 = vmatpush2.bf16.msra.mxu0 0
    %7075 = vmatprep.subr.bf16.mxu0 0
    %7076 = vmatpush2.bf16.msra.mxu0 0
    %7077 = vmatprep.subr.bf16.mxu0 0
    %7078 = vmatpush2.bf16.msra.mxu0 0
    %7079 = vmatprep.subr.bf16.mxu0 0
    %7080 = vmatpush2.bf16.msra.mxu0 0
    %7081 = vmatprep.subr.bf16.mxu0 0
    %7082 = vmatpush2.bf16.msra.mxu0 0
    %7083 = vmatprep.mubr.bf16.mxu0 0
    %7084 = vmatmul.mubr.bf16.gmra.mxu0 %v7049
    %v7085 = vpop.f32.mrf.mxu0
    %v7086 = vadd.f32 %v7034, %v7085
    %v7087 = vpop.f32.mrf.mxu0
    %v7088 = vpop.f32.mrf.mxu0
    %v7089 = vadd.f32 %v7034, %v7088
    %v7090 = vpop.f32.mrf.mxu0
    %7091 = vdwg.mxu0
    %v7092 = vmul.f32 %v7086, 0.5
    %v7093 = vmul.f32 %v7089, 0.5
    %v7094 = vmul.f32 %v7086, 0.70710677
    %v7095 = vmul.f32 %v7089, 0.70710677
    %v7096 = verf.f32.pop %v7094
    %v7097 = verf.f32.pop %v7095
    %v7098 = vadd.f32 %v7096, 1.0
    %v7099 = vadd.f32 %v7097, 1.0
    %v7100 = vmul.f32 %v7092, %v7098
    %v7101 = vmul.f32 %v7093, %v7099
    %v7102 = vpack.c.bf16 %v7101, %v7100
    %s7103 = scalar_lea.vmem %s13, 128
    %v7104 = vld [vmem:[%s7103] sm:$0xf]
    %v7105 = vld [vmem:[%s7103 + $0x4] sm:$0xf]
    %v7106 = vld [vmem:[%s7103 + $0x8] sm:$0xf]
    %v7107 = vld [vmem:[%s7103 + $0xc] sm:$0xf]
    %v7108 = vld [vmem:[%s7103 + $0x10] sm:$0xf]
    %v7109 = vld [vmem:[%s7103 + $0x14] sm:$0xf]
    %v7110 = vld [vmem:[%s7103 + $0x18] sm:$0xf]
    %v7111 = vld [vmem:[%s7103 + $0x1c] sm:$0xf]
    %s7112 = scalar_lea.vmem %s14, 4
    %v7113 = vld [vmem:[%s7112] sm:$0x1]
    %v7115 = vlaneseq
    %v7116 = vshrl.u32 %v7115, 7
    %v7117 = vsub.s32 0, %v7116
    %v7118 = vrot.slane %v7113, %v7117
    %v7128 = vunpack.c.l.b16 %v7104
    %v7129 = vunpack.c.l.b16 %v7105
    %v7130 = vunpack.c.l.b16 %v7106
    %v7131 = vunpack.c.l.b16 %v7107
    %v7132 = vunpack.c.l.b16 %v7108
    %v7133 = vunpack.c.l.b16 %v7109
    %v7134 = vunpack.c.l.b16 %v7110
    %v7135 = vunpack.c.l.b16 %v7111
    %v7136 = vpack.c.b16 %v7129, %v7128
    %v7137 = vpack.c.b16 %v7131, %v7130
    %v7138 = vpack.c.b16 %v7133, %v7132
    %v7139 = vpack.c.b16 %v7135, %v7134
    %v7145 = vsel %vm1928, %v7102, 0
    %7147 = vmatprep.subr.bf16.mxu0 0
    %7148 = vmatpush1.bf16.msra.mxu0 0
    %7149 = vmatprep.subr.bf16.mxu0 0
    %7150 = vmatpush1.bf16.msra.mxu0 0
    %7151 = vmatprep.subr.bf16.mxu0 0
    %7152 = vmatpush1.bf16.msra.mxu0 0
    %7153 = vmatprep.subr.bf16.mxu0 0
    %7154 = vmatpush1.bf16.msra.mxu0 0
    %7155 = vmatprep.subr.bf16.mxu0 0
    %7156 = vmatpush1.bf16.msra.mxu0 %v7139
    %7157 = vmatprep.subr.bf16.mxu0 0
    %7158 = vmatpush1.bf16.msra.mxu0 %v7138
    %7159 = vmatprep.subr.bf16.mxu0 0
    %7160 = vmatpush1.bf16.msra.mxu0 %v7137
    %7161 = vmatprep.subr.bf16.mxu0 0
    %7162 = vmatpush1.bf16.msra.mxu0 %v7136
    %7163 = vmatprep.subr.bf16.mxu0 0
    %7164 = vmatpush2.bf16.msra.mxu0 0
    %7165 = vmatprep.subr.bf16.mxu0 0
    %7166 = vmatpush2.bf16.msra.mxu0 0
    %7167 = vmatprep.subr.bf16.mxu0 0
    %7168 = vmatpush2.bf16.msra.mxu0 0
    %7169 = vmatprep.subr.bf16.mxu0 0
    %7170 = vmatpush2.bf16.msra.mxu0 0
    %7171 = vmatprep.subr.bf16.mxu0 0
    %7172 = vmatpush2.bf16.msra.mxu0 0
    %7173 = vmatprep.subr.bf16.mxu0 0
    %7174 = vmatpush2.bf16.msra.mxu0 0
    %7175 = vmatprep.subr.bf16.mxu0 0
    %7176 = vmatpush2.bf16.msra.mxu0 0
    %7177 = vmatprep.subr.bf16.mxu0 0
    %7178 = vmatpush2.bf16.msra.mxu0 0
    %7179 = vmatprep.mubr.bf16.mxu0 0
    %7180 = vmatmul.mubr.bf16.gmra.mxu0 %v7145
    %v7181 = vpop.f32.mrf.mxu0
    %v7182 = vadd.f32 %v7118, %v7181
    %v7183 = vpop.f32.mrf.mxu0
    %v7184 = vpop.f32.mrf.mxu0
    %v7185 = vadd.f32 %v7118, %v7184
    %v7186 = vpop.f32.mrf.mxu0
    %7187 = vdwg.mxu0
    %s7188 = scalar_lea.vmem %s15, 8
    %v7189 = vld [vmem:[%s7188] sm:$0x3]
    %v7190 = vadd.f32 %v7020, %v7182
    %v7191 = vadd.f32 %v7021, %v7185
    %v7192 = vsel %vm487, %v7190, 0.0
    %7193 = vadd.xlane.f32.xlu0 %v7192
    %v7194 = vpop.xlane.xlu0 %7193
    %v7195 = vsel %vm487, %v7191, 0.0
    %7196 = vadd.xlane.f32.xlu0 %v7195
    %v7197 = vpop.xlane.xlu0 %7196
    %v7198 = vmul.f32 %v7194, %v1777
    %v7199 = vmul.f32 %v7197, %v1777
    %v7200 = vsub.f32 %v7190, %v7198
    %v7201 = vsub.f32 %v7191, %v7199
    %v7202 = vmul.f32 %v7200, %v7200
    %v7203 = vmul.f32 %v7201, %v7201
    %v7204 = vsel %vm487, %v7202, 0.0
    %7205 = vadd.xlane.f32.xlu0 %v7204
    %v7206 = vpop.xlane.xlu0 %7205
    %v7207 = vsel %vm487, %v7203, 0.0
    %7208 = vadd.xlane.f32.xlu0 %v7207
    %v7209 = vpop.xlane.xlu0 %7208
    %v7210 = vmul.f32 %v7206, %v1777
    %v7211 = vmul.f32 %v7209, %v1777
    %v7212 = vadd.f32 %v7210, 1e-05
    %v7213 = vadd.f32 %v7211, 1e-05
    %v7214 = vrsqrt.pop %v7212
    %v7215 = vrsqrt.pop %v7213
    %v7216 = vmul.f32 %v7200, %v7214
    %v7217 = vmul.f32 %v7201, %v7215
    %v7218 = vlaneseq
    %v7219 = vshrl.u32 %v7218, 7
    %v7220 = vsub.s32 0, %v7219
    %v7221 = vrot.slane %v7189, %v7220
    %v7222 = vmul.f32 %v7216, %v7221
    %v7223 = vmul.f32 %v7217, %v7221
    %v7224 = vlaneseq
    %v7225 = vshrl.u32 %v7224, 7
    %v7226 = vsub.s32 1, %v7225
    %v7227 = vrot.slane %v7189, %v7226
    %v7228 = vadd.f32 %v7222, %v7227
    %v7229 = vadd.f32 %v7223, %v7227
    %v7230 = vpack.c.bf16 %v7229, %v7228
    %s7231 = scalar_lea.vmem %s6, 80
    %v7232 = vld [vmem:[%s7231] sm:$0xf]
    %v7233 = vld [vmem:[%s7231 + $0x4] sm:$0xf]
    %v7234 = vld [vmem:[%s7231 + $0x8] sm:$0xf]
    %v7235 = vld [vmem:[%s7231 + $0xc] sm:$0xf]
    %s7236 = scalar_lea.vmem %s7, 5
    %v7237 = vld [vmem:[%s7236] sm:$0x1]
    %v7239 = vlaneseq
    %v7240 = vshrl.u32 %v7239, 7
    %v7241 = vsub.s32 0, %v7240
    %v7242 = vrot.slane %v7237, %v7241
    %v7248 = vunpack.c.l.b16 %v7232
    %v7249 = vunpack.c.l.b16 %v7233
    %v7250 = vunpack.c.l.b16 %v7234
    %v7251 = vunpack.c.l.b16 %v7235
    %v7252 = vpack.c.b16 %v7249, %v7248
    %v7253 = vpack.c.b16 %v7251, %v7250
    %v7257 = vsel %vm487, %v7230, 0
    %7259 = vmatprep.subr.bf16.mxu0 0
    %7260 = vmatpush1.bf16.msra.mxu0 0
    %7261 = vmatprep.subr.bf16.mxu0 0
    %7262 = vmatpush1.bf16.msra.mxu0 0
    %7263 = vmatprep.subr.bf16.mxu0 0
    %7264 = vmatpush1.bf16.msra.mxu0 0
    %7265 = vmatprep.subr.bf16.mxu0 0
    %7266 = vmatpush1.bf16.msra.mxu0 0
    %7267 = vmatprep.subr.bf16.mxu0 0
    %7268 = vmatpush1.bf16.msra.mxu0 0
    %7269 = vmatprep.subr.bf16.mxu0 0
    %7270 = vmatpush1.bf16.msra.mxu0 0
    %7271 = vmatprep.subr.bf16.mxu0 0
    %7272 = vmatpush1.bf16.msra.mxu0 %v7253
    %7273 = vmatprep.subr.bf16.mxu0 0
    %7274 = vmatpush1.bf16.msra.mxu0 %v7252
    %7275 = vmatprep.subr.bf16.mxu0 0
    %7276 = vmatpush2.bf16.msra.mxu0 0
    %7277 = vmatprep.subr.bf16.mxu0 0
    %7278 = vmatpush2.bf16.msra.mxu0 0
    %7279 = vmatprep.subr.bf16.mxu0 0
    %7280 = vmatpush2.bf16.msra.mxu0 0
    %7281 = vmatprep.subr.bf16.mxu0 0
    %7282 = vmatpush2.bf16.msra.mxu0 0
    %7283 = vmatprep.subr.bf16.mxu0 0
    %7284 = vmatpush2.bf16.msra.mxu0 0
    %7285 = vmatprep.subr.bf16.mxu0 0
    %7286 = vmatpush2.bf16.msra.mxu0 0
    %7287 = vmatprep.subr.bf16.mxu0 0
    %7288 = vmatpush2.bf16.msra.mxu0 0
    %7289 = vmatprep.subr.bf16.mxu0 0
    %7290 = vmatpush2.bf16.msra.mxu0 0
    %7291 = vmatprep.mubr.bf16.mxu0 0
    %7292 = vmatmul.mubr.bf16.gmra.mxu0 %v7257
    %v7293 = vpop.f32.mrf.mxu0
    %v7294 = vadd.f32 %v7242, %v7293
    %v7295 = vpop.f32.mrf.mxu0
    %v7296 = vpop.f32.mrf.mxu0
    %v7297 = vadd.f32 %v7242, %v7296
    %v7298 = vpop.f32.mrf.mxu0
    %7299 = vdwg.mxu0
    %v7300 = vpack.c.bf16 %v7294, %v7294
    %v7301 = vpack.c.bf16 %v7297, %v7297
    %7303 = vrot.lane.b32.xlu0 %v7300, 96
    %v7304 = vpop.permute.xlu0 %7303
    %v7306 = vsel %vm786, %v7300, 0
    %v7309 = vsel %vm786, %v7304, 0
    %7311 = vmatprep.subr.bf16.mxu0 0
    %7312 = vmatpush1.bf16.xpose.msra.mxu0 0
    %7313 = vmatprep.subr.bf16.mxu0 0
    %7314 = vmatpush1.bf16.xpose.msra.mxu0 0
    %7315 = vmatprep.subr.bf16.mxu0 0
    %7316 = vmatpush1.bf16.xpose.msra.mxu0 0
    %7317 = vmatprep.subr.bf16.mxu0 0
    %7318 = vmatpush1.bf16.xpose.msra.mxu0 0
    %7319 = vmatprep.subr.bf16.mxu0 0
    %7320 = vmatpush1.bf16.xpose.msra.mxu0 0
    %7321 = vmatprep.subr.bf16.mxu0 0
    %7322 = vmatpush1.bf16.xpose.msra.mxu0 0
    %7323 = vmatprep.subr.bf16.mxu0 0
    %7324 = vmatpush1.bf16.xpose.msra.mxu0 0
    %7325 = vmatprep.subr.bf16.mxu0 0
    %7326 = vmatpush1.bf16.xpose.msra.mxu0 %v7309
    %7327 = vmatprep.subr.bf16.mxu0 0
    %7328 = vmatpush2.bf16.xpose.msra.mxu0 0
    %7329 = vmatprep.subr.bf16.mxu0 0
    %7330 = vmatpush2.bf16.xpose.msra.mxu0 0
    %7331 = vmatprep.subr.bf16.mxu0 0
    %7332 = vmatpush2.bf16.xpose.msra.mxu0 0
    %7333 = vmatprep.subr.bf16.mxu0 0
    %7334 = vmatpush2.bf16.xpose.msra.mxu0 0
    %7335 = vmatprep.subr.bf16.mxu0 0
    %7336 = vmatpush2.bf16.xpose.msra.mxu0 0
    %7337 = vmatprep.subr.bf16.mxu0 0
    %7338 = vmatpush2.bf16.xpose.msra.mxu0 0
    %7339 = vmatprep.subr.bf16.mxu0 0
    %7340 = vmatpush2.bf16.xpose.msra.mxu0 0
    %7341 = vmatprep.subr.bf16.mxu0 0
    %7342 = vmatpush2.bf16.xpose.msra.mxu0 0
    %7343 = vmatprep.mubr.bf16.mxu0 0
    %7344 = vmatmul.mubr.bf16.gmra.mxu0 %v7306
    %v7345 = vpop.f32.mrf.mxu0
    %v7346 = vadd.f32 0.0, %v7345
    %v7347 = vpop.f32.mrf.mxu0
    %v7348 = vpop.f32.mrf.mxu0
    %v7349 = vpop.f32.mrf.mxu0
    %7350 = vdwg.mxu0
    %7352 = vrot.lane.b32.xlu0 %v7301, 96
    %v7353 = vpop.permute.xlu0 %7352
    %v7355 = vsel %vm786, %v7301, 0
    %v7358 = vsel %vm786, %v7353, 0
    %7360 = vmatprep.subr.bf16.mxu0 0
    %7361 = vmatpush1.bf16.xpose.msra.mxu0 0
    %7362 = vmatprep.subr.bf16.mxu0 0
    %7363 = vmatpush1.bf16.xpose.msra.mxu0 0
    %7364 = vmatprep.subr.bf16.mxu0 0
    %7365 = vmatpush1.bf16.xpose.msra.mxu0 0
    %7366 = vmatprep.subr.bf16.mxu0 0
    %7367 = vmatpush1.bf16.xpose.msra.mxu0 0
    %7368 = vmatprep.subr.bf16.mxu0 0
    %7369 = vmatpush1.bf16.xpose.msra.mxu0 0
    %7370 = vmatprep.subr.bf16.mxu0 0
    %7371 = vmatpush1.bf16.xpose.msra.mxu0 0
    %7372 = vmatprep.subr.bf16.mxu0 0
    %7373 = vmatpush1.bf16.xpose.msra.mxu0 0
    %7374 = vmatprep.subr.bf16.mxu0 0
    %7375 = vmatpush1.bf16.xpose.msra.mxu0 %v7358
    %7376 = vmatprep.subr.bf16.mxu0 0
    %7377 = vmatpush2.bf16.xpose.msra.mxu0 0
    %7378 = vmatprep.subr.bf16.mxu0 0
    %7379 = vmatpush2.bf16.xpose.msra.mxu0 0
    %7380 = vmatprep.subr.bf16.mxu0 0
    %7381 = vmatpush2.bf16.xpose.msra.mxu0 0
    %7382 = vmatprep.subr.bf16.mxu0 0
    %7383 = vmatpush2.bf16.xpose.msra.mxu0 0
    %7384 = vmatprep.subr.bf16.mxu0 0
    %7385 = vmatpush2.bf16.xpose.msra.mxu0 0
    %7386 = vmatprep.subr.bf16.mxu0 0
    %7387 = vmatpush2.bf16.xpose.msra.mxu0 0
    %7388 = vmatprep.subr.bf16.mxu0 0
    %7389 = vmatpush2.bf16.xpose.msra.mxu0 0
    %7390 = vmatprep.subr.bf16.mxu0 0
    %7391 = vmatpush2.bf16.xpose.msra.mxu0 0
    %7392 = vmatprep.mubr.bf16.mxu0 0
    %7393 = vmatmul.mubr.bf16.gmra.mxu0 %v7355
    %v7394 = vpop.f32.mrf.mxu0
    %v7395 = vadd.f32 0.0, %v7394
    %v7396 = vpop.f32.mrf.mxu0
    %v7397 = vpop.f32.mrf.mxu0
    %v7398 = vpop.f32.mrf.mxu0
    %7399 = vdwg.mxu0
    %v7400 = vsel %vm786, %v7346, -inf
    %7401 = vmax.xlane.f32.xlu0 %v7400
    %v7402 = vpop.xlane.xlu0 %7401
    %v7403 = vsel %vm786, %v7395, -inf
    %7404 = vmax.xlane.f32.xlu0 %v7403
    %v7405 = vpop.xlane.xlu0 %7404
    %v7406 = vsub.f32 %v7346, %v7402
    %v7407 = vsub.f32 %v7395, %v7405
    %v7408 = vmul.f32 %v7406, 1.442695
    %v7409 = vpow.pop %v7408
    %v7410 = vmul.f32 %v7407, 1.442695
    %v7411 = vpow.pop %v7410
    %v7412 = vsel %vm786, %v7409, 0.0
    %7413 = vadd.xlane.f32.xlu0 %v7412
    %v7414 = vpop.xlane.xlu0 %7413
    %v7415 = vsel %vm786, %v7411, 0.0
    %7416 = vadd.xlane.f32.xlu0 %v7415
    %v7417 = vpop.xlane.xlu0 %7416
    %v7418 = vrcp.pop %v7414
    %v7419 = vrcp.pop %v7417
    %v7420 = vmul.f32 %v7409, %v7418
    %v7421 = vmul.f32 %v7411, %v7419
    %v7422 = vpack.c.bf16 %v7420, %v7420
    %v7423 = vpack.c.bf16 %v7421, %v7421
    %7424 = vrot.lane.b32.xlu0 %v7300, 64
    %v7425 = vpop.permute.xlu0 %7424
    %v7427 = vsel %vm786, %v7422, 0
    %v7430 = vsel %vm911, %v7425, 0
    %7432 = vmatprep.subr.bf16.mxu0 0
    %7433 = vmatpush1.bf16.msra.mxu0 0
    %7434 = vmatprep.subr.bf16.mxu0 0
    %7435 = vmatpush1.bf16.msra.mxu0 0
    %7436 = vmatprep.subr.bf16.mxu0 0
    %7437 = vmatpush1.bf16.msra.mxu0 0
    %7438 = vmatprep.subr.bf16.mxu0 0
    %7439 = vmatpush1.bf16.msra.mxu0 0
    %7440 = vmatprep.subr.bf16.mxu0 0
    %7441 = vmatpush1.bf16.msra.mxu0 0
    %7442 = vmatprep.subr.bf16.mxu0 0
    %7443 = vmatpush1.bf16.msra.mxu0 0
    %7444 = vmatprep.subr.bf16.mxu0 0
    %7445 = vmatpush1.bf16.msra.mxu0 0
    %7446 = vmatprep.subr.bf16.mxu0 0
    %7447 = vmatpush1.bf16.msra.mxu0 %v7430
    %7448 = vmatprep.subr.bf16.mxu0 0
    %7449 = vmatpush2.bf16.msra.mxu0 0
    %7450 = vmatprep.subr.bf16.mxu0 0
    %7451 = vmatpush2.bf16.msra.mxu0 0
    %7452 = vmatprep.subr.bf16.mxu0 0
    %7453 = vmatpush2.bf16.msra.mxu0 0
    %7454 = vmatprep.subr.bf16.mxu0 0
    %7455 = vmatpush2.bf16.msra.mxu0 0
    %7456 = vmatprep.subr.bf16.mxu0 0
    %7457 = vmatpush2.bf16.msra.mxu0 0
    %7458 = vmatprep.subr.bf16.mxu0 0
    %7459 = vmatpush2.bf16.msra.mxu0 0
    %7460 = vmatprep.subr.bf16.mxu0 0
    %7461 = vmatpush2.bf16.msra.mxu0 0
    %7462 = vmatprep.subr.bf16.mxu0 0
    %7463 = vmatpush2.bf16.msra.mxu0 0
    %7464 = vmatprep.mubr.bf16.mxu0 0
    %7465 = vmatmul.mubr.bf16.gmra.mxu0 %v7427
    %v7466 = vpop.f32.mrf.mxu0
    %v7467 = vadd.f32 0.0, %v7466
    %v7468 = vpop.f32.mrf.mxu0
    %v7469 = vpop.f32.mrf.mxu0
    %v7470 = vpop.f32.mrf.mxu0
    %7471 = vdwg.mxu0
    %7472 = vrot.lane.b32.xlu0 %v7301, 64
    %v7473 = vpop.permute.xlu0 %7472
    %v7475 = vsel %vm786, %v7423, 0
    %v7478 = vsel %vm911, %v7473, 0
    %7480 = vmatprep.subr.bf16.mxu0 0
    %7481 = vmatpush1.bf16.msra.mxu0 0
    %7482 = vmatprep.subr.bf16.mxu0 0
    %7483 = vmatpush1.bf16.msra.mxu0 0
    %7484 = vmatprep.subr.bf16.mxu0 0
    %7485 = vmatpush1.bf16.msra.mxu0 0
    %7486 = vmatprep.subr.bf16.mxu0 0
    %7487 = vmatpush1.bf16.msra.mxu0 0
    %7488 = vmatprep.subr.bf16.mxu0 0
    %7489 = vmatpush1.bf16.msra.mxu0 0
    %7490 = vmatprep.subr.bf16.mxu0 0
    %7491 = vmatpush1.bf16.msra.mxu0 0
    %7492 = vmatprep.subr.bf16.mxu0 0
    %7493 = vmatpush1.bf16.msra.mxu0 0
    %7494 = vmatprep.subr.bf16.mxu0 0
    %7495 = vmatpush1.bf16.msra.mxu0 %v7478
    %7496 = vmatprep.subr.bf16.mxu0 0
    %7497 = vmatpush2.bf16.msra.mxu0 0
    %7498 = vmatprep.subr.bf16.mxu0 0
    %7499 = vmatpush2.bf16.msra.mxu0 0
    %7500 = vmatprep.subr.bf16.mxu0 0
    %7501 = vmatpush2.bf16.msra.mxu0 0
    %7502 = vmatprep.subr.bf16.mxu0 0
    %7503 = vmatpush2.bf16.msra.mxu0 0
    %7504 = vmatprep.subr.bf16.mxu0 0
    %7505 = vmatpush2.bf16.msra.mxu0 0
    %7506 = vmatprep.subr.bf16.mxu0 0
    %7507 = vmatpush2.bf16.msra.mxu0 0
    %7508 = vmatprep.subr.bf16.mxu0 0
    %7509 = vmatpush2.bf16.msra.mxu0 0
    %7510 = vmatprep.subr.bf16.mxu0 0
    %7511 = vmatpush2.bf16.msra.mxu0 0
    %7512 = vmatprep.mubr.bf16.mxu0 0
    %7513 = vmatmul.mubr.bf16.gmra.mxu0 %v7475
    %v7514 = vpop.f32.mrf.mxu0
    %v7515 = vadd.f32 0.0, %v7514
    %v7516 = vpop.f32.mrf.mxu0
    %v7517 = vpop.f32.mrf.mxu0
    %v7518 = vpop.f32.mrf.mxu0
    %7519 = vdwg.mxu0
    %7520 = vst.msk [vmem:[#allocation3] sm:$0xff] %vm786, %v7467
    %7521 = vst.msk [vmem:[#allocation3 + $0x8] sm:$0xff] %vm786, %v7515
    %7522 = vrot.lane.b32.xlu0 %v7300, 120
    %v7523 = vpop.permute.xlu0 %7522
    %7524 = vrot.lane.b32.xlu0 %v7300, 88
    %v7525 = vpop.permute.xlu0 %7524
    %v7527 = vsel %vm786, %v7523, 0
    %v7530 = vsel %vm786, %v7525, 0
    %7532 = vmatprep.subr.bf16.mxu0 0
    %7533 = vmatpush1.bf16.xpose.msra.mxu0 0
    %7534 = vmatprep.subr.bf16.mxu0 0
    %7535 = vmatpush1.bf16.xpose.msra.mxu0 0
    %7536 = vmatprep.subr.bf16.mxu0 0
    %7537 = vmatpush1.bf16.xpose.msra.mxu0 0
    %7538 = vmatprep.subr.bf16.mxu0 0
    %7539 = vmatpush1.bf16.xpose.msra.mxu0 0
    %7540 = vmatprep.subr.bf16.mxu0 0
    %7541 = vmatpush1.bf16.xpose.msra.mxu0 0
    %7542 = vmatprep.subr.bf16.mxu0 0
    %7543 = vmatpush1.bf16.xpose.msra.mxu0 0
    %7544 = vmatprep.subr.bf16.mxu0 0
    %7545 = vmatpush1.bf16.xpose.msra.mxu0 0
    %7546 = vmatprep.subr.bf16.mxu0 0
    %7547 = vmatpush1.bf16.xpose.msra.mxu0 %v7530
    %7548 = vmatprep.subr.bf16.mxu0 0
    %7549 = vmatpush2.bf16.xpose.msra.mxu0 0
    %7550 = vmatprep.subr.bf16.mxu0 0
    %7551 = vmatpush2.bf16.xpose.msra.mxu0 0
    %7552 = vmatprep.subr.bf16.mxu0 0
    %7553 = vmatpush2.bf16.xpose.msra.mxu0 0
    %7554 = vmatprep.subr.bf16.mxu0 0
    %7555 = vmatpush2.bf16.xpose.msra.mxu0 0
    %7556 = vmatprep.subr.bf16.mxu0 0
    %7557 = vmatpush2.bf16.xpose.msra.mxu0 0
    %7558 = vmatprep.subr.bf16.mxu0 0
    %7559 = vmatpush2.bf16.xpose.msra.mxu0 0
    %7560 = vmatprep.subr.bf16.mxu0 0
    %7561 = vmatpush2.bf16.xpose.msra.mxu0 0
    %7562 = vmatprep.subr.bf16.mxu0 0
    %7563 = vmatpush2.bf16.xpose.msra.mxu0 0
    %7564 = vmatprep.mubr.bf16.mxu0 0
    %7565 = vmatmul.mubr.bf16.gmra.mxu0 %v7527
    %v7566 = vpop.f32.mrf.mxu0
    %v7567 = vadd.f32 0.0, %v7566
    %v7568 = vpop.f32.mrf.mxu0
    %v7569 = vpop.f32.mrf.mxu0
    %v7570 = vpop.f32.mrf.mxu0
    %7571 = vdwg.mxu0
    %7572 = vrot.lane.b32.xlu0 %v7301, 120
    %v7573 = vpop.permute.xlu0 %7572
    %7574 = vrot.lane.b32.xlu0 %v7301, 88
    %v7575 = vpop.permute.xlu0 %7574
    %v7577 = vsel %vm786, %v7573, 0
    %v7580 = vsel %vm786, %v7575, 0
    %7582 = vmatprep.subr.bf16.mxu0 0
    %7583 = vmatpush1.bf16.xpose.msra.mxu0 0
    %7584 = vmatprep.subr.bf16.mxu0 0
    %7585 = vmatpush1.bf16.xpose.msra.mxu0 0
    %7586 = vmatprep.subr.bf16.mxu0 0
    %7587 = vmatpush1.bf16.xpose.msra.mxu0 0
    %7588 = vmatprep.subr.bf16.mxu0 0
    %7589 = vmatpush1.bf16.xpose.msra.mxu0 0
    %7590 = vmatprep.subr.bf16.mxu0 0
    %7591 = vmatpush1.bf16.xpose.msra.mxu0 0
    %7592 = vmatprep.subr.bf16.mxu0 0
    %7593 = vmatpush1.bf16.xpose.msra.mxu0 0
    %7594 = vmatprep.subr.bf16.mxu0 0
    %7595 = vmatpush1.bf16.xpose.msra.mxu0 0
    %7596 = vmatprep.subr.bf16.mxu0 0
    %7597 = vmatpush1.bf16.xpose.msra.mxu0 %v7580
    %7598 = vmatprep.subr.bf16.mxu0 0
    %7599 = vmatpush2.bf16.xpose.msra.mxu0 0
    %7600 = vmatprep.subr.bf16.mxu0 0
    %7601 = vmatpush2.bf16.xpose.msra.mxu0 0
    %7602 = vmatprep.subr.bf16.mxu0 0
    %7603 = vmatpush2.bf16.xpose.msra.mxu0 0
    %7604 = vmatprep.subr.bf16.mxu0 0
    %7605 = vmatpush2.bf16.xpose.msra.mxu0 0
    %7606 = vmatprep.subr.bf16.mxu0 0
    %7607 = vmatpush2.bf16.xpose.msra.mxu0 0
    %7608 = vmatprep.subr.bf16.mxu0 0
    %7609 = vmatpush2.bf16.xpose.msra.mxu0 0
    %7610 = vmatprep.subr.bf16.mxu0 0
    %7611 = vmatpush2.bf16.xpose.msra.mxu0 0
    %7612 = vmatprep.subr.bf16.mxu0 0
    %7613 = vmatpush2.bf16.xpose.msra.mxu0 0
    %7614 = vmatprep.mubr.bf16.mxu0 0
    %7615 = vmatmul.mubr.bf16.gmra.mxu0 %v7577
    %v7616 = vpop.f32.mrf.mxu0
    %v7617 = vadd.f32 0.0, %v7616
    %v7618 = vpop.f32.mrf.mxu0
    %v7619 = vpop.f32.mrf.mxu0
    %v7620 = vpop.f32.mrf.mxu0
    %7621 = vdwg.mxu0
    %v7622 = vsel %vm786, %v7567, -inf
    %7623 = vmax.xlane.f32.xlu0 %v7622
    %v7624 = vpop.xlane.xlu0 %7623
    %v7625 = vsel %vm786, %v7617, -inf
    %7626 = vmax.xlane.f32.xlu0 %v7625
    %v7627 = vpop.xlane.xlu0 %7626
    %v7628 = vsub.f32 %v7567, %v7624
    %v7629 = vsub.f32 %v7617, %v7627
    %v7630 = vmul.f32 %v7628, 1.442695
    %v7631 = vpow.pop %v7630
    %v7632 = vmul.f32 %v7629, 1.442695
    %v7633 = vpow.pop %v7632
    %v7634 = vsel %vm786, %v7631, 0.0
    %7635 = vadd.xlane.f32.xlu0 %v7634
    %v7636 = vpop.xlane.xlu0 %7635
    %v7637 = vsel %vm786, %v7633, 0.0
    %7638 = vadd.xlane.f32.xlu0 %v7637
    %v7639 = vpop.xlane.xlu0 %7638
    %v7640 = vrcp.pop %v7636
    %v7641 = vrcp.pop %v7639
    %v7642 = vmul.f32 %v7631, %v7640
    %v7643 = vmul.f32 %v7633, %v7641
    %v7644 = vpack.c.bf16 %v7642, %v7642
    %v7645 = vpack.c.bf16 %v7643, %v7643
    %7646 = vrot.lane.b32.xlu0 %v7300, 56
    %v7647 = vpop.permute.xlu0 %7646
    %v7649 = vsel %vm786, %v7644, 0
    %v7652 = vsel %vm911, %v7647, 0
    %7654 = vmatprep.subr.bf16.mxu0 0
    %7655 = vmatpush1.bf16.msra.mxu0 0
    %7656 = vmatprep.subr.bf16.mxu0 0
    %7657 = vmatpush1.bf16.msra.mxu0 0
    %7658 = vmatprep.subr.bf16.mxu0 0
    %7659 = vmatpush1.bf16.msra.mxu0 0
    %7660 = vmatprep.subr.bf16.mxu0 0
    %7661 = vmatpush1.bf16.msra.mxu0 0
    %7662 = vmatprep.subr.bf16.mxu0 0
    %7663 = vmatpush1.bf16.msra.mxu0 0
    %7664 = vmatprep.subr.bf16.mxu0 0
    %7665 = vmatpush1.bf16.msra.mxu0 0
    %7666 = vmatprep.subr.bf16.mxu0 0
    %7667 = vmatpush1.bf16.msra.mxu0 0
    %7668 = vmatprep.subr.bf16.mxu0 0
    %7669 = vmatpush1.bf16.msra.mxu0 %v7652
    %7670 = vmatprep.subr.bf16.mxu0 0
    %7671 = vmatpush2.bf16.msra.mxu0 0
    %7672 = vmatprep.subr.bf16.mxu0 0
    %7673 = vmatpush2.bf16.msra.mxu0 0
    %7674 = vmatprep.subr.bf16.mxu0 0
    %7675 = vmatpush2.bf16.msra.mxu0 0
    %7676 = vmatprep.subr.bf16.mxu0 0
    %7677 = vmatpush2.bf16.msra.mxu0 0
    %7678 = vmatprep.subr.bf16.mxu0 0
    %7679 = vmatpush2.bf16.msra.mxu0 0
    %7680 = vmatprep.subr.bf16.mxu0 0
    %7681 = vmatpush2.bf16.msra.mxu0 0
    %7682 = vmatprep.subr.bf16.mxu0 0
    %7683 = vmatpush2.bf16.msra.mxu0 0
    %7684 = vmatprep.subr.bf16.mxu0 0
    %7685 = vmatpush2.bf16.msra.mxu0 0
    %7686 = vmatprep.mubr.bf16.mxu0 0
    %7687 = vmatmul.mubr.bf16.gmra.mxu0 %v7649
    %v7688 = vpop.f32.mrf.mxu0
    %v7689 = vadd.f32 0.0, %v7688
    %v7690 = vpop.f32.mrf.mxu0
    %v7691 = vpop.f32.mrf.mxu0
    %v7692 = vpop.f32.mrf.mxu0
    %7693 = vdwg.mxu0
    %7694 = vrot.lane.b32.xlu0 %v7301, 56
    %v7695 = vpop.permute.xlu0 %7694
    %v7697 = vsel %vm786, %v7645, 0
    %v7700 = vsel %vm911, %v7695, 0
    %7702 = vmatprep.subr.bf16.mxu0 0
    %7703 = vmatpush1.bf16.msra.mxu0 0
    %7704 = vmatprep.subr.bf16.mxu0 0
    %7705 = vmatpush1.bf16.msra.mxu0 0
    %7706 = vmatprep.subr.bf16.mxu0 0
    %7707 = vmatpush1.bf16.msra.mxu0 0
    %7708 = vmatprep.subr.bf16.mxu0 0
    %7709 = vmatpush1.bf16.msra.mxu0 0
    %7710 = vmatprep.subr.bf16.mxu0 0
    %7711 = vmatpush1.bf16.msra.mxu0 0
    %7712 = vmatprep.subr.bf16.mxu0 0
    %7713 = vmatpush1.bf16.msra.mxu0 0
    %7714 = vmatprep.subr.bf16.mxu0 0
    %7715 = vmatpush1.bf16.msra.mxu0 0
    %7716 = vmatprep.subr.bf16.mxu0 0
    %7717 = vmatpush1.bf16.msra.mxu0 %v7700
    %7718 = vmatprep.subr.bf16.mxu0 0
    %7719 = vmatpush2.bf16.msra.mxu0 0
    %7720 = vmatprep.subr.bf16.mxu0 0
    %7721 = vmatpush2.bf16.msra.mxu0 0
    %7722 = vmatprep.subr.bf16.mxu0 0
    %7723 = vmatpush2.bf16.msra.mxu0 0
    %7724 = vmatprep.subr.bf16.mxu0 0
    %7725 = vmatpush2.bf16.msra.mxu0 0
    %7726 = vmatprep.subr.bf16.mxu0 0
    %7727 = vmatpush2.bf16.msra.mxu0 0
    %7728 = vmatprep.subr.bf16.mxu0 0
    %7729 = vmatpush2.bf16.msra.mxu0 0
    %7730 = vmatprep.subr.bf16.mxu0 0
    %7731 = vmatpush2.bf16.msra.mxu0 0
    %7732 = vmatprep.subr.bf16.mxu0 0
    %7733 = vmatpush2.bf16.msra.mxu0 0
    %7734 = vmatprep.mubr.bf16.mxu0 0
    %7735 = vmatmul.mubr.bf16.gmra.mxu0 %v7697
    %v7736 = vpop.f32.mrf.mxu0
    %v7737 = vadd.f32 0.0, %v7736
    %v7738 = vpop.f32.mrf.mxu0
    %v7739 = vpop.f32.mrf.mxu0
    %v7740 = vpop.f32.mrf.mxu0
    %7741 = vdwg.mxu0
    %7744 = vrot.lane.b32.xlu0 %v7689, 8
    %v7745 = vpop.permute.xlu0 %7744
    %7746 = vrot.lane.b32.xlu0 %v7737, 8
    %v7747 = vpop.permute.xlu0 %7746
    %7750 = vst.msk [vmem:[#allocation3] sm:$0xff] %vm1233, %v7745
    %7751 = vst.msk [vmem:[#allocation3 + $0x8] sm:$0xff] %vm1233, %v7747
    %7752 = vrot.lane.b32.xlu0 %v7300, 112
    %v7753 = vpop.permute.xlu0 %7752
    %7754 = vrot.lane.b32.xlu0 %v7300, 80
    %v7755 = vpop.permute.xlu0 %7754
    %v7757 = vsel %vm786, %v7753, 0
    %v7760 = vsel %vm786, %v7755, 0
    %7762 = vmatprep.subr.bf16.mxu0 0
    %7763 = vmatpush1.bf16.xpose.msra.mxu0 0
    %7764 = vmatprep.subr.bf16.mxu0 0
    %7765 = vmatpush1.bf16.xpose.msra.mxu0 0
    %7766 = vmatprep.subr.bf16.mxu0 0
    %7767 = vmatpush1.bf16.xpose.msra.mxu0 0
    %7768 = vmatprep.subr.bf16.mxu0 0
    %7769 = vmatpush1.bf16.xpose.msra.mxu0 0
    %7770 = vmatprep.subr.bf16.mxu0 0
    %7771 = vmatpush1.bf16.xpose.msra.mxu0 0
    %7772 = vmatprep.subr.bf16.mxu0 0
    %7773 = vmatpush1.bf16.xpose.msra.mxu0 0
    %7774 = vmatprep.subr.bf16.mxu0 0
    %7775 = vmatpush1.bf16.xpose.msra.mxu0 0
    %7776 = vmatprep.subr.bf16.mxu0 0
    %7777 = vmatpush1.bf16.xpose.msra.mxu0 %v7760
    %7778 = vmatprep.subr.bf16.mxu0 0
    %7779 = vmatpush2.bf16.xpose.msra.mxu0 0
    %7780 = vmatprep.subr.bf16.mxu0 0
    %7781 = vmatpush2.bf16.xpose.msra.mxu0 0
    %7782 = vmatprep.subr.bf16.mxu0 0
    %7783 = vmatpush2.bf16.xpose.msra.mxu0 0
    %7784 = vmatprep.subr.bf16.mxu0 0
    %7785 = vmatpush2.bf16.xpose.msra.mxu0 0
    %7786 = vmatprep.subr.bf16.mxu0 0
    %7787 = vmatpush2.bf16.xpose.msra.mxu0 0
    %7788 = vmatprep.subr.bf16.mxu0 0
    %7789 = vmatpush2.bf16.xpose.msra.mxu0 0
    %7790 = vmatprep.subr.bf16.mxu0 0
    %7791 = vmatpush2.bf16.xpose.msra.mxu0 0
    %7792 = vmatprep.subr.bf16.mxu0 0
    %7793 = vmatpush2.bf16.xpose.msra.mxu0 0
    %7794 = vmatprep.mubr.bf16.mxu0 0
    %7795 = vmatmul.mubr.bf16.gmra.mxu0 %v7757
    %v7796 = vpop.f32.mrf.mxu0
    %v7797 = vadd.f32 0.0, %v7796
    %v7798 = vpop.f32.mrf.mxu0
    %v7799 = vpop.f32.mrf.mxu0
    %v7800 = vpop.f32.mrf.mxu0
    %7801 = vdwg.mxu0
    %7802 = vrot.lane.b32.xlu0 %v7301, 112
    %v7803 = vpop.permute.xlu0 %7802
    %7804 = vrot.lane.b32.xlu0 %v7301, 80
    %v7805 = vpop.permute.xlu0 %7804
    %v7807 = vsel %vm786, %v7803, 0
    %v7810 = vsel %vm786, %v7805, 0
    %7812 = vmatprep.subr.bf16.mxu0 0
    %7813 = vmatpush1.bf16.xpose.msra.mxu0 0
    %7814 = vmatprep.subr.bf16.mxu0 0
    %7815 = vmatpush1.bf16.xpose.msra.mxu0 0
    %7816 = vmatprep.subr.bf16.mxu0 0
    %7817 = vmatpush1.bf16.xpose.msra.mxu0 0
    %7818 = vmatprep.subr.bf16.mxu0 0
    %7819 = vmatpush1.bf16.xpose.msra.mxu0 0
    %7820 = vmatprep.subr.bf16.mxu0 0
    %7821 = vmatpush1.bf16.xpose.msra.mxu0 0
    %7822 = vmatprep.subr.bf16.mxu0 0
    %7823 = vmatpush1.bf16.xpose.msra.mxu0 0
    %7824 = vmatprep.subr.bf16.mxu0 0
    %7825 = vmatpush1.bf16.xpose.msra.mxu0 0
    %7826 = vmatprep.subr.bf16.mxu0 0
    %7827 = vmatpush1.bf16.xpose.msra.mxu0 %v7810
    %7828 = vmatprep.subr.bf16.mxu0 0
    %7829 = vmatpush2.bf16.xpose.msra.mxu0 0
    %7830 = vmatprep.subr.bf16.mxu0 0
    %7831 = vmatpush2.bf16.xpose.msra.mxu0 0
    %7832 = vmatprep.subr.bf16.mxu0 0
    %7833 = vmatpush2.bf16.xpose.msra.mxu0 0
    %7834 = vmatprep.subr.bf16.mxu0 0
    %7835 = vmatpush2.bf16.xpose.msra.mxu0 0
    %7836 = vmatprep.subr.bf16.mxu0 0
    %7837 = vmatpush2.bf16.xpose.msra.mxu0 0
    %7838 = vmatprep.subr.bf16.mxu0 0
    %7839 = vmatpush2.bf16.xpose.msra.mxu0 0
    %7840 = vmatprep.subr.bf16.mxu0 0
    %7841 = vmatpush2.bf16.xpose.msra.mxu0 0
    %7842 = vmatprep.subr.bf16.mxu0 0
    %7843 = vmatpush2.bf16.xpose.msra.mxu0 0
    %7844 = vmatprep.mubr.bf16.mxu0 0
    %7845 = vmatmul.mubr.bf16.gmra.mxu0 %v7807
    %v7846 = vpop.f32.mrf.mxu0
    %v7847 = vadd.f32 0.0, %v7846
    %v7848 = vpop.f32.mrf.mxu0
    %v7849 = vpop.f32.mrf.mxu0
    %v7850 = vpop.f32.mrf.mxu0
    %7851 = vdwg.mxu0
    %v7852 = vsel %vm786, %v7797, -inf
    %7853 = vmax.xlane.f32.xlu0 %v7852
    %v7854 = vpop.xlane.xlu0 %7853
    %v7855 = vsel %vm786, %v7847, -inf
    %7856 = vmax.xlane.f32.xlu0 %v7855
    %v7857 = vpop.xlane.xlu0 %7856
    %v7858 = vsub.f32 %v7797, %v7854
    %v7859 = vsub.f32 %v7847, %v7857
    %v7860 = vmul.f32 %v7858, 1.442695
    %v7861 = vpow.pop %v7860
    %v7862 = vmul.f32 %v7859, 1.442695
    %v7863 = vpow.pop %v7862
    %v7864 = vsel %vm786, %v7861, 0.0
    %7865 = vadd.xlane.f32.xlu0 %v7864
    %v7866 = vpop.xlane.xlu0 %7865
    %v7867 = vsel %vm786, %v7863, 0.0
    %7868 = vadd.xlane.f32.xlu0 %v7867
    %v7869 = vpop.xlane.xlu0 %7868
    %v7870 = vrcp.pop %v7866
    %v7871 = vrcp.pop %v7869
    %v7872 = vmul.f32 %v7861, %v7870
    %v7873 = vmul.f32 %v7863, %v7871
    %v7874 = vpack.c.bf16 %v7872, %v7872
    %v7875 = vpack.c.bf16 %v7873, %v7873
    %7876 = vrot.lane.b32.xlu0 %v7300, 48
    %v7877 = vpop.permute.xlu0 %7876
    %v7879 = vsel %vm786, %v7874, 0
    %v7882 = vsel %vm911, %v7877, 0
    %7884 = vmatprep.subr.bf16.mxu0 0
    %7885 = vmatpush1.bf16.msra.mxu0 0
    %7886 = vmatprep.subr.bf16.mxu0 0
    %7887 = vmatpush1.bf16.msra.mxu0 0
    %7888 = vmatprep.subr.bf16.mxu0 0
    %7889 = vmatpush1.bf16.msra.mxu0 0
    %7890 = vmatprep.subr.bf16.mxu0 0
    %7891 = vmatpush1.bf16.msra.mxu0 0
    %7892 = vmatprep.subr.bf16.mxu0 0
    %7893 = vmatpush1.bf16.msra.mxu0 0
    %7894 = vmatprep.subr.bf16.mxu0 0
    %7895 = vmatpush1.bf16.msra.mxu0 0
    %7896 = vmatprep.subr.bf16.mxu0 0
    %7897 = vmatpush1.bf16.msra.mxu0 0
    %7898 = vmatprep.subr.bf16.mxu0 0
    %7899 = vmatpush1.bf16.msra.mxu0 %v7882
    %7900 = vmatprep.subr.bf16.mxu0 0
    %7901 = vmatpush2.bf16.msra.mxu0 0
    %7902 = vmatprep.subr.bf16.mxu0 0
    %7903 = vmatpush2.bf16.msra.mxu0 0
    %7904 = vmatprep.subr.bf16.mxu0 0
    %7905 = vmatpush2.bf16.msra.mxu0 0
    %7906 = vmatprep.subr.bf16.mxu0 0
    %7907 = vmatpush2.bf16.msra.mxu0 0
    %7908 = vmatprep.subr.bf16.mxu0 0
    %7909 = vmatpush2.bf16.msra.mxu0 0
    %7910 = vmatprep.subr.bf16.mxu0 0
    %7911 = vmatpush2.bf16.msra.mxu0 0
    %7912 = vmatprep.subr.bf16.mxu0 0
    %7913 = vmatpush2.bf16.msra.mxu0 0
    %7914 = vmatprep.subr.bf16.mxu0 0
    %7915 = vmatpush2.bf16.msra.mxu0 0
    %7916 = vmatprep.mubr.bf16.mxu0 0
    %7917 = vmatmul.mubr.bf16.gmra.mxu0 %v7879
    %v7918 = vpop.f32.mrf.mxu0
    %v7919 = vadd.f32 0.0, %v7918
    %v7920 = vpop.f32.mrf.mxu0
    %v7921 = vpop.f32.mrf.mxu0
    %v7922 = vpop.f32.mrf.mxu0
    %7923 = vdwg.mxu0
    %7924 = vrot.lane.b32.xlu0 %v7301, 48
    %v7925 = vpop.permute.xlu0 %7924
    %v7927 = vsel %vm786, %v7875, 0
    %v7930 = vsel %vm911, %v7925, 0
    %7932 = vmatprep.subr.bf16.mxu0 0
    %7933 = vmatpush1.bf16.msra.mxu0 0
    %7934 = vmatprep.subr.bf16.mxu0 0
    %7935 = vmatpush1.bf16.msra.mxu0 0
    %7936 = vmatprep.subr.bf16.mxu0 0
    %7937 = vmatpush1.bf16.msra.mxu0 0
    %7938 = vmatprep.subr.bf16.mxu0 0
    %7939 = vmatpush1.bf16.msra.mxu0 0
    %7940 = vmatprep.subr.bf16.mxu0 0
    %7941 = vmatpush1.bf16.msra.mxu0 0
    %7942 = vmatprep.subr.bf16.mxu0 0
    %7943 = vmatpush1.bf16.msra.mxu0 0
    %7944 = vmatprep.subr.bf16.mxu0 0
    %7945 = vmatpush1.bf16.msra.mxu0 0
    %7946 = vmatprep.subr.bf16.mxu0 0
    %7947 = vmatpush1.bf16.msra.mxu0 %v7930
    %7948 = vmatprep.subr.bf16.mxu0 0
    %7949 = vmatpush2.bf16.msra.mxu0 0
    %7950 = vmatprep.subr.bf16.mxu0 0
    %7951 = vmatpush2.bf16.msra.mxu0 0
    %7952 = vmatprep.subr.bf16.mxu0 0
    %7953 = vmatpush2.bf16.msra.mxu0 0
    %7954 = vmatprep.subr.bf16.mxu0 0
    %7955 = vmatpush2.bf16.msra.mxu0 0
    %7956 = vmatprep.subr.bf16.mxu0 0
    %7957 = vmatpush2.bf16.msra.mxu0 0
    %7958 = vmatprep.subr.bf16.mxu0 0
    %7959 = vmatpush2.bf16.msra.mxu0 0
    %7960 = vmatprep.subr.bf16.mxu0 0
    %7961 = vmatpush2.bf16.msra.mxu0 0
    %7962 = vmatprep.subr.bf16.mxu0 0
    %7963 = vmatpush2.bf16.msra.mxu0 0
    %7964 = vmatprep.mubr.bf16.mxu0 0
    %7965 = vmatmul.mubr.bf16.gmra.mxu0 %v7927
    %v7966 = vpop.f32.mrf.mxu0
    %v7967 = vadd.f32 0.0, %v7966
    %v7968 = vpop.f32.mrf.mxu0
    %v7969 = vpop.f32.mrf.mxu0
    %v7970 = vpop.f32.mrf.mxu0
    %7971 = vdwg.mxu0
    %7974 = vrot.lane.b32.xlu0 %v7919, 16
    %v7975 = vpop.permute.xlu0 %7974
    %7976 = vrot.lane.b32.xlu0 %v7967, 16
    %v7977 = vpop.permute.xlu0 %7976
    %7980 = vst.msk [vmem:[#allocation3] sm:$0xff] %vm1464, %v7975
    %7981 = vst.msk [vmem:[#allocation3 + $0x8] sm:$0xff] %vm1464, %v7977
    %7982 = vrot.lane.b32.xlu0 %v7300, 104
    %v7983 = vpop.permute.xlu0 %7982
    %7984 = vrot.lane.b32.xlu0 %v7300, 72
    %v7985 = vpop.permute.xlu0 %7984
    %v7987 = vsel %vm786, %v7983, 0
    %v7990 = vsel %vm786, %v7985, 0
    %7992 = vmatprep.subr.bf16.mxu0 0
    %7993 = vmatpush1.bf16.xpose.msra.mxu0 0
    %7994 = vmatprep.subr.bf16.mxu0 0
    %7995 = vmatpush1.bf16.xpose.msra.mxu0 0
    %7996 = vmatprep.subr.bf16.mxu0 0
    %7997 = vmatpush1.bf16.xpose.msra.mxu0 0
    %7998 = vmatprep.subr.bf16.mxu0 0
    %7999 = vmatpush1.bf16.xpose.msra.mxu0 0
    %8000 = vmatprep.subr.bf16.mxu0 0
    %8001 = vmatpush1.bf16.xpose.msra.mxu0 0
    %8002 = vmatprep.subr.bf16.mxu0 0
    %8003 = vmatpush1.bf16.xpose.msra.mxu0 0
    %8004 = vmatprep.subr.bf16.mxu0 0
    %8005 = vmatpush1.bf16.xpose.msra.mxu0 0
    %8006 = vmatprep.subr.bf16.mxu0 0
    %8007 = vmatpush1.bf16.xpose.msra.mxu0 %v7990
    %8008 = vmatprep.subr.bf16.mxu0 0
    %8009 = vmatpush2.bf16.xpose.msra.mxu0 0
    %8010 = vmatprep.subr.bf16.mxu0 0
    %8011 = vmatpush2.bf16.xpose.msra.mxu0 0
    %8012 = vmatprep.subr.bf16.mxu0 0
    %8013 = vmatpush2.bf16.xpose.msra.mxu0 0
    %8014 = vmatprep.subr.bf16.mxu0 0
    %8015 = vmatpush2.bf16.xpose.msra.mxu0 0
    %8016 = vmatprep.subr.bf16.mxu0 0
    %8017 = vmatpush2.bf16.xpose.msra.mxu0 0
    %8018 = vmatprep.subr.bf16.mxu0 0
    %8019 = vmatpush2.bf16.xpose.msra.mxu0 0
    %8020 = vmatprep.subr.bf16.mxu0 0
    %8021 = vmatpush2.bf16.xpose.msra.mxu0 0
    %8022 = vmatprep.subr.bf16.mxu0 0
    %8023 = vmatpush2.bf16.xpose.msra.mxu0 0
    %8024 = vmatprep.mubr.bf16.mxu0 0
    %8025 = vmatmul.mubr.bf16.gmra.mxu0 %v7987
    %v8026 = vpop.f32.mrf.mxu0
    %v8027 = vadd.f32 0.0, %v8026
    %v8028 = vpop.f32.mrf.mxu0
    %v8029 = vpop.f32.mrf.mxu0
    %v8030 = vpop.f32.mrf.mxu0
    %8031 = vdwg.mxu0
    %8032 = vrot.lane.b32.xlu0 %v7301, 104
    %v8033 = vpop.permute.xlu0 %8032
    %8034 = vrot.lane.b32.xlu0 %v7301, 72
    %v8035 = vpop.permute.xlu0 %8034
    %v8037 = vsel %vm786, %v8033, 0
    %v8040 = vsel %vm786, %v8035, 0
    %8042 = vmatprep.subr.bf16.mxu0 0
    %8043 = vmatpush1.bf16.xpose.msra.mxu0 0
    %8044 = vmatprep.subr.bf16.mxu0 0
    %8045 = vmatpush1.bf16.xpose.msra.mxu0 0
    %8046 = vmatprep.subr.bf16.mxu0 0
    %8047 = vmatpush1.bf16.xpose.msra.mxu0 0
    %8048 = vmatprep.subr.bf16.mxu0 0
    %8049 = vmatpush1.bf16.xpose.msra.mxu0 0
    %8050 = vmatprep.subr.bf16.mxu0 0
    %8051 = vmatpush1.bf16.xpose.msra.mxu0 0
    %8052 = vmatprep.subr.bf16.mxu0 0
    %8053 = vmatpush1.bf16.xpose.msra.mxu0 0
    %8054 = vmatprep.subr.bf16.mxu0 0
    %8055 = vmatpush1.bf16.xpose.msra.mxu0 0
    %8056 = vmatprep.subr.bf16.mxu0 0
    %8057 = vmatpush1.bf16.xpose.msra.mxu0 %v8040
    %8058 = vmatprep.subr.bf16.mxu0 0
    %8059 = vmatpush2.bf16.xpose.msra.mxu0 0
    %8060 = vmatprep.subr.bf16.mxu0 0
    %8061 = vmatpush2.bf16.xpose.msra.mxu0 0
    %8062 = vmatprep.subr.bf16.mxu0 0
    %8063 = vmatpush2.bf16.xpose.msra.mxu0 0
    %8064 = vmatprep.subr.bf16.mxu0 0
    %8065 = vmatpush2.bf16.xpose.msra.mxu0 0
    %8066 = vmatprep.subr.bf16.mxu0 0
    %8067 = vmatpush2.bf16.xpose.msra.mxu0 0
    %8068 = vmatprep.subr.bf16.mxu0 0
    %8069 = vmatpush2.bf16.xpose.msra.mxu0 0
    %8070 = vmatprep.subr.bf16.mxu0 0
    %8071 = vmatpush2.bf16.xpose.msra.mxu0 0
    %8072 = vmatprep.subr.bf16.mxu0 0
    %8073 = vmatpush2.bf16.xpose.msra.mxu0 0
    %8074 = vmatprep.mubr.bf16.mxu0 0
    %8075 = vmatmul.mubr.bf16.gmra.mxu0 %v8037
    %v8076 = vpop.f32.mrf.mxu0
    %v8077 = vadd.f32 0.0, %v8076
    %v8078 = vpop.f32.mrf.mxu0
    %v8079 = vpop.f32.mrf.mxu0
    %v8080 = vpop.f32.mrf.mxu0
    %8081 = vdwg.mxu0
    %v8082 = vsel %vm786, %v8027, -inf
    %8083 = vmax.xlane.f32.xlu0 %v8082
    %v8084 = vpop.xlane.xlu0 %8083
    %v8085 = vsel %vm786, %v8077, -inf
    %8086 = vmax.xlane.f32.xlu0 %v8085
    %v8087 = vpop.xlane.xlu0 %8086
    %v8088 = vsub.f32 %v8027, %v8084
    %v8089 = vsub.f32 %v8077, %v8087
    %v8090 = vmul.f32 %v8088, 1.442695
    %v8091 = vpow.pop %v8090
    %v8092 = vmul.f32 %v8089, 1.442695
    %v8093 = vpow.pop %v8092
    %v8094 = vsel %vm786, %v8091, 0.0
    %8095 = vadd.xlane.f32.xlu0 %v8094
    %v8096 = vpop.xlane.xlu0 %8095
    %v8097 = vsel %vm786, %v8093, 0.0
    %8098 = vadd.xlane.f32.xlu0 %v8097
    %v8099 = vpop.xlane.xlu0 %8098
    %v8100 = vrcp.pop %v8096
    %v8101 = vrcp.pop %v8099
    %v8102 = vmul.f32 %v8091, %v8100
    %v8103 = vmul.f32 %v8093, %v8101
    %v8104 = vpack.c.bf16 %v8102, %v8102
    %v8105 = vpack.c.bf16 %v8103, %v8103
    %8106 = vrot.lane.b32.xlu0 %v7300, 40
    %v8107 = vpop.permute.xlu0 %8106
    %v8109 = vsel %vm786, %v8104, 0
    %v8112 = vsel %vm911, %v8107, 0
    %8114 = vmatprep.subr.bf16.mxu0 0
    %8115 = vmatpush1.bf16.msra.mxu0 0
    %8116 = vmatprep.subr.bf16.mxu0 0
    %8117 = vmatpush1.bf16.msra.mxu0 0
    %8118 = vmatprep.subr.bf16.mxu0 0
    %8119 = vmatpush1.bf16.msra.mxu0 0
    %8120 = vmatprep.subr.bf16.mxu0 0
    %8121 = vmatpush1.bf16.msra.mxu0 0
    %8122 = vmatprep.subr.bf16.mxu0 0
    %8123 = vmatpush1.bf16.msra.mxu0 0
    %8124 = vmatprep.subr.bf16.mxu0 0
    %8125 = vmatpush1.bf16.msra.mxu0 0
    %8126 = vmatprep.subr.bf16.mxu0 0
    %8127 = vmatpush1.bf16.msra.mxu0 0
    %8128 = vmatprep.subr.bf16.mxu0 0
    %8129 = vmatpush1.bf16.msra.mxu0 %v8112
    %8130 = vmatprep.subr.bf16.mxu0 0
    %8131 = vmatpush2.bf16.msra.mxu0 0
    %8132 = vmatprep.subr.bf16.mxu0 0
    %8133 = vmatpush2.bf16.msra.mxu0 0
    %8134 = vmatprep.subr.bf16.mxu0 0
    %8135 = vmatpush2.bf16.msra.mxu0 0
    %8136 = vmatprep.subr.bf16.mxu0 0
    %8137 = vmatpush2.bf16.msra.mxu0 0
    %8138 = vmatprep.subr.bf16.mxu0 0
    %8139 = vmatpush2.bf16.msra.mxu0 0
    %8140 = vmatprep.subr.bf16.mxu0 0
    %8141 = vmatpush2.bf16.msra.mxu0 0
    %8142 = vmatprep.subr.bf16.mxu0 0
    %8143 = vmatpush2.bf16.msra.mxu0 0
    %8144 = vmatprep.subr.bf16.mxu0 0
    %8145 = vmatpush2.bf16.msra.mxu0 0
    %8146 = vmatprep.mubr.bf16.mxu0 0
    %8147 = vmatmul.mubr.bf16.gmra.mxu0 %v8109
    %v8148 = vpop.f32.mrf.mxu0
    %v8149 = vadd.f32 0.0, %v8148
    %v8150 = vpop.f32.mrf.mxu0
    %v8151 = vpop.f32.mrf.mxu0
    %v8152 = vpop.f32.mrf.mxu0
    %8153 = vdwg.mxu0
    %8154 = vrot.lane.b32.xlu0 %v7301, 40
    %v8155 = vpop.permute.xlu0 %8154
    %v8157 = vsel %vm786, %v8105, 0
    %v8160 = vsel %vm911, %v8155, 0
    %8162 = vmatprep.subr.bf16.mxu0 0
    %8163 = vmatpush1.bf16.msra.mxu0 0
    %8164 = vmatprep.subr.bf16.mxu0 0
    %8165 = vmatpush1.bf16.msra.mxu0 0
    %8166 = vmatprep.subr.bf16.mxu0 0
    %8167 = vmatpush1.bf16.msra.mxu0 0
    %8168 = vmatprep.subr.bf16.mxu0 0
    %8169 = vmatpush1.bf16.msra.mxu0 0
    %8170 = vmatprep.subr.bf16.mxu0 0
    %8171 = vmatpush1.bf16.msra.mxu0 0
    %8172 = vmatprep.subr.bf16.mxu0 0
    %8173 = vmatpush1.bf16.msra.mxu0 0
    %8174 = vmatprep.subr.bf16.mxu0 0
    %8175 = vmatpush1.bf16.msra.mxu0 0
    %8176 = vmatprep.subr.bf16.mxu0 0
    %8177 = vmatpush1.bf16.msra.mxu0 %v8160
    %8178 = vmatprep.subr.bf16.mxu0 0
    %8179 = vmatpush2.bf16.msra.mxu0 0
    %8180 = vmatprep.subr.bf16.mxu0 0
    %8181 = vmatpush2.bf16.msra.mxu0 0
    %8182 = vmatprep.subr.bf16.mxu0 0
    %8183 = vmatpush2.bf16.msra.mxu0 0
    %8184 = vmatprep.subr.bf16.mxu0 0
    %8185 = vmatpush2.bf16.msra.mxu0 0
    %8186 = vmatprep.subr.bf16.mxu0 0
    %8187 = vmatpush2.bf16.msra.mxu0 0
    %8188 = vmatprep.subr.bf16.mxu0 0
    %8189 = vmatpush2.bf16.msra.mxu0 0
    %8190 = vmatprep.subr.bf16.mxu0 0
    %8191 = vmatpush2.bf16.msra.mxu0 0
    %8192 = vmatprep.subr.bf16.mxu0 0
    %8193 = vmatpush2.bf16.msra.mxu0 0
    %8194 = vmatprep.mubr.bf16.mxu0 0
    %8195 = vmatmul.mubr.bf16.gmra.mxu0 %v8157
    %v8196 = vpop.f32.mrf.mxu0
    %v8197 = vadd.f32 0.0, %v8196
    %v8198 = vpop.f32.mrf.mxu0
    %v8199 = vpop.f32.mrf.mxu0
    %v8200 = vpop.f32.mrf.mxu0
    %8201 = vdwg.mxu0
    %8204 = vrot.lane.b32.xlu0 %v8149, 24
    %v8205 = vpop.permute.xlu0 %8204
    %8206 = vrot.lane.b32.xlu0 %v8197, 24
    %v8207 = vpop.permute.xlu0 %8206
    %8210 = vst.msk [vmem:[#allocation3] sm:$0xff] %vm1695, %v8205
    %8211 = vst.msk [vmem:[#allocation3 + $0x8] sm:$0xff] %vm1695, %v8207
    %v8212 = vld [vmem:[#allocation3] sm:$0xff]
    %v8213 = vld [vmem:[#allocation3 + $0x8] sm:$0xff]
    %v8214 = vpack.c.bf16 %v8213, %v8212
    %s8215 = scalar_lea.vmem %s8, 80
    %v8216 = vld [vmem:[%s8215] sm:$0xf]
    %v8217 = vld [vmem:[%s8215 + $0x4] sm:$0xf]
    %v8218 = vld [vmem:[%s8215 + $0x8] sm:$0xf]
    %v8219 = vld [vmem:[%s8215 + $0xc] sm:$0xf]
    %s8220 = scalar_lea.vmem %s9, 5
    %v8221 = vld [vmem:[%s8220] sm:$0x1]
    %v8223 = vlaneseq
    %v8224 = vshrl.u32 %v8223, 7
    %v8225 = vsub.s32 0, %v8224
    %v8226 = vrot.slane %v8221, %v8225
    %v8232 = vunpack.c.l.b16 %v8216
    %v8233 = vunpack.c.l.b16 %v8217
    %v8234 = vunpack.c.l.b16 %v8218
    %v8235 = vunpack.c.l.b16 %v8219
    %v8236 = vpack.c.b16 %v8233, %v8232
    %v8237 = vpack.c.b16 %v8235, %v8234
    %v8241 = vsel %vm487, %v8214, 0
    %8243 = vmatprep.subr.bf16.mxu0 0
    %8244 = vmatpush1.bf16.msra.mxu0 0
    %8245 = vmatprep.subr.bf16.mxu0 0
    %8246 = vmatpush1.bf16.msra.mxu0 0
    %8247 = vmatprep.subr.bf16.mxu0 0
    %8248 = vmatpush1.bf16.msra.mxu0 0
    %8249 = vmatprep.subr.bf16.mxu0 0
    %8250 = vmatpush1.bf16.msra.mxu0 0
    %8251 = vmatprep.subr.bf16.mxu0 0
    %8252 = vmatpush1.bf16.msra.mxu0 0
    %8253 = vmatprep.subr.bf16.mxu0 0
    %8254 = vmatpush1.bf16.msra.mxu0 0
    %8255 = vmatprep.subr.bf16.mxu0 0
    %8256 = vmatpush1.bf16.msra.mxu0 %v8237
    %8257 = vmatprep.subr.bf16.mxu0 0
    %8258 = vmatpush1.bf16.msra.mxu0 %v8236
    %8259 = vmatprep.subr.bf16.mxu0 0
    %8260 = vmatpush2.bf16.msra.mxu0 0
    %8261 = vmatprep.subr.bf16.mxu0 0
    %8262 = vmatpush2.bf16.msra.mxu0 0
    %8263 = vmatprep.subr.bf16.mxu0 0
    %8264 = vmatpush2.bf16.msra.mxu0 0
    %8265 = vmatprep.subr.bf16.mxu0 0
    %8266 = vmatpush2.bf16.msra.mxu0 0
    %8267 = vmatprep.subr.bf16.mxu0 0
    %8268 = vmatpush2.bf16.msra.mxu0 0
    %8269 = vmatprep.subr.bf16.mxu0 0
    %8270 = vmatpush2.bf16.msra.mxu0 0
    %8271 = vmatprep.subr.bf16.mxu0 0
    %8272 = vmatpush2.bf16.msra.mxu0 0
    %8273 = vmatprep.subr.bf16.mxu0 0
    %8274 = vmatpush2.bf16.msra.mxu0 0
    %8275 = vmatprep.mubr.bf16.mxu0 0
    %8276 = vmatmul.mubr.bf16.gmra.mxu0 %v8241
    %v8277 = vpop.f32.mrf.mxu0
    %v8278 = vadd.f32 %v8226, %v8277
    %v8279 = vpop.f32.mrf.mxu0
    %v8280 = vpop.f32.mrf.mxu0
    %v8281 = vadd.f32 %v8226, %v8280
    %v8282 = vpop.f32.mrf.mxu0
    %8283 = vdwg.mxu0
    %s8284 = scalar_lea.vmem %s10, 10
    %v8285 = vld [vmem:[%s8284] sm:$0x3]
    %v8286 = vadd.f32 %v7228, %v8278
    %v8287 = vadd.f32 %v7229, %v8281
    %v8288 = vsel %vm487, %v8286, 0.0
    %8289 = vadd.xlane.f32.xlu0 %v8288
    %v8290 = vpop.xlane.xlu0 %8289
    %v8291 = vsel %vm487, %v8287, 0.0
    %8292 = vadd.xlane.f32.xlu0 %v8291
    %v8293 = vpop.xlane.xlu0 %8292
    %v8294 = vmul.f32 %v8290, %v1777
    %v8295 = vmul.f32 %v8293, %v1777
    %v8296 = vsub.f32 %v8286, %v8294
    %v8297 = vsub.f32 %v8287, %v8295
    %v8298 = vmul.f32 %v8296, %v8296
    %v8299 = vmul.f32 %v8297, %v8297
    %v8300 = vsel %vm487, %v8298, 0.0
    %8301 = vadd.xlane.f32.xlu0 %v8300
    %v8302 = vpop.xlane.xlu0 %8301
    %v8303 = vsel %vm487, %v8299, 0.0
    %8304 = vadd.xlane.f32.xlu0 %v8303
    %v8305 = vpop.xlane.xlu0 %8304
    %v8306 = vmul.f32 %v8302, %v1777
    %v8307 = vmul.f32 %v8305, %v1777
    %v8308 = vadd.f32 %v8306, 1e-05
    %v8309 = vadd.f32 %v8307, 1e-05
    %v8310 = vrsqrt.pop %v8308
    %v8311 = vrsqrt.pop %v8309
    %v8312 = vmul.f32 %v8296, %v8310
    %v8313 = vmul.f32 %v8297, %v8311
    %v8314 = vlaneseq
    %v8315 = vshrl.u32 %v8314, 7
    %v8316 = vsub.s32 0, %v8315
    %v8317 = vrot.slane %v8285, %v8316
    %v8318 = vmul.f32 %v8312, %v8317
    %v8319 = vmul.f32 %v8313, %v8317
    %v8320 = vlaneseq
    %v8321 = vshrl.u32 %v8320, 7
    %v8322 = vsub.s32 1, %v8321
    %v8323 = vrot.slane %v8285, %v8322
    %v8324 = vadd.f32 %v8318, %v8323
    %v8325 = vadd.f32 %v8319, %v8323
    %v8326 = vpack.c.bf16 %v8325, %v8324
    %s8327 = scalar_lea.vmem %s11, 80
    %v8328 = vld [vmem:[%s8327] sm:$0xf]
    %v8329 = vld [vmem:[%s8327 + $0x4] sm:$0xf]
    %v8330 = vld [vmem:[%s8327 + $0x8] sm:$0xf]
    %v8331 = vld [vmem:[%s8327 + $0xc] sm:$0xf]
    %s8332 = scalar_lea.vmem %s12, 5
    %v8333 = vld [vmem:[%s8332] sm:$0x1]
    %v8335 = vlaneseq
    %v8336 = vshrl.u32 %v8335, 7
    %v8337 = vsub.s32 0, %v8336
    %v8338 = vrot.slane %v8333, %v8337
    %v8344 = vunpack.c.l.b16 %v8328
    %v8345 = vunpack.c.l.b16 %v8329
    %v8346 = vunpack.c.l.b16 %v8330
    %v8347 = vunpack.c.l.b16 %v8331
    %v8348 = vpack.c.b16 %v8345, %v8344
    %v8349 = vpack.c.b16 %v8347, %v8346
    %v8353 = vsel %vm487, %v8326, 0
    %8355 = vmatprep.subr.bf16.mxu0 0
    %8356 = vmatpush1.bf16.msra.mxu0 0
    %8357 = vmatprep.subr.bf16.mxu0 0
    %8358 = vmatpush1.bf16.msra.mxu0 0
    %8359 = vmatprep.subr.bf16.mxu0 0
    %8360 = vmatpush1.bf16.msra.mxu0 0
    %8361 = vmatprep.subr.bf16.mxu0 0
    %8362 = vmatpush1.bf16.msra.mxu0 0
    %8363 = vmatprep.subr.bf16.mxu0 0
    %8364 = vmatpush1.bf16.msra.mxu0 0
    %8365 = vmatprep.subr.bf16.mxu0 0
    %8366 = vmatpush1.bf16.msra.mxu0 0
    %8367 = vmatprep.subr.bf16.mxu0 0
    %8368 = vmatpush1.bf16.msra.mxu0 %v8349
    %8369 = vmatprep.subr.bf16.mxu0 0
    %8370 = vmatpush1.bf16.msra.mxu0 %v8348
    %8371 = vmatprep.subr.bf16.mxu0 0
    %8372 = vmatpush2.bf16.msra.mxu0 0
    %8373 = vmatprep.subr.bf16.mxu0 0
    %8374 = vmatpush2.bf16.msra.mxu0 0
    %8375 = vmatprep.subr.bf16.mxu0 0
    %8376 = vmatpush2.bf16.msra.mxu0 0
    %8377 = vmatprep.subr.bf16.mxu0 0
    %8378 = vmatpush2.bf16.msra.mxu0 0
    %8379 = vmatprep.subr.bf16.mxu0 0
    %8380 = vmatpush2.bf16.msra.mxu0 0
    %8381 = vmatprep.subr.bf16.mxu0 0
    %8382 = vmatpush2.bf16.msra.mxu0 0
    %8383 = vmatprep.subr.bf16.mxu0 0
    %8384 = vmatpush2.bf16.msra.mxu0 0
    %8385 = vmatprep.subr.bf16.mxu0 0
    %8386 = vmatpush2.bf16.msra.mxu0 0
    %8387 = vmatprep.mubr.bf16.mxu0 0
    %8388 = vmatmul.mubr.bf16.gmra.mxu0 %v8353
    %v8389 = vpop.f32.mrf.mxu0
    %v8390 = vadd.f32 %v8338, %v8389
    %v8391 = vpop.f32.mrf.mxu0
    %v8392 = vpop.f32.mrf.mxu0
    %v8393 = vadd.f32 %v8338, %v8392
    %v8394 = vpop.f32.mrf.mxu0
    %8395 = vdwg.mxu0
    %v8396 = vmul.f32 %v8390, 0.5
    %v8397 = vmul.f32 %v8393, 0.5
    %v8398 = vmul.f32 %v8390, 0.70710677
    %v8399 = vmul.f32 %v8393, 0.70710677
    %v8400 = verf.f32.pop %v8398
    %v8401 = verf.f32.pop %v8399
    %v8402 = vadd.f32 %v8400, 1.0
    %v8403 = vadd.f32 %v8401, 1.0
    %v8404 = vmul.f32 %v8396, %v8402
    %v8405 = vmul.f32 %v8397, %v8403
    %v8406 = vpack.c.bf16 %v8405, %v8404
    %s8407 = scalar_lea.vmem %s13, 160
    %v8408 = vld [vmem:[%s8407] sm:$0xf]
    %v8409 = vld [vmem:[%s8407 + $0x4] sm:$0xf]
    %v8410 = vld [vmem:[%s8407 + $0x8] sm:$0xf]
    %v8411 = vld [vmem:[%s8407 + $0xc] sm:$0xf]
    %v8412 = vld [vmem:[%s8407 + $0x10] sm:$0xf]
    %v8413 = vld [vmem:[%s8407 + $0x14] sm:$0xf]
    %v8414 = vld [vmem:[%s8407 + $0x18] sm:$0xf]
    %v8415 = vld [vmem:[%s8407 + $0x1c] sm:$0xf]
    %s8416 = scalar_lea.vmem %s14, 5
    %v8417 = vld [vmem:[%s8416] sm:$0x1]
    %v8419 = vlaneseq
    %v8420 = vshrl.u32 %v8419, 7
    %v8421 = vsub.s32 0, %v8420
    %v8422 = vrot.slane %v8417, %v8421
    %v8432 = vunpack.c.l.b16 %v8408
    %v8433 = vunpack.c.l.b16 %v8409
    %v8434 = vunpack.c.l.b16 %v8410
    %v8435 = vunpack.c.l.b16 %v8411
    %v8436 = vunpack.c.l.b16 %v8412
    %v8437 = vunpack.c.l.b16 %v8413
    %v8438 = vunpack.c.l.b16 %v8414
    %v8439 = vunpack.c.l.b16 %v8415
    %v8440 = vpack.c.b16 %v8433, %v8432
    %v8441 = vpack.c.b16 %v8435, %v8434
    %v8442 = vpack.c.b16 %v8437, %v8436
    %v8443 = vpack.c.b16 %v8439, %v8438
    %v8449 = vsel %vm1928, %v8406, 0
    %8451 = vmatprep.subr.bf16.mxu0 0
    %8452 = vmatpush1.bf16.msra.mxu0 0
    %8453 = vmatprep.subr.bf16.mxu0 0
    %8454 = vmatpush1.bf16.msra.mxu0 0
    %8455 = vmatprep.subr.bf16.mxu0 0
    %8456 = vmatpush1.bf16.msra.mxu0 0
    %8457 = vmatprep.subr.bf16.mxu0 0
    %8458 = vmatpush1.bf16.msra.mxu0 0
    %8459 = vmatprep.subr.bf16.mxu0 0
    %8460 = vmatpush1.bf16.msra.mxu0 %v8443
    %8461 = vmatprep.subr.bf16.mxu0 0
    %8462 = vmatpush1.bf16.msra.mxu0 %v8442
    %8463 = vmatprep.subr.bf16.mxu0 0
    %8464 = vmatpush1.bf16.msra.mxu0 %v8441
    %8465 = vmatprep.subr.bf16.mxu0 0
    %8466 = vmatpush1.bf16.msra.mxu0 %v8440
    %8467 = vmatprep.subr.bf16.mxu0 0
    %8468 = vmatpush2.bf16.msra.mxu0 0
    %8469 = vmatprep.subr.bf16.mxu0 0
    %8470 = vmatpush2.bf16.msra.mxu0 0
    %8471 = vmatprep.subr.bf16.mxu0 0
    %8472 = vmatpush2.bf16.msra.mxu0 0
    %8473 = vmatprep.subr.bf16.mxu0 0
    %8474 = vmatpush2.bf16.msra.mxu0 0
    %8475 = vmatprep.subr.bf16.mxu0 0
    %8476 = vmatpush2.bf16.msra.mxu0 0
    %8477 = vmatprep.subr.bf16.mxu0 0
    %8478 = vmatpush2.bf16.msra.mxu0 0
    %8479 = vmatprep.subr.bf16.mxu0 0
    %8480 = vmatpush2.bf16.msra.mxu0 0
    %8481 = vmatprep.subr.bf16.mxu0 0
    %8482 = vmatpush2.bf16.msra.mxu0 0
    %8483 = vmatprep.mubr.bf16.mxu0 0
    %8484 = vmatmul.mubr.bf16.gmra.mxu0 %v8449
    %v8485 = vpop.f32.mrf.mxu0
    %v8486 = vadd.f32 %v8422, %v8485
    %v8487 = vpop.f32.mrf.mxu0
    %v8488 = vpop.f32.mrf.mxu0
    %v8489 = vadd.f32 %v8422, %v8488
    %v8490 = vpop.f32.mrf.mxu0
    %8491 = vdwg.mxu0
    %s8492 = scalar_lea.vmem %s15, 10
    %v8493 = vld [vmem:[%s8492] sm:$0x3]
    %v8494 = vadd.f32 %v8324, %v8486
    %v8495 = vadd.f32 %v8325, %v8489
    %v8496 = vsel %vm487, %v8494, 0.0
    %8497 = vadd.xlane.f32.xlu0 %v8496
    %v8498 = vpop.xlane.xlu0 %8497
    %v8499 = vsel %vm487, %v8495, 0.0
    %8500 = vadd.xlane.f32.xlu0 %v8499
    %v8501 = vpop.xlane.xlu0 %8500
    %v8502 = vmul.f32 %v8498, %v1777
    %v8503 = vmul.f32 %v8501, %v1777
    %v8504 = vsub.f32 %v8494, %v8502
    %v8505 = vsub.f32 %v8495, %v8503
    %v8506 = vmul.f32 %v8504, %v8504
    %v8507 = vmul.f32 %v8505, %v8505
    %v8508 = vsel %vm487, %v8506, 0.0
    %8509 = vadd.xlane.f32.xlu0 %v8508
    %v8510 = vpop.xlane.xlu0 %8509
    %v8511 = vsel %vm487, %v8507, 0.0
    %8512 = vadd.xlane.f32.xlu0 %v8511
    %v8513 = vpop.xlane.xlu0 %8512
    %v8514 = vmul.f32 %v8510, %v1777
    %v8515 = vmul.f32 %v8513, %v1777
    %v8516 = vadd.f32 %v8514, 1e-05
    %v8517 = vadd.f32 %v8515, 1e-05
    %v8518 = vrsqrt.pop %v8516
    %v8519 = vrsqrt.pop %v8517
    %v8520 = vmul.f32 %v8504, %v8518
    %v8521 = vmul.f32 %v8505, %v8519
    %v8522 = vlaneseq
    %v8523 = vshrl.u32 %v8522, 7
    %v8524 = vsub.s32 0, %v8523
    %v8525 = vrot.slane %v8493, %v8524
    %v8526 = vmul.f32 %v8520, %v8525
    %v8527 = vmul.f32 %v8521, %v8525
    %v8528 = vlaneseq
    %v8529 = vshrl.u32 %v8528, 7
    %v8530 = vsub.s32 1, %v8529
    %v8531 = vrot.slane %v8493, %v8530
    %v8532 = vadd.f32 %v8526, %v8531
    %v8533 = vadd.f32 %v8527, %v8531
    %v8534 = vsel %vm487, %v8532, 0.0
    %v8535 = vrot.slane %v8534, 4
    %v8536 = vadd.f32 %v8534, %v8535
    %v8537 = vrot.slane %v8536, 2
    %v8538 = vadd.f32 %v8536, %v8537
    %v8539 = vrot.slane %v8538, 1
    %v8540 = vadd.f32 %v8538, %v8539
    %v8541 = vsel %vm487, %v8533, 0.0
    %v8542 = vrot.slane %v8541, 4
    %v8543 = vadd.f32 %v8541, %v8542
    %v8544 = vrot.slane %v8543, 2
    %v8545 = vadd.f32 %v8543, %v8544
    %v8546 = vrot.slane %v8545, 1
    %v8547 = vadd.f32 %v8545, %v8546
    %v8548 = vrcp.pop 8.0
    %v8549 = vmul.f32 %v8540, %v8548
    %v8550 = vmul.f32 %v8547, %v8548
    %v8551 = vpack.c.bf16 %v8549, %v8549
    %v8552 = vpack.c.bf16 %v8550, %v8550
    %v8553 = vld [vmem:[%s16] sm:$0xf]
    %v8554 = vld [vmem:[%s16 + $0x4] sm:$0xf]
    %v8555 = vld [vmem:[%s16 + $0x8] sm:$0xf]
    %v8556 = vld [vmem:[%s16 + $0xc] sm:$0xf]
    %v8557 = vld [vmem:[%s17] sm:$0x1]
    %v8559 = vlaneseq
    %v8560 = vshrl.u32 %v8559, 7
    %v8561 = vsub.s32 0, %v8560
    %v8562 = vrot.slane %v8557, %v8561
    %v8566 = vunpack.c.l.b16 %v8551
    %v8567 = vunpack.c.l.b16 %v8552
    %vm8568 = vcmask 1041409
    %v8569 = vsel %vm8568, %v8567, %v8566
    %v8570 = vpack.c.b16 %v8569, %v8569
    %v8575 = vunpack.c.l.b16 %v8553
    %v8576 = vunpack.c.l.b16 %v8554
    %v8577 = vunpack.c.l.b16 %v8555
    %v8578 = vunpack.c.l.b16 %v8556
    %v8579 = vpack.c.b16 %v8576, %v8575
    %v8580 = vpack.c.b16 %v8578, %v8577
    %v8584 = vsel %vm487, %v8570, 0
    %8586 = vmatprep.subr.bf16.mxu0 0
    %8587 = vmatpush1.bf16.msra.mxu0 0
    %8588 = vmatprep.subr.bf16.mxu0 0
    %8589 = vmatpush1.bf16.msra.mxu0 0
    %8590 = vmatprep.subr.bf16.mxu0 0
    %8591 = vmatpush1.bf16.msra.mxu0 0
    %8592 = vmatprep.subr.bf16.mxu0 0
    %8593 = vmatpush1.bf16.msra.mxu0 0
    %8594 = vmatprep.subr.bf16.mxu0 0
    %8595 = vmatpush1.bf16.msra.mxu0 0
    %8596 = vmatprep.subr.bf16.mxu0 0
    %8597 = vmatpush1.bf16.msra.mxu0 0
    %8598 = vmatprep.subr.bf16.mxu0 0
    %8599 = vmatpush1.bf16.msra.mxu0 %v8580
    %8600 = vmatprep.subr.bf16.mxu0 0
    %8601 = vmatpush1.bf16.msra.mxu0 %v8579
    %8602 = vmatprep.subr.bf16.mxu0 0
    %8603 = vmatpush2.bf16.msra.mxu0 0
    %8604 = vmatprep.subr.bf16.mxu0 0
    %8605 = vmatpush2.bf16.msra.mxu0 0
    %8606 = vmatprep.subr.bf16.mxu0 0
    %8607 = vmatpush2.bf16.msra.mxu0 0
    %8608 = vmatprep.subr.bf16.mxu0 0
    %8609 = vmatpush2.bf16.msra.mxu0 0
    %8610 = vmatprep.subr.bf16.mxu0 0
    %8611 = vmatpush2.bf16.msra.mxu0 0
    %8612 = vmatprep.subr.bf16.mxu0 0
    %8613 = vmatpush2.bf16.msra.mxu0 0
    %8614 = vmatprep.subr.bf16.mxu0 0
    %8615 = vmatpush2.bf16.msra.mxu0 0
    %8616 = vmatprep.subr.bf16.mxu0 0
    %8617 = vmatpush2.bf16.msra.mxu0 0
    %8618 = vmatprep.mubr.bf16.mxu0 0
    %8619 = vmatmul.mubr.bf16.gmra.mxu0 %v8584
    %v8620 = vpop.f32.mrf.mxu0
    %v8621 = vadd.f32 %v8562, %v8620
    %v8622 = vpop.f32.mrf.mxu0
    %v8623 = vpop.f32.mrf.mxu0
    %v8624 = vpop.f32.mrf.mxu0
    %8625 = vdwg.mxu0
    %8626 = vst [vmem:[#allocation4] sm:$0x3] %v8621
    // Predicated region
    $region74: #{tpu_custom_call.1} parent=1 // pred_check
      _
    $region75: #{tpu_custom_call.1} parent=1 // pred_check_branch
      %8628 = sbr.rel (0) target = $region77
    $region76: #{tpu_custom_call.1} parent=1 // pred_region
      %s8630 = ssub.s32 32, 32
      %8631 = vsyncadd [#allocation5], %s8630
      %s8633 = sshll.u32 [#allocation4], 4
      %s8634 = int_to_ptr.vmem [resolvable:$true] %s8633
      %8636 = dma.vmem_to_hbm [thread:$0]  %s8634, 32, %s18, [#allocation5]
    $region77: #{tpu_custom_call.1} parent=1 // pred_fallthru
      _
    // Predicated region
    $region78: #{tpu_custom_call.1} parent=1 // pred_check
      _
    $region79: #{tpu_custom_call.1} parent=1 // pred_check_branch
      %8638 = sbr.rel (0) target = $region81
    $region80: #{tpu_custom_call.1} parent=1 // pred_region
      %8639 = dma.done [#allocation5], 32
    $region81: #{tpu_custom_call.1} parent=1 // pred_fallthru
      _
    %8640 = vsyncpa [#allocation5], 1

</llo_original>
